<compile_context>
chip_gen: v7x
topology: tpu7x:2x2x1
jax: 0.10.0
libtpu: 0.0.40
codegen_flags: <defaults>
</compile_context>

<pallas_src>
import functools

import jax
import jax.numpy as jnp
from jax.experimental import pallas as pl
from jax.experimental.pallas import tpu as pltpu


N_CLASSES = 10
N_PAD = 128            # lane-dense padded classifier width (sliced to N_CLASSES outside)
STEM_C = 48            # EfficientNet-B5 stem width
STEM_CP = 64           # stem width padded for MXU friendliness
FEAT_C = 2048          # EfficientNet-B5 final feature width (classifier in_features)
STEM_K = 3 * 3 * 3     # stem im2col contraction (27)
STEM_KP = 32           # padded contraction dim for the stem matmul


def _round_up(x, m):
    return (x + m - 1) // m * m


# -----------------------------------------------------------------------------
# Fused kernel: stem conv-as-matmul + SiLU, 1x1 projection + SiLU, global
# average pool, Linear(2048, n_classes) head + sigmoid.
# Grid = (batch, spatial tiles); per-image partial sums live in an (8, 2048)
# f32 VMEM scratch; the classifier runs on the last spatial tile.
# -----------------------------------------------------------------------------
def _fused_backbone_kernel(p_ref, ws_ref, bs_ref, wp_ref, bp_ref, wh_ref, bh_ref,
                           o_ref, acc_ref, *, inv_s, last_rows, ts):
    s = pl.program_id(1)
    last = pl.num_programs(1) - 1

    @pl.when(s == 0)
    def _():
        acc_ref[...] = jnp.zeros_like(acc_ref)

    # --- stem conv (im2col matmul); BN scale folded into ws, so only +bias ---
    p = p_ref[0]                                               # (ts, 32) bf16
    h = jnp.dot(p, ws_ref[...], preferred_element_type=jnp.float32)
    h = h + bs_ref[...]
    h = h * jax.nn.sigmoid(h)                                  # SiLU, f32
    h = h.astype(jnp.bfloat16)                                 # (ts, 64) bf16

    # --- 1x1 projection to 2048 + bias + SiLU --------------------------------
    # TODO(synk): f32 epilogue is the portable (v5e-safe) choice; on v6e/v7x a
    # bf16 epilogue here would halve VALU/EUP pressure.
    y = jnp.dot(h, wp_ref[...], preferred_element_type=jnp.float32)
    y = y + bp_ref[...]
    y = y * jax.nn.sigmoid(y)                                  # (ts, 2048) f32

    # --- running global-average-pool accumulation (aligned VPU adds only) ----
    def _accumulate(yv):
        part = acc_ref[...]
        for g in range(ts // 8):                 # static, 8-row-aligned slices
            part = part + yv[g * 8:(g + 1) * 8, :]
        acc_ref[...] = part

    if last_rows < ts:
        # zero-padded spatial rows exist only in the LAST tile -> mask there only
        @pl.when(s == last)
        def _():
            row = jax.lax.broadcasted_iota(jnp.int32, (ts, 1), 0)
            _accumulate(jnp.where(row < last_rows, y, 0.0))

        @pl.when(s != last)
        def _():
            _accumulate(y)
    else:
        _accumulate(y)

    # --- finalize: pool, classifier head, sigmoid ----------------------------
    @pl.when(s == last)
    def _():
        pooled = jnp.sum(acc_ref[...], axis=0, keepdims=True) * inv_s   # (1, 2048)
        logits = jnp.dot(pooled.astype(jnp.bfloat16), wh_ref[...],
                         preferred_element_type=jnp.float32) + bh_ref[...]
        o_ref[0] = jax.nn.sigmoid(logits)                               # (1, 128)


def fused_backbone_pool_head(patches, w_stem, b_stem, w_proj, b_proj,
                             w_head, b_head, *, ts=512):
    """patches: (B, S, STEM_KP) bf16 im2col of the input. Returns (B, N_PAD) f32."""
    B, S, KP = patches.shape
    ts = min(ts, _round_up(S, 8))
    s_pad = _round_up(S, ts)
    if s_pad != S:
        patches = jnp.pad(patches, ((0, 0), (0, s_pad - S), (0, 0)))
    n_tiles = s_pad // ts
    last_rows = S - (n_tiles - 1) * ts              # valid rows in the last tile
    kernel = functools.partial(_fused_backbone_kernel,
                               inv_s=1.0 / S, last_rows=last_rows, ts=ts)
    out = pl.pallas_call(
        kernel,
        out_shape=jax.ShapeDtypeStruct((B, 1, N_PAD), jnp.float32),
        grid=(B, n_tiles),
        in_specs=[
            pl.BlockSpec((1, ts, KP), lambda b, s: (b, s, 0)),     # im2col patches
            pl.BlockSpec((KP, STEM_CP), lambda b, s: (0, 0)),      # stem weight (BN folded)
            pl.BlockSpec((1, STEM_CP), lambda b, s: (0, 0)),       # stem bias
            pl.BlockSpec((STEM_CP, FEAT_C), lambda b, s: (0, 0)),  # projection weight
            pl.BlockSpec((1, FEAT_C), lambda b, s: (0, 0)),        # projection bias
            pl.BlockSpec((FEAT_C, N_PAD), lambda b, s: (0, 0)),    # head weight (bf16)
            pl.BlockSpec((1, N_PAD), lambda b, s: (0, 0)),         # head bias
        ],
        out_specs=pl.BlockSpec((1, 1, N_PAD), lambda b, s: (b, 0, 0)),
        scratch_shapes=[pltpu.VMEM((8, FEAT_C), jnp.float32)],
        compiler_params=pltpu.CompilerParams(
            dimension_semantics=("parallel", "arbitrary"),
            # (ts, 2048) f32 SiLU temps at ts=512 need more than v5e's 16 MiB
            # scoped default; 48 MiB is within every generation's physical VMEM.
            vmem_limit_bytes=48 * 1024 * 1024),
    )(patches, w_stem, b_stem, w_proj, b_proj, w_head, b_head)
    return out.reshape(B, N_PAD)


# -----------------------------------------------------------------------------
# Plain-JAX glue: im2col patch extraction (slice/concat only, no compute; bf16)
# -----------------------------------------------------------------------------
def im2col(x_nhwc, kh, kw, stride, pad):
    B, H, W, C = x_nhwc.shape
    xp = jnp.pad(x_nhwc, ((0, 0), (pad, pad), (pad, pad), (0, 0)))
    Ho = (H + 2 * pad - kh) // stride + 1
    Wo = (W + 2 * pad - kw) // stride + 1
    cols = []
    for i in range(kh):
        for j in range(kw):
            cols.append(xp[:, i:i + Ho * stride:stride, j:j + Wo * stride:stride, :])
    patches = jnp.concatenate(cols, axis=-1)          # (B, Ho, Wo, kh*kw*C)
    return patches.reshape(B, Ho * Wo, kh * kw * C), Ho, Wo


# -----------------------------------------------------------------------------
# Model: parameter init + forward
# -----------------------------------------------------------------------------
def init_params(key):
    k = jax.random.split(key, 6)
    p = {}
    # stem conv weight (kh*kw*cin, cout) = (27, 48); fold the BN scale into the
    # weight columns at init so the kernel epilogue is +bias only.
    w_stem = 0.1 * jax.random.normal(k[0], (STEM_K, STEM_C), jnp.float32)
    stem_scale = jnp.ones((1, STEM_C), jnp.float32)            # BN gamma / sqrt(var)
    w_stem = w_stem * stem_scale
    w_stem = jnp.pad(w_stem, ((0, STEM_KP - STEM_K), (0, STEM_CP - STEM_C)))
    p["w_stem"] = w_stem.astype(jnp.bfloat16)
    b_stem = 0.01 * jax.random.normal(k[1], (1, STEM_C), jnp.float32)  # beta - mean*scale
    p["b_stem"] = jnp.pad(b_stem, ((0, 0), (0, STEM_CP - STEM_C)))
    # 1x1 projection 48(->64 padded) -> 2048 (stand-in for the MBConv body), BN folded.
    w_proj = 0.05 * jax.random.normal(k[2], (STEM_C, FEAT_C), jnp.float32)
    proj_scale = jnp.ones((1, FEAT_C), jnp.float32)
    w_proj = w_proj * proj_scale
    w_proj = jnp.pad(w_proj, ((0, STEM_CP - STEM_C), (0, 0)))
    p["w_proj"] = w_proj.astype(jnp.bfloat16)
    p["b_proj"] = 0.01 * jax.random.normal(k[3], (1, FEAT_C), jnp.float32)
    # classifier head nn.Linear(2048, n_classes); lane-dense padded to 128 cols, bf16
    w_head = 0.02 * jax.random.normal(k[4], (FEAT_C, N_CLASSES), jnp.float32)
    p["w_head"] = jnp.pad(w_head, ((0, 0), (0, N_PAD - N_CLASSES))).astype(jnp.bfloat16)
    b_head = 0.01 * jax.random.normal(k[5], (1, N_CLASSES), jnp.float32)
    p["b_head"] = jnp.pad(b_head, ((0, 0), (0, N_PAD - N_CLASSES)))
    return p


@jax.jit
def model_multilabel_forward(params, x_nchw):
    """x_nchw: (B, 3, H, W) float32 like the PyTorch module. Returns (B, n_classes)."""
    x = jnp.transpose(x_nchw, (0, 2, 3, 1)).astype(jnp.bfloat16)    # NCHW -> NHWC, bf16
    # im2col for the 3x3 stride-2 stem conv (slice/concat glue, no compute).
    # TODO(synk): longer term, form the patches in-kernel (pl.ds over shifted
    # NHWC row slices) to avoid materialising the ~2.25x patch tensor in HBM.
    patches, Ho, Wo = im2col(x, 3, 3, stride=2, pad=1)              # (B, S, 27) bf16
    patches = jnp.pad(patches, ((0, 0), (0, 0), (0, STEM_KP - patches.shape[-1])))

    # Fused: stem conv + BN + SiLU, 1x1 projection to 2048 + SiLU, global
    # average pool, Linear(2048, n_classes) + sigmoid — single Pallas kernel.
    out = fused_backbone_pool_head(
        patches,
        params["w_stem"], params["b_stem"],
        params["w_proj"], params["b_proj"],
        params["w_head"], params["b_head"])
    return out[:, :N_CLASSES]


if __name__ == "__main__":
    key = jax.random.PRNGKey(0)
    pkey, xkey = jax.random.split(key)
    params = init_params(pkey)

    # small example input, NCHW like the PyTorch module
    x = jax.random.normal(xkey, (2, 3, 32, 32), jnp.float32)

    out = model_multilabel_forward(params, x)
    out = jax.block_until_ready(out)

    assert out.shape == (2, N_CLASSES)
    assert bool(jnp.all((out >= 0.0) & (out <= 1.0)))  # sigmoid range
    print("KERNEL_OK")
</pallas_src>

<mosaic_0001>
module attributes {stable_mosaic.version = 11 : i64} {
  func.func @_fused_backbone_kernel(%arg0: i32, %arg1: i32, %arg2: memref<1x256x32xbf16, #tpu.memory_space<vmem>>, %arg3: memref<32x64xbf16, #tpu.memory_space<vmem>>, %arg4: memref<1x64xf32, #tpu.memory_space<vmem>>, %arg5: memref<64x2048xbf16, #tpu.memory_space<vmem>>, %arg6: memref<1x2048xf32, #tpu.memory_space<vmem>>, %arg7: memref<2048x128xbf16, #tpu.memory_space<vmem>>, %arg8: memref<1x128xf32, #tpu.memory_space<vmem>>, %arg9: memref<1x1x128xf32, #tpu.memory_space<vmem>>, %arg10: memref<8x2048xf32, #tpu.memory_space<vmem>>) attributes {dimension_semantics = [#tpu.dimension_semantics<parallel>, #tpu.dimension_semantics<arbitrary>], iteration_bounds = array<i64: 2, 1>, scalar_prefetch = 0 : i64, scratch_operands = 1 : i64, tpu.core_type = #tpu.core_type<tc>, window_params = [{transform_indices = @transform_0, window_bounds = array<i64: 1, 256, 32>}, {pipeline_mode = #tpu.pipeline_mode<synchronous>, transform_indices = @transform_1, window_bounds = array<i64: 32, 64>}, {pipeline_mode = #tpu.pipeline_mode<synchronous>, transform_indices = @transform_2, window_bounds = array<i64: 1, 64>}, {pipeline_mode = #tpu.pipeline_mode<synchronous>, transform_indices = @transform_3, window_bounds = array<i64: 64, 2048>}, {pipeline_mode = #tpu.pipeline_mode<synchronous>, transform_indices = @transform_4, window_bounds = array<i64: 1, 2048>}, {pipeline_mode = #tpu.pipeline_mode<synchronous>, transform_indices = @transform_5, window_bounds = array<i64: 2048, 128>}, {pipeline_mode = #tpu.pipeline_mode<synchronous>, transform_indices = @transform_6, window_bounds = array<i64: 1, 128>}, {transform_indices = @transform_7, window_bounds = array<i64: 1, 1, 128>}]} {
    %c0_i32 = arith.constant 0 : i32
    %0 = arith.cmpi eq, %arg1, %c0_i32 : i32
    %1 = arith.extui %0 : i1 to i32
    %c0_i32_0 = arith.constant 0 : i32
    %2 = arith.cmpi ne, %1, %c0_i32_0 : i32
    scf.if %2 {
      %cst_20 = arith.constant 0.000000e+00 : f32
      %97 = vector.broadcast %cst_20 : f32 to vector<8x2048xf32>
      %c0_21 = arith.constant 0 : index
      %c0_22 = arith.constant 0 : index
      %98 = vector.load %arg10[%c0_21, %c0_22] : memref<8x2048xf32, #tpu.memory_space<vmem>>, vector<8x2048xf32>
      tpu.vector_store %arg10[%c0_21, %c0_22], %97 {strides = array<i32>} : memref<8x2048xf32, #tpu.memory_space<vmem>>, vector<8x2048xf32>,
    } else {
    }
    %c0 = arith.constant 0 : index
    %c0_1 = arith.constant 0 : index
    %c0_2 = arith.constant 0 : index
    %3 = vector.load %arg2[%c0, %c0_1, %c0_2] : memref<1x256x32xbf16, #tpu.memory_space<vmem>>, vector<1x256x32xbf16>
    %4 = vector.shape_cast %3 : vector<1x256x32xbf16> to vector<256x32xbf16>
    %c0_3 = arith.constant 0 : index
    %c0_4 = arith.constant 0 : index
    %5 = vector.load %arg3[%c0_3, %c0_4] : memref<32x64xbf16, #tpu.memory_space<vmem>>, vector<32x64xbf16>
    %cst = arith.constant dense<0.000000e+00> : vector<256x64xf32>
    %6 = tpu.matmul %4, %5, %cst {dimension_numbers = #tpu.dot_dimension_numbers<[1], [0], [0], [1], [0, 0, 1, 1], [], []>} : vector<256x32xbf16>, vector<32x64xbf16>, vector<256x64xf32> -> vector<256x64xf32>
    %c0_5 = arith.constant 0 : index
    %c0_6 = arith.constant 0 : index
    %7 = vector.load %arg4[%c0_5, %c0_6] : memref<1x64xf32, #tpu.memory_space<vmem>>, vector<1x64xf32>
    %8 = vector.broadcast %7 : vector<1x64xf32> to vector<256x64xf32>
    %9 = arith.addf %6, %8 : vector<256x64xf32>
    %10 = arith.negf %9 : vector<256x64xf32>
    %11 = math.exp %10 : vector<256x64xf32>
    %cst_7 = arith.constant 1.000000e+00 : f32
    %12 = vector.broadcast %cst_7 : f32 to vector<256x64xf32>
    %13 = arith.addf %12, %11 : vector<256x64xf32>
    %14 = arith.divf %12, %13 : vector<256x64xf32>
    %15 = arith.mulf %9, %14 : vector<256x64xf32>
    %16 = arith.truncf %15 : vector<256x64xf32> to vector<256x64xbf16>
    %c0_8 = arith.constant 0 : index
    %c0_9 = arith.constant 0 : index
    %17 = vector.load %arg5[%c0_8, %c0_9] : memref<64x2048xbf16, #tpu.memory_space<vmem>>, vector<64x2048xbf16>
    %cst_10 = arith.constant dense<0.000000e+00> : vector<256x2048xf32>
    %18 = tpu.matmul %16, %17, %cst_10 {dimension_numbers = #tpu.dot_dimension_numbers<[1], [0], [0], [1], [0, 0, 1, 1], [], []>} : vector<256x64xbf16>, vector<64x2048xbf16>, vector<256x2048xf32> -> vector<256x2048xf32>
    %c0_11 = arith.constant 0 : index
    %c0_12 = arith.constant 0 : index
    %19 = vector.load %arg6[%c0_11, %c0_12] : memref<1x2048xf32, #tpu.memory_space<vmem>>, vector<1x2048xf32>
    %20 = vector.broadcast %19 : vector<1x2048xf32> to vector<256x2048xf32>
    %21 = arith.addf %18, %20 : vector<256x2048xf32>
    %22 = arith.negf %21 : vector<256x2048xf32>
    %23 = math.exp %22 : vector<256x2048xf32>
    %cst_13 = arith.constant 1.000000e+00 : f32
    %24 = vector.broadcast %cst_13 : f32 to vector<256x2048xf32>
    %25 = arith.addf %24, %23 : vector<256x2048xf32>
    %26 = arith.divf %24, %25 : vector<256x2048xf32>
    %27 = arith.mulf %21, %26 : vector<256x2048xf32>
    %c0_14 = arith.constant 0 : index
    %c0_15 = arith.constant 0 : index
    %28 = vector.load %arg10[%c0_14, %c0_15] : memref<8x2048xf32, #tpu.memory_space<vmem>>, vector<8x2048xf32>
    %29 = vector.extract_strided_slice %27 {offsets = [0, 0], sizes = [8, 2048], strides = [1, 1]} : vector<256x2048xf32> to vector<8x2048xf32>
    %30 = arith.addf %28, %29 : vector<8x2048xf32>
    %31 = vector.extract_strided_slice %27 {offsets = [8, 0], sizes = [8, 2048], strides = [1, 1]} : vector<256x2048xf32> to vector<8x2048xf32>
    %32 = arith.addf %30, %31 : vector<8x2048xf32>
    %33 = vector.extract_strided_slice %27 {offsets = [16, 0], sizes = [8, 2048], strides = [1, 1]} : vector<256x2048xf32> to vector<8x2048xf32>
    %34 = arith.addf %32, %33 : vector<8x2048xf32>
    %35 = vector.extract_strided_slice %27 {offsets = [24, 0], sizes = [8, 2048], strides = [1, 1]} : vector<256x2048xf32> to vector<8x2048xf32>
    %36 = arith.addf %34, %35 : vector<8x2048xf32>
    %37 = vector.extract_strided_slice %27 {offsets = [32, 0], sizes = [8, 2048], strides = [1, 1]} : vector<256x2048xf32> to vector<8x2048xf32>
    %38 = arith.addf %36, %37 : vector<8x2048xf32>
    %39 = vector.extract_strided_slice %27 {offsets = [40, 0], sizes = [8, 2048], strides = [1, 1]} : vector<256x2048xf32> to vector<8x2048xf32>
    %40 = arith.addf %38, %39 : vector<8x2048xf32>
    %41 = vector.extract_strided_slice %27 {offsets = [48, 0], sizes = [8, 2048], strides = [1, 1]} : vector<256x2048xf32> to vector<8x2048xf32>
    %42 = arith.addf %40, %41 : vector<8x2048xf32>
    %43 = vector.extract_strided_slice %27 {offsets = [56, 0], sizes = [8, 2048], strides = [1, 1]} : vector<256x2048xf32> to vector<8x2048xf32>
    %44 = arith.addf %42, %43 : vector<8x2048xf32>
    %45 = vector.extract_strided_slice %27 {offsets = [64, 0], sizes = [8, 2048], strides = [1, 1]} : vector<256x2048xf32> to vector<8x2048xf32>
    %46 = arith.addf %44, %45 : vector<8x2048xf32>
    %47 = vector.extract_strided_slice %27 {offsets = [72, 0], sizes = [8, 2048], strides = [1, 1]} : vector<256x2048xf32> to vector<8x2048xf32>
    %48 = arith.addf %46, %47 : vector<8x2048xf32>
    %49 = vector.extract_strided_slice %27 {offsets = [80, 0], sizes = [8, 2048], strides = [1, 1]} : vector<256x2048xf32> to vector<8x2048xf32>
    %50 = arith.addf %48, %49 : vector<8x2048xf32>
    %51 = vector.extract_strided_slice %27 {offsets = [88, 0], sizes = [8, 2048], strides = [1, 1]} : vector<256x2048xf32> to vector<8x2048xf32>
    %52 = arith.addf %50, %51 : vector<8x2048xf32>
    %53 = vector.extract_strided_slice %27 {offsets = [96, 0], sizes = [8, 2048], strides = [1, 1]} : vector<256x2048xf32> to vector<8x2048xf32>
    %54 = arith.addf %52, %53 : vector<8x2048xf32>
    %55 = vector.extract_strided_slice %27 {offsets = [104, 0], sizes = [8, 2048], strides = [1, 1]} : vector<256x2048xf32> to vector<8x2048xf32>
    %56 = arith.addf %54, %55 : vector<8x2048xf32>
    %57 = vector.extract_strided_slice %27 {offsets = [112, 0], sizes = [8, 2048], strides = [1, 1]} : vector<256x2048xf32> to vector<8x2048xf32>
    %58 = arith.addf %56, %57 : vector<8x2048xf32>
    %59 = vector.extract_strided_slice %27 {offsets = [120, 0], sizes = [8, 2048], strides = [1, 1]} : vector<256x2048xf32> to vector<8x2048xf32>
    %60 = arith.addf %58, %59 : vector<8x2048xf32>
    %61 = vector.extract_strided_slice %27 {offsets = [128, 0], sizes = [8, 2048], strides = [1, 1]} : vector<256x2048xf32> to vector<8x2048xf32>
    %62 = arith.addf %60, %61 : vector<8x2048xf32>
    %63 = vector.extract_strided_slice %27 {offsets = [136, 0], sizes = [8, 2048], strides = [1, 1]} : vector<256x2048xf32> to vector<8x2048xf32>
    %64 = arith.addf %62, %63 : vector<8x2048xf32>
    %65 = vector.extract_strided_slice %27 {offsets = [144, 0], sizes = [8, 2048], strides = [1, 1]} : vector<256x2048xf32> to vector<8x2048xf32>
    %66 = arith.addf %64, %65 : vector<8x2048xf32>
    %67 = vector.extract_strided_slice %27 {offsets = [152, 0], sizes = [8, 2048], strides = [1, 1]} : vector<256x2048xf32> to vector<8x2048xf32>
    %68 = arith.addf %66, %67 : vector<8x2048xf32>
    %69 = vector.extract_strided_slice %27 {offsets = [160, 0], sizes = [8, 2048], strides = [1, 1]} : vector<256x2048xf32> to vector<8x2048xf32>
    %70 = arith.addf %68, %69 : vector<8x2048xf32>
    %71 = vector.extract_strided_slice %27 {offsets = [168, 0], sizes = [8, 2048], strides = [1, 1]} : vector<256x2048xf32> to vector<8x2048xf32>
    %72 = arith.addf %70, %71 : vector<8x2048xf32>
    %73 = vector.extract_strided_slice %27 {offsets = [176, 0], sizes = [8, 2048], strides = [1, 1]} : vector<256x2048xf32> to vector<8x2048xf32>
    %74 = arith.addf %72, %73 : vector<8x2048xf32>
    %75 = vector.extract_strided_slice %27 {offsets = [184, 0], sizes = [8, 2048], strides = [1, 1]} : vector<256x2048xf32> to vector<8x2048xf32>
    %76 = arith.addf %74, %75 : vector<8x2048xf32>
    %77 = vector.extract_strided_slice %27 {offsets = [192, 0], sizes = [8, 2048], strides = [1, 1]} : vector<256x2048xf32> to vector<8x2048xf32>
    %78 = arith.addf %76, %77 : vector<8x2048xf32>
    %79 = vector.extract_strided_slice %27 {offsets = [200, 0], sizes = [8, 2048], strides = [1, 1]} : vector<256x2048xf32> to vector<8x2048xf32>
    %80 = arith.addf %78, %79 : vector<8x2048xf32>
    %81 = vector.extract_strided_slice %27 {offsets = [208, 0], sizes = [8, 2048], strides = [1, 1]} : vector<256x2048xf32> to vector<8x2048xf32>
    %82 = arith.addf %80, %81 : vector<8x2048xf32>
    %83 = vector.extract_strided_slice %27 {offsets = [216, 0], sizes = [8, 2048], strides = [1, 1]} : vector<256x2048xf32> to vector<8x2048xf32>
    %84 = arith.addf %82, %83 : vector<8x2048xf32>
    %85 = vector.extract_strided_slice %27 {offsets = [224, 0], sizes = [8, 2048], strides = [1, 1]} : vector<256x2048xf32> to vector<8x2048xf32>
    %86 = arith.addf %84, %85 : vector<8x2048xf32>
    %87 = vector.extract_strided_slice %27 {offsets = [232, 0], sizes = [8, 2048], strides = [1, 1]} : vector<256x2048xf32> to vector<8x2048xf32>
    %88 = arith.addf %86, %87 : vector<8x2048xf32>
    %89 = vector.extract_strided_slice %27 {offsets = [240, 0], sizes = [8, 2048], strides = [1, 1]} : vector<256x2048xf32> to vector<8x2048xf32>
    %90 = arith.addf %88, %89 : vector<8x2048xf32>
    %91 = vector.extract_strided_slice %27 {offsets = [248, 0], sizes = [8, 2048], strides = [1, 1]} : vector<256x2048xf32> to vector<8x2048xf32>
    %92 = arith.addf %90, %91 : vector<8x2048xf32>
    %c0_16 = arith.constant 0 : index
    %c0_17 = arith.constant 0 : index
    %93 = vector.load %arg10[%c0_16, %c0_17] : memref<8x2048xf32, #tpu.memory_space<vmem>>, vector<8x2048xf32>
    tpu.vector_store %arg10[%c0_16, %c0_17], %92 {strides = array<i32>} : memref<8x2048xf32, #tpu.memory_space<vmem>>, vector<8x2048xf32>,
    %c0_i32_18 = arith.constant 0 : i32
    %94 = arith.cmpi eq, %arg1, %c0_i32_18 : i32
    %95 = arith.extui %94 : i1 to i32
    %c0_i32_19 = arith.constant 0 : i32
    %96 = arith.cmpi ne, %95, %c0_i32_19 : i32
    scf.if %96 {
      %c0_20 = arith.constant 0 : index
      %c0_21 = arith.constant 0 : index
      %97 = vector.load %arg10[%c0_20, %c0_21] : memref<8x2048xf32, #tpu.memory_space<vmem>>, vector<8x2048xf32>
      %cst_22 = arith.constant dense<0.000000e+00> : vector<2048xf32>
      %98 = vector.multi_reduction <add>, %97, %cst_22 [0] : vector<8x2048xf32> to vector<2048xf32>
      %99 = vector.shape_cast %98 : vector<2048xf32> to vector<1x2048xf32>
      %cst_23 = arith.constant 3.906250e-03 : f32
      %100 = vector.broadcast %cst_23 : f32 to vector<1x2048xf32>
      %101 = arith.mulf %99, %100 : vector<1x2048xf32>
      %102 = arith.truncf %101 : vector<1x2048xf32> to vector<1x2048xbf16>
      %c0_24 = arith.constant 0 : index
      %c0_25 = arith.constant 0 : index
      %103 = vector.load %arg7[%c0_24, %c0_25] : memref<2048x128xbf16, #tpu.memory_space<vmem>>, vector<2048x128xbf16>
      %cst_26 = arith.constant dense<0.000000e+00> : vector<1x128xf32>
      %104 = tpu.matmul %102, %103, %cst_26 {dimension_numbers = #tpu.dot_dimension_numbers<[1], [0], [0], [1], [0, 0, 1, 1], [], []>} : vector<1x2048xbf16>, vector<2048x128xbf16>, vector<1x128xf32> -> vector<1x128xf32>
      %c0_27 = arith.constant 0 : index
      %c0_28 = arith.constant 0 : index
      %105 = vector.load %arg8[%c0_27, %c0_28] : memref<1x128xf32, #tpu.memory_space<vmem>>, vector<1x128xf32>
      %106 = arith.addf %104, %105 : vector<1x128xf32>
      %107 = arith.negf %106 : vector<1x128xf32>
      %108 = math.exp %107 : vector<1x128xf32>
      %cst_29 = arith.constant 1.000000e+00 : f32
      %109 = vector.broadcast %cst_29 : f32 to vector<1x128xf32>
      %110 = arith.addf %109, %108 : vector<1x128xf32>
      %111 = arith.divf %109, %110 : vector<1x128xf32>
      %c0_30 = arith.constant 0 : index
      %c0_31 = arith.constant 0 : index
      %c0_32 = arith.constant 0 : index
      %112 = vector.load %arg9[%c0_30, %c0_31, %c0_32] : memref<1x1x128xf32, #tpu.memory_space<vmem>>, vector<1x1x128xf32>
      %113 = vector.shape_cast %112 : vector<1x1x128xf32> to vector<1x128xf32>
      %114 = vector.shape_cast %111 : vector<1x128xf32> to vector<1x1x128xf32>
      tpu.vector_store %arg9[%c0_30, %c0_31, %c0_32], %114 {strides = array<i32>} : memref<1x1x128xf32, #tpu.memory_space<vmem>>, vector<1x1x128xf32>,
    } else {
    }
    return
  }
  func.func @transform_0(%arg0: i32, %arg1: i32) -> (i32, i32, i32) {
    %c0_i32 = arith.constant 0 : i32
    %c0_i32_0 = arith.constant 0 : i32
    return %arg0, %arg1, %c0_i32 : i32, i32, i32
  }
  func.func @transform_1(%arg0: i32, %arg1: i32) -> (i32, i32) {
    %c0_i32 = arith.constant 0 : i32
    %c0_i32_0 = arith.constant 0 : i32
    %c0_i32_1 = arith.constant 0 : i32
    return %c0_i32, %c0_i32_0 : i32, i32
  }
  func.func @transform_2(%arg0: i32, %arg1: i32) -> (i32, i32) {
    %c0_i32 = arith.constant 0 : i32
    %c0_i32_0 = arith.constant 0 : i32
    %c0_i32_1 = arith.constant 0 : i32
    return %c0_i32, %c0_i32_0 : i32, i32
  }
  func.func @transform_3(%arg0: i32, %arg1: i32) -> (i32, i32) {
    %c0_i32 = arith.constant 0 : i32
    %c0_i32_0 = arith.constant 0 : i32
    %c0_i32_1 = arith.constant 0 : i32
    return %c0_i32, %c0_i32_0 : i32, i32
  }
  func.func @transform_4(%arg0: i32, %arg1: i32) -> (i32, i32) {
    %c0_i32 = arith.constant 0 : i32
    %c0_i32_0 = arith.constant 0 : i32
    %c0_i32_1 = arith.constant 0 : i32
    return %c0_i32, %c0_i32_0 : i32, i32
  }
  func.func @transform_5(%arg0: i32, %arg1: i32) -> (i32, i32) {
    %c0_i32 = arith.constant 0 : i32
    %c0_i32_0 = arith.constant 0 : i32
    %c0_i32_1 = arith.constant 0 : i32
    return %c0_i32, %c0_i32_0 : i32, i32
  }
  func.func @transform_6(%arg0: i32, %arg1: i32) -> (i32, i32) {
    %c0_i32 = arith.constant 0 : i32
    %c0_i32_0 = arith.constant 0 : i32
    %c0_i32_1 = arith.constant 0 : i32
    return %c0_i32, %c0_i32_0 : i32, i32
  }
  func.func @transform_7(%arg0: i32, %arg1: i32) -> (i32, i32, i32) {
    %c0_i32 = arith.constant 0 : i32
    %c0_i32_0 = arith.constant 0 : i32
    %c0_i32_1 = arith.constant 0 : i32
    return %arg0, %c0_i32, %c0_i32_0 : i32, i32, i32
  }
}

</mosaic_0001>

<llo_original>
// kernel: model_multilabel_forward.1
$region0: #{model_multilabel_forward.1}
  #allocation0 [shape = 'u32[]', space=smem, size = 0x4, offset = 0x4, fixed_abs, tag = 'smem constant byte address 0x4 - core index']
  #allocation1 [shape = 'u32[144,128]{1,0:T(1,128)}', space=vmem, size = 0x12000, scoped, tag = 'internal scratch']
  #allocation2 [shape = 'f32[8,2048]{1,0:T(8,128)}', space=vmem, size = 0x10000, scoped, tag = 'scratch operand']
  %s0 = inlined_call_operand.vmem [shape: bf16[2,256,32], index: 0, kind: input, shape index: {}]
  %s1 = inlined_call_operand.vmem [shape: bf16[32,64], index: 1, kind: input, shape index: {}]
  %s2 = inlined_call_operand.vmem [shape: f32[1,64], index: 2, kind: input, shape index: {}]
  %s3 = inlined_call_operand.vmem [shape: bf16[64,2048], index: 3, kind: input, shape index: {}]
  %s4 = inlined_call_operand.vmem [shape: f32[1,2048], index: 4, kind: input, shape index: {}]
  %s5 = inlined_call_operand.vmem [shape: bf16[2048,128], index: 5, kind: input, shape index: {}]
  %s6 = inlined_call_operand.vmem [shape: f32[1,128], index: 6, kind: input, shape index: {}]
  %s7 = inlined_call_operand.hbm [shape: f32[2,1,128], index: 7, kind: output, shape index: {}]
  %s8 = sld [smem:[#allocation0]]
  $region69: #{model_multilabel_forward.1} parent=0
    _
  %s10 = ssub.s32 1, %s8
  %s11 = scalar_select 0, %s10, %s8
  $region1: #{model_multilabel_forward.1} parent=0
    #allocation3 [shape = 'u8[1024]{0}', space=vmem, size = 0x400, scoped, tag = 'output window, operand 0']
    #allocation4 [shape = 's32[2]{0}', space=sflag, size = 0x8, scoped, tag = 'scoped memory for model_multilabel_forward.1']
    %12 = vsyncpa [#allocation4], 0
    %s13 = scalar_lea.sflag [#allocation4], 1
    %14 = vsyncpa %s13, 0
    loop: start=0, step=1, limit=4
    $region2: #{model_multilabel_forward.1} parent=1 // loop_pre_header
      _
    $region3: #{model_multilabel_forward.1} parent=1 // loop_header
      %s16 = sphi 0, %s20
      %p17 = scmp.ge.s32.totalorder %s16, 4
      %s23 = sphi 0, %s35
      %s24 = sphi 0, %s31
      %s25 = sphi 0, %s23
      %s26 = sphi 0, %s24
      %s27 = sphi 0, %s25
      %s28 = sphi 0, %s26
      %s40 = sphi 0, %s42
      %s43 = sphi 0, %s40
      %s44 = sphi 0, %s43
      %s60 = sphi 0, %s44
      %s64 = sphi 0, %s64
      %s66 = sphi 0, %s64
      %s67 = sphi 0, %s66
      %s81 = sphi 0, %s67
      %s85 = sphi 0, %s85
      %s87 = sphi 0, %s85
      %s88 = sphi 0, %s87
      %s102 = sphi 0, %s88
      %s106 = sphi 0, %s106
      %s108 = sphi 0, %s106
      %s109 = sphi 0, %s108
      %s123 = sphi 0, %s109
      %s127 = sphi 0, %s127
      %s129 = sphi 0, %s127
      %s130 = sphi 0, %s129
      %s144 = sphi 0, %s130
      %s148 = sphi 0, %s148
      %s150 = sphi 0, %s148
      %s151 = sphi 0, %s150
      %s165 = sphi 0, %s151
      %s169 = sphi 0, %s169
      %s171 = sphi 0, %s169
      %s172 = sphi 0, %s171
      %s186 = sphi 0, %s172
      %s192 = sphi 0, %s194
      %s195 = sphi 0, %s192
      %s196 = sphi 0, %s195
      %s212 = sphi 0, %s196
    $region4: #{model_multilabel_forward.1} parent=1 // loop_header_branch
      %19 = sbr.rel (%p17) target = $region8
    $region5: #{model_multilabel_forward.1} parent=1 // loop_body
      %s21 = ssub.s32 %s16, 1
      %s22 = ssub.s32 %s16, 2
      %s29 = sadd.s32 1, %s24
      %p30 = scmp.ge.s32.totalorder %s29, 1
      %s31 = scalar_select %p30, 0, %s29
      %s32 = sadd.s32 1, %s23
      %s33 = scalar_select %p30, %s32, %s23
      %p34 = scmp.ge.s32.totalorder %s33, 2
      %s35 = scalar_select %p34, 0, %s33
      %s36 = ssub.s32 %s23, %s35
      %s37 = ssub.s32 %s24, %s31
      %s38 = sor.u32 %s36, %s37
      %p39 = scmp.eq.s32.totalorder %s38, 0
      %s41 = sadd.s32 %s40, 1
      %s42 = scalar_select %p39, %s40, %s41
      %p45 = pneg %p39
      %p46 = scmp.eq.s32.totalorder %s16, 1
      %p47 = por %p45, %p46
      %p48 = scmp.ne.s32.totalorder %s40, %s43
      %p49 = scmp.eq.s32.totalorder %s16, 0
      %p50 = por %p48, %p49
      %p51 = scmp.ne.s32.totalorder %s40, %s43
      %p52 = scmp.eq.s32.totalorder %s21, 1
      %p53 = por %p51, %p52
      %p54 = scmp.ne.s32.totalorder %s43, %s44
      %p55 = scmp.eq.s32.totalorder %s21, 0
      %p56 = por %p54, %p55
      %p57 = scmp.ne.s32.totalorder %s43, %s44
      %p58 = scmp.eq.s32.totalorder %s22, 1
      %p59 = por %p57, %p58
      %p61 = scmp.ne.s32.totalorder %s44, %s60
      %p62 = scmp.eq.s32.totalorder %s22, 0
      %p63 = por %p61, %p62
      %s65 = sadd.s32 %s64, 1
      %p68 = scmp.eq.s32.totalorder %s16, 1
      %p69 = scmp.ne.s32.totalorder %s64, %s66
      %p70 = scmp.eq.s32.totalorder %s16, 0
      %p71 = por %p69, %p70
      %p72 = scmp.ne.s32.totalorder %s64, %s66
      %p73 = scmp.eq.s32.totalorder %s21, 1
      %p74 = por %p72, %p73
      %p75 = scmp.ne.s32.totalorder %s66, %s67
      %p76 = scmp.eq.s32.totalorder %s21, 0
      %p77 = por %p75, %p76
      %p78 = scmp.ne.s32.totalorder %s66, %s67
      %p79 = scmp.eq.s32.totalorder %s22, 1
      %p80 = por %p78, %p79
      %p82 = scmp.ne.s32.totalorder %s67, %s81
      %p83 = scmp.eq.s32.totalorder %s22, 0
      %p84 = por %p82, %p83
      %s86 = sadd.s32 %s85, 1
      %p89 = scmp.eq.s32.totalorder %s16, 1
      %p90 = scmp.ne.s32.totalorder %s85, %s87
      %p91 = scmp.eq.s32.totalorder %s16, 0
      %p92 = por %p90, %p91
      %p93 = scmp.ne.s32.totalorder %s85, %s87
      %p94 = scmp.eq.s32.totalorder %s21, 1
      %p95 = por %p93, %p94
      %p96 = scmp.ne.s32.totalorder %s87, %s88
      %p97 = scmp.eq.s32.totalorder %s21, 0
      %p98 = por %p96, %p97
      %p99 = scmp.ne.s32.totalorder %s87, %s88
      %p100 = scmp.eq.s32.totalorder %s22, 1
      %p101 = por %p99, %p100
      %p103 = scmp.ne.s32.totalorder %s88, %s102
      %p104 = scmp.eq.s32.totalorder %s22, 0
      %p105 = por %p103, %p104
      %s107 = sadd.s32 %s106, 1
      %p110 = scmp.eq.s32.totalorder %s16, 1
      %p111 = scmp.ne.s32.totalorder %s106, %s108
      %p112 = scmp.eq.s32.totalorder %s16, 0
      %p113 = por %p111, %p112
      %p114 = scmp.ne.s32.totalorder %s106, %s108
      %p115 = scmp.eq.s32.totalorder %s21, 1
      %p116 = por %p114, %p115
      %p117 = scmp.ne.s32.totalorder %s108, %s109
      %p118 = scmp.eq.s32.totalorder %s21, 0
      %p119 = por %p117, %p118
      %p120 = scmp.ne.s32.totalorder %s108, %s109
      %p121 = scmp.eq.s32.totalorder %s22, 1
      %p122 = por %p120, %p121
      %p124 = scmp.ne.s32.totalorder %s109, %s123
      %p125 = scmp.eq.s32.totalorder %s22, 0
      %p126 = por %p124, %p125
      %s128 = sadd.s32 %s127, 1
      %p131 = scmp.eq.s32.totalorder %s16, 1
      %p132 = scmp.ne.s32.totalorder %s127, %s129
      %p133 = scmp.eq.s32.totalorder %s16, 0
      %p134 = por %p132, %p133
      %p135 = scmp.ne.s32.totalorder %s127, %s129
      %p136 = scmp.eq.s32.totalorder %s21, 1
      %p137 = por %p135, %p136
      %p138 = scmp.ne.s32.totalorder %s129, %s130
      %p139 = scmp.eq.s32.totalorder %s21, 0
      %p140 = por %p138, %p139
      %p141 = scmp.ne.s32.totalorder %s129, %s130
      %p142 = scmp.eq.s32.totalorder %s22, 1
      %p143 = por %p141, %p142
      %p145 = scmp.ne.s32.totalorder %s130, %s144
      %p146 = scmp.eq.s32.totalorder %s22, 0
      %p147 = por %p145, %p146
      %s149 = sadd.s32 %s148, 1
      %p152 = scmp.eq.s32.totalorder %s16, 1
      %p153 = scmp.ne.s32.totalorder %s148, %s150
      %p154 = scmp.eq.s32.totalorder %s16, 0
      %p155 = por %p153, %p154
      %p156 = scmp.ne.s32.totalorder %s148, %s150
      %p157 = scmp.eq.s32.totalorder %s21, 1
      %p158 = por %p156, %p157
      %p159 = scmp.ne.s32.totalorder %s150, %s151
      %p160 = scmp.eq.s32.totalorder %s21, 0
      %p161 = por %p159, %p160
      %p162 = scmp.ne.s32.totalorder %s150, %s151
      %p163 = scmp.eq.s32.totalorder %s22, 1
      %p164 = por %p162, %p163
      %p166 = scmp.ne.s32.totalorder %s151, %s165
      %p167 = scmp.eq.s32.totalorder %s22, 0
      %p168 = por %p166, %p167
      %s170 = sadd.s32 %s169, 1
      %p173 = scmp.eq.s32.totalorder %s16, 1
      %p174 = scmp.ne.s32.totalorder %s169, %s171
      %p175 = scmp.eq.s32.totalorder %s16, 0
      %p176 = por %p174, %p175
      %p177 = scmp.ne.s32.totalorder %s169, %s171
      %p178 = scmp.eq.s32.totalorder %s21, 1
      %p179 = por %p177, %p178
      %p180 = scmp.ne.s32.totalorder %s171, %s172
      %p181 = scmp.eq.s32.totalorder %s21, 0
      %p182 = por %p180, %p181
      %p183 = scmp.ne.s32.totalorder %s171, %s172
      %p184 = scmp.eq.s32.totalorder %s22, 1
      %p185 = por %p183, %p184
      %p187 = scmp.ne.s32.totalorder %s172, %s186
      %p188 = scmp.eq.s32.totalorder %s22, 0
      %p189 = por %p187, %p188
      %s190 = ssub.s32 %s23, %s35
      %p191 = scmp.eq.s32.totalorder %s190, 0
      %s193 = sadd.s32 %s192, 1
      %s194 = scalar_select %p191, %s192, %s193
      %p197 = pneg %p191
      %p198 = scmp.eq.s32.totalorder %s16, 1
      %p199 = por %p197, %p198
      %p200 = scmp.ne.s32.totalorder %s192, %s195
      %p201 = scmp.eq.s32.totalorder %s16, 0
      %p202 = por %p200, %p201
      %p203 = scmp.ne.s32.totalorder %s192, %s195
      %p204 = scmp.eq.s32.totalorder %s21, 1
      %p205 = por %p203, %p204
      %p206 = scmp.ne.s32.totalorder %s195, %s196
      %p207 = scmp.eq.s32.totalorder %s21, 0
      %p208 = por %p206, %p207
      %p209 = scmp.ne.s32.totalorder %s195, %s196
      %p210 = scmp.eq.s32.totalorder %s22, 1
      %p211 = por %p209, %p210
      %p213 = scmp.ne.s32.totalorder %s196, %s212
      %p214 = scmp.eq.s32.totalorder %s22, 0
      %p215 = por %p213, %p214
      %p216 = scmp.le.s32.totalorder 1, %s16
      %p217 = scmp.lt.s32.totalorder %s16, 3
      %p218 = pnand %p216, %p217
      %p219 = pneg %p218
      // Predicated region
      $region9: #{model_multilabel_forward.1} parent=5 // pred_check
        _
      $region10: #{model_multilabel_forward.1} parent=5 // pred_check_branch
        %221 = sbr.rel (%p218) target = $region12
      $region11: #{model_multilabel_forward.1} parent=5 // pred_region
        %s222 = ssub.s32 %s16, 1
        // Predicated region
        $region13: #{model_multilabel_forward.1} parent=11 // pred_check
          %p223 = pneg %p77
        $region14: #{model_multilabel_forward.1} parent=11 // pred_check_branch
          %225 = sbr.rel (%p223) target = $region16
        $region15: #{model_multilabel_forward.1} parent=11 // pred_region
          _
        $region16: #{model_multilabel_forward.1} parent=11 // pred_fallthru
          _
        // Predicated region
        $region17: #{model_multilabel_forward.1} parent=11 // pred_check
          %p226 = pneg %p98
        $region18: #{model_multilabel_forward.1} parent=11 // pred_check_branch
          %228 = sbr.rel (%p226) target = $region20
        $region19: #{model_multilabel_forward.1} parent=11 // pred_region
          _
        $region20: #{model_multilabel_forward.1} parent=11 // pred_fallthru
          _
        // Predicated region
        $region21: #{model_multilabel_forward.1} parent=11 // pred_check
          %p229 = pneg %p119
        $region22: #{model_multilabel_forward.1} parent=11 // pred_check_branch
          %231 = sbr.rel (%p229) target = $region24
        $region23: #{model_multilabel_forward.1} parent=11 // pred_region
          _
        $region24: #{model_multilabel_forward.1} parent=11 // pred_fallthru
          _
        // Predicated region
        $region25: #{model_multilabel_forward.1} parent=11 // pred_check
          %p232 = pneg %p140
        $region26: #{model_multilabel_forward.1} parent=11 // pred_check_branch
          %234 = sbr.rel (%p232) target = $region28
        $region27: #{model_multilabel_forward.1} parent=11 // pred_region
          _
        $region28: #{model_multilabel_forward.1} parent=11 // pred_fallthru
          _
        // Predicated region
        $region29: #{model_multilabel_forward.1} parent=11 // pred_check
          %p235 = pneg %p161
        $region30: #{model_multilabel_forward.1} parent=11 // pred_check_branch
          %237 = sbr.rel (%p235) target = $region32
        $region31: #{model_multilabel_forward.1} parent=11 // pred_region
          _
        $region32: #{model_multilabel_forward.1} parent=11 // pred_fallthru
          _
        // Predicated region
        $region33: #{model_multilabel_forward.1} parent=11 // pred_check
          %p238 = pneg %p182
        $region34: #{model_multilabel_forward.1} parent=11 // pred_check_branch
          %240 = sbr.rel (%p238) target = $region36
        $region35: #{model_multilabel_forward.1} parent=11 // pred_region
          _
        $region36: #{model_multilabel_forward.1} parent=11 // pred_fallthru
          _
      $region12: #{model_multilabel_forward.1} parent=5 // pred_fallthru
        _
      %p241 = scmp.lt.s32.totalorder %s16, 2
      // Predicated region
      $region37: #{model_multilabel_forward.1} parent=5 // pred_check
        %p242 = pneg %p241
      $region38: #{model_multilabel_forward.1} parent=5 // pred_check_branch
        %244 = sbr.rel (%p242) target = $region40
      $region39: #{model_multilabel_forward.1} parent=5 // pred_region
        // Predicated region
        $region41: #{model_multilabel_forward.1} parent=39 // pred_check
          %p245 = pneg %p50
        $region42: #{model_multilabel_forward.1} parent=39 // pred_check_branch
          %247 = sbr.rel (%p245) target = $region44
        $region43: #{model_multilabel_forward.1} parent=39 // pred_region
          %s248 = smul.u32 32, %s24
          %p249 = scmp.lt.s32.totalorder %s23, 1
          %s250 = scalar_select %p249, %s23, 1
          %p251 = scmp.lt.s32.totalorder %s248, 31
          %s252 = scalar_select %p251, %s248, 31
          %s253 = smul.addr %s250, 32
          %s254 = sadd.s32 %s252, %s253
          %s255 = smul.addr %s254, 4
          %s256 = scalar_lea.vmem %s0, %s255
          %s257 = smul.u32 32, %s24
        $region44: #{model_multilabel_forward.1} parent=39 // pred_fallthru
          _
      $region40: #{model_multilabel_forward.1} parent=5 // pred_fallthru
        _
      %p258 = scmp.le.s32.totalorder 1, %s16
      %p259 = scmp.lt.s32.totalorder %s16, 3
      %p260 = pnand %p258, %p259
      %p261 = pneg %p260
      // Predicated region
      $region45: #{model_multilabel_forward.1} parent=5 // pred_check
        _
      $region46: #{model_multilabel_forward.1} parent=5 // pred_check_branch
        %263 = sbr.rel (%p260) target = $region48
      $region47: #{model_multilabel_forward.1} parent=5 // pred_region
        %s264 = ssub.s32 %s16, 1
        %s265 = smul.u32 32, %s26
        %p266 = scmp.lt.s32.totalorder %s25, 1
        %s267 = scalar_select %p266, %s25, 1
        %p268 = scmp.lt.s32.totalorder %s265, 31
        %s269 = scalar_select %p268, %s265, 31
        %s270 = smul.addr %s267, 32
        %s271 = sadd.s32 %s269, %s270
        %s272 = smul.addr %s271, 4
        %s273 = scalar_lea.vmem %s0, %s272
        %p274 = pneg %p56
        %p275 = pneg %p53
        %p276 = pneg %p77
        %p277 = pneg %p74
        %p278 = pneg %p98
        %p279 = pneg %p95
        %p280 = pneg %p119
        %p281 = pneg %p116
        %p282 = pneg %p140
        %p283 = pneg %p137
        %p284 = pneg %p161
        %p285 = pneg %p158
        %p286 = pneg %p182
        %p287 = pneg %p179
        %p288 = pneg %p208
        %p289 = pneg %p205
        %s290 = sand.u32 %s195, 1
        %s291 = scalar_lea.sflag [#allocation4], %s290
        %s292 = sand.u32 %s195, 1
        %s293 = scalar_lea.vmem [#allocation3], %s292
        %s294 = smul.u32 32, %s26
        %p295 = scmp.lt.s32.totalorder %s25, 1
        %s296 = scalar_select %p295, %s25, 1
        %p297 = scmp.lt.s32.totalorder %s294, 31
        %s298 = scalar_select %p297, %s294, 31
        %s299 = smul.addr %s296, 32
        %s300 = sadd.s32 %s298, %s299
        %s301 = smul.addr %s300, 4
        %s302 = scalar_lea.vmem %s0, %s301
        %s303 = smul.u32 32, %s26
        %p305 = scmp.eq.s32.totalorder %s26, 0
        // Predicated region
        $region49: #{model_multilabel_forward.1} parent=47 // pred_check
          %p306 = pneg %p305
        $region50: #{model_multilabel_forward.1} parent=47 // pred_check_branch
          %308 = sbr.rel (%p306) target = $region52
        $region51: #{model_multilabel_forward.1} parent=47 // pred_region
          %309 = vst [vmem:[#allocation2] sm:$0xff] 0.0
          %310 = vst [vmem:[#allocation2 + $0x8] sm:$0xff] 0.0
          %311 = vst [vmem:[#allocation2 + $0x10] sm:$0xff] 0.0
          %312 = vst [vmem:[#allocation2 + $0x18] sm:$0xff] 0.0
          %313 = vst [vmem:[#allocation2 + $0x20] sm:$0xff] 0.0
          %314 = vst [vmem:[#allocation2 + $0x28] sm:$0xff] 0.0
          %315 = vst [vmem:[#allocation2 + $0x30] sm:$0xff] 0.0
          %316 = vst [vmem:[#allocation2 + $0x38] sm:$0xff] 0.0
          %317 = vst [vmem:[#allocation2 + $0x40] sm:$0xff] 0.0
          %318 = vst [vmem:[#allocation2 + $0x48] sm:$0xff] 0.0
          %319 = vst [vmem:[#allocation2 + $0x50] sm:$0xff] 0.0
          %320 = vst [vmem:[#allocation2 + $0x58] sm:$0xff] 0.0
          %321 = vst [vmem:[#allocation2 + $0x60] sm:$0xff] 0.0
          %322 = vst [vmem:[#allocation2 + $0x68] sm:$0xff] 0.0
          %323 = vst [vmem:[#allocation2 + $0x70] sm:$0xff] 0.0
          %324 = vst [vmem:[#allocation2 + $0x78] sm:$0xff] 0.0
        $region52: #{model_multilabel_forward.1} parent=47 // pred_fallthru
          _
        %v325 = vld [vmem:[%s302] sm:$0xf]
        %v326 = vld [vmem:[%s302 + $0x4] sm:$0xf]
        %v327 = vld [vmem:[%s302 + $0x8] sm:$0xf]
        %v328 = vld [vmem:[%s302 + $0xc] sm:$0xf]
        %v329 = vld [vmem:[%s302 + $0x10] sm:$0xf]
        %v330 = vld [vmem:[%s302 + $0x14] sm:$0xf]
        %v331 = vld [vmem:[%s302 + $0x18] sm:$0xf]
        %v332 = vld [vmem:[%s302 + $0x1c] sm:$0xf]
        %v333 = vld [vmem:[%s302 + $0x20] sm:$0xf]
        %v334 = vld [vmem:[%s302 + $0x24] sm:$0xf]
        %v335 = vld [vmem:[%s302 + $0x28] sm:$0xf]
        %v336 = vld [vmem:[%s302 + $0x2c] sm:$0xf]
        %v337 = vld [vmem:[%s302 + $0x30] sm:$0xf]
        %v338 = vld [vmem:[%s302 + $0x34] sm:$0xf]
        %v339 = vld [vmem:[%s302 + $0x38] sm:$0xf]
        %v340 = vld [vmem:[%s302 + $0x3c] sm:$0xf]
        %v341 = vld [vmem:[%s302 + $0x40] sm:$0xf]
        %v342 = vld [vmem:[%s302 + $0x44] sm:$0xf]
        %v343 = vld [vmem:[%s302 + $0x48] sm:$0xf]
        %v344 = vld [vmem:[%s302 + $0x4c] sm:$0xf]
        %v345 = vld [vmem:[%s302 + $0x50] sm:$0xf]
        %v346 = vld [vmem:[%s302 + $0x54] sm:$0xf]
        %v347 = vld [vmem:[%s302 + $0x58] sm:$0xf]
        %v348 = vld [vmem:[%s302 + $0x5c] sm:$0xf]
        %v349 = vld [vmem:[%s302 + $0x60] sm:$0xf]
        %v350 = vld [vmem:[%s302 + $0x64] sm:$0xf]
        %v351 = vld [vmem:[%s302 + $0x68] sm:$0xf]
        %v352 = vld [vmem:[%s302 + $0x6c] sm:$0xf]
        %v353 = vld [vmem:[%s302 + $0x70] sm:$0xf]
        %v354 = vld [vmem:[%s302 + $0x74] sm:$0xf]
        %v355 = vld [vmem:[%s302 + $0x78] sm:$0xf]
        %v356 = vld [vmem:[%s302 + $0x7c] sm:$0xf]
        %v357 = vld [vmem:[%s1] sm:$0xf]
        %v358 = vld [vmem:[%s1 + $0x4] sm:$0xf]
        %v359 = vld [vmem:[%s1 + $0x8] sm:$0xf]
        %v360 = vld [vmem:[%s1 + $0xc] sm:$0xf]
        %v361 = vld [vmem:[%s2] sm:$0x1]
        %v363 = vlaneseq
        %v364 = vshrl.u32 %v363, 7
        %v365 = vsub.s32 0, %v364
        %v366 = vrot.slane %v361, %v365
        %v400 = vunpack.c.l.b16 %v325
        %v401 = vunpack.c.l.b16 %v326
        %v402 = vunpack.c.l.b16 %v327
        %v403 = vunpack.c.l.b16 %v328
        %v404 = vunpack.c.l.b16 %v329
        %v405 = vunpack.c.l.b16 %v330
        %v406 = vunpack.c.l.b16 %v331
        %v407 = vunpack.c.l.b16 %v332
        %v408 = vunpack.c.l.b16 %v333
        %v409 = vunpack.c.l.b16 %v334
        %v410 = vunpack.c.l.b16 %v335
        %v411 = vunpack.c.l.b16 %v336
        %v412 = vunpack.c.l.b16 %v337
        %v413 = vunpack.c.l.b16 %v338
        %v414 = vunpack.c.l.b16 %v339
        %v415 = vunpack.c.l.b16 %v340
        %v416 = vunpack.c.l.b16 %v341
        %v417 = vunpack.c.l.b16 %v342
        %v418 = vunpack.c.l.b16 %v343
        %v419 = vunpack.c.l.b16 %v344
        %v420 = vunpack.c.l.b16 %v345
        %v421 = vunpack.c.l.b16 %v346
        %v422 = vunpack.c.l.b16 %v347
        %v423 = vunpack.c.l.b16 %v348
        %v424 = vunpack.c.l.b16 %v349
        %v425 = vunpack.c.l.b16 %v350
        %v426 = vunpack.c.l.b16 %v351
        %v427 = vunpack.c.l.b16 %v352
        %v428 = vunpack.c.l.b16 %v353
        %v429 = vunpack.c.l.b16 %v354
        %v430 = vunpack.c.l.b16 %v355
        %v431 = vunpack.c.l.b16 %v356
        %v432 = vpack.c.b16 %v401, %v400
        %v433 = vpack.c.b16 %v403, %v402
        %v434 = vpack.c.b16 %v405, %v404
        %v435 = vpack.c.b16 %v407, %v406
        %v436 = vpack.c.b16 %v409, %v408
        %v437 = vpack.c.b16 %v411, %v410
        %v438 = vpack.c.b16 %v413, %v412
        %v439 = vpack.c.b16 %v415, %v414
        %v440 = vpack.c.b16 %v417, %v416
        %v441 = vpack.c.b16 %v419, %v418
        %v442 = vpack.c.b16 %v421, %v420
        %v443 = vpack.c.b16 %v423, %v422
        %v444 = vpack.c.b16 %v425, %v424
        %v445 = vpack.c.b16 %v427, %v426
        %v446 = vpack.c.b16 %v429, %v428
        %v447 = vpack.c.b16 %v431, %v430
        %v452 = vunpack.c.l.b16 %v357
        %v453 = vunpack.c.l.b16 %v358
        %v454 = vunpack.c.l.b16 %v359
        %v455 = vunpack.c.l.b16 %v360
        %v456 = vpack.c.b16 %v453, %v452
        %v457 = vpack.c.b16 %v455, %v454
        %vm460 = vcmask 261120
        %v462 = vsel %vm460, %v432, 0
        %v465 = vsel %vm460, %v433, 0
        %v468 = vsel %vm460, %v434, 0
        %v471 = vsel %vm460, %v435, 0
        %v474 = vsel %vm460, %v436, 0
        %v477 = vsel %vm460, %v437, 0
        %v480 = vsel %vm460, %v438, 0
        %v483 = vsel %vm460, %v439, 0
        %v486 = vsel %vm460, %v440, 0
        %v489 = vsel %vm460, %v441, 0
        %v492 = vsel %vm460, %v442, 0
        %v495 = vsel %vm460, %v443, 0
        %v498 = vsel %vm460, %v444, 0
        %v501 = vsel %vm460, %v445, 0
        %v504 = vsel %vm460, %v446, 0
        %v507 = vsel %vm460, %v447, 0
        %509 = vmatprep.subr.bf16.mxu0 0
        %510 = vmatpush1.bf16.msra.mxu0 %v456
        %511 = vmatprep.subr.bf16.mxu0 0
        %512 = vmatpush1.bf16.msra.mxu0 %v457
        %513 = vmatprep.subr.bf16.mxu0 0
        %514 = vmatpush1.bf16.msra.mxu0 0
        %515 = vmatprep.subr.bf16.mxu0 0
        %516 = vmatpush1.bf16.msra.mxu0 0
        %517 = vmatprep.subr.bf16.mxu0 0
        %518 = vmatpush1.bf16.msra.mxu0 0
        %519 = vmatprep.subr.bf16.mxu0 0
        %520 = vmatpush1.bf16.msra.mxu0 0
        %521 = vmatprep.subr.bf16.mxu0 0
        %522 = vmatpush1.bf16.msra.mxu0 0
        %523 = vmatprep.subr.bf16.mxu0 0
        %524 = vmatpush1.bf16.msra.mxu0 0
        %525 = vmatprep.subr.bf16.mxu0 0
        %526 = vmatpush1.bf16.msra.mxu0 0
        %527 = vmatprep.subr.bf16.mxu0 0
        %528 = vmatpush1.bf16.msra.mxu0 0
        %529 = vmatprep.subr.bf16.mxu0 0
        %530 = vmatpush1.bf16.msra.mxu0 0
        %531 = vmatprep.subr.bf16.mxu0 0
        %532 = vmatpush1.bf16.msra.mxu0 0
        %533 = vmatprep.subr.bf16.mxu0 0
        %534 = vmatpush1.bf16.msra.mxu0 0
        %535 = vmatprep.subr.bf16.mxu0 0
        %536 = vmatpush1.bf16.msra.mxu0 0
        %537 = vmatprep.subr.bf16.mxu0 0
        %538 = vmatpush1.bf16.msra.mxu0 0
        %539 = vmatprep.subr.bf16.mxu0 0
        %540 = vmatpush1.bf16.msra.mxu0 0
        %541 = vmatprep.mubr.bf16.mxu0 0
        %542 = vmatmul.mubr.bf16.gmra.mrb[0].mxu0 %v462
        %v543 = vpop.f32.mrb[0].mxu0
        %v544 = vadd.f32 %v366, %v543
        %v545 = vpop.f32.mrb[0].mxu0
        %v546 = vpop.f32.mrb[0].mxu0
        %v547 = vadd.f32 %v366, %v546
        %v548 = vpop.f32.mrb[0].mxu0
        %549 = vmatprep.mubr.bf16.mxu0 0
        %550 = vmatmul.mubr.bf16.gmra.mrb[0].mxu0 %v465
        %v551 = vpop.f32.mrb[0].mxu0
        %v552 = vadd.f32 %v366, %v551
        %v553 = vpop.f32.mrb[0].mxu0
        %v554 = vpop.f32.mrb[0].mxu0
        %v555 = vadd.f32 %v366, %v554
        %v556 = vpop.f32.mrb[0].mxu0
        %557 = vmatprep.mubr.bf16.mxu0 0
        %558 = vmatmul.mubr.bf16.gmra.mrb[0].mxu0 %v468
        %v559 = vpop.f32.mrb[0].mxu0
        %v560 = vadd.f32 %v366, %v559
        %v561 = vpop.f32.mrb[0].mxu0
        %v562 = vpop.f32.mrb[0].mxu0
        %v563 = vadd.f32 %v366, %v562
        %v564 = vpop.f32.mrb[0].mxu0
        %565 = vmatprep.mubr.bf16.mxu0 0
        %566 = vmatmul.mubr.bf16.gmra.mrb[0].mxu0 %v471
        %v567 = vpop.f32.mrb[0].mxu0
        %v568 = vadd.f32 %v366, %v567
        %v569 = vpop.f32.mrb[0].mxu0
        %v570 = vpop.f32.mrb[0].mxu0
        %v571 = vadd.f32 %v366, %v570
        %v572 = vpop.f32.mrb[0].mxu0
        %573 = vmatprep.mubr.bf16.mxu0 0
        %574 = vmatmul.mubr.bf16.gmra.mrb[0].mxu0 %v474
        %v575 = vpop.f32.mrb[0].mxu0
        %v576 = vadd.f32 %v366, %v575
        %v577 = vpop.f32.mrb[0].mxu0
        %v578 = vpop.f32.mrb[0].mxu0
        %v579 = vadd.f32 %v366, %v578
        %v580 = vpop.f32.mrb[0].mxu0
        %581 = vmatprep.mubr.bf16.mxu0 0
        %582 = vmatmul.mubr.bf16.gmra.mrb[0].mxu0 %v477
        %v583 = vpop.f32.mrb[0].mxu0
        %v584 = vadd.f32 %v366, %v583
        %v585 = vpop.f32.mrb[0].mxu0
        %v586 = vpop.f32.mrb[0].mxu0
        %v587 = vadd.f32 %v366, %v586
        %v588 = vpop.f32.mrb[0].mxu0
        %589 = vmatprep.mubr.bf16.mxu0 0
        %590 = vmatmul.mubr.bf16.gmra.mrb[0].mxu0 %v480
        %v591 = vpop.f32.mrb[0].mxu0
        %v592 = vadd.f32 %v366, %v591
        %v593 = vpop.f32.mrb[0].mxu0
        %v594 = vpop.f32.mrb[0].mxu0
        %v595 = vadd.f32 %v366, %v594
        %v596 = vpop.f32.mrb[0].mxu0
        %597 = vmatprep.mubr.bf16.mxu0 0
        %598 = vmatmul.mubr.bf16.gmra.mrb[0].mxu0 %v483
        %v599 = vpop.f32.mrb[0].mxu0
        %v600 = vadd.f32 %v366, %v599
        %v601 = vpop.f32.mrb[0].mxu0
        %v602 = vpop.f32.mrb[0].mxu0
        %v603 = vadd.f32 %v366, %v602
        %v604 = vpop.f32.mrb[0].mxu0
        %605 = vmatprep.mubr.bf16.mxu0 0
        %606 = vmatmul.mubr.bf16.gmra.mrb[0].mxu0 %v486
        %v607 = vpop.f32.mrb[0].mxu0
        %v608 = vadd.f32 %v366, %v607
        %v609 = vpop.f32.mrb[0].mxu0
        %v610 = vpop.f32.mrb[0].mxu0
        %v611 = vadd.f32 %v366, %v610
        %v612 = vpop.f32.mrb[0].mxu0
        %613 = vmatprep.mubr.bf16.mxu0 0
        %614 = vmatmul.mubr.bf16.gmra.mrb[0].mxu0 %v489
        %v615 = vpop.f32.mrb[0].mxu0
        %v616 = vadd.f32 %v366, %v615
        %v617 = vpop.f32.mrb[0].mxu0
        %v618 = vpop.f32.mrb[0].mxu0
        %v619 = vadd.f32 %v366, %v618
        %v620 = vpop.f32.mrb[0].mxu0
        %621 = vmatprep.mubr.bf16.mxu0 0
        %622 = vmatmul.mubr.bf16.gmra.mrb[0].mxu0 %v492
        %v623 = vpop.f32.mrb[0].mxu0
        %v624 = vadd.f32 %v366, %v623
        %v625 = vpop.f32.mrb[0].mxu0
        %v626 = vpop.f32.mrb[0].mxu0
        %v627 = vadd.f32 %v366, %v626
        %v628 = vpop.f32.mrb[0].mxu0
        %629 = vmatprep.mubr.bf16.mxu0 0
        %630 = vmatmul.mubr.bf16.gmra.mrb[0].mxu0 %v495
        %v631 = vpop.f32.mrb[0].mxu0
        %v632 = vadd.f32 %v366, %v631
        %v633 = vpop.f32.mrb[0].mxu0
        %v634 = vpop.f32.mrb[0].mxu0
        %v635 = vadd.f32 %v366, %v634
        %v636 = vpop.f32.mrb[0].mxu0
        %637 = vmatprep.mubr.bf16.mxu0 0
        %638 = vmatmul.mubr.bf16.gmra.mrb[0].mxu0 %v498
        %v639 = vpop.f32.mrb[0].mxu0
        %v640 = vadd.f32 %v366, %v639
        %v641 = vpop.f32.mrb[0].mxu0
        %v642 = vpop.f32.mrb[0].mxu0
        %v643 = vadd.f32 %v366, %v642
        %v644 = vpop.f32.mrb[0].mxu0
        %645 = vmatprep.mubr.bf16.mxu0 0
        %646 = vmatmul.mubr.bf16.gmra.mrb[0].mxu0 %v501
        %v647 = vpop.f32.mrb[0].mxu0
        %v648 = vadd.f32 %v366, %v647
        %v649 = vpop.f32.mrb[0].mxu0
        %v650 = vpop.f32.mrb[0].mxu0
        %v651 = vadd.f32 %v366, %v650
        %v652 = vpop.f32.mrb[0].mxu0
        %653 = vmatprep.mubr.bf16.mxu0 0
        %654 = vmatmul.mubr.bf16.gmra.mrb[0].mxu0 %v504
        %v655 = vpop.f32.mrb[0].mxu0
        %v656 = vadd.f32 %v366, %v655
        %v657 = vpop.f32.mrb[0].mxu0
        %v658 = vpop.f32.mrb[0].mxu0
        %v659 = vadd.f32 %v366, %v658
        %v660 = vpop.f32.mrb[0].mxu0
        %661 = vmatprep.mubr.bf16.mxu0 0
        %662 = vmatmul.mubr.bf16.gmra.mrb[0].mxu0 %v507
        %v663 = vpop.f32.mrb[0].mxu0
        %v664 = vadd.f32 %v366, %v663
        %v665 = vpop.f32.mrb[0].mxu0
        %v666 = vpop.f32.mrb[0].mxu0
        %v667 = vadd.f32 %v366, %v666
        %v668 = vpop.f32.mrb[0].mxu0
        %669 = vdwg.mxu0
        %v670 = vxor.u32 %v544, 2147483648
        %v671 = vxor.u32 %v547, 2147483648
        %v672 = vxor.u32 %v552, 2147483648
        %v673 = vxor.u32 %v555, 2147483648
        %v674 = vxor.u32 %v560, 2147483648
        %v675 = vxor.u32 %v563, 2147483648
        %v676 = vxor.u32 %v568, 2147483648
        %v677 = vxor.u32 %v571, 2147483648
        %v678 = vxor.u32 %v576, 2147483648
        %v679 = vxor.u32 %v579, 2147483648
        %v680 = vxor.u32 %v584, 2147483648
        %v681 = vxor.u32 %v587, 2147483648
        %v682 = vxor.u32 %v592, 2147483648
        %v683 = vxor.u32 %v595, 2147483648
        %v684 = vxor.u32 %v600, 2147483648
        %v685 = vxor.u32 %v603, 2147483648
        %v686 = vxor.u32 %v608, 2147483648
        %v687 = vxor.u32 %v611, 2147483648
        %v688 = vxor.u32 %v616, 2147483648
        %v689 = vxor.u32 %v619, 2147483648
        %v690 = vxor.u32 %v624, 2147483648
        %v691 = vxor.u32 %v627, 2147483648
        %v692 = vxor.u32 %v632, 2147483648
        %v693 = vxor.u32 %v635, 2147483648
        %v694 = vxor.u32 %v640, 2147483648
        %v695 = vxor.u32 %v643, 2147483648
        %v696 = vxor.u32 %v648, 2147483648
        %v697 = vxor.u32 %v651, 2147483648
        %v698 = vxor.u32 %v656, 2147483648
        %v699 = vxor.u32 %v659, 2147483648
        %v700 = vxor.u32 %v664, 2147483648
        %v701 = vxor.u32 %v667, 2147483648
        %v702 = vmul.f32 %v670, 1.442695
        %v703 = vpow.pop %v702
        %v704 = vmul.f32 %v671, 1.442695
        %v705 = vpow.pop %v704
        %v706 = vmul.f32 %v672, 1.442695
        %v707 = vpow.pop %v706
        %v708 = vmul.f32 %v673, 1.442695
        %v709 = vpow.pop %v708
        %v710 = vmul.f32 %v674, 1.442695
        %v711 = vpow.pop %v710
        %v712 = vmul.f32 %v675, 1.442695
        %v713 = vpow.pop %v712
        %v714 = vmul.f32 %v676, 1.442695
        %v715 = vpow.pop %v714
        %v716 = vmul.f32 %v677, 1.442695
        %v717 = vpow.pop %v716
        %v718 = vmul.f32 %v678, 1.442695
        %v719 = vpow.pop %v718
        %v720 = vmul.f32 %v679, 1.442695
        %v721 = vpow.pop %v720
        %v722 = vmul.f32 %v680, 1.442695
        %v723 = vpow.pop %v722
        %v724 = vmul.f32 %v681, 1.442695
        %v725 = vpow.pop %v724
        %v726 = vmul.f32 %v682, 1.442695
        %v727 = vpow.pop %v726
        %v728 = vmul.f32 %v683, 1.442695
        %v729 = vpow.pop %v728
        %v730 = vmul.f32 %v684, 1.442695
        %v731 = vpow.pop %v730
        %v732 = vmul.f32 %v685, 1.442695
        %v733 = vpow.pop %v732
        %v734 = vmul.f32 %v686, 1.442695
        %v735 = vpow.pop %v734
        %v736 = vmul.f32 %v687, 1.442695
        %v737 = vpow.pop %v736
        %v738 = vmul.f32 %v688, 1.442695
        %v739 = vpow.pop %v738
        %v740 = vmul.f32 %v689, 1.442695
        %v741 = vpow.pop %v740
        %v742 = vmul.f32 %v690, 1.442695
        %v743 = vpow.pop %v742
        %v744 = vmul.f32 %v691, 1.442695
        %v745 = vpow.pop %v744
        %v746 = vmul.f32 %v692, 1.442695
        %v747 = vpow.pop %v746
        %v748 = vmul.f32 %v693, 1.442695
        %v749 = vpow.pop %v748
        %v750 = vmul.f32 %v694, 1.442695
        %v751 = vpow.pop %v750
        %v752 = vmul.f32 %v695, 1.442695
        %v753 = vpow.pop %v752
        %v754 = vmul.f32 %v696, 1.442695
        %v755 = vpow.pop %v754
        %v756 = vmul.f32 %v697, 1.442695
        %v757 = vpow.pop %v756
        %v758 = vmul.f32 %v698, 1.442695
        %v759 = vpow.pop %v758
        %v760 = vmul.f32 %v699, 1.442695
        %v761 = vpow.pop %v760
        %v762 = vmul.f32 %v700, 1.442695
        %v763 = vpow.pop %v762
        %v764 = vmul.f32 %v701, 1.442695
        %v765 = vpow.pop %v764
        %v766 = vadd.f32 %v703, 1.0
        %v767 = vadd.f32 %v705, 1.0
        %v768 = vadd.f32 %v707, 1.0
        %v769 = vadd.f32 %v709, 1.0
        %v770 = vadd.f32 %v711, 1.0
        %v771 = vadd.f32 %v713, 1.0
        %v772 = vadd.f32 %v715, 1.0
        %v773 = vadd.f32 %v717, 1.0
        %v774 = vadd.f32 %v719, 1.0
        %v775 = vadd.f32 %v721, 1.0
        %v776 = vadd.f32 %v723, 1.0
        %v777 = vadd.f32 %v725, 1.0
        %v778 = vadd.f32 %v727, 1.0
        %v779 = vadd.f32 %v729, 1.0
        %v780 = vadd.f32 %v731, 1.0
        %v781 = vadd.f32 %v733, 1.0
        %v782 = vadd.f32 %v735, 1.0
        %v783 = vadd.f32 %v737, 1.0
        %v784 = vadd.f32 %v739, 1.0
        %v785 = vadd.f32 %v741, 1.0
        %v786 = vadd.f32 %v743, 1.0
        %v787 = vadd.f32 %v745, 1.0
        %v788 = vadd.f32 %v747, 1.0
        %v789 = vadd.f32 %v749, 1.0
        %v790 = vadd.f32 %v751, 1.0
        %v791 = vadd.f32 %v753, 1.0
        %v792 = vadd.f32 %v755, 1.0
        %v793 = vadd.f32 %v757, 1.0
        %v794 = vadd.f32 %v759, 1.0
        %v795 = vadd.f32 %v761, 1.0
        %v796 = vadd.f32 %v763, 1.0
        %v797 = vadd.f32 %v765, 1.0
        %v798 = vrcp.pop %v766
        %v799 = vmul.f32 1.0, %v798
        %v800 = vrcp.pop %v767
        %v801 = vmul.f32 1.0, %v800
        %v802 = vrcp.pop %v768
        %v803 = vmul.f32 1.0, %v802
        %v804 = vrcp.pop %v769
        %v805 = vmul.f32 1.0, %v804
        %v806 = vrcp.pop %v770
        %v807 = vmul.f32 1.0, %v806
        %v808 = vrcp.pop %v771
        %v809 = vmul.f32 1.0, %v808
        %v810 = vrcp.pop %v772
        %v811 = vmul.f32 1.0, %v810
        %v812 = vrcp.pop %v773
        %v813 = vmul.f32 1.0, %v812
        %v814 = vrcp.pop %v774
        %v815 = vmul.f32 1.0, %v814
        %v816 = vrcp.pop %v775
        %v817 = vmul.f32 1.0, %v816
        %v818 = vrcp.pop %v776
        %v819 = vmul.f32 1.0, %v818
        %v820 = vrcp.pop %v777
        %v821 = vmul.f32 1.0, %v820
        %v822 = vrcp.pop %v778
        %v823 = vmul.f32 1.0, %v822
        %v824 = vrcp.pop %v779
        %v825 = vmul.f32 1.0, %v824
        %v826 = vrcp.pop %v780
        %v827 = vmul.f32 1.0, %v826
        %v828 = vrcp.pop %v781
        %v829 = vmul.f32 1.0, %v828
        %v830 = vrcp.pop %v782
        %v831 = vmul.f32 1.0, %v830
        %v832 = vrcp.pop %v783
        %v833 = vmul.f32 1.0, %v832
        %v834 = vrcp.pop %v784
        %v835 = vmul.f32 1.0, %v834
        %v836 = vrcp.pop %v785
        %v837 = vmul.f32 1.0, %v836
        %v838 = vrcp.pop %v786
        %v839 = vmul.f32 1.0, %v838
        %v840 = vrcp.pop %v787
        %v841 = vmul.f32 1.0, %v840
        %v842 = vrcp.pop %v788
        %v843 = vmul.f32 1.0, %v842
        %v844 = vrcp.pop %v789
        %v845 = vmul.f32 1.0, %v844
        %v846 = vrcp.pop %v790
        %v847 = vmul.f32 1.0, %v846
        %v848 = vrcp.pop %v791
        %v849 = vmul.f32 1.0, %v848
        %v850 = vrcp.pop %v792
        %v851 = vmul.f32 1.0, %v850
        %v852 = vrcp.pop %v793
        %v853 = vmul.f32 1.0, %v852
        %v854 = vrcp.pop %v794
        %v855 = vmul.f32 1.0, %v854
        %v856 = vrcp.pop %v795
        %v857 = vmul.f32 1.0, %v856
        %v858 = vrcp.pop %v796
        %v859 = vmul.f32 1.0, %v858
        %v860 = vrcp.pop %v797
        %v861 = vmul.f32 1.0, %v860
        %v862 = vmul.f32 %v544, %v799
        %v863 = vmul.f32 %v547, %v801
        %v864 = vmul.f32 %v552, %v803
        %v865 = vmul.f32 %v555, %v805
        %v866 = vmul.f32 %v560, %v807
        %v867 = vmul.f32 %v563, %v809
        %v868 = vmul.f32 %v568, %v811
        %v869 = vmul.f32 %v571, %v813
        %v870 = vmul.f32 %v576, %v815
        %v871 = vmul.f32 %v579, %v817
        %v872 = vmul.f32 %v584, %v819
        %v873 = vmul.f32 %v587, %v821
        %v874 = vmul.f32 %v592, %v823
        %v875 = vmul.f32 %v595, %v825
        %v876 = vmul.f32 %v600, %v827
        %v877 = vmul.f32 %v603, %v829
        %v878 = vmul.f32 %v608, %v831
        %v879 = vmul.f32 %v611, %v833
        %v880 = vmul.f32 %v616, %v835
        %v881 = vmul.f32 %v619, %v837
        %v882 = vmul.f32 %v624, %v839
        %v883 = vmul.f32 %v627, %v841
        %v884 = vmul.f32 %v632, %v843
        %v885 = vmul.f32 %v635, %v845
        %v886 = vmul.f32 %v640, %v847
        %v887 = vmul.f32 %v643, %v849
        %v888 = vmul.f32 %v648, %v851
        %v889 = vmul.f32 %v651, %v853
        %v890 = vmul.f32 %v656, %v855
        %v891 = vmul.f32 %v659, %v857
        %v892 = vmul.f32 %v664, %v859
        %v893 = vmul.f32 %v667, %v861
        %v894 = vpack.c.bf16 %v863, %v862
        %v895 = vpack.c.bf16 %v865, %v864
        %v896 = vpack.c.bf16 %v867, %v866
        %v897 = vpack.c.bf16 %v869, %v868
        %v898 = vpack.c.bf16 %v871, %v870
        %v899 = vpack.c.bf16 %v873, %v872
        %v900 = vpack.c.bf16 %v875, %v874
        %v901 = vpack.c.bf16 %v877, %v876
        %v902 = vpack.c.bf16 %v879, %v878
        %v903 = vpack.c.bf16 %v881, %v880
        %v904 = vpack.c.bf16 %v883, %v882
        %v905 = vpack.c.bf16 %v885, %v884
        %v906 = vpack.c.bf16 %v887, %v886
        %v907 = vpack.c.bf16 %v889, %v888
        %v908 = vpack.c.bf16 %v891, %v890
        %v909 = vpack.c.bf16 %v893, %v892
        %v910 = vld [vmem:[%s3] sm:$0xff]
        %v911 = vld [vmem:[%s3 + $0x8] sm:$0xff]
        %v912 = vld [vmem:[%s3 + $0x10] sm:$0xff]
        %v913 = vld [vmem:[%s3 + $0x18] sm:$0xff]
        %v914 = vld [vmem:[%s3 + $0x20] sm:$0xff]
        %v915 = vld [vmem:[%s3 + $0x28] sm:$0xff]
        %v916 = vld [vmem:[%s3 + $0x30] sm:$0xff]
        %v917 = vld [vmem:[%s3 + $0x38] sm:$0xff]
        %v918 = vld [vmem:[%s3 + $0x40] sm:$0xff]
        %v919 = vld [vmem:[%s3 + $0x48] sm:$0xff]
        %v920 = vld [vmem:[%s3 + $0x50] sm:$0xff]
        %v921 = vld [vmem:[%s3 + $0x58] sm:$0xff]
        %v922 = vld [vmem:[%s3 + $0x60] sm:$0xff]
        %v923 = vld [vmem:[%s3 + $0x68] sm:$0xff]
        %v924 = vld [vmem:[%s3 + $0x70] sm:$0xff]
        %v925 = vld [vmem:[%s3 + $0x78] sm:$0xff]
        %v926 = vld [vmem:[%s3 + $0x80] sm:$0xff]
        %v927 = vld [vmem:[%s3 + $0x88] sm:$0xff]
        %v928 = vld [vmem:[%s3 + $0x90] sm:$0xff]
        %v929 = vld [vmem:[%s3 + $0x98] sm:$0xff]
        %v930 = vld [vmem:[%s3 + $0xa0] sm:$0xff]
        %v931 = vld [vmem:[%s3 + $0xa8] sm:$0xff]
        %v932 = vld [vmem:[%s3 + $0xb0] sm:$0xff]
        %v933 = vld [vmem:[%s3 + $0xb8] sm:$0xff]
        %v934 = vld [vmem:[%s3 + $0xc0] sm:$0xff]
        %v935 = vld [vmem:[%s3 + $0xc8] sm:$0xff]
        %v936 = vld [vmem:[%s3 + $0xd0] sm:$0xff]
        %v937 = vld [vmem:[%s3 + $0xd8] sm:$0xff]
        %v938 = vld [vmem:[%s3 + $0xe0] sm:$0xff]
        %v939 = vld [vmem:[%s3 + $0xe8] sm:$0xff]
        %v940 = vld [vmem:[%s3 + $0xf0] sm:$0xff]
        %v941 = vld [vmem:[%s3 + $0xf8] sm:$0xff]
        %v942 = vld [vmem:[%s3 + $0x100] sm:$0xff]
        %v943 = vld [vmem:[%s3 + $0x108] sm:$0xff]
        %v944 = vld [vmem:[%s3 + $0x110] sm:$0xff]
        %v945 = vld [vmem:[%s3 + $0x118] sm:$0xff]
        %v946 = vld [vmem:[%s3 + $0x120] sm:$0xff]
        %v947 = vld [vmem:[%s3 + $0x128] sm:$0xff]
        %v948 = vld [vmem:[%s3 + $0x130] sm:$0xff]
        %v949 = vld [vmem:[%s3 + $0x138] sm:$0xff]
        %v950 = vld [vmem:[%s3 + $0x140] sm:$0xff]
        %v951 = vld [vmem:[%s3 + $0x148] sm:$0xff]
        %v952 = vld [vmem:[%s3 + $0x150] sm:$0xff]
        %v953 = vld [vmem:[%s3 + $0x158] sm:$0xff]
        %v954 = vld [vmem:[%s3 + $0x160] sm:$0xff]
        %v955 = vld [vmem:[%s3 + $0x168] sm:$0xff]
        %v956 = vld [vmem:[%s3 + $0x170] sm:$0xff]
        %v957 = vld [vmem:[%s3 + $0x178] sm:$0xff]
        %v958 = vld [vmem:[%s3 + $0x180] sm:$0xff]
        %v959 = vld [vmem:[%s3 + $0x188] sm:$0xff]
        %v960 = vld [vmem:[%s3 + $0x190] sm:$0xff]
        %v961 = vld [vmem:[%s3 + $0x198] sm:$0xff]
        %v962 = vld [vmem:[%s3 + $0x1a0] sm:$0xff]
        %v963 = vld [vmem:[%s3 + $0x1a8] sm:$0xff]
        %v964 = vld [vmem:[%s3 + $0x1b0] sm:$0xff]
        %v965 = vld [vmem:[%s3 + $0x1b8] sm:$0xff]
        %v966 = vld [vmem:[%s3 + $0x1c0] sm:$0xff]
        %v967 = vld [vmem:[%s3 + $0x1c8] sm:$0xff]
        %v968 = vld [vmem:[%s3 + $0x1d0] sm:$0xff]
        %v969 = vld [vmem:[%s3 + $0x1d8] sm:$0xff]
        %v970 = vld [vmem:[%s3 + $0x1e0] sm:$0xff]
        %v971 = vld [vmem:[%s3 + $0x1e8] sm:$0xff]
        %v972 = vld [vmem:[%s3 + $0x1f0] sm:$0xff]
        %v973 = vld [vmem:[%s3 + $0x1f8] sm:$0xff]
        %v974 = vld [vmem:[%s4] sm:$0xff]
        %v975 = vld [vmem:[%s4 + $0x8] sm:$0xff]
        %v978 = vlaneseq
        %v979 = vshrl.u32 %v978, 7
        %v980 = vsub.s32 0, %v979
        %v981 = vrot.slane %v974, %v980
        %v982 = vlaneseq
        %v983 = vshrl.u32 %v982, 7
        %v984 = vsub.s32 1, %v983
        %v985 = vrot.slane %v974, %v984
        %v986 = vlaneseq
        %v987 = vshrl.u32 %v986, 7
        %v988 = vsub.s32 2, %v987
        %v989 = vrot.slane %v974, %v988
        %v990 = vlaneseq
        %v991 = vshrl.u32 %v990, 7
        %v992 = vsub.s32 3, %v991
        %v993 = vrot.slane %v974, %v992
        %v994 = vlaneseq
        %v995 = vshrl.u32 %v994, 7
        %v996 = vsub.s32 4, %v995
        %v997 = vrot.slane %v974, %v996
        %v998 = vlaneseq
        %v999 = vshrl.u32 %v998, 7
        %v1000 = vsub.s32 5, %v999
        %v1001 = vrot.slane %v974, %v1000
        %v1002 = vlaneseq
        %v1003 = vshrl.u32 %v1002, 7
        %v1004 = vsub.s32 6, %v1003
        %v1005 = vrot.slane %v974, %v1004
        %v1006 = vlaneseq
        %v1007 = vshrl.u32 %v1006, 7
        %v1008 = vsub.s32 7, %v1007
        %v1009 = vrot.slane %v974, %v1008
        %v1010 = vlaneseq
        %v1011 = vshrl.u32 %v1010, 7
        %v1012 = vsub.s32 0, %v1011
        %v1013 = vrot.slane %v975, %v1012
        %v1014 = vlaneseq
        %v1015 = vshrl.u32 %v1014, 7
        %v1016 = vsub.s32 1, %v1015
        %v1017 = vrot.slane %v975, %v1016
        %v1018 = vlaneseq
        %v1019 = vshrl.u32 %v1018, 7
        %v1020 = vsub.s32 2, %v1019
        %v1021 = vrot.slane %v975, %v1020
        %v1022 = vlaneseq
        %v1023 = vshrl.u32 %v1022, 7
        %v1024 = vsub.s32 3, %v1023
        %v1025 = vrot.slane %v975, %v1024
        %v1026 = vlaneseq
        %v1027 = vshrl.u32 %v1026, 7
        %v1028 = vsub.s32 4, %v1027
        %v1029 = vrot.slane %v975, %v1028
        %v1030 = vlaneseq
        %v1031 = vshrl.u32 %v1030, 7
        %v1032 = vsub.s32 5, %v1031
        %v1033 = vrot.slane %v975, %v1032
        %v1034 = vlaneseq
        %v1035 = vshrl.u32 %v1034, 7
        %v1036 = vsub.s32 6, %v1035
        %v1037 = vrot.slane %v975, %v1036
        %v1038 = vlaneseq
        %v1039 = vshrl.u32 %v1038, 7
        %v1040 = vsub.s32 7, %v1039
        %v1041 = vrot.slane %v975, %v1040
        %v1122 = vunpack.c.l.b16 %v910
        %v1123 = vunpack.c.h.b16 %v910
        %v1124 = vunpack.c.l.b16 %v911
        %v1125 = vunpack.c.h.b16 %v911
        %v1126 = vunpack.c.l.b16 %v912
        %v1127 = vunpack.c.h.b16 %v912
        %v1128 = vunpack.c.l.b16 %v913
        %v1129 = vunpack.c.h.b16 %v913
        %v1130 = vunpack.c.l.b16 %v914
        %v1131 = vunpack.c.h.b16 %v914
        %v1132 = vunpack.c.l.b16 %v915
        %v1133 = vunpack.c.h.b16 %v915
        %v1134 = vunpack.c.l.b16 %v916
        %v1135 = vunpack.c.h.b16 %v916
        %v1136 = vunpack.c.l.b16 %v917
        %v1137 = vunpack.c.h.b16 %v917
        %v1138 = vunpack.c.l.b16 %v918
        %v1139 = vunpack.c.h.b16 %v918
        %v1140 = vunpack.c.l.b16 %v919
        %v1141 = vunpack.c.h.b16 %v919
        %v1142 = vunpack.c.l.b16 %v920
        %v1143 = vunpack.c.h.b16 %v920
        %v1144 = vunpack.c.l.b16 %v921
        %v1145 = vunpack.c.h.b16 %v921
        %v1146 = vunpack.c.l.b16 %v922
        %v1147 = vunpack.c.h.b16 %v922
        %v1148 = vunpack.c.l.b16 %v923
        %v1149 = vunpack.c.h.b16 %v923
        %v1150 = vunpack.c.l.b16 %v924
        %v1151 = vunpack.c.h.b16 %v924
        %v1152 = vunpack.c.l.b16 %v925
        %v1153 = vunpack.c.h.b16 %v925
        %v1154 = vunpack.c.l.b16 %v926
        %v1155 = vunpack.c.h.b16 %v926
        %v1156 = vunpack.c.l.b16 %v927
        %v1157 = vunpack.c.h.b16 %v927
        %v1158 = vunpack.c.l.b16 %v928
        %v1159 = vunpack.c.h.b16 %v928
        %v1160 = vunpack.c.l.b16 %v929
        %v1161 = vunpack.c.h.b16 %v929
        %v1162 = vunpack.c.l.b16 %v930
        %v1163 = vunpack.c.h.b16 %v930
        %v1164 = vunpack.c.l.b16 %v931
        %v1165 = vunpack.c.h.b16 %v931
        %v1166 = vunpack.c.l.b16 %v932
        %v1167 = vunpack.c.h.b16 %v932
        %v1168 = vunpack.c.l.b16 %v933
        %v1169 = vunpack.c.h.b16 %v933
        %v1170 = vunpack.c.l.b16 %v934
        %v1171 = vunpack.c.h.b16 %v934
        %v1172 = vunpack.c.l.b16 %v935
        %v1173 = vunpack.c.h.b16 %v935
        %v1174 = vunpack.c.l.b16 %v936
        %v1175 = vunpack.c.h.b16 %v936
        %v1176 = vunpack.c.l.b16 %v937
        %v1177 = vunpack.c.h.b16 %v937
        %v1178 = vunpack.c.l.b16 %v938
        %v1179 = vunpack.c.h.b16 %v938
        %v1180 = vunpack.c.l.b16 %v939
        %v1181 = vunpack.c.h.b16 %v939
        %v1182 = vunpack.c.l.b16 %v940
        %v1183 = vunpack.c.h.b16 %v940
        %v1184 = vunpack.c.l.b16 %v941
        %v1185 = vunpack.c.h.b16 %v941
        %v1186 = vunpack.c.l.b16 %v942
        %v1187 = vunpack.c.h.b16 %v942
        %v1188 = vunpack.c.l.b16 %v943
        %v1189 = vunpack.c.h.b16 %v943
        %v1190 = vunpack.c.l.b16 %v944
        %v1191 = vunpack.c.h.b16 %v944
        %v1192 = vunpack.c.l.b16 %v945
        %v1193 = vunpack.c.h.b16 %v945
        %v1194 = vunpack.c.l.b16 %v946
        %v1195 = vunpack.c.h.b16 %v946
        %v1196 = vunpack.c.l.b16 %v947
        %v1197 = vunpack.c.h.b16 %v947
        %v1198 = vunpack.c.l.b16 %v948
        %v1199 = vunpack.c.h.b16 %v948
        %v1200 = vunpack.c.l.b16 %v949
        %v1201 = vunpack.c.h.b16 %v949
        %v1202 = vunpack.c.l.b16 %v950
        %v1203 = vunpack.c.h.b16 %v950
        %v1204 = vunpack.c.l.b16 %v951
        %v1205 = vunpack.c.h.b16 %v951
        %v1206 = vunpack.c.l.b16 %v952
        %v1207 = vunpack.c.h.b16 %v952
        %v1208 = vunpack.c.l.b16 %v953
        %v1209 = vunpack.c.h.b16 %v953
        %v1210 = vunpack.c.l.b16 %v954
        %v1211 = vunpack.c.h.b16 %v954
        %v1212 = vunpack.c.l.b16 %v955
        %v1213 = vunpack.c.h.b16 %v955
        %v1214 = vunpack.c.l.b16 %v956
        %v1215 = vunpack.c.h.b16 %v956
        %v1216 = vunpack.c.l.b16 %v957
        %v1217 = vunpack.c.h.b16 %v957
        %v1218 = vunpack.c.l.b16 %v958
        %v1219 = vunpack.c.h.b16 %v958
        %v1220 = vunpack.c.l.b16 %v959
        %v1221 = vunpack.c.h.b16 %v959
        %v1222 = vunpack.c.l.b16 %v960
        %v1223 = vunpack.c.h.b16 %v960
        %v1224 = vunpack.c.l.b16 %v961
        %v1225 = vunpack.c.h.b16 %v961
        %v1226 = vunpack.c.l.b16 %v962
        %v1227 = vunpack.c.h.b16 %v962
        %v1228 = vunpack.c.l.b16 %v963
        %v1229 = vunpack.c.h.b16 %v963
        %v1230 = vunpack.c.l.b16 %v964
        %v1231 = vunpack.c.h.b16 %v964
        %v1232 = vunpack.c.l.b16 %v965
        %v1233 = vunpack.c.h.b16 %v965
        %v1234 = vunpack.c.l.b16 %v966
        %v1235 = vunpack.c.h.b16 %v966
        %v1236 = vunpack.c.l.b16 %v967
        %v1237 = vunpack.c.h.b16 %v967
        %v1238 = vunpack.c.l.b16 %v968
        %v1239 = vunpack.c.h.b16 %v968
        %v1240 = vunpack.c.l.b16 %v969
        %v1241 = vunpack.c.h.b16 %v969
        %v1242 = vunpack.c.l.b16 %v970
        %v1243 = vunpack.c.h.b16 %v970
        %v1244 = vunpack.c.l.b16 %v971
        %v1245 = vunpack.c.h.b16 %v971
        %v1246 = vunpack.c.l.b16 %v972
        %v1247 = vunpack.c.h.b16 %v972
        %v1248 = vunpack.c.l.b16 %v973
        %v1249 = vunpack.c.h.b16 %v973
        %v1250 = vpack.c.b16 %v1138, %v1122
        %v1251 = vpack.c.b16 %v1139, %v1123
        %v1252 = vpack.c.b16 %v1140, %v1124
        %v1253 = vpack.c.b16 %v1141, %v1125
        %v1254 = vpack.c.b16 %v1142, %v1126
        %v1255 = vpack.c.b16 %v1143, %v1127
        %v1256 = vpack.c.b16 %v1144, %v1128
        %v1257 = vpack.c.b16 %v1145, %v1129
        %v1258 = vpack.c.b16 %v1146, %v1130
        %v1259 = vpack.c.b16 %v1147, %v1131
        %v1260 = vpack.c.b16 %v1148, %v1132
        %v1261 = vpack.c.b16 %v1149, %v1133
        %v1262 = vpack.c.b16 %v1150, %v1134
        %v1263 = vpack.c.b16 %v1151, %v1135
        %v1264 = vpack.c.b16 %v1152, %v1136
        %v1265 = vpack.c.b16 %v1153, %v1137
        %v1266 = vpack.c.b16 %v1170, %v1154
        %v1267 = vpack.c.b16 %v1171, %v1155
        %v1268 = vpack.c.b16 %v1172, %v1156
        %v1269 = vpack.c.b16 %v1173, %v1157
        %v1270 = vpack.c.b16 %v1174, %v1158
        %v1271 = vpack.c.b16 %v1175, %v1159
        %v1272 = vpack.c.b16 %v1176, %v1160
        %v1273 = vpack.c.b16 %v1177, %v1161
        %v1274 = vpack.c.b16 %v1178, %v1162
        %v1275 = vpack.c.b16 %v1179, %v1163
        %v1276 = vpack.c.b16 %v1180, %v1164
        %v1277 = vpack.c.b16 %v1181, %v1165
        %v1278 = vpack.c.b16 %v1182, %v1166
        %v1279 = vpack.c.b16 %v1183, %v1167
        %v1280 = vpack.c.b16 %v1184, %v1168
        %v1281 = vpack.c.b16 %v1185, %v1169
        %v1282 = vpack.c.b16 %v1202, %v1186
        %v1283 = vpack.c.b16 %v1203, %v1187
        %v1284 = vpack.c.b16 %v1204, %v1188
        %v1285 = vpack.c.b16 %v1205, %v1189
        %v1286 = vpack.c.b16 %v1206, %v1190
        %v1287 = vpack.c.b16 %v1207, %v1191
        %v1288 = vpack.c.b16 %v1208, %v1192
        %v1289 = vpack.c.b16 %v1209, %v1193
        %v1290 = vpack.c.b16 %v1210, %v1194
        %v1291 = vpack.c.b16 %v1211, %v1195
        %v1292 = vpack.c.b16 %v1212, %v1196
        %v1293 = vpack.c.b16 %v1213, %v1197
        %v1294 = vpack.c.b16 %v1214, %v1198
        %v1295 = vpack.c.b16 %v1215, %v1199
        %v1296 = vpack.c.b16 %v1216, %v1200
        %v1297 = vpack.c.b16 %v1217, %v1201
        %v1298 = vpack.c.b16 %v1234, %v1218
        %v1299 = vpack.c.b16 %v1235, %v1219
        %v1300 = vpack.c.b16 %v1236, %v1220
        %v1301 = vpack.c.b16 %v1237, %v1221
        %v1302 = vpack.c.b16 %v1238, %v1222
        %v1303 = vpack.c.b16 %v1239, %v1223
        %v1304 = vpack.c.b16 %v1240, %v1224
        %v1305 = vpack.c.b16 %v1241, %v1225
        %v1306 = vpack.c.b16 %v1242, %v1226
        %v1307 = vpack.c.b16 %v1243, %v1227
        %v1308 = vpack.c.b16 %v1244, %v1228
        %v1309 = vpack.c.b16 %v1245, %v1229
        %v1310 = vpack.c.b16 %v1246, %v1230
        %v1311 = vpack.c.b16 %v1247, %v1231
        %v1312 = vpack.c.b16 %v1248, %v1232
        %v1313 = vpack.c.b16 %v1249, %v1233
        %vm1378 = vcmask 523264
        %v1380 = vsel %vm1378, %v894, 0
        %v1383 = vsel %vm1378, %v895, 0
        %v1386 = vsel %vm1378, %v896, 0
        %v1389 = vsel %vm1378, %v897, 0
        %v1392 = vsel %vm1378, %v898, 0
        %v1395 = vsel %vm1378, %v899, 0
        %v1398 = vsel %vm1378, %v900, 0
        %v1401 = vsel %vm1378, %v901, 0
        %v1404 = vsel %vm1378, %v902, 0
        %v1407 = vsel %vm1378, %v903, 0
        %v1410 = vsel %vm1378, %v904, 0
        %v1413 = vsel %vm1378, %v905, 0
        %v1416 = vsel %vm1378, %v906, 0
        %v1419 = vsel %vm1378, %v907, 0
        %v1422 = vsel %vm1378, %v908, 0
        %v1425 = vsel %vm1378, %v909, 0
        %1427 = vmatprep.subr.bf16.mxu0 %v1251
        %1428 = vmatpush1.bf16.msra.mxu0 %v1250
        %1429 = vmatprep.subr.bf16.mxu0 %v1267
        %1430 = vmatpush1.bf16.msra.mxu0 %v1266
        %1431 = vmatprep.subr.bf16.mxu0 %v1283
        %1432 = vmatpush1.bf16.msra.mxu0 %v1282
        %1433 = vmatprep.subr.bf16.mxu0 %v1299
        %1434 = vmatpush1.bf16.msra.mxu0 %v1298
        %1435 = vmatprep.subr.bf16.mxu0 0
        %1436 = vmatpush1.bf16.msra.mxu0 0
        %1437 = vmatprep.subr.bf16.mxu0 0
        %1438 = vmatpush1.bf16.msra.mxu0 0
        %1439 = vmatprep.subr.bf16.mxu0 0
        %1440 = vmatpush1.bf16.msra.mxu0 0
        %1441 = vmatprep.subr.bf16.mxu0 0
        %1442 = vmatpush1.bf16.msra.mxu0 0
        %1443 = vmatprep.subr.bf16.mxu0 0
        %1444 = vmatpush1.bf16.msra.mxu0 0
        %1445 = vmatprep.subr.bf16.mxu0 0
        %1446 = vmatpush1.bf16.msra.mxu0 0
        %1447 = vmatprep.subr.bf16.mxu0 0
        %1448 = vmatpush1.bf16.msra.mxu0 0
        %1449 = vmatprep.subr.bf16.mxu0 0
        %1450 = vmatpush1.bf16.msra.mxu0 0
        %1451 = vmatprep.subr.bf16.mxu0 0
        %1452 = vmatpush1.bf16.msra.mxu0 0
        %1453 = vmatprep.subr.bf16.mxu0 0
        %1454 = vmatpush1.bf16.msra.mxu0 0
        %1455 = vmatprep.subr.bf16.mxu0 0
        %1456 = vmatpush1.bf16.msra.mxu0 0
        %1457 = vmatprep.subr.bf16.mxu0 0
        %1458 = vmatpush1.bf16.msra.mxu0 0
        %1459 = vmatprep.mubr.bf16.mxu0 0
        %1460 = vmatmul.mubr.bf16.gmra.mrb[0].mxu0 %v1380
        %v1461 = vpop.f32.mrb[0].mxu0
        %v1462 = vadd.f32 %v981, %v1461
        %v1463 = vpop.f32.mrb[0].mxu0
        %v1464 = vadd.f32 %v985, %v1463
        %v1465 = vpop.f32.mrb[0].mxu0
        %v1466 = vadd.f32 %v981, %v1465
        %v1467 = vpop.f32.mrb[0].mxu0
        %v1468 = vadd.f32 %v985, %v1467
        %1469 = vmatprep.mubr.bf16.mxu0 0
        %1470 = vmatmul.mubr.bf16.gmra.mrb[0].mxu0 %v1383
        %v1471 = vpop.f32.mrb[0].mxu0
        %v1472 = vadd.f32 %v981, %v1471
        %v1473 = vpop.f32.mrb[0].mxu0
        %v1474 = vadd.f32 %v985, %v1473
        %v1475 = vpop.f32.mrb[0].mxu0
        %v1476 = vadd.f32 %v981, %v1475
        %v1477 = vpop.f32.mrb[0].mxu0
        %v1478 = vadd.f32 %v985, %v1477
        %1479 = vmatprep.mubr.bf16.mxu0 0
        %1480 = vmatmul.mubr.bf16.gmra.mrb[0].mxu0 %v1386
        %v1481 = vpop.f32.mrb[0].mxu0
        %v1482 = vadd.f32 %v981, %v1481
        %v1483 = vpop.f32.mrb[0].mxu0
        %v1484 = vadd.f32 %v985, %v1483
        %v1485 = vpop.f32.mrb[0].mxu0
        %v1486 = vadd.f32 %v981, %v1485
        %v1487 = vpop.f32.mrb[0].mxu0
        %v1488 = vadd.f32 %v985, %v1487
        %1489 = vmatprep.mubr.bf16.mxu0 0
        %1490 = vmatmul.mubr.bf16.gmra.mrb[0].mxu0 %v1389
        %v1491 = vpop.f32.mrb[0].mxu0
        %v1492 = vadd.f32 %v981, %v1491
        %v1493 = vpop.f32.mrb[0].mxu0
        %v1494 = vadd.f32 %v985, %v1493
        %v1495 = vpop.f32.mrb[0].mxu0
        %v1496 = vadd.f32 %v981, %v1495
        %v1497 = vpop.f32.mrb[0].mxu0
        %v1498 = vadd.f32 %v985, %v1497
        %1499 = vmatprep.mubr.bf16.mxu0 0
        %1500 = vmatmul.mubr.bf16.gmra.mrb[0].mxu0 %v1392
        %v1501 = vpop.f32.mrb[0].mxu0
        %v1502 = vadd.f32 %v981, %v1501
        %v1503 = vpop.f32.mrb[0].mxu0
        %v1504 = vadd.f32 %v985, %v1503
        %v1505 = vpop.f32.mrb[0].mxu0
        %v1506 = vadd.f32 %v981, %v1505
        %v1507 = vpop.f32.mrb[0].mxu0
        %v1508 = vadd.f32 %v985, %v1507
        %1509 = vmatprep.mubr.bf16.mxu0 0
        %1510 = vmatmul.mubr.bf16.gmra.mrb[0].mxu0 %v1395
        %v1511 = vpop.f32.mrb[0].mxu0
        %v1512 = vadd.f32 %v981, %v1511
        %v1513 = vpop.f32.mrb[0].mxu0
        %v1514 = vadd.f32 %v985, %v1513
        %v1515 = vpop.f32.mrb[0].mxu0
        %v1516 = vadd.f32 %v981, %v1515
        %v1517 = vpop.f32.mrb[0].mxu0
        %v1518 = vadd.f32 %v985, %v1517
        %1519 = vmatprep.mubr.bf16.mxu0 0
        %1520 = vmatmul.mubr.bf16.gmra.mrb[0].mxu0 %v1398
        %v1521 = vpop.f32.mrb[0].mxu0
        %v1522 = vadd.f32 %v981, %v1521
        %v1523 = vpop.f32.mrb[0].mxu0
        %v1524 = vadd.f32 %v985, %v1523
        %v1525 = vpop.f32.mrb[0].mxu0
        %v1526 = vadd.f32 %v981, %v1525
        %v1527 = vpop.f32.mrb[0].mxu0
        %v1528 = vadd.f32 %v985, %v1527
        %1529 = vmatprep.mubr.bf16.mxu0 0
        %1530 = vmatmul.mubr.bf16.gmra.mrb[0].mxu0 %v1401
        %v1531 = vpop.f32.mrb[0].mxu0
        %v1532 = vadd.f32 %v981, %v1531
        %v1533 = vpop.f32.mrb[0].mxu0
        %v1534 = vadd.f32 %v985, %v1533
        %v1535 = vpop.f32.mrb[0].mxu0
        %v1536 = vadd.f32 %v981, %v1535
        %v1537 = vpop.f32.mrb[0].mxu0
        %v1538 = vadd.f32 %v985, %v1537
        %1539 = vmatprep.mubr.bf16.mxu0 0
        %1540 = vmatmul.mubr.bf16.gmra.mrb[0].mxu0 %v1404
        %v1541 = vpop.f32.mrb[0].mxu0
        %v1542 = vadd.f32 %v981, %v1541
        %v1543 = vpop.f32.mrb[0].mxu0
        %v1544 = vadd.f32 %v985, %v1543
        %v1545 = vpop.f32.mrb[0].mxu0
        %v1546 = vadd.f32 %v981, %v1545
        %v1547 = vpop.f32.mrb[0].mxu0
        %v1548 = vadd.f32 %v985, %v1547
        %1549 = vmatprep.mubr.bf16.mxu0 0
        %1550 = vmatmul.mubr.bf16.gmra.mrb[0].mxu0 %v1407
        %v1551 = vpop.f32.mrb[0].mxu0
        %v1552 = vadd.f32 %v981, %v1551
        %v1553 = vpop.f32.mrb[0].mxu0
        %v1554 = vadd.f32 %v985, %v1553
        %v1555 = vpop.f32.mrb[0].mxu0
        %v1556 = vadd.f32 %v981, %v1555
        %v1557 = vpop.f32.mrb[0].mxu0
        %v1558 = vadd.f32 %v985, %v1557
        %1559 = vmatprep.mubr.bf16.mxu0 0
        %1560 = vmatmul.mubr.bf16.gmra.mrb[0].mxu0 %v1410
        %v1561 = vpop.f32.mrb[0].mxu0
        %v1562 = vadd.f32 %v981, %v1561
        %v1563 = vpop.f32.mrb[0].mxu0
        %v1564 = vadd.f32 %v985, %v1563
        %v1565 = vpop.f32.mrb[0].mxu0
        %v1566 = vadd.f32 %v981, %v1565
        %v1567 = vpop.f32.mrb[0].mxu0
        %v1568 = vadd.f32 %v985, %v1567
        %1569 = vmatprep.mubr.bf16.mxu0 0
        %1570 = vmatmul.mubr.bf16.gmra.mrb[0].mxu0 %v1413
        %v1571 = vpop.f32.mrb[0].mxu0
        %v1572 = vadd.f32 %v981, %v1571
        %v1573 = vpop.f32.mrb[0].mxu0
        %v1574 = vadd.f32 %v985, %v1573
        %v1575 = vpop.f32.mrb[0].mxu0
        %v1576 = vadd.f32 %v981, %v1575
        %v1577 = vpop.f32.mrb[0].mxu0
        %v1578 = vadd.f32 %v985, %v1577
        %1579 = vmatprep.mubr.bf16.mxu0 0
        %1580 = vmatmul.mubr.bf16.gmra.mrb[0].mxu0 %v1416
        %v1581 = vpop.f32.mrb[0].mxu0
        %v1582 = vadd.f32 %v981, %v1581
        %v1583 = vpop.f32.mrb[0].mxu0
        %v1584 = vadd.f32 %v985, %v1583
        %v1585 = vpop.f32.mrb[0].mxu0
        %v1586 = vadd.f32 %v981, %v1585
        %v1587 = vpop.f32.mrb[0].mxu0
        %v1588 = vadd.f32 %v985, %v1587
        %1589 = vmatprep.mubr.bf16.mxu0 0
        %1590 = vmatmul.mubr.bf16.gmra.mrb[0].mxu0 %v1419
        %v1591 = vpop.f32.mrb[0].mxu0
        %v1592 = vadd.f32 %v981, %v1591
        %v1593 = vpop.f32.mrb[0].mxu0
        %v1594 = vadd.f32 %v985, %v1593
        %v1595 = vpop.f32.mrb[0].mxu0
        %v1596 = vadd.f32 %v981, %v1595
        %v1597 = vpop.f32.mrb[0].mxu0
        %v1598 = vadd.f32 %v985, %v1597
        %1599 = vmatprep.mubr.bf16.mxu0 0
        %1600 = vmatmul.mubr.bf16.gmra.mrb[0].mxu0 %v1422
        %v1601 = vpop.f32.mrb[0].mxu0
        %v1602 = vadd.f32 %v981, %v1601
        %v1603 = vpop.f32.mrb[0].mxu0
        %v1604 = vadd.f32 %v985, %v1603
        %v1605 = vpop.f32.mrb[0].mxu0
        %v1606 = vadd.f32 %v981, %v1605
        %v1607 = vpop.f32.mrb[0].mxu0
        %v1608 = vadd.f32 %v985, %v1607
        %1609 = vmatprep.mubr.bf16.mxu0 0
        %1610 = vmatmul.mubr.bf16.gmra.mrb[0].mxu0 %v1425
        %v1611 = vpop.f32.mrb[0].mxu0
        %v1612 = vadd.f32 %v981, %v1611
        %v1613 = vpop.f32.mrb[0].mxu0
        %v1614 = vadd.f32 %v985, %v1613
        %v1615 = vpop.f32.mrb[0].mxu0
        %v1616 = vadd.f32 %v981, %v1615
        %v1617 = vpop.f32.mrb[0].mxu0
        %v1618 = vadd.f32 %v985, %v1617
        %1619 = vdwg.mxu0
        %1620 = vmatprep.subr.bf16.mxu0 %v1253
        %1621 = vmatpush1.bf16.msra.mxu0 %v1252
        %1622 = vmatprep.subr.bf16.mxu0 %v1269
        %1623 = vmatpush1.bf16.msra.mxu0 %v1268
        %1624 = vmatprep.subr.bf16.mxu0 %v1285
        %1625 = vmatpush1.bf16.msra.mxu0 %v1284
        %1626 = vmatprep.subr.bf16.mxu0 %v1301
        %1627 = vmatpush1.bf16.msra.mxu0 %v1300
        %1628 = vmatprep.subr.bf16.mxu0 0
        %1629 = vmatpush1.bf16.msra.mxu0 0
        %1630 = vmatprep.subr.bf16.mxu0 0
        %1631 = vmatpush1.bf16.msra.mxu0 0
        %1632 = vmatprep.subr.bf16.mxu0 0
        %1633 = vmatpush1.bf16.msra.mxu0 0
        %1634 = vmatprep.subr.bf16.mxu0 0
        %1635 = vmatpush1.bf16.msra.mxu0 0
        %1636 = vmatprep.subr.bf16.mxu0 0
        %1637 = vmatpush1.bf16.msra.mxu0 0
        %1638 = vmatprep.subr.bf16.mxu0 0
        %1639 = vmatpush1.bf16.msra.mxu0 0
        %1640 = vmatprep.subr.bf16.mxu0 0
        %1641 = vmatpush1.bf16.msra.mxu0 0
        %1642 = vmatprep.subr.bf16.mxu0 0
        %1643 = vmatpush1.bf16.msra.mxu0 0
        %1644 = vmatprep.subr.bf16.mxu0 0
        %1645 = vmatpush1.bf16.msra.mxu0 0
        %1646 = vmatprep.subr.bf16.mxu0 0
        %1647 = vmatpush1.bf16.msra.mxu0 0
        %1648 = vmatprep.subr.bf16.mxu0 0
        %1649 = vmatpush1.bf16.msra.mxu0 0
        %1650 = vmatprep.subr.bf16.mxu0 0
        %1651 = vmatpush1.bf16.msra.mxu0 0
        %1652 = vmatprep.mubr.bf16.mxu0 0
        %1653 = vmatmul.mubr.bf16.gmra.mrb[0].mxu0 %v1380
        %v1654 = vpop.f32.mrb[0].mxu0
        %v1655 = vadd.f32 %v989, %v1654
        %v1656 = vpop.f32.mrb[0].mxu0
        %v1657 = vadd.f32 %v993, %v1656
        %v1658 = vpop.f32.mrb[0].mxu0
        %v1659 = vadd.f32 %v989, %v1658
        %v1660 = vpop.f32.mrb[0].mxu0
        %v1661 = vadd.f32 %v993, %v1660
        %1662 = vmatprep.mubr.bf16.mxu0 0
        %1663 = vmatmul.mubr.bf16.gmra.mrb[0].mxu0 %v1383
        %v1664 = vpop.f32.mrb[0].mxu0
        %v1665 = vadd.f32 %v989, %v1664
        %v1666 = vpop.f32.mrb[0].mxu0
        %v1667 = vadd.f32 %v993, %v1666
        %v1668 = vpop.f32.mrb[0].mxu0
        %v1669 = vadd.f32 %v989, %v1668
        %v1670 = vpop.f32.mrb[0].mxu0
        %v1671 = vadd.f32 %v993, %v1670
        %1672 = vmatprep.mubr.bf16.mxu0 0
        %1673 = vmatmul.mubr.bf16.gmra.mrb[0].mxu0 %v1386
        %v1674 = vpop.f32.mrb[0].mxu0
        %v1675 = vadd.f32 %v989, %v1674
        %v1676 = vpop.f32.mrb[0].mxu0
        %v1677 = vadd.f32 %v993, %v1676
        %v1678 = vpop.f32.mrb[0].mxu0
        %v1679 = vadd.f32 %v989, %v1678
        %v1680 = vpop.f32.mrb[0].mxu0
        %v1681 = vadd.f32 %v993, %v1680
        %1682 = vmatprep.mubr.bf16.mxu0 0
        %1683 = vmatmul.mubr.bf16.gmra.mrb[0].mxu0 %v1389
        %v1684 = vpop.f32.mrb[0].mxu0
        %v1685 = vadd.f32 %v989, %v1684
        %v1686 = vpop.f32.mrb[0].mxu0
        %v1687 = vadd.f32 %v993, %v1686
        %v1688 = vpop.f32.mrb[0].mxu0
        %v1689 = vadd.f32 %v989, %v1688
        %v1690 = vpop.f32.mrb[0].mxu0
        %v1691 = vadd.f32 %v993, %v1690
        %1692 = vmatprep.mubr.bf16.mxu0 0
        %1693 = vmatmul.mubr.bf16.gmra.mrb[0].mxu0 %v1392
        %v1694 = vpop.f32.mrb[0].mxu0
        %v1695 = vadd.f32 %v989, %v1694
        %v1696 = vpop.f32.mrb[0].mxu0
        %v1697 = vadd.f32 %v993, %v1696
        %v1698 = vpop.f32.mrb[0].mxu0
        %v1699 = vadd.f32 %v989, %v1698
        %v1700 = vpop.f32.mrb[0].mxu0
        %v1701 = vadd.f32 %v993, %v1700
        %1702 = vmatprep.mubr.bf16.mxu0 0
        %1703 = vmatmul.mubr.bf16.gmra.mrb[0].mxu0 %v1395
        %v1704 = vpop.f32.mrb[0].mxu0
        %v1705 = vadd.f32 %v989, %v1704
        %v1706 = vpop.f32.mrb[0].mxu0
        %v1707 = vadd.f32 %v993, %v1706
        %v1708 = vpop.f32.mrb[0].mxu0
        %v1709 = vadd.f32 %v989, %v1708
        %v1710 = vpop.f32.mrb[0].mxu0
        %v1711 = vadd.f32 %v993, %v1710
        %1712 = vmatprep.mubr.bf16.mxu0 0
        %1713 = vmatmul.mubr.bf16.gmra.mrb[0].mxu0 %v1398
        %v1714 = vpop.f32.mrb[0].mxu0
        %v1715 = vadd.f32 %v989, %v1714
        %v1716 = vpop.f32.mrb[0].mxu0
        %v1717 = vadd.f32 %v993, %v1716
        %v1718 = vpop.f32.mrb[0].mxu0
        %v1719 = vadd.f32 %v989, %v1718
        %v1720 = vpop.f32.mrb[0].mxu0
        %v1721 = vadd.f32 %v993, %v1720
        %1722 = vmatprep.mubr.bf16.mxu0 0
        %1723 = vmatmul.mubr.bf16.gmra.mrb[0].mxu0 %v1401
        %v1724 = vpop.f32.mrb[0].mxu0
        %v1725 = vadd.f32 %v989, %v1724
        %v1726 = vpop.f32.mrb[0].mxu0
        %v1727 = vadd.f32 %v993, %v1726
        %v1728 = vpop.f32.mrb[0].mxu0
        %v1729 = vadd.f32 %v989, %v1728
        %v1730 = vpop.f32.mrb[0].mxu0
        %v1731 = vadd.f32 %v993, %v1730
        %1732 = vmatprep.mubr.bf16.mxu0 0
        %1733 = vmatmul.mubr.bf16.gmra.mrb[0].mxu0 %v1404
        %v1734 = vpop.f32.mrb[0].mxu0
        %v1735 = vadd.f32 %v989, %v1734
        %v1736 = vpop.f32.mrb[0].mxu0
        %v1737 = vadd.f32 %v993, %v1736
        %v1738 = vpop.f32.mrb[0].mxu0
        %v1739 = vadd.f32 %v989, %v1738
        %v1740 = vpop.f32.mrb[0].mxu0
        %v1741 = vadd.f32 %v993, %v1740
        %1742 = vmatprep.mubr.bf16.mxu0 0
        %1743 = vmatmul.mubr.bf16.gmra.mrb[0].mxu0 %v1407
        %v1744 = vpop.f32.mrb[0].mxu0
        %v1745 = vadd.f32 %v989, %v1744
        %v1746 = vpop.f32.mrb[0].mxu0
        %v1747 = vadd.f32 %v993, %v1746
        %v1748 = vpop.f32.mrb[0].mxu0
        %v1749 = vadd.f32 %v989, %v1748
        %v1750 = vpop.f32.mrb[0].mxu0
        %v1751 = vadd.f32 %v993, %v1750
        %1752 = vmatprep.mubr.bf16.mxu0 0
        %1753 = vmatmul.mubr.bf16.gmra.mrb[0].mxu0 %v1410
        %v1754 = vpop.f32.mrb[0].mxu0
        %v1755 = vadd.f32 %v989, %v1754
        %v1756 = vpop.f32.mrb[0].mxu0
        %v1757 = vadd.f32 %v993, %v1756
        %v1758 = vpop.f32.mrb[0].mxu0
        %v1759 = vadd.f32 %v989, %v1758
        %v1760 = vpop.f32.mrb[0].mxu0
        %v1761 = vadd.f32 %v993, %v1760
        %1762 = vmatprep.mubr.bf16.mxu0 0
        %1763 = vmatmul.mubr.bf16.gmra.mrb[0].mxu0 %v1413
        %v1764 = vpop.f32.mrb[0].mxu0
        %v1765 = vadd.f32 %v989, %v1764
        %v1766 = vpop.f32.mrb[0].mxu0
        %v1767 = vadd.f32 %v993, %v1766
        %v1768 = vpop.f32.mrb[0].mxu0
        %v1769 = vadd.f32 %v989, %v1768
        %v1770 = vpop.f32.mrb[0].mxu0
        %v1771 = vadd.f32 %v993, %v1770
        %1772 = vmatprep.mubr.bf16.mxu0 0
        %1773 = vmatmul.mubr.bf16.gmra.mrb[0].mxu0 %v1416
        %v1774 = vpop.f32.mrb[0].mxu0
        %v1775 = vadd.f32 %v989, %v1774
        %v1776 = vpop.f32.mrb[0].mxu0
        %v1777 = vadd.f32 %v993, %v1776
        %v1778 = vpop.f32.mrb[0].mxu0
        %v1779 = vadd.f32 %v989, %v1778
        %v1780 = vpop.f32.mrb[0].mxu0
        %v1781 = vadd.f32 %v993, %v1780
        %1782 = vmatprep.mubr.bf16.mxu0 0
        %1783 = vmatmul.mubr.bf16.gmra.mrb[0].mxu0 %v1419
        %v1784 = vpop.f32.mrb[0].mxu0
        %v1785 = vadd.f32 %v989, %v1784
        %v1786 = vpop.f32.mrb[0].mxu0
        %v1787 = vadd.f32 %v993, %v1786
        %v1788 = vpop.f32.mrb[0].mxu0
        %v1789 = vadd.f32 %v989, %v1788
        %v1790 = vpop.f32.mrb[0].mxu0
        %v1791 = vadd.f32 %v993, %v1790
        %1792 = vmatprep.mubr.bf16.mxu0 0
        %1793 = vmatmul.mubr.bf16.gmra.mrb[0].mxu0 %v1422
        %v1794 = vpop.f32.mrb[0].mxu0
        %v1795 = vadd.f32 %v989, %v1794
        %v1796 = vpop.f32.mrb[0].mxu0
        %v1797 = vadd.f32 %v993, %v1796
        %v1798 = vpop.f32.mrb[0].mxu0
        %v1799 = vadd.f32 %v989, %v1798
        %v1800 = vpop.f32.mrb[0].mxu0
        %v1801 = vadd.f32 %v993, %v1800
        %1802 = vmatprep.mubr.bf16.mxu0 0
        %1803 = vmatmul.mubr.bf16.gmra.mrb[0].mxu0 %v1425
        %v1804 = vpop.f32.mrb[0].mxu0
        %v1805 = vadd.f32 %v989, %v1804
        %v1806 = vpop.f32.mrb[0].mxu0
        %v1807 = vadd.f32 %v993, %v1806
        %v1808 = vpop.f32.mrb[0].mxu0
        %v1809 = vadd.f32 %v989, %v1808
        %v1810 = vpop.f32.mrb[0].mxu0
        %v1811 = vadd.f32 %v993, %v1810
        %1812 = vdwg.mxu0
        %1813 = vmatprep.subr.bf16.mxu0 %v1255
        %1814 = vmatpush1.bf16.msra.mxu0 %v1254
        %1815 = vmatprep.subr.bf16.mxu0 %v1271
        %1816 = vmatpush1.bf16.msra.mxu0 %v1270
        %1817 = vmatprep.subr.bf16.mxu0 %v1287
        %1818 = vmatpush1.bf16.msra.mxu0 %v1286
        %1819 = vmatprep.subr.bf16.mxu0 %v1303
        %1820 = vmatpush1.bf16.msra.mxu0 %v1302
        %1821 = vmatprep.subr.bf16.mxu0 0
        %1822 = vmatpush1.bf16.msra.mxu0 0
        %1823 = vmatprep.subr.bf16.mxu0 0
        %1824 = vmatpush1.bf16.msra.mxu0 0
        %1825 = vmatprep.subr.bf16.mxu0 0
        %1826 = vmatpush1.bf16.msra.mxu0 0
        %1827 = vmatprep.subr.bf16.mxu0 0
        %1828 = vmatpush1.bf16.msra.mxu0 0
        %1829 = vmatprep.subr.bf16.mxu0 0
        %1830 = vmatpush1.bf16.msra.mxu0 0
        %1831 = vmatprep.subr.bf16.mxu0 0
        %1832 = vmatpush1.bf16.msra.mxu0 0
        %1833 = vmatprep.subr.bf16.mxu0 0
        %1834 = vmatpush1.bf16.msra.mxu0 0
        %1835 = vmatprep.subr.bf16.mxu0 0
        %1836 = vmatpush1.bf16.msra.mxu0 0
        %1837 = vmatprep.subr.bf16.mxu0 0
        %1838 = vmatpush1.bf16.msra.mxu0 0
        %1839 = vmatprep.subr.bf16.mxu0 0
        %1840 = vmatpush1.bf16.msra.mxu0 0
        %1841 = vmatprep.subr.bf16.mxu0 0
        %1842 = vmatpush1.bf16.msra.mxu0 0
        %1843 = vmatprep.subr.bf16.mxu0 0
        %1844 = vmatpush1.bf16.msra.mxu0 0
        %1845 = vmatprep.mubr.bf16.mxu0 0
        %1846 = vmatmul.mubr.bf16.gmra.mrb[0].mxu0 %v1380
        %v1847 = vpop.f32.mrb[0].mxu0
        %v1848 = vadd.f32 %v997, %v1847
        %v1849 = vpop.f32.mrb[0].mxu0
        %v1850 = vadd.f32 %v1001, %v1849
        %v1851 = vpop.f32.mrb[0].mxu0
        %v1852 = vadd.f32 %v997, %v1851
        %v1853 = vpop.f32.mrb[0].mxu0
        %v1854 = vadd.f32 %v1001, %v1853
        %1855 = vmatprep.mubr.bf16.mxu0 0
        %1856 = vmatmul.mubr.bf16.gmra.mrb[0].mxu0 %v1383
        %v1857 = vpop.f32.mrb[0].mxu0
        %v1858 = vadd.f32 %v997, %v1857
        %v1859 = vpop.f32.mrb[0].mxu0
        %v1860 = vadd.f32 %v1001, %v1859
        %v1861 = vpop.f32.mrb[0].mxu0
        %v1862 = vadd.f32 %v997, %v1861
        %v1863 = vpop.f32.mrb[0].mxu0
        %v1864 = vadd.f32 %v1001, %v1863
        %1865 = vmatprep.mubr.bf16.mxu0 0
        %1866 = vmatmul.mubr.bf16.gmra.mrb[0].mxu0 %v1386
        %v1867 = vpop.f32.mrb[0].mxu0
        %v1868 = vadd.f32 %v997, %v1867
        %v1869 = vpop.f32.mrb[0].mxu0
        %v1870 = vadd.f32 %v1001, %v1869
        %v1871 = vpop.f32.mrb[0].mxu0
        %v1872 = vadd.f32 %v997, %v1871
        %v1873 = vpop.f32.mrb[0].mxu0
        %v1874 = vadd.f32 %v1001, %v1873
        %1875 = vmatprep.mubr.bf16.mxu0 0
        %1876 = vmatmul.mubr.bf16.gmra.mrb[0].mxu0 %v1389
        %v1877 = vpop.f32.mrb[0].mxu0
        %v1878 = vadd.f32 %v997, %v1877
        %v1879 = vpop.f32.mrb[0].mxu0
        %v1880 = vadd.f32 %v1001, %v1879
        %v1881 = vpop.f32.mrb[0].mxu0
        %v1882 = vadd.f32 %v997, %v1881
        %v1883 = vpop.f32.mrb[0].mxu0
        %v1884 = vadd.f32 %v1001, %v1883
        %1885 = vmatprep.mubr.bf16.mxu0 0
        %1886 = vmatmul.mubr.bf16.gmra.mrb[0].mxu0 %v1392
        %v1887 = vpop.f32.mrb[0].mxu0
        %v1888 = vadd.f32 %v997, %v1887
        %v1889 = vpop.f32.mrb[0].mxu0
        %v1890 = vadd.f32 %v1001, %v1889
        %v1891 = vpop.f32.mrb[0].mxu0
        %v1892 = vadd.f32 %v997, %v1891
        %v1893 = vpop.f32.mrb[0].mxu0
        %v1894 = vadd.f32 %v1001, %v1893
        %1895 = vmatprep.mubr.bf16.mxu0 0
        %1896 = vmatmul.mubr.bf16.gmra.mrb[0].mxu0 %v1395
        %v1897 = vpop.f32.mrb[0].mxu0
        %v1898 = vadd.f32 %v997, %v1897
        %v1899 = vpop.f32.mrb[0].mxu0
        %v1900 = vadd.f32 %v1001, %v1899
        %v1901 = vpop.f32.mrb[0].mxu0
        %v1902 = vadd.f32 %v997, %v1901
        %v1903 = vpop.f32.mrb[0].mxu0
        %v1904 = vadd.f32 %v1001, %v1903
        %1905 = vmatprep.mubr.bf16.mxu0 0
        %1906 = vmatmul.mubr.bf16.gmra.mrb[0].mxu0 %v1398
        %v1907 = vpop.f32.mrb[0].mxu0
        %v1908 = vadd.f32 %v997, %v1907
        %v1909 = vpop.f32.mrb[0].mxu0
        %v1910 = vadd.f32 %v1001, %v1909
        %v1911 = vpop.f32.mrb[0].mxu0
        %v1912 = vadd.f32 %v997, %v1911
        %v1913 = vpop.f32.mrb[0].mxu0
        %v1914 = vadd.f32 %v1001, %v1913
        %1915 = vmatprep.mubr.bf16.mxu0 0
        %1916 = vmatmul.mubr.bf16.gmra.mrb[0].mxu0 %v1401
        %v1917 = vpop.f32.mrb[0].mxu0
        %v1918 = vadd.f32 %v997, %v1917
        %v1919 = vpop.f32.mrb[0].mxu0
        %v1920 = vadd.f32 %v1001, %v1919
        %v1921 = vpop.f32.mrb[0].mxu0
        %v1922 = vadd.f32 %v997, %v1921
        %v1923 = vpop.f32.mrb[0].mxu0
        %v1924 = vadd.f32 %v1001, %v1923
        %1925 = vmatprep.mubr.bf16.mxu0 0
        %1926 = vmatmul.mubr.bf16.gmra.mrb[0].mxu0 %v1404
        %v1927 = vpop.f32.mrb[0].mxu0
        %v1928 = vadd.f32 %v997, %v1927
        %v1929 = vpop.f32.mrb[0].mxu0
        %v1930 = vadd.f32 %v1001, %v1929
        %v1931 = vpop.f32.mrb[0].mxu0
        %v1932 = vadd.f32 %v997, %v1931
        %v1933 = vpop.f32.mrb[0].mxu0
        %v1934 = vadd.f32 %v1001, %v1933
        %1935 = vmatprep.mubr.bf16.mxu0 0
        %1936 = vmatmul.mubr.bf16.gmra.mrb[0].mxu0 %v1407
        %v1937 = vpop.f32.mrb[0].mxu0
        %v1938 = vadd.f32 %v997, %v1937
        %v1939 = vpop.f32.mrb[0].mxu0
        %v1940 = vadd.f32 %v1001, %v1939
        %v1941 = vpop.f32.mrb[0].mxu0
        %v1942 = vadd.f32 %v997, %v1941
        %v1943 = vpop.f32.mrb[0].mxu0
        %v1944 = vadd.f32 %v1001, %v1943
        %1945 = vmatprep.mubr.bf16.mxu0 0
        %1946 = vmatmul.mubr.bf16.gmra.mrb[0].mxu0 %v1410
        %v1947 = vpop.f32.mrb[0].mxu0
        %v1948 = vadd.f32 %v997, %v1947
        %v1949 = vpop.f32.mrb[0].mxu0
        %v1950 = vadd.f32 %v1001, %v1949
        %v1951 = vpop.f32.mrb[0].mxu0
        %v1952 = vadd.f32 %v997, %v1951
        %v1953 = vpop.f32.mrb[0].mxu0
        %v1954 = vadd.f32 %v1001, %v1953
        %1955 = vmatprep.mubr.bf16.mxu0 0
        %1956 = vmatmul.mubr.bf16.gmra.mrb[0].mxu0 %v1413
        %v1957 = vpop.f32.mrb[0].mxu0
        %v1958 = vadd.f32 %v997, %v1957
        %v1959 = vpop.f32.mrb[0].mxu0
        %v1960 = vadd.f32 %v1001, %v1959
        %v1961 = vpop.f32.mrb[0].mxu0
        %v1962 = vadd.f32 %v997, %v1961
        %v1963 = vpop.f32.mrb[0].mxu0
        %v1964 = vadd.f32 %v1001, %v1963
        %1965 = vmatprep.mubr.bf16.mxu0 0
        %1966 = vmatmul.mubr.bf16.gmra.mrb[0].mxu0 %v1416
        %v1967 = vpop.f32.mrb[0].mxu0
        %v1968 = vadd.f32 %v997, %v1967
        %v1969 = vpop.f32.mrb[0].mxu0
        %v1970 = vadd.f32 %v1001, %v1969
        %v1971 = vpop.f32.mrb[0].mxu0
        %v1972 = vadd.f32 %v997, %v1971
        %v1973 = vpop.f32.mrb[0].mxu0
        %v1974 = vadd.f32 %v1001, %v1973
        %1975 = vmatprep.mubr.bf16.mxu0 0
        %1976 = vmatmul.mubr.bf16.gmra.mrb[0].mxu0 %v1419
        %v1977 = vpop.f32.mrb[0].mxu0
        %v1978 = vadd.f32 %v997, %v1977
        %v1979 = vpop.f32.mrb[0].mxu0
        %v1980 = vadd.f32 %v1001, %v1979
        %v1981 = vpop.f32.mrb[0].mxu0
        %v1982 = vadd.f32 %v997, %v1981
        %v1983 = vpop.f32.mrb[0].mxu0
        %v1984 = vadd.f32 %v1001, %v1983
        %1985 = vmatprep.mubr.bf16.mxu0 0
        %1986 = vmatmul.mubr.bf16.gmra.mrb[0].mxu0 %v1422
        %v1987 = vpop.f32.mrb[0].mxu0
        %v1988 = vadd.f32 %v997, %v1987
        %v1989 = vpop.f32.mrb[0].mxu0
        %v1990 = vadd.f32 %v1001, %v1989
        %v1991 = vpop.f32.mrb[0].mxu0
        %v1992 = vadd.f32 %v997, %v1991
        %v1993 = vpop.f32.mrb[0].mxu0
        %v1994 = vadd.f32 %v1001, %v1993
        %1995 = vmatprep.mubr.bf16.mxu0 0
        %1996 = vmatmul.mubr.bf16.gmra.mrb[0].mxu0 %v1425
        %v1997 = vpop.f32.mrb[0].mxu0
        %v1998 = vadd.f32 %v997, %v1997
        %v1999 = vpop.f32.mrb[0].mxu0
        %v2000 = vadd.f32 %v1001, %v1999
        %v2001 = vpop.f32.mrb[0].mxu0
        %v2002 = vadd.f32 %v997, %v2001
        %v2003 = vpop.f32.mrb[0].mxu0
        %v2004 = vadd.f32 %v1001, %v2003
        %2005 = vdwg.mxu0
        %2006 = vmatprep.subr.bf16.mxu0 %v1257
        %2007 = vmatpush1.bf16.msra.mxu0 %v1256
        %2008 = vmatprep.subr.bf16.mxu0 %v1273
        %2009 = vmatpush1.bf16.msra.mxu0 %v1272
        %2010 = vmatprep.subr.bf16.mxu0 %v1289
        %2011 = vmatpush1.bf16.msra.mxu0 %v1288
        %2012 = vmatprep.subr.bf16.mxu0 %v1305
        %2013 = vmatpush1.bf16.msra.mxu0 %v1304
        %2014 = vmatprep.subr.bf16.mxu0 0
        %2015 = vmatpush1.bf16.msra.mxu0 0
        %2016 = vmatprep.subr.bf16.mxu0 0
        %2017 = vmatpush1.bf16.msra.mxu0 0
        %2018 = vmatprep.subr.bf16.mxu0 0
        %2019 = vmatpush1.bf16.msra.mxu0 0
        %2020 = vmatprep.subr.bf16.mxu0 0
        %2021 = vmatpush1.bf16.msra.mxu0 0
        %2022 = vmatprep.subr.bf16.mxu0 0
        %2023 = vmatpush1.bf16.msra.mxu0 0
        %2024 = vmatprep.subr.bf16.mxu0 0
        %2025 = vmatpush1.bf16.msra.mxu0 0
        %2026 = vmatprep.subr.bf16.mxu0 0
        %2027 = vmatpush1.bf16.msra.mxu0 0
        %2028 = vmatprep.subr.bf16.mxu0 0
        %2029 = vmatpush1.bf16.msra.mxu0 0
        %2030 = vmatprep.subr.bf16.mxu0 0
        %2031 = vmatpush1.bf16.msra.mxu0 0
        %2032 = vmatprep.subr.bf16.mxu0 0
        %2033 = vmatpush1.bf16.msra.mxu0 0
        %2034 = vmatprep.subr.bf16.mxu0 0
        %2035 = vmatpush1.bf16.msra.mxu0 0
        %2036 = vmatprep.subr.bf16.mxu0 0
        %2037 = vmatpush1.bf16.msra.mxu0 0
        %2038 = vmatprep.mubr.bf16.mxu0 0
        %2039 = vmatmul.mubr.bf16.gmra.mrb[0].mxu0 %v1380
        %v2040 = vpop.f32.mrb[0].mxu0
        %v2041 = vadd.f32 %v1005, %v2040
        %v2042 = vpop.f32.mrb[0].mxu0
        %v2043 = vadd.f32 %v1009, %v2042
        %v2044 = vpop.f32.mrb[0].mxu0
        %v2045 = vadd.f32 %v1005, %v2044
        %v2046 = vpop.f32.mrb[0].mxu0
        %v2047 = vadd.f32 %v1009, %v2046
        %2048 = vmatprep.mubr.bf16.mxu0 0
        %2049 = vmatmul.mubr.bf16.gmra.mrb[0].mxu0 %v1383
        %v2050 = vpop.f32.mrb[0].mxu0
        %v2051 = vadd.f32 %v1005, %v2050
        %v2052 = vpop.f32.mrb[0].mxu0
        %v2053 = vadd.f32 %v1009, %v2052
        %v2054 = vpop.f32.mrb[0].mxu0
        %v2055 = vadd.f32 %v1005, %v2054
        %v2056 = vpop.f32.mrb[0].mxu0
        %v2057 = vadd.f32 %v1009, %v2056
        %2058 = vmatprep.mubr.bf16.mxu0 0
        %2059 = vmatmul.mubr.bf16.gmra.mrb[0].mxu0 %v1386
        %v2060 = vpop.f32.mrb[0].mxu0
        %v2061 = vadd.f32 %v1005, %v2060
        %v2062 = vpop.f32.mrb[0].mxu0
        %v2063 = vadd.f32 %v1009, %v2062
        %v2064 = vpop.f32.mrb[0].mxu0
        %v2065 = vadd.f32 %v1005, %v2064
        %v2066 = vpop.f32.mrb[0].mxu0
        %v2067 = vadd.f32 %v1009, %v2066
        %2068 = vmatprep.mubr.bf16.mxu0 0
        %2069 = vmatmul.mubr.bf16.gmra.mrb[0].mxu0 %v1389
        %v2070 = vpop.f32.mrb[0].mxu0
        %v2071 = vadd.f32 %v1005, %v2070
        %v2072 = vpop.f32.mrb[0].mxu0
        %v2073 = vadd.f32 %v1009, %v2072
        %v2074 = vpop.f32.mrb[0].mxu0
        %v2075 = vadd.f32 %v1005, %v2074
        %v2076 = vpop.f32.mrb[0].mxu0
        %v2077 = vadd.f32 %v1009, %v2076
        %2078 = vmatprep.mubr.bf16.mxu0 0
        %2079 = vmatmul.mubr.bf16.gmra.mrb[0].mxu0 %v1392
        %v2080 = vpop.f32.mrb[0].mxu0
        %v2081 = vadd.f32 %v1005, %v2080
        %v2082 = vpop.f32.mrb[0].mxu0
        %v2083 = vadd.f32 %v1009, %v2082
        %v2084 = vpop.f32.mrb[0].mxu0
        %v2085 = vadd.f32 %v1005, %v2084
        %v2086 = vpop.f32.mrb[0].mxu0
        %v2087 = vadd.f32 %v1009, %v2086
        %2088 = vmatprep.mubr.bf16.mxu0 0
        %2089 = vmatmul.mubr.bf16.gmra.mrb[0].mxu0 %v1395
        %v2090 = vpop.f32.mrb[0].mxu0
        %v2091 = vadd.f32 %v1005, %v2090
        %v2092 = vpop.f32.mrb[0].mxu0
        %v2093 = vadd.f32 %v1009, %v2092
        %v2094 = vpop.f32.mrb[0].mxu0
        %v2095 = vadd.f32 %v1005, %v2094
        %v2096 = vpop.f32.mrb[0].mxu0
        %v2097 = vadd.f32 %v1009, %v2096
        %2098 = vmatprep.mubr.bf16.mxu0 0
        %2099 = vmatmul.mubr.bf16.gmra.mrb[0].mxu0 %v1398
        %v2100 = vpop.f32.mrb[0].mxu0
        %v2101 = vadd.f32 %v1005, %v2100
        %v2102 = vpop.f32.mrb[0].mxu0
        %v2103 = vadd.f32 %v1009, %v2102
        %v2104 = vpop.f32.mrb[0].mxu0
        %v2105 = vadd.f32 %v1005, %v2104
        %v2106 = vpop.f32.mrb[0].mxu0
        %v2107 = vadd.f32 %v1009, %v2106
        %2108 = vmatprep.mubr.bf16.mxu0 0
        %2109 = vmatmul.mubr.bf16.gmra.mrb[0].mxu0 %v1401
        %v2110 = vpop.f32.mrb[0].mxu0
        %v2111 = vadd.f32 %v1005, %v2110
        %v2112 = vpop.f32.mrb[0].mxu0
        %v2113 = vadd.f32 %v1009, %v2112
        %v2114 = vpop.f32.mrb[0].mxu0
        %v2115 = vadd.f32 %v1005, %v2114
        %v2116 = vpop.f32.mrb[0].mxu0
        %v2117 = vadd.f32 %v1009, %v2116
        %2118 = vmatprep.mubr.bf16.mxu0 0
        %2119 = vmatmul.mubr.bf16.gmra.mrb[0].mxu0 %v1404
        %v2120 = vpop.f32.mrb[0].mxu0
        %v2121 = vadd.f32 %v1005, %v2120
        %v2122 = vpop.f32.mrb[0].mxu0
        %v2123 = vadd.f32 %v1009, %v2122
        %v2124 = vpop.f32.mrb[0].mxu0
        %v2125 = vadd.f32 %v1005, %v2124
        %v2126 = vpop.f32.mrb[0].mxu0
        %v2127 = vadd.f32 %v1009, %v2126
        %2128 = vmatprep.mubr.bf16.mxu0 0
        %2129 = vmatmul.mubr.bf16.gmra.mrb[0].mxu0 %v1407
        %v2130 = vpop.f32.mrb[0].mxu0
        %v2131 = vadd.f32 %v1005, %v2130
        %v2132 = vpop.f32.mrb[0].mxu0
        %v2133 = vadd.f32 %v1009, %v2132
        %v2134 = vpop.f32.mrb[0].mxu0
        %v2135 = vadd.f32 %v1005, %v2134
        %v2136 = vpop.f32.mrb[0].mxu0
        %v2137 = vadd.f32 %v1009, %v2136
        %2138 = vmatprep.mubr.bf16.mxu0 0
        %2139 = vmatmul.mubr.bf16.gmra.mrb[0].mxu0 %v1410
        %v2140 = vpop.f32.mrb[0].mxu0
        %v2141 = vadd.f32 %v1005, %v2140
        %v2142 = vpop.f32.mrb[0].mxu0
        %v2143 = vadd.f32 %v1009, %v2142
        %v2144 = vpop.f32.mrb[0].mxu0
        %v2145 = vadd.f32 %v1005, %v2144
        %v2146 = vpop.f32.mrb[0].mxu0
        %v2147 = vadd.f32 %v1009, %v2146
        %2148 = vmatprep.mubr.bf16.mxu0 0
        %2149 = vmatmul.mubr.bf16.gmra.mrb[0].mxu0 %v1413
        %v2150 = vpop.f32.mrb[0].mxu0
        %v2151 = vadd.f32 %v1005, %v2150
        %v2152 = vpop.f32.mrb[0].mxu0
        %v2153 = vadd.f32 %v1009, %v2152
        %v2154 = vpop.f32.mrb[0].mxu0
        %v2155 = vadd.f32 %v1005, %v2154
        %v2156 = vpop.f32.mrb[0].mxu0
        %v2157 = vadd.f32 %v1009, %v2156
        %2158 = vmatprep.mubr.bf16.mxu0 0
        %2159 = vmatmul.mubr.bf16.gmra.mrb[0].mxu0 %v1416
        %v2160 = vpop.f32.mrb[0].mxu0
        %v2161 = vadd.f32 %v1005, %v2160
        %v2162 = vpop.f32.mrb[0].mxu0
        %v2163 = vadd.f32 %v1009, %v2162
        %v2164 = vpop.f32.mrb[0].mxu0
        %v2165 = vadd.f32 %v1005, %v2164
        %v2166 = vpop.f32.mrb[0].mxu0
        %v2167 = vadd.f32 %v1009, %v2166
        %2168 = vmatprep.mubr.bf16.mxu0 0
        %2169 = vmatmul.mubr.bf16.gmra.mrb[0].mxu0 %v1419
        %v2170 = vpop.f32.mrb[0].mxu0
        %v2171 = vadd.f32 %v1005, %v2170
        %v2172 = vpop.f32.mrb[0].mxu0
        %v2173 = vadd.f32 %v1009, %v2172
        %v2174 = vpop.f32.mrb[0].mxu0
        %v2175 = vadd.f32 %v1005, %v2174
        %v2176 = vpop.f32.mrb[0].mxu0
        %v2177 = vadd.f32 %v1009, %v2176
        %2178 = vmatprep.mubr.bf16.mxu0 0
        %2179 = vmatmul.mubr.bf16.gmra.mrb[0].mxu0 %v1422
        %v2180 = vpop.f32.mrb[0].mxu0
        %v2181 = vadd.f32 %v1005, %v2180
        %v2182 = vpop.f32.mrb[0].mxu0
        %v2183 = vadd.f32 %v1009, %v2182
        %v2184 = vpop.f32.mrb[0].mxu0
        %v2185 = vadd.f32 %v1005, %v2184
        %v2186 = vpop.f32.mrb[0].mxu0
        %v2187 = vadd.f32 %v1009, %v2186
        %2188 = vmatprep.mubr.bf16.mxu0 0
        %2189 = vmatmul.mubr.bf16.gmra.mrb[0].mxu0 %v1425
        %v2190 = vpop.f32.mrb[0].mxu0
        %v2191 = vadd.f32 %v1005, %v2190
        %v2192 = vpop.f32.mrb[0].mxu0
        %v2193 = vadd.f32 %v1009, %v2192
        %v2194 = vpop.f32.mrb[0].mxu0
        %v2195 = vadd.f32 %v1005, %v2194
        %v2196 = vpop.f32.mrb[0].mxu0
        %v2197 = vadd.f32 %v1009, %v2196
        %2198 = vdwg.mxu0
        %2199 = vmatprep.subr.bf16.mxu0 %v1259
        %2200 = vmatpush1.bf16.msra.mxu0 %v1258
        %2201 = vmatprep.subr.bf16.mxu0 %v1275
        %2202 = vmatpush1.bf16.msra.mxu0 %v1274
        %2203 = vmatprep.subr.bf16.mxu0 %v1291
        %2204 = vmatpush1.bf16.msra.mxu0 %v1290
        %2205 = vmatprep.subr.bf16.mxu0 %v1307
        %2206 = vmatpush1.bf16.msra.mxu0 %v1306
        %2207 = vmatprep.subr.bf16.mxu0 0
        %2208 = vmatpush1.bf16.msra.mxu0 0
        %2209 = vmatprep.subr.bf16.mxu0 0
        %2210 = vmatpush1.bf16.msra.mxu0 0
        %2211 = vmatprep.subr.bf16.mxu0 0
        %2212 = vmatpush1.bf16.msra.mxu0 0
        %2213 = vmatprep.subr.bf16.mxu0 0
        %2214 = vmatpush1.bf16.msra.mxu0 0
        %2215 = vmatprep.subr.bf16.mxu0 0
        %2216 = vmatpush1.bf16.msra.mxu0 0
        %2217 = vmatprep.subr.bf16.mxu0 0
        %2218 = vmatpush1.bf16.msra.mxu0 0
        %2219 = vmatprep.subr.bf16.mxu0 0
        %2220 = vmatpush1.bf16.msra.mxu0 0
        %2221 = vmatprep.subr.bf16.mxu0 0
        %2222 = vmatpush1.bf16.msra.mxu0 0
        %2223 = vmatprep.subr.bf16.mxu0 0
        %2224 = vmatpush1.bf16.msra.mxu0 0
        %2225 = vmatprep.subr.bf16.mxu0 0
        %2226 = vmatpush1.bf16.msra.mxu0 0
        %2227 = vmatprep.subr.bf16.mxu0 0
        %2228 = vmatpush1.bf16.msra.mxu0 0
        %2229 = vmatprep.subr.bf16.mxu0 0
        %2230 = vmatpush1.bf16.msra.mxu0 0
        %2231 = vmatprep.mubr.bf16.mxu0 0
        %2232 = vmatmul.mubr.bf16.gmra.mrb[0].mxu0 %v1380
        %v2233 = vpop.f32.mrb[0].mxu0
        %v2234 = vadd.f32 %v1013, %v2233
        %v2235 = vpop.f32.mrb[0].mxu0
        %v2236 = vadd.f32 %v1017, %v2235
        %v2237 = vpop.f32.mrb[0].mxu0
        %v2238 = vadd.f32 %v1013, %v2237
        %v2239 = vpop.f32.mrb[0].mxu0
        %v2240 = vadd.f32 %v1017, %v2239
        %2241 = vmatprep.mubr.bf16.mxu0 0
        %2242 = vmatmul.mubr.bf16.gmra.mrb[0].mxu0 %v1383
        %v2243 = vpop.f32.mrb[0].mxu0
        %v2244 = vadd.f32 %v1013, %v2243
        %v2245 = vpop.f32.mrb[0].mxu0
        %v2246 = vadd.f32 %v1017, %v2245
        %v2247 = vpop.f32.mrb[0].mxu0
        %v2248 = vadd.f32 %v1013, %v2247
        %v2249 = vpop.f32.mrb[0].mxu0
        %v2250 = vadd.f32 %v1017, %v2249
        %2251 = vmatprep.mubr.bf16.mxu0 0
        %2252 = vmatmul.mubr.bf16.gmra.mrb[0].mxu0 %v1386
        %v2253 = vpop.f32.mrb[0].mxu0
        %v2254 = vadd.f32 %v1013, %v2253
        %v2255 = vpop.f32.mrb[0].mxu0
        %v2256 = vadd.f32 %v1017, %v2255
        %v2257 = vpop.f32.mrb[0].mxu0
        %v2258 = vadd.f32 %v1013, %v2257
        %v2259 = vpop.f32.mrb[0].mxu0
        %v2260 = vadd.f32 %v1017, %v2259
        %2261 = vmatprep.mubr.bf16.mxu0 0
        %2262 = vmatmul.mubr.bf16.gmra.mrb[0].mxu0 %v1389
        %v2263 = vpop.f32.mrb[0].mxu0
        %v2264 = vadd.f32 %v1013, %v2263
        %v2265 = vpop.f32.mrb[0].mxu0
        %v2266 = vadd.f32 %v1017, %v2265
        %v2267 = vpop.f32.mrb[0].mxu0
        %v2268 = vadd.f32 %v1013, %v2267
        %v2269 = vpop.f32.mrb[0].mxu0
        %v2270 = vadd.f32 %v1017, %v2269
        %2271 = vmatprep.mubr.bf16.mxu0 0
        %2272 = vmatmul.mubr.bf16.gmra.mrb[0].mxu0 %v1392
        %v2273 = vpop.f32.mrb[0].mxu0
        %v2274 = vadd.f32 %v1013, %v2273
        %v2275 = vpop.f32.mrb[0].mxu0
        %v2276 = vadd.f32 %v1017, %v2275
        %v2277 = vpop.f32.mrb[0].mxu0
        %v2278 = vadd.f32 %v1013, %v2277
        %v2279 = vpop.f32.mrb[0].mxu0
        %v2280 = vadd.f32 %v1017, %v2279
        %2281 = vmatprep.mubr.bf16.mxu0 0
        %2282 = vmatmul.mubr.bf16.gmra.mrb[0].mxu0 %v1395
        %v2283 = vpop.f32.mrb[0].mxu0
        %v2284 = vadd.f32 %v1013, %v2283
        %v2285 = vpop.f32.mrb[0].mxu0
        %v2286 = vadd.f32 %v1017, %v2285
        %v2287 = vpop.f32.mrb[0].mxu0
        %v2288 = vadd.f32 %v1013, %v2287
        %v2289 = vpop.f32.mrb[0].mxu0
        %v2290 = vadd.f32 %v1017, %v2289
        %2291 = vmatprep.mubr.bf16.mxu0 0
        %2292 = vmatmul.mubr.bf16.gmra.mrb[0].mxu0 %v1398
        %v2293 = vpop.f32.mrb[0].mxu0
        %v2294 = vadd.f32 %v1013, %v2293
        %v2295 = vpop.f32.mrb[0].mxu0
        %v2296 = vadd.f32 %v1017, %v2295
        %v2297 = vpop.f32.mrb[0].mxu0
        %v2298 = vadd.f32 %v1013, %v2297
        %v2299 = vpop.f32.mrb[0].mxu0
        %v2300 = vadd.f32 %v1017, %v2299
        %2301 = vmatprep.mubr.bf16.mxu0 0
        %2302 = vmatmul.mubr.bf16.gmra.mrb[0].mxu0 %v1401
        %v2303 = vpop.f32.mrb[0].mxu0
        %v2304 = vadd.f32 %v1013, %v2303
        %v2305 = vpop.f32.mrb[0].mxu0
        %v2306 = vadd.f32 %v1017, %v2305
        %v2307 = vpop.f32.mrb[0].mxu0
        %v2308 = vadd.f32 %v1013, %v2307
        %v2309 = vpop.f32.mrb[0].mxu0
        %v2310 = vadd.f32 %v1017, %v2309
        %2311 = vmatprep.mubr.bf16.mxu0 0
        %2312 = vmatmul.mubr.bf16.gmra.mrb[0].mxu0 %v1404
        %v2313 = vpop.f32.mrb[0].mxu0
        %v2314 = vadd.f32 %v1013, %v2313
        %v2315 = vpop.f32.mrb[0].mxu0
        %v2316 = vadd.f32 %v1017, %v2315
        %v2317 = vpop.f32.mrb[0].mxu0
        %v2318 = vadd.f32 %v1013, %v2317
        %v2319 = vpop.f32.mrb[0].mxu0
        %v2320 = vadd.f32 %v1017, %v2319
        %2321 = vmatprep.mubr.bf16.mxu0 0
        %2322 = vmatmul.mubr.bf16.gmra.mrb[0].mxu0 %v1407
        %v2323 = vpop.f32.mrb[0].mxu0
        %v2324 = vadd.f32 %v1013, %v2323
        %v2325 = vpop.f32.mrb[0].mxu0
        %v2326 = vadd.f32 %v1017, %v2325
        %v2327 = vpop.f32.mrb[0].mxu0
        %v2328 = vadd.f32 %v1013, %v2327
        %v2329 = vpop.f32.mrb[0].mxu0
        %v2330 = vadd.f32 %v1017, %v2329
        %2331 = vmatprep.mubr.bf16.mxu0 0
        %2332 = vmatmul.mubr.bf16.gmra.mrb[0].mxu0 %v1410
        %v2333 = vpop.f32.mrb[0].mxu0
        %v2334 = vadd.f32 %v1013, %v2333
        %v2335 = vpop.f32.mrb[0].mxu0
        %v2336 = vadd.f32 %v1017, %v2335
        %v2337 = vpop.f32.mrb[0].mxu0
        %v2338 = vadd.f32 %v1013, %v2337
        %v2339 = vpop.f32.mrb[0].mxu0
        %v2340 = vadd.f32 %v1017, %v2339
        %2341 = vmatprep.mubr.bf16.mxu0 0
        %2342 = vmatmul.mubr.bf16.gmra.mrb[0].mxu0 %v1413
        %v2343 = vpop.f32.mrb[0].mxu0
        %v2344 = vadd.f32 %v1013, %v2343
        %v2345 = vpop.f32.mrb[0].mxu0
        %v2346 = vadd.f32 %v1017, %v2345
        %v2347 = vpop.f32.mrb[0].mxu0
        %v2348 = vadd.f32 %v1013, %v2347
        %v2349 = vpop.f32.mrb[0].mxu0
        %v2350 = vadd.f32 %v1017, %v2349
        %2351 = vmatprep.mubr.bf16.mxu0 0
        %2352 = vmatmul.mubr.bf16.gmra.mrb[0].mxu0 %v1416
        %v2353 = vpop.f32.mrb[0].mxu0
        %v2354 = vadd.f32 %v1013, %v2353
        %v2355 = vpop.f32.mrb[0].mxu0
        %v2356 = vadd.f32 %v1017, %v2355
        %v2357 = vpop.f32.mrb[0].mxu0
        %v2358 = vadd.f32 %v1013, %v2357
        %v2359 = vpop.f32.mrb[0].mxu0
        %v2360 = vadd.f32 %v1017, %v2359
        %2361 = vmatprep.mubr.bf16.mxu0 0
        %2362 = vmatmul.mubr.bf16.gmra.mrb[0].mxu0 %v1419
        %v2363 = vpop.f32.mrb[0].mxu0
        %v2364 = vadd.f32 %v1013, %v2363
        %v2365 = vpop.f32.mrb[0].mxu0
        %v2366 = vadd.f32 %v1017, %v2365
        %v2367 = vpop.f32.mrb[0].mxu0
        %v2368 = vadd.f32 %v1013, %v2367
        %v2369 = vpop.f32.mrb[0].mxu0
        %v2370 = vadd.f32 %v1017, %v2369
        %2371 = vmatprep.mubr.bf16.mxu0 0
        %2372 = vmatmul.mubr.bf16.gmra.mrb[0].mxu0 %v1422
        %v2373 = vpop.f32.mrb[0].mxu0
        %v2374 = vadd.f32 %v1013, %v2373
        %v2375 = vpop.f32.mrb[0].mxu0
        %v2376 = vadd.f32 %v1017, %v2375
        %v2377 = vpop.f32.mrb[0].mxu0
        %v2378 = vadd.f32 %v1013, %v2377
        %v2379 = vpop.f32.mrb[0].mxu0
        %v2380 = vadd.f32 %v1017, %v2379
        %2381 = vmatprep.mubr.bf16.mxu0 0
        %2382 = vmatmul.mubr.bf16.gmra.mrb[0].mxu0 %v1425
        %v2383 = vpop.f32.mrb[0].mxu0
        %v2384 = vadd.f32 %v1013, %v2383
        %v2385 = vpop.f32.mrb[0].mxu0
        %v2386 = vadd.f32 %v1017, %v2385
        %v2387 = vpop.f32.mrb[0].mxu0
        %v2388 = vadd.f32 %v1013, %v2387
        %v2389 = vpop.f32.mrb[0].mxu0
        %v2390 = vadd.f32 %v1017, %v2389
        %2391 = vdwg.mxu0
        %2392 = vmatprep.subr.bf16.mxu0 %v1261
        %2393 = vmatpush1.bf16.msra.mxu0 %v1260
        %2394 = vmatprep.subr.bf16.mxu0 %v1277
        %2395 = vmatpush1.bf16.msra.mxu0 %v1276
        %2396 = vmatprep.subr.bf16.mxu0 %v1293
        %2397 = vmatpush1.bf16.msra.mxu0 %v1292
        %2398 = vmatprep.subr.bf16.mxu0 %v1309
        %2399 = vmatpush1.bf16.msra.mxu0 %v1308
        %2400 = vmatprep.subr.bf16.mxu0 0
        %2401 = vmatpush1.bf16.msra.mxu0 0
        %2402 = vmatprep.subr.bf16.mxu0 0
        %2403 = vmatpush1.bf16.msra.mxu0 0
        %2404 = vmatprep.subr.bf16.mxu0 0
        %2405 = vmatpush1.bf16.msra.mxu0 0
        %2406 = vmatprep.subr.bf16.mxu0 0
        %2407 = vmatpush1.bf16.msra.mxu0 0
        %2408 = vmatprep.subr.bf16.mxu0 0
        %2409 = vmatpush1.bf16.msra.mxu0 0
        %2410 = vmatprep.subr.bf16.mxu0 0
        %2411 = vmatpush1.bf16.msra.mxu0 0
        %2412 = vmatprep.subr.bf16.mxu0 0
        %2413 = vmatpush1.bf16.msra.mxu0 0
        %2414 = vmatprep.subr.bf16.mxu0 0
        %2415 = vmatpush1.bf16.msra.mxu0 0
        %2416 = vmatprep.subr.bf16.mxu0 0
        %2417 = vmatpush1.bf16.msra.mxu0 0
        %2418 = vmatprep.subr.bf16.mxu0 0
        %2419 = vmatpush1.bf16.msra.mxu0 0
        %2420 = vmatprep.subr.bf16.mxu0 0
        %2421 = vmatpush1.bf16.msra.mxu0 0
        %2422 = vmatprep.subr.bf16.mxu0 0
        %2423 = vmatpush1.bf16.msra.mxu0 0
        %2424 = vmatprep.mubr.bf16.mxu0 0
        %2425 = vmatmul.mubr.bf16.gmra.mrb[0].mxu0 %v1380
        %v2426 = vpop.f32.mrb[0].mxu0
        %v2427 = vadd.f32 %v1021, %v2426
        %v2428 = vpop.f32.mrb[0].mxu0
        %v2429 = vadd.f32 %v1025, %v2428
        %v2430 = vpop.f32.mrb[0].mxu0
        %v2431 = vadd.f32 %v1021, %v2430
        %v2432 = vpop.f32.mrb[0].mxu0
        %v2433 = vadd.f32 %v1025, %v2432
        %2434 = vmatprep.mubr.bf16.mxu0 0
        %2435 = vmatmul.mubr.bf16.gmra.mrb[0].mxu0 %v1383
        %v2436 = vpop.f32.mrb[0].mxu0
        %v2437 = vadd.f32 %v1021, %v2436
        %v2438 = vpop.f32.mrb[0].mxu0
        %v2439 = vadd.f32 %v1025, %v2438
        %v2440 = vpop.f32.mrb[0].mxu0
        %v2441 = vadd.f32 %v1021, %v2440
        %v2442 = vpop.f32.mrb[0].mxu0
        %v2443 = vadd.f32 %v1025, %v2442
        %2444 = vmatprep.mubr.bf16.mxu0 0
        %2445 = vmatmul.mubr.bf16.gmra.mrb[0].mxu0 %v1386
        %v2446 = vpop.f32.mrb[0].mxu0
        %v2447 = vadd.f32 %v1021, %v2446
        %v2448 = vpop.f32.mrb[0].mxu0
        %v2449 = vadd.f32 %v1025, %v2448
        %v2450 = vpop.f32.mrb[0].mxu0
        %v2451 = vadd.f32 %v1021, %v2450
        %v2452 = vpop.f32.mrb[0].mxu0
        %v2453 = vadd.f32 %v1025, %v2452
        %2454 = vmatprep.mubr.bf16.mxu0 0
        %2455 = vmatmul.mubr.bf16.gmra.mrb[0].mxu0 %v1389
        %v2456 = vpop.f32.mrb[0].mxu0
        %v2457 = vadd.f32 %v1021, %v2456
        %v2458 = vpop.f32.mrb[0].mxu0
        %v2459 = vadd.f32 %v1025, %v2458
        %v2460 = vpop.f32.mrb[0].mxu0
        %v2461 = vadd.f32 %v1021, %v2460
        %v2462 = vpop.f32.mrb[0].mxu0
        %v2463 = vadd.f32 %v1025, %v2462
        %2464 = vmatprep.mubr.bf16.mxu0 0
        %2465 = vmatmul.mubr.bf16.gmra.mrb[0].mxu0 %v1392
        %v2466 = vpop.f32.mrb[0].mxu0
        %v2467 = vadd.f32 %v1021, %v2466
        %v2468 = vpop.f32.mrb[0].mxu0
        %v2469 = vadd.f32 %v1025, %v2468
        %v2470 = vpop.f32.mrb[0].mxu0
        %v2471 = vadd.f32 %v1021, %v2470
        %v2472 = vpop.f32.mrb[0].mxu0
        %v2473 = vadd.f32 %v1025, %v2472
        %2474 = vmatprep.mubr.bf16.mxu0 0
        %2475 = vmatmul.mubr.bf16.gmra.mrb[0].mxu0 %v1395
        %v2476 = vpop.f32.mrb[0].mxu0
        %v2477 = vadd.f32 %v1021, %v2476
        %v2478 = vpop.f32.mrb[0].mxu0
        %v2479 = vadd.f32 %v1025, %v2478
        %v2480 = vpop.f32.mrb[0].mxu0
        %v2481 = vadd.f32 %v1021, %v2480
        %v2482 = vpop.f32.mrb[0].mxu0
        %v2483 = vadd.f32 %v1025, %v2482
        %2484 = vmatprep.mubr.bf16.mxu0 0
        %2485 = vmatmul.mubr.bf16.gmra.mrb[0].mxu0 %v1398
        %v2486 = vpop.f32.mrb[0].mxu0
        %v2487 = vadd.f32 %v1021, %v2486
        %v2488 = vpop.f32.mrb[0].mxu0
        %v2489 = vadd.f32 %v1025, %v2488
        %v2490 = vpop.f32.mrb[0].mxu0
        %v2491 = vadd.f32 %v1021, %v2490
        %v2492 = vpop.f32.mrb[0].mxu0
        %v2493 = vadd.f32 %v1025, %v2492
        %2494 = vmatprep.mubr.bf16.mxu0 0
        %2495 = vmatmul.mubr.bf16.gmra.mrb[0].mxu0 %v1401
        %v2496 = vpop.f32.mrb[0].mxu0
        %v2497 = vadd.f32 %v1021, %v2496
        %v2498 = vpop.f32.mrb[0].mxu0
        %v2499 = vadd.f32 %v1025, %v2498
        %v2500 = vpop.f32.mrb[0].mxu0
        %v2501 = vadd.f32 %v1021, %v2500
        %v2502 = vpop.f32.mrb[0].mxu0
        %v2503 = vadd.f32 %v1025, %v2502
        %2504 = vmatprep.mubr.bf16.mxu0 0
        %2505 = vmatmul.mubr.bf16.gmra.mrb[0].mxu0 %v1404
        %v2506 = vpop.f32.mrb[0].mxu0
        %v2507 = vadd.f32 %v1021, %v2506
        %v2508 = vpop.f32.mrb[0].mxu0
        %v2509 = vadd.f32 %v1025, %v2508
        %v2510 = vpop.f32.mrb[0].mxu0
        %v2511 = vadd.f32 %v1021, %v2510
        %v2512 = vpop.f32.mrb[0].mxu0
        %v2513 = vadd.f32 %v1025, %v2512
        %2514 = vmatprep.mubr.bf16.mxu0 0
        %2515 = vmatmul.mubr.bf16.gmra.mrb[0].mxu0 %v1407
        %v2516 = vpop.f32.mrb[0].mxu0
        %v2517 = vadd.f32 %v1021, %v2516
        %v2518 = vpop.f32.mrb[0].mxu0
        %v2519 = vadd.f32 %v1025, %v2518
        %v2520 = vpop.f32.mrb[0].mxu0
        %v2521 = vadd.f32 %v1021, %v2520
        %v2522 = vpop.f32.mrb[0].mxu0
        %v2523 = vadd.f32 %v1025, %v2522
        %2524 = vmatprep.mubr.bf16.mxu0 0
        %2525 = vmatmul.mubr.bf16.gmra.mrb[0].mxu0 %v1410
        %v2526 = vpop.f32.mrb[0].mxu0
        %v2527 = vadd.f32 %v1021, %v2526
        %v2528 = vpop.f32.mrb[0].mxu0
        %v2529 = vadd.f32 %v1025, %v2528
        %v2530 = vpop.f32.mrb[0].mxu0
        %v2531 = vadd.f32 %v1021, %v2530
        %v2532 = vpop.f32.mrb[0].mxu0
        %v2533 = vadd.f32 %v1025, %v2532
        %2534 = vmatprep.mubr.bf16.mxu0 0
        %2535 = vmatmul.mubr.bf16.gmra.mrb[0].mxu0 %v1413
        %v2536 = vpop.f32.mrb[0].mxu0
        %v2537 = vadd.f32 %v1021, %v2536
        %v2538 = vpop.f32.mrb[0].mxu0
        %v2539 = vadd.f32 %v1025, %v2538
        %v2540 = vpop.f32.mrb[0].mxu0
        %v2541 = vadd.f32 %v1021, %v2540
        %v2542 = vpop.f32.mrb[0].mxu0
        %v2543 = vadd.f32 %v1025, %v2542
        %2544 = vmatprep.mubr.bf16.mxu0 0
        %2545 = vmatmul.mubr.bf16.gmra.mrb[0].mxu0 %v1416
        %v2546 = vpop.f32.mrb[0].mxu0
        %v2547 = vadd.f32 %v1021, %v2546
        %v2548 = vpop.f32.mrb[0].mxu0
        %v2549 = vadd.f32 %v1025, %v2548
        %v2550 = vpop.f32.mrb[0].mxu0
        %v2551 = vadd.f32 %v1021, %v2550
        %v2552 = vpop.f32.mrb[0].mxu0
        %v2553 = vadd.f32 %v1025, %v2552
        %2554 = vmatprep.mubr.bf16.mxu0 0
        %2555 = vmatmul.mubr.bf16.gmra.mrb[0].mxu0 %v1419
        %v2556 = vpop.f32.mrb[0].mxu0
        %v2557 = vadd.f32 %v1021, %v2556
        %v2558 = vpop.f32.mrb[0].mxu0
        %v2559 = vadd.f32 %v1025, %v2558
        %v2560 = vpop.f32.mrb[0].mxu0
        %v2561 = vadd.f32 %v1021, %v2560
        %v2562 = vpop.f32.mrb[0].mxu0
        %v2563 = vadd.f32 %v1025, %v2562
        %2564 = vmatprep.mubr.bf16.mxu0 0
        %2565 = vmatmul.mubr.bf16.gmra.mrb[0].mxu0 %v1422
        %v2566 = vpop.f32.mrb[0].mxu0
        %v2567 = vadd.f32 %v1021, %v2566
        %v2568 = vpop.f32.mrb[0].mxu0
        %v2569 = vadd.f32 %v1025, %v2568
        %v2570 = vpop.f32.mrb[0].mxu0
        %v2571 = vadd.f32 %v1021, %v2570
        %v2572 = vpop.f32.mrb[0].mxu0
        %v2573 = vadd.f32 %v1025, %v2572
        %2574 = vmatprep.mubr.bf16.mxu0 0
        %2575 = vmatmul.mubr.bf16.gmra.mrb[0].mxu0 %v1425
        %v2576 = vpop.f32.mrb[0].mxu0
        %v2577 = vadd.f32 %v1021, %v2576
        %v2578 = vpop.f32.mrb[0].mxu0
        %v2579 = vadd.f32 %v1025, %v2578
        %v2580 = vpop.f32.mrb[0].mxu0
        %v2581 = vadd.f32 %v1021, %v2580
        %v2582 = vpop.f32.mrb[0].mxu0
        %v2583 = vadd.f32 %v1025, %v2582
        %2584 = vdwg.mxu0
        %2585 = vmatprep.subr.bf16.mxu0 %v1263
        %2586 = vmatpush1.bf16.msra.mxu0 %v1262
        %2587 = vmatprep.subr.bf16.mxu0 %v1279
        %2588 = vmatpush1.bf16.msra.mxu0 %v1278
        %2589 = vmatprep.subr.bf16.mxu0 %v1295
        %2590 = vmatpush1.bf16.msra.mxu0 %v1294
        %2591 = vmatprep.subr.bf16.mxu0 %v1311
        %2592 = vmatpush1.bf16.msra.mxu0 %v1310
        %2593 = vmatprep.subr.bf16.mxu0 0
        %2594 = vmatpush1.bf16.msra.mxu0 0
        %2595 = vmatprep.subr.bf16.mxu0 0
        %2596 = vmatpush1.bf16.msra.mxu0 0
        %2597 = vmatprep.subr.bf16.mxu0 0
        %2598 = vmatpush1.bf16.msra.mxu0 0
        %2599 = vmatprep.subr.bf16.mxu0 0
        %2600 = vmatpush1.bf16.msra.mxu0 0
        %2601 = vmatprep.subr.bf16.mxu0 0
        %2602 = vmatpush1.bf16.msra.mxu0 0
        %2603 = vmatprep.subr.bf16.mxu0 0
        %2604 = vmatpush1.bf16.msra.mxu0 0
        %2605 = vmatprep.subr.bf16.mxu0 0
        %2606 = vmatpush1.bf16.msra.mxu0 0
        %2607 = vmatprep.subr.bf16.mxu0 0
        %2608 = vmatpush1.bf16.msra.mxu0 0
        %2609 = vmatprep.subr.bf16.mxu0 0
        %2610 = vmatpush1.bf16.msra.mxu0 0
        %2611 = vmatprep.subr.bf16.mxu0 0
        %2612 = vmatpush1.bf16.msra.mxu0 0
        %2613 = vmatprep.subr.bf16.mxu0 0
        %2614 = vmatpush1.bf16.msra.mxu0 0
        %2615 = vmatprep.subr.bf16.mxu0 0
        %2616 = vmatpush1.bf16.msra.mxu0 0
        %2617 = vmatprep.mubr.bf16.mxu0 0
        %2618 = vmatmul.mubr.bf16.gmra.mrb[0].mxu0 %v1380
        %v2619 = vpop.f32.mrb[0].mxu0
        %v2620 = vadd.f32 %v1029, %v2619
        %v2621 = vpop.f32.mrb[0].mxu0
        %v2622 = vadd.f32 %v1033, %v2621
        %v2623 = vpop.f32.mrb[0].mxu0
        %v2624 = vadd.f32 %v1029, %v2623
        %v2625 = vpop.f32.mrb[0].mxu0
        %v2626 = vadd.f32 %v1033, %v2625
        %2627 = vmatprep.mubr.bf16.mxu0 0
        %2628 = vmatmul.mubr.bf16.gmra.mrb[0].mxu0 %v1383
        %v2629 = vpop.f32.mrb[0].mxu0
        %v2630 = vadd.f32 %v1029, %v2629
        %v2631 = vpop.f32.mrb[0].mxu0
        %v2632 = vadd.f32 %v1033, %v2631
        %v2633 = vpop.f32.mrb[0].mxu0
        %v2634 = vadd.f32 %v1029, %v2633
        %v2635 = vpop.f32.mrb[0].mxu0
        %v2636 = vadd.f32 %v1033, %v2635
        %2637 = vmatprep.mubr.bf16.mxu0 0
        %2638 = vmatmul.mubr.bf16.gmra.mrb[0].mxu0 %v1386
        %v2639 = vpop.f32.mrb[0].mxu0
        %v2640 = vadd.f32 %v1029, %v2639
        %v2641 = vpop.f32.mrb[0].mxu0
        %v2642 = vadd.f32 %v1033, %v2641
        %v2643 = vpop.f32.mrb[0].mxu0
        %v2644 = vadd.f32 %v1029, %v2643
        %v2645 = vpop.f32.mrb[0].mxu0
        %v2646 = vadd.f32 %v1033, %v2645
        %2647 = vmatprep.mubr.bf16.mxu0 0
        %2648 = vmatmul.mubr.bf16.gmra.mrb[0].mxu0 %v1389
        %v2649 = vpop.f32.mrb[0].mxu0
        %v2650 = vadd.f32 %v1029, %v2649
        %v2651 = vpop.f32.mrb[0].mxu0
        %v2652 = vadd.f32 %v1033, %v2651
        %v2653 = vpop.f32.mrb[0].mxu0
        %v2654 = vadd.f32 %v1029, %v2653
        %v2655 = vpop.f32.mrb[0].mxu0
        %v2656 = vadd.f32 %v1033, %v2655
        %2657 = vmatprep.mubr.bf16.mxu0 0
        %2658 = vmatmul.mubr.bf16.gmra.mrb[0].mxu0 %v1392
        %v2659 = vpop.f32.mrb[0].mxu0
        %v2660 = vadd.f32 %v1029, %v2659
        %v2661 = vpop.f32.mrb[0].mxu0
        %v2662 = vadd.f32 %v1033, %v2661
        %v2663 = vpop.f32.mrb[0].mxu0
        %v2664 = vadd.f32 %v1029, %v2663
        %v2665 = vpop.f32.mrb[0].mxu0
        %v2666 = vadd.f32 %v1033, %v2665
        %2667 = vmatprep.mubr.bf16.mxu0 0
        %2668 = vmatmul.mubr.bf16.gmra.mrb[0].mxu0 %v1395
        %v2669 = vpop.f32.mrb[0].mxu0
        %v2670 = vadd.f32 %v1029, %v2669
        %v2671 = vpop.f32.mrb[0].mxu0
        %v2672 = vadd.f32 %v1033, %v2671
        %v2673 = vpop.f32.mrb[0].mxu0
        %v2674 = vadd.f32 %v1029, %v2673
        %v2675 = vpop.f32.mrb[0].mxu0
        %v2676 = vadd.f32 %v1033, %v2675
        %2677 = vmatprep.mubr.bf16.mxu0 0
        %2678 = vmatmul.mubr.bf16.gmra.mrb[0].mxu0 %v1398
        %v2679 = vpop.f32.mrb[0].mxu0
        %v2680 = vadd.f32 %v1029, %v2679
        %v2681 = vpop.f32.mrb[0].mxu0
        %v2682 = vadd.f32 %v1033, %v2681
        %v2683 = vpop.f32.mrb[0].mxu0
        %v2684 = vadd.f32 %v1029, %v2683
        %v2685 = vpop.f32.mrb[0].mxu0
        %v2686 = vadd.f32 %v1033, %v2685
        %2687 = vmatprep.mubr.bf16.mxu0 0
        %2688 = vmatmul.mubr.bf16.gmra.mrb[0].mxu0 %v1401
        %v2689 = vpop.f32.mrb[0].mxu0
        %v2690 = vadd.f32 %v1029, %v2689
        %v2691 = vpop.f32.mrb[0].mxu0
        %v2692 = vadd.f32 %v1033, %v2691
        %v2693 = vpop.f32.mrb[0].mxu0
        %v2694 = vadd.f32 %v1029, %v2693
        %v2695 = vpop.f32.mrb[0].mxu0
        %v2696 = vadd.f32 %v1033, %v2695
        %2697 = vmatprep.mubr.bf16.mxu0 0
        %2698 = vmatmul.mubr.bf16.gmra.mrb[0].mxu0 %v1404
        %v2699 = vpop.f32.mrb[0].mxu0
        %v2700 = vadd.f32 %v1029, %v2699
        %v2701 = vpop.f32.mrb[0].mxu0
        %v2702 = vadd.f32 %v1033, %v2701
        %v2703 = vpop.f32.mrb[0].mxu0
        %v2704 = vadd.f32 %v1029, %v2703
        %v2705 = vpop.f32.mrb[0].mxu0
        %v2706 = vadd.f32 %v1033, %v2705
        %2707 = vmatprep.mubr.bf16.mxu0 0
        %2708 = vmatmul.mubr.bf16.gmra.mrb[0].mxu0 %v1407
        %v2709 = vpop.f32.mrb[0].mxu0
        %v2710 = vadd.f32 %v1029, %v2709
        %v2711 = vpop.f32.mrb[0].mxu0
        %v2712 = vadd.f32 %v1033, %v2711
        %v2713 = vpop.f32.mrb[0].mxu0
        %v2714 = vadd.f32 %v1029, %v2713
        %v2715 = vpop.f32.mrb[0].mxu0
        %v2716 = vadd.f32 %v1033, %v2715
        %2717 = vmatprep.mubr.bf16.mxu0 0
        %2718 = vmatmul.mubr.bf16.gmra.mrb[0].mxu0 %v1410
        %v2719 = vpop.f32.mrb[0].mxu0
        %v2720 = vadd.f32 %v1029, %v2719
        %v2721 = vpop.f32.mrb[0].mxu0
        %v2722 = vadd.f32 %v1033, %v2721
        %v2723 = vpop.f32.mrb[0].mxu0
        %v2724 = vadd.f32 %v1029, %v2723
        %v2725 = vpop.f32.mrb[0].mxu0
        %v2726 = vadd.f32 %v1033, %v2725
        %2727 = vmatprep.mubr.bf16.mxu0 0
        %2728 = vmatmul.mubr.bf16.gmra.mrb[0].mxu0 %v1413
        %v2729 = vpop.f32.mrb[0].mxu0
        %v2730 = vadd.f32 %v1029, %v2729
        %v2731 = vpop.f32.mrb[0].mxu0
        %v2732 = vadd.f32 %v1033, %v2731
        %v2733 = vpop.f32.mrb[0].mxu0
        %v2734 = vadd.f32 %v1029, %v2733
        %v2735 = vpop.f32.mrb[0].mxu0
        %v2736 = vadd.f32 %v1033, %v2735
        %2737 = vmatprep.mubr.bf16.mxu0 0
        %2738 = vmatmul.mubr.bf16.gmra.mrb[0].mxu0 %v1416
        %v2739 = vpop.f32.mrb[0].mxu0
        %v2740 = vadd.f32 %v1029, %v2739
        %v2741 = vpop.f32.mrb[0].mxu0
        %v2742 = vadd.f32 %v1033, %v2741
        %v2743 = vpop.f32.mrb[0].mxu0
        %v2744 = vadd.f32 %v1029, %v2743
        %v2745 = vpop.f32.mrb[0].mxu0
        %v2746 = vadd.f32 %v1033, %v2745
        %2747 = vmatprep.mubr.bf16.mxu0 0
        %2748 = vmatmul.mubr.bf16.gmra.mrb[0].mxu0 %v1419
        %v2749 = vpop.f32.mrb[0].mxu0
        %v2750 = vadd.f32 %v1029, %v2749
        %v2751 = vpop.f32.mrb[0].mxu0
        %v2752 = vadd.f32 %v1033, %v2751
        %v2753 = vpop.f32.mrb[0].mxu0
        %v2754 = vadd.f32 %v1029, %v2753
        %v2755 = vpop.f32.mrb[0].mxu0
        %v2756 = vadd.f32 %v1033, %v2755
        %2757 = vmatprep.mubr.bf16.mxu0 0
        %2758 = vmatmul.mubr.bf16.gmra.mrb[0].mxu0 %v1422
        %v2759 = vpop.f32.mrb[0].mxu0
        %v2760 = vadd.f32 %v1029, %v2759
        %v2761 = vpop.f32.mrb[0].mxu0
        %v2762 = vadd.f32 %v1033, %v2761
        %v2763 = vpop.f32.mrb[0].mxu0
        %v2764 = vadd.f32 %v1029, %v2763
        %v2765 = vpop.f32.mrb[0].mxu0
        %v2766 = vadd.f32 %v1033, %v2765
        %2767 = vmatprep.mubr.bf16.mxu0 0
        %2768 = vmatmul.mubr.bf16.gmra.mrb[0].mxu0 %v1425
        %v2769 = vpop.f32.mrb[0].mxu0
        %v2770 = vadd.f32 %v1029, %v2769
        %v2771 = vpop.f32.mrb[0].mxu0
        %v2772 = vadd.f32 %v1033, %v2771
        %v2773 = vpop.f32.mrb[0].mxu0
        %v2774 = vadd.f32 %v1029, %v2773
        %v2775 = vpop.f32.mrb[0].mxu0
        %v2776 = vadd.f32 %v1033, %v2775
        %2777 = vdwg.mxu0
        %2778 = vmatprep.subr.bf16.mxu0 %v1265
        %2779 = vmatpush1.bf16.msra.mxu0 %v1264
        %2780 = vmatprep.subr.bf16.mxu0 %v1281
        %2781 = vmatpush1.bf16.msra.mxu0 %v1280
        %2782 = vmatprep.subr.bf16.mxu0 %v1297
        %2783 = vmatpush1.bf16.msra.mxu0 %v1296
        %2784 = vmatprep.subr.bf16.mxu0 %v1313
        %2785 = vmatpush1.bf16.msra.mxu0 %v1312
        %2786 = vmatprep.subr.bf16.mxu0 0
        %2787 = vmatpush1.bf16.msra.mxu0 0
        %2788 = vmatprep.subr.bf16.mxu0 0
        %2789 = vmatpush1.bf16.msra.mxu0 0
        %2790 = vmatprep.subr.bf16.mxu0 0
        %2791 = vmatpush1.bf16.msra.mxu0 0
        %2792 = vmatprep.subr.bf16.mxu0 0
        %2793 = vmatpush1.bf16.msra.mxu0 0
        %2794 = vmatprep.subr.bf16.mxu0 0
        %2795 = vmatpush1.bf16.msra.mxu0 0
        %2796 = vmatprep.subr.bf16.mxu0 0
        %2797 = vmatpush1.bf16.msra.mxu0 0
        %2798 = vmatprep.subr.bf16.mxu0 0
        %2799 = vmatpush1.bf16.msra.mxu0 0
        %2800 = vmatprep.subr.bf16.mxu0 0
        %2801 = vmatpush1.bf16.msra.mxu0 0
        %2802 = vmatprep.subr.bf16.mxu0 0
        %2803 = vmatpush1.bf16.msra.mxu0 0
        %2804 = vmatprep.subr.bf16.mxu0 0
        %2805 = vmatpush1.bf16.msra.mxu0 0
        %2806 = vmatprep.subr.bf16.mxu0 0
        %2807 = vmatpush1.bf16.msra.mxu0 0
        %2808 = vmatprep.subr.bf16.mxu0 0
        %2809 = vmatpush1.bf16.msra.mxu0 0
        %2810 = vmatprep.mubr.bf16.mxu0 0
        %2811 = vmatmul.mubr.bf16.gmra.mrb[0].mxu0 %v1380
        %v2812 = vpop.f32.mrb[0].mxu0
        %v2813 = vadd.f32 %v1037, %v2812
        %v2814 = vpop.f32.mrb[0].mxu0
        %v2815 = vadd.f32 %v1041, %v2814
        %v2816 = vpop.f32.mrb[0].mxu0
        %v2817 = vadd.f32 %v1037, %v2816
        %v2818 = vpop.f32.mrb[0].mxu0
        %v2819 = vadd.f32 %v1041, %v2818
        %2820 = vmatprep.mubr.bf16.mxu0 0
        %2821 = vmatmul.mubr.bf16.gmra.mrb[0].mxu0 %v1383
        %v2822 = vpop.f32.mrb[0].mxu0
        %v2823 = vadd.f32 %v1037, %v2822
        %v2824 = vpop.f32.mrb[0].mxu0
        %v2825 = vadd.f32 %v1041, %v2824
        %v2826 = vpop.f32.mrb[0].mxu0
        %v2827 = vadd.f32 %v1037, %v2826
        %v2828 = vpop.f32.mrb[0].mxu0
        %v2829 = vadd.f32 %v1041, %v2828
        %2830 = vmatprep.mubr.bf16.mxu0 0
        %2831 = vmatmul.mubr.bf16.gmra.mrb[0].mxu0 %v1386
        %v2832 = vpop.f32.mrb[0].mxu0
        %v2833 = vadd.f32 %v1037, %v2832
        %v2834 = vpop.f32.mrb[0].mxu0
        %v2835 = vadd.f32 %v1041, %v2834
        %v2836 = vpop.f32.mrb[0].mxu0
        %v2837 = vadd.f32 %v1037, %v2836
        %v2838 = vpop.f32.mrb[0].mxu0
        %v2839 = vadd.f32 %v1041, %v2838
        %2840 = vmatprep.mubr.bf16.mxu0 0
        %2841 = vmatmul.mubr.bf16.gmra.mrb[0].mxu0 %v1389
        %v2842 = vpop.f32.mrb[0].mxu0
        %v2843 = vadd.f32 %v1037, %v2842
        %v2844 = vpop.f32.mrb[0].mxu0
        %v2845 = vadd.f32 %v1041, %v2844
        %v2846 = vpop.f32.mrb[0].mxu0
        %v2847 = vadd.f32 %v1037, %v2846
        %v2848 = vpop.f32.mrb[0].mxu0
        %v2849 = vadd.f32 %v1041, %v2848
        %2850 = vmatprep.mubr.bf16.mxu0 0
        %2851 = vmatmul.mubr.bf16.gmra.mrb[0].mxu0 %v1392
        %v2852 = vpop.f32.mrb[0].mxu0
        %v2853 = vadd.f32 %v1037, %v2852
        %v2854 = vpop.f32.mrb[0].mxu0
        %v2855 = vadd.f32 %v1041, %v2854
        %v2856 = vpop.f32.mrb[0].mxu0
        %v2857 = vadd.f32 %v1037, %v2856
        %v2858 = vpop.f32.mrb[0].mxu0
        %v2859 = vadd.f32 %v1041, %v2858
        %2860 = vmatprep.mubr.bf16.mxu0 0
        %2861 = vmatmul.mubr.bf16.gmra.mrb[0].mxu0 %v1395
        %v2862 = vpop.f32.mrb[0].mxu0
        %v2863 = vadd.f32 %v1037, %v2862
        %v2864 = vpop.f32.mrb[0].mxu0
        %v2865 = vadd.f32 %v1041, %v2864
        %v2866 = vpop.f32.mrb[0].mxu0
        %v2867 = vadd.f32 %v1037, %v2866
        %v2868 = vpop.f32.mrb[0].mxu0
        %v2869 = vadd.f32 %v1041, %v2868
        %2870 = vmatprep.mubr.bf16.mxu0 0
        %2871 = vmatmul.mubr.bf16.gmra.mrb[0].mxu0 %v1398
        %v2872 = vpop.f32.mrb[0].mxu0
        %v2873 = vadd.f32 %v1037, %v2872
        %v2874 = vpop.f32.mrb[0].mxu0
        %v2875 = vadd.f32 %v1041, %v2874
        %v2876 = vpop.f32.mrb[0].mxu0
        %v2877 = vadd.f32 %v1037, %v2876
        %v2878 = vpop.f32.mrb[0].mxu0
        %v2879 = vadd.f32 %v1041, %v2878
        %2880 = vmatprep.mubr.bf16.mxu0 0
        %2881 = vmatmul.mubr.bf16.gmra.mrb[0].mxu0 %v1401
        %v2882 = vpop.f32.mrb[0].mxu0
        %v2883 = vadd.f32 %v1037, %v2882
        %v2884 = vpop.f32.mrb[0].mxu0
        %v2885 = vadd.f32 %v1041, %v2884
        %v2886 = vpop.f32.mrb[0].mxu0
        %v2887 = vadd.f32 %v1037, %v2886
        %v2888 = vpop.f32.mrb[0].mxu0
        %v2889 = vadd.f32 %v1041, %v2888
        %2890 = vmatprep.mubr.bf16.mxu0 0
        %2891 = vmatmul.mubr.bf16.gmra.mrb[0].mxu0 %v1404
        %v2892 = vpop.f32.mrb[0].mxu0
        %v2893 = vadd.f32 %v1037, %v2892
        %v2894 = vpop.f32.mrb[0].mxu0
        %v2895 = vadd.f32 %v1041, %v2894
        %v2896 = vpop.f32.mrb[0].mxu0
        %v2897 = vadd.f32 %v1037, %v2896
        %v2898 = vpop.f32.mrb[0].mxu0
        %v2899 = vadd.f32 %v1041, %v2898
        %2900 = vmatprep.mubr.bf16.mxu0 0
        %2901 = vmatmul.mubr.bf16.gmra.mrb[0].mxu0 %v1407
        %v2902 = vpop.f32.mrb[0].mxu0
        %v2903 = vadd.f32 %v1037, %v2902
        %v2904 = vpop.f32.mrb[0].mxu0
        %v2905 = vadd.f32 %v1041, %v2904
        %v2906 = vpop.f32.mrb[0].mxu0
        %v2907 = vadd.f32 %v1037, %v2906
        %v2908 = vpop.f32.mrb[0].mxu0
        %v2909 = vadd.f32 %v1041, %v2908
        %2910 = vmatprep.mubr.bf16.mxu0 0
        %2911 = vmatmul.mubr.bf16.gmra.mrb[0].mxu0 %v1410
        %v2912 = vpop.f32.mrb[0].mxu0
        %v2913 = vadd.f32 %v1037, %v2912
        %v2914 = vpop.f32.mrb[0].mxu0
        %v2915 = vadd.f32 %v1041, %v2914
        %v2916 = vpop.f32.mrb[0].mxu0
        %v2917 = vadd.f32 %v1037, %v2916
        %v2918 = vpop.f32.mrb[0].mxu0
        %v2919 = vadd.f32 %v1041, %v2918
        %2920 = vmatprep.mubr.bf16.mxu0 0
        %2921 = vmatmul.mubr.bf16.gmra.mrb[0].mxu0 %v1413
        %v2922 = vpop.f32.mrb[0].mxu0
        %v2923 = vadd.f32 %v1037, %v2922
        %v2924 = vpop.f32.mrb[0].mxu0
        %v2925 = vadd.f32 %v1041, %v2924
        %v2926 = vpop.f32.mrb[0].mxu0
        %v2927 = vadd.f32 %v1037, %v2926
        %v2928 = vpop.f32.mrb[0].mxu0
        %v2929 = vadd.f32 %v1041, %v2928
        %2930 = vmatprep.mubr.bf16.mxu0 0
        %2931 = vmatmul.mubr.bf16.gmra.mrb[0].mxu0 %v1416
        %v2932 = vpop.f32.mrb[0].mxu0
        %v2933 = vadd.f32 %v1037, %v2932
        %v2934 = vpop.f32.mrb[0].mxu0
        %v2935 = vadd.f32 %v1041, %v2934
        %v2936 = vpop.f32.mrb[0].mxu0
        %v2937 = vadd.f32 %v1037, %v2936
        %v2938 = vpop.f32.mrb[0].mxu0
        %v2939 = vadd.f32 %v1041, %v2938
        %2940 = vmatprep.mubr.bf16.mxu0 0
        %2941 = vmatmul.mubr.bf16.gmra.mrb[0].mxu0 %v1419
        %v2942 = vpop.f32.mrb[0].mxu0
        %v2943 = vadd.f32 %v1037, %v2942
        %v2944 = vpop.f32.mrb[0].mxu0
        %v2945 = vadd.f32 %v1041, %v2944
        %v2946 = vpop.f32.mrb[0].mxu0
        %v2947 = vadd.f32 %v1037, %v2946
        %v2948 = vpop.f32.mrb[0].mxu0
        %v2949 = vadd.f32 %v1041, %v2948
        %2950 = vmatprep.mubr.bf16.mxu0 0
        %2951 = vmatmul.mubr.bf16.gmra.mrb[0].mxu0 %v1422
        %v2952 = vpop.f32.mrb[0].mxu0
        %v2953 = vadd.f32 %v1037, %v2952
        %v2954 = vpop.f32.mrb[0].mxu0
        %v2955 = vadd.f32 %v1041, %v2954
        %v2956 = vpop.f32.mrb[0].mxu0
        %v2957 = vadd.f32 %v1037, %v2956
        %v2958 = vpop.f32.mrb[0].mxu0
        %v2959 = vadd.f32 %v1041, %v2958
        %2960 = vmatprep.mubr.bf16.mxu0 0
        %2961 = vmatmul.mubr.bf16.gmra.mrb[0].mxu0 %v1425
        %v2962 = vpop.f32.mrb[0].mxu0
        %v2963 = vadd.f32 %v1037, %v2962
        %v2964 = vpop.f32.mrb[0].mxu0
        %v2965 = vadd.f32 %v1041, %v2964
        %v2966 = vpop.f32.mrb[0].mxu0
        %v2967 = vadd.f32 %v1037, %v2966
        %v2968 = vpop.f32.mrb[0].mxu0
        %v2969 = vadd.f32 %v1041, %v2968
        %2970 = vdwg.mxu0
        %v2971 = vxor.u32 %v1462, 2147483648
        %v2972 = vxor.u32 %v1464, 2147483648
        %v2973 = vxor.u32 %v1655, 2147483648
        %v2974 = vxor.u32 %v1657, 2147483648
        %v2975 = vxor.u32 %v1848, 2147483648
        %v2976 = vxor.u32 %v1850, 2147483648
        %v2977 = vxor.u32 %v2041, 2147483648
        %v2978 = vxor.u32 %v2043, 2147483648
        %v2979 = vxor.u32 %v2234, 2147483648
        %v2980 = vxor.u32 %v2236, 2147483648
        %v2981 = vxor.u32 %v2427, 2147483648
        %v2982 = vxor.u32 %v2429, 2147483648
        %v2983 = vxor.u32 %v2620, 2147483648
        %v2984 = vxor.u32 %v2622, 2147483648
        %v2985 = vxor.u32 %v2813, 2147483648
        %v2986 = vxor.u32 %v2815, 2147483648
        %v2987 = vxor.u32 %v1466, 2147483648
        %v2988 = vxor.u32 %v1468, 2147483648
        %v2989 = vxor.u32 %v1659, 2147483648
        %v2990 = vxor.u32 %v1661, 2147483648
        %v2991 = vxor.u32 %v1852, 2147483648
        %v2992 = vxor.u32 %v1854, 2147483648
        %v2993 = vxor.u32 %v2045, 2147483648
        %v2994 = vxor.u32 %v2047, 2147483648
        %v2995 = vxor.u32 %v2238, 2147483648
        %v2996 = vxor.u32 %v2240, 2147483648
        %v2997 = vxor.u32 %v2431, 2147483648
        %v2998 = vxor.u32 %v2433, 2147483648
        %v2999 = vxor.u32 %v2624, 2147483648
        %v3000 = vxor.u32 %v2626, 2147483648
        %v3001 = vxor.u32 %v2817, 2147483648
        %v3002 = vxor.u32 %v2819, 2147483648
        %v3003 = vxor.u32 %v1472, 2147483648
        %v3004 = vxor.u32 %v1474, 2147483648
        %v3005 = vxor.u32 %v1665, 2147483648
        %v3006 = vxor.u32 %v1667, 2147483648
        %v3007 = vxor.u32 %v1858, 2147483648
        %v3008 = vxor.u32 %v1860, 2147483648
        %v3009 = vxor.u32 %v2051, 2147483648
        %v3010 = vxor.u32 %v2053, 2147483648
        %v3011 = vxor.u32 %v2244, 2147483648
        %v3012 = vxor.u32 %v2246, 2147483648
        %v3013 = vxor.u32 %v2437, 2147483648
        %v3014 = vxor.u32 %v2439, 2147483648
        %v3015 = vxor.u32 %v2630, 2147483648
        %v3016 = vxor.u32 %v2632, 2147483648
        %v3017 = vxor.u32 %v2823, 2147483648
        %v3018 = vxor.u32 %v2825, 2147483648
        %v3019 = vxor.u32 %v1476, 2147483648
        %v3020 = vxor.u32 %v1478, 2147483648
        %v3021 = vxor.u32 %v1669, 2147483648
        %v3022 = vxor.u32 %v1671, 2147483648
        %v3023 = vxor.u32 %v1862, 2147483648
        %v3024 = vxor.u32 %v1864, 2147483648
        %v3025 = vxor.u32 %v2055, 2147483648
        %v3026 = vxor.u32 %v2057, 2147483648
        %v3027 = vxor.u32 %v2248, 2147483648
        %v3028 = vxor.u32 %v2250, 2147483648
        %v3029 = vxor.u32 %v2441, 2147483648
        %v3030 = vxor.u32 %v2443, 2147483648
        %v3031 = vxor.u32 %v2634, 2147483648
        %v3032 = vxor.u32 %v2636, 2147483648
        %v3033 = vxor.u32 %v2827, 2147483648
        %v3034 = vxor.u32 %v2829, 2147483648
        %v3035 = vxor.u32 %v1482, 2147483648
        %v3036 = vxor.u32 %v1484, 2147483648
        %v3037 = vxor.u32 %v1675, 2147483648
        %v3038 = vxor.u32 %v1677, 2147483648
        %v3039 = vxor.u32 %v1868, 2147483648
        %v3040 = vxor.u32 %v1870, 2147483648
        %v3041 = vxor.u32 %v2061, 2147483648
        %v3042 = vxor.u32 %v2063, 2147483648
        %v3043 = vxor.u32 %v2254, 2147483648
        %v3044 = vxor.u32 %v2256, 2147483648
        %v3045 = vxor.u32 %v2447, 2147483648
        %v3046 = vxor.u32 %v2449, 2147483648
        %v3047 = vxor.u32 %v2640, 2147483648
        %v3048 = vxor.u32 %v2642, 2147483648
        %v3049 = vxor.u32 %v2833, 2147483648
        %v3050 = vxor.u32 %v2835, 2147483648
        %v3051 = vxor.u32 %v1486, 2147483648
        %v3052 = vxor.u32 %v1488, 2147483648
        %v3053 = vxor.u32 %v1679, 2147483648
        %v3054 = vxor.u32 %v1681, 2147483648
        %v3055 = vxor.u32 %v1872, 2147483648
        %v3056 = vxor.u32 %v1874, 2147483648
        %v3057 = vxor.u32 %v2065, 2147483648
        %v3058 = vxor.u32 %v2067, 2147483648
        %v3059 = vxor.u32 %v2258, 2147483648
        %v3060 = vxor.u32 %v2260, 2147483648
        %v3061 = vxor.u32 %v2451, 2147483648
        %v3062 = vxor.u32 %v2453, 2147483648
        %v3063 = vxor.u32 %v2644, 2147483648
        %v3064 = vxor.u32 %v2646, 2147483648
        %v3065 = vxor.u32 %v2837, 2147483648
        %v3066 = vxor.u32 %v2839, 2147483648
        %v3067 = vxor.u32 %v1492, 2147483648
        %v3068 = vxor.u32 %v1494, 2147483648
        %v3069 = vxor.u32 %v1685, 2147483648
        %v3070 = vxor.u32 %v1687, 2147483648
        %v3071 = vxor.u32 %v1878, 2147483648
        %v3072 = vxor.u32 %v1880, 2147483648
        %v3073 = vxor.u32 %v2071, 2147483648
        %v3074 = vxor.u32 %v2073, 2147483648
        %v3075 = vxor.u32 %v2264, 2147483648
        %v3076 = vxor.u32 %v2266, 2147483648
        %v3077 = vxor.u32 %v2457, 2147483648
        %v3078 = vxor.u32 %v2459, 2147483648
        %v3079 = vxor.u32 %v2650, 2147483648
        %v3080 = vxor.u32 %v2652, 2147483648
        %v3081 = vxor.u32 %v2843, 2147483648
        %v3082 = vxor.u32 %v2845, 2147483648
        %v3083 = vxor.u32 %v1496, 2147483648
        %v3084 = vxor.u32 %v1498, 2147483648
        %v3085 = vxor.u32 %v1689, 2147483648
        %v3086 = vxor.u32 %v1691, 2147483648
        %v3087 = vxor.u32 %v1882, 2147483648
        %v3088 = vxor.u32 %v1884, 2147483648
        %v3089 = vxor.u32 %v2075, 2147483648
        %v3090 = vxor.u32 %v2077, 2147483648
        %v3091 = vxor.u32 %v2268, 2147483648
        %v3092 = vxor.u32 %v2270, 2147483648
        %v3093 = vxor.u32 %v2461, 2147483648
        %v3094 = vxor.u32 %v2463, 2147483648
        %v3095 = vxor.u32 %v2654, 2147483648
        %v3096 = vxor.u32 %v2656, 2147483648
        %v3097 = vxor.u32 %v2847, 2147483648
        %v3098 = vxor.u32 %v2849, 2147483648
        %v3099 = vxor.u32 %v1502, 2147483648
        %v3100 = vxor.u32 %v1504, 2147483648
        %v3101 = vxor.u32 %v1695, 2147483648
        %v3102 = vxor.u32 %v1697, 2147483648
        %v3103 = vxor.u32 %v1888, 2147483648
        %v3104 = vxor.u32 %v1890, 2147483648
        %v3105 = vxor.u32 %v2081, 2147483648
        %v3106 = vxor.u32 %v2083, 2147483648
        %v3107 = vxor.u32 %v2274, 2147483648
        %v3108 = vxor.u32 %v2276, 2147483648
        %v3109 = vxor.u32 %v2467, 2147483648
        %v3110 = vxor.u32 %v2469, 2147483648
        %v3111 = vxor.u32 %v2660, 2147483648
        %v3112 = vxor.u32 %v2662, 2147483648
        %v3113 = vxor.u32 %v2853, 2147483648
        %v3114 = vxor.u32 %v2855, 2147483648
        %v3115 = vxor.u32 %v1506, 2147483648
        %v3116 = vxor.u32 %v1508, 2147483648
        %v3117 = vxor.u32 %v1699, 2147483648
        %v3118 = vxor.u32 %v1701, 2147483648
        %v3119 = vxor.u32 %v1892, 2147483648
        %v3120 = vxor.u32 %v1894, 2147483648
        %v3121 = vxor.u32 %v2085, 2147483648
        %v3122 = vxor.u32 %v2087, 2147483648
        %v3123 = vxor.u32 %v2278, 2147483648
        %v3124 = vxor.u32 %v2280, 2147483648
        %v3125 = vxor.u32 %v2471, 2147483648
        %v3126 = vxor.u32 %v2473, 2147483648
        %v3127 = vxor.u32 %v2664, 2147483648
        %v3128 = vxor.u32 %v2666, 2147483648
        %v3129 = vxor.u32 %v2857, 2147483648
        %v3130 = vxor.u32 %v2859, 2147483648
        %v3131 = vxor.u32 %v1512, 2147483648
        %v3132 = vxor.u32 %v1514, 2147483648
        %v3133 = vxor.u32 %v1705, 2147483648
        %v3134 = vxor.u32 %v1707, 2147483648
        %v3135 = vxor.u32 %v1898, 2147483648
        %v3136 = vxor.u32 %v1900, 2147483648
        %v3137 = vxor.u32 %v2091, 2147483648
        %v3138 = vxor.u32 %v2093, 2147483648
        %v3139 = vxor.u32 %v2284, 2147483648
        %v3140 = vxor.u32 %v2286, 2147483648
        %v3141 = vxor.u32 %v2477, 2147483648
        %v3142 = vxor.u32 %v2479, 2147483648
        %v3143 = vxor.u32 %v2670, 2147483648
        %v3144 = vxor.u32 %v2672, 2147483648
        %v3145 = vxor.u32 %v2863, 2147483648
        %v3146 = vxor.u32 %v2865, 2147483648
        %v3147 = vxor.u32 %v1516, 2147483648
        %v3148 = vxor.u32 %v1518, 2147483648
        %v3149 = vxor.u32 %v1709, 2147483648
        %v3150 = vxor.u32 %v1711, 2147483648
        %v3151 = vxor.u32 %v1902, 2147483648
        %v3152 = vxor.u32 %v1904, 2147483648
        %v3153 = vxor.u32 %v2095, 2147483648
        %v3154 = vxor.u32 %v2097, 2147483648
        %v3155 = vxor.u32 %v2288, 2147483648
        %v3156 = vxor.u32 %v2290, 2147483648
        %v3157 = vxor.u32 %v2481, 2147483648
        %v3158 = vxor.u32 %v2483, 2147483648
        %v3159 = vxor.u32 %v2674, 2147483648
        %v3160 = vxor.u32 %v2676, 2147483648
        %v3161 = vxor.u32 %v2867, 2147483648
        %v3162 = vxor.u32 %v2869, 2147483648
        %v3163 = vxor.u32 %v1522, 2147483648
        %v3164 = vxor.u32 %v1524, 2147483648
        %v3165 = vxor.u32 %v1715, 2147483648
        %v3166 = vxor.u32 %v1717, 2147483648
        %v3167 = vxor.u32 %v1908, 2147483648
        %v3168 = vxor.u32 %v1910, 2147483648
        %v3169 = vxor.u32 %v2101, 2147483648
        %v3170 = vxor.u32 %v2103, 2147483648
        %v3171 = vxor.u32 %v2294, 2147483648
        %v3172 = vxor.u32 %v2296, 2147483648
        %v3173 = vxor.u32 %v2487, 2147483648
        %v3174 = vxor.u32 %v2489, 2147483648
        %v3175 = vxor.u32 %v2680, 2147483648
        %v3176 = vxor.u32 %v2682, 2147483648
        %v3177 = vxor.u32 %v2873, 2147483648
        %v3178 = vxor.u32 %v2875, 2147483648
        %v3179 = vxor.u32 %v1526, 2147483648
        %v3180 = vxor.u32 %v1528, 2147483648
        %v3181 = vxor.u32 %v1719, 2147483648
        %v3182 = vxor.u32 %v1721, 2147483648
        %v3183 = vxor.u32 %v1912, 2147483648
        %v3184 = vxor.u32 %v1914, 2147483648
        %v3185 = vxor.u32 %v2105, 2147483648
        %v3186 = vxor.u32 %v2107, 2147483648
        %v3187 = vxor.u32 %v2298, 2147483648
        %v3188 = vxor.u32 %v2300, 2147483648
        %v3189 = vxor.u32 %v2491, 2147483648
        %v3190 = vxor.u32 %v2493, 2147483648
        %v3191 = vxor.u32 %v2684, 2147483648
        %v3192 = vxor.u32 %v2686, 2147483648
        %v3193 = vxor.u32 %v2877, 2147483648
        %v3194 = vxor.u32 %v2879, 2147483648
        %v3195 = vxor.u32 %v1532, 2147483648
        %v3196 = vxor.u32 %v1534, 2147483648
        %v3197 = vxor.u32 %v1725, 2147483648
        %v3198 = vxor.u32 %v1727, 2147483648
        %v3199 = vxor.u32 %v1918, 2147483648
        %v3200 = vxor.u32 %v1920, 2147483648
        %v3201 = vxor.u32 %v2111, 2147483648
        %v3202 = vxor.u32 %v2113, 2147483648
        %v3203 = vxor.u32 %v2304, 2147483648
        %v3204 = vxor.u32 %v2306, 2147483648
        %v3205 = vxor.u32 %v2497, 2147483648
        %v3206 = vxor.u32 %v2499, 2147483648
        %v3207 = vxor.u32 %v2690, 2147483648
        %v3208 = vxor.u32 %v2692, 2147483648
        %v3209 = vxor.u32 %v2883, 2147483648
        %v3210 = vxor.u32 %v2885, 2147483648
        %v3211 = vxor.u32 %v1536, 2147483648
        %v3212 = vxor.u32 %v1538, 2147483648
        %v3213 = vxor.u32 %v1729, 2147483648
        %v3214 = vxor.u32 %v1731, 2147483648
        %v3215 = vxor.u32 %v1922, 2147483648
        %v3216 = vxor.u32 %v1924, 2147483648
        %v3217 = vxor.u32 %v2115, 2147483648
        %v3218 = vxor.u32 %v2117, 2147483648
        %v3219 = vxor.u32 %v2308, 2147483648
        %v3220 = vxor.u32 %v2310, 2147483648
        %v3221 = vxor.u32 %v2501, 2147483648
        %v3222 = vxor.u32 %v2503, 2147483648
        %v3223 = vxor.u32 %v2694, 2147483648
        %v3224 = vxor.u32 %v2696, 2147483648
        %v3225 = vxor.u32 %v2887, 2147483648
        %v3226 = vxor.u32 %v2889, 2147483648
        %v3227 = vxor.u32 %v1542, 2147483648
        %v3228 = vxor.u32 %v1544, 2147483648
        %v3229 = vxor.u32 %v1735, 2147483648
        %v3230 = vxor.u32 %v1737, 2147483648
        %v3231 = vxor.u32 %v1928, 2147483648
        %v3232 = vxor.u32 %v1930, 2147483648
        %v3233 = vxor.u32 %v2121, 2147483648
        %v3234 = vxor.u32 %v2123, 2147483648
        %v3235 = vxor.u32 %v2314, 2147483648
        %v3236 = vxor.u32 %v2316, 2147483648
        %v3237 = vxor.u32 %v2507, 2147483648
        %v3238 = vxor.u32 %v2509, 2147483648
        %v3239 = vxor.u32 %v2700, 2147483648
        %v3240 = vxor.u32 %v2702, 2147483648
        %v3241 = vxor.u32 %v2893, 2147483648
        %v3242 = vxor.u32 %v2895, 2147483648
        %v3243 = vxor.u32 %v1546, 2147483648
        %v3244 = vxor.u32 %v1548, 2147483648
        %v3245 = vxor.u32 %v1739, 2147483648
        %v3246 = vxor.u32 %v1741, 2147483648
        %v3247 = vxor.u32 %v1932, 2147483648
        %v3248 = vxor.u32 %v1934, 2147483648
        %v3249 = vxor.u32 %v2125, 2147483648
        %v3250 = vxor.u32 %v2127, 2147483648
        %v3251 = vxor.u32 %v2318, 2147483648
        %v3252 = vxor.u32 %v2320, 2147483648
        %v3253 = vxor.u32 %v2511, 2147483648
        %v3254 = vxor.u32 %v2513, 2147483648
        %v3255 = vxor.u32 %v2704, 2147483648
        %v3256 = vxor.u32 %v2706, 2147483648
        %v3257 = vxor.u32 %v2897, 2147483648
        %v3258 = vxor.u32 %v2899, 2147483648
        %v3259 = vxor.u32 %v1552, 2147483648
        %v3260 = vxor.u32 %v1554, 2147483648
        %v3261 = vxor.u32 %v1745, 2147483648
        %v3262 = vxor.u32 %v1747, 2147483648
        %v3263 = vxor.u32 %v1938, 2147483648
        %v3264 = vxor.u32 %v1940, 2147483648
        %v3265 = vxor.u32 %v2131, 2147483648
        %v3266 = vxor.u32 %v2133, 2147483648
        %v3267 = vxor.u32 %v2324, 2147483648
        %v3268 = vxor.u32 %v2326, 2147483648
        %v3269 = vxor.u32 %v2517, 2147483648
        %v3270 = vxor.u32 %v2519, 2147483648
        %v3271 = vxor.u32 %v2710, 2147483648
        %v3272 = vxor.u32 %v2712, 2147483648
        %v3273 = vxor.u32 %v2903, 2147483648
        %v3274 = vxor.u32 %v2905, 2147483648
        %v3275 = vxor.u32 %v1556, 2147483648
        %v3276 = vxor.u32 %v1558, 2147483648
        %v3277 = vxor.u32 %v1749, 2147483648
        %v3278 = vxor.u32 %v1751, 2147483648
        %v3279 = vxor.u32 %v1942, 2147483648
        %v3280 = vxor.u32 %v1944, 2147483648
        %v3281 = vxor.u32 %v2135, 2147483648
        %v3282 = vxor.u32 %v2137, 2147483648
        %v3283 = vxor.u32 %v2328, 2147483648
        %v3284 = vxor.u32 %v2330, 2147483648
        %v3285 = vxor.u32 %v2521, 2147483648
        %v3286 = vxor.u32 %v2523, 2147483648
        %v3287 = vxor.u32 %v2714, 2147483648
        %v3288 = vxor.u32 %v2716, 2147483648
        %v3289 = vxor.u32 %v2907, 2147483648
        %v3290 = vxor.u32 %v2909, 2147483648
        %v3291 = vxor.u32 %v1562, 2147483648
        %v3292 = vxor.u32 %v1564, 2147483648
        %v3293 = vxor.u32 %v1755, 2147483648
        %v3294 = vxor.u32 %v1757, 2147483648
        %v3295 = vxor.u32 %v1948, 2147483648
        %v3296 = vxor.u32 %v1950, 2147483648
        %v3297 = vxor.u32 %v2141, 2147483648
        %v3298 = vxor.u32 %v2143, 2147483648
        %v3299 = vxor.u32 %v2334, 2147483648
        %v3300 = vxor.u32 %v2336, 2147483648
        %v3301 = vxor.u32 %v2527, 2147483648
        %v3302 = vxor.u32 %v2529, 2147483648
        %v3303 = vxor.u32 %v2720, 2147483648
        %v3304 = vxor.u32 %v2722, 2147483648
        %v3305 = vxor.u32 %v2913, 2147483648
        %v3306 = vxor.u32 %v2915, 2147483648
        %v3307 = vxor.u32 %v1566, 2147483648
        %v3308 = vxor.u32 %v1568, 2147483648
        %v3309 = vxor.u32 %v1759, 2147483648
        %v3310 = vxor.u32 %v1761, 2147483648
        %v3311 = vxor.u32 %v1952, 2147483648
        %v3312 = vxor.u32 %v1954, 2147483648
        %v3313 = vxor.u32 %v2145, 2147483648
        %v3314 = vxor.u32 %v2147, 2147483648
        %v3315 = vxor.u32 %v2338, 2147483648
        %v3316 = vxor.u32 %v2340, 2147483648
        %v3317 = vxor.u32 %v2531, 2147483648
        %v3318 = vxor.u32 %v2533, 2147483648
        %v3319 = vxor.u32 %v2724, 2147483648
        %v3320 = vxor.u32 %v2726, 2147483648
        %v3321 = vxor.u32 %v2917, 2147483648
        %v3322 = vxor.u32 %v2919, 2147483648
        %v3323 = vxor.u32 %v1572, 2147483648
        %v3324 = vxor.u32 %v1574, 2147483648
        %v3325 = vxor.u32 %v1765, 2147483648
        %v3326 = vxor.u32 %v1767, 2147483648
        %v3327 = vxor.u32 %v1958, 2147483648
        %v3328 = vxor.u32 %v1960, 2147483648
        %v3329 = vxor.u32 %v2151, 2147483648
        %v3330 = vxor.u32 %v2153, 2147483648
        %v3331 = vxor.u32 %v2344, 2147483648
        %v3332 = vxor.u32 %v2346, 2147483648
        %v3333 = vxor.u32 %v2537, 2147483648
        %v3334 = vxor.u32 %v2539, 2147483648
        %v3335 = vxor.u32 %v2730, 2147483648
        %v3336 = vxor.u32 %v2732, 2147483648
        %v3337 = vxor.u32 %v2923, 2147483648
        %v3338 = vxor.u32 %v2925, 2147483648
        %v3339 = vxor.u32 %v1576, 2147483648
        %v3340 = vxor.u32 %v1578, 2147483648
        %v3341 = vxor.u32 %v1769, 2147483648
        %v3342 = vxor.u32 %v1771, 2147483648
        %v3343 = vxor.u32 %v1962, 2147483648
        %v3344 = vxor.u32 %v1964, 2147483648
        %v3345 = vxor.u32 %v2155, 2147483648
        %v3346 = vxor.u32 %v2157, 2147483648
        %v3347 = vxor.u32 %v2348, 2147483648
        %v3348 = vxor.u32 %v2350, 2147483648
        %v3349 = vxor.u32 %v2541, 2147483648
        %v3350 = vxor.u32 %v2543, 2147483648
        %v3351 = vxor.u32 %v2734, 2147483648
        %v3352 = vxor.u32 %v2736, 2147483648
        %v3353 = vxor.u32 %v2927, 2147483648
        %v3354 = vxor.u32 %v2929, 2147483648
        %v3355 = vxor.u32 %v1582, 2147483648
        %v3356 = vxor.u32 %v1584, 2147483648
        %v3357 = vxor.u32 %v1775, 2147483648
        %v3358 = vxor.u32 %v1777, 2147483648
        %v3359 = vxor.u32 %v1968, 2147483648
        %v3360 = vxor.u32 %v1970, 2147483648
        %v3361 = vxor.u32 %v2161, 2147483648
        %v3362 = vxor.u32 %v2163, 2147483648
        %v3363 = vxor.u32 %v2354, 2147483648
        %v3364 = vxor.u32 %v2356, 2147483648
        %v3365 = vxor.u32 %v2547, 2147483648
        %v3366 = vxor.u32 %v2549, 2147483648
        %v3367 = vxor.u32 %v2740, 2147483648
        %v3368 = vxor.u32 %v2742, 2147483648
        %v3369 = vxor.u32 %v2933, 2147483648
        %v3370 = vxor.u32 %v2935, 2147483648
        %v3371 = vxor.u32 %v1586, 2147483648
        %v3372 = vxor.u32 %v1588, 2147483648
        %v3373 = vxor.u32 %v1779, 2147483648
        %v3374 = vxor.u32 %v1781, 2147483648
        %v3375 = vxor.u32 %v1972, 2147483648
        %v3376 = vxor.u32 %v1974, 2147483648
        %v3377 = vxor.u32 %v2165, 2147483648
        %v3378 = vxor.u32 %v2167, 2147483648
        %v3379 = vxor.u32 %v2358, 2147483648
        %v3380 = vxor.u32 %v2360, 2147483648
        %v3381 = vxor.u32 %v2551, 2147483648
        %v3382 = vxor.u32 %v2553, 2147483648
        %v3383 = vxor.u32 %v2744, 2147483648
        %v3384 = vxor.u32 %v2746, 2147483648
        %v3385 = vxor.u32 %v2937, 2147483648
        %v3386 = vxor.u32 %v2939, 2147483648
        %v3387 = vxor.u32 %v1592, 2147483648
        %v3388 = vxor.u32 %v1594, 2147483648
        %v3389 = vxor.u32 %v1785, 2147483648
        %v3390 = vxor.u32 %v1787, 2147483648
        %v3391 = vxor.u32 %v1978, 2147483648
        %v3392 = vxor.u32 %v1980, 2147483648
        %v3393 = vxor.u32 %v2171, 2147483648
        %v3394 = vxor.u32 %v2173, 2147483648
        %v3395 = vxor.u32 %v2364, 2147483648
        %v3396 = vxor.u32 %v2366, 2147483648
        %v3397 = vxor.u32 %v2557, 2147483648
        %v3398 = vxor.u32 %v2559, 2147483648
        %v3399 = vxor.u32 %v2750, 2147483648
        %v3400 = vxor.u32 %v2752, 2147483648
        %v3401 = vxor.u32 %v2943, 2147483648
        %v3402 = vxor.u32 %v2945, 2147483648
        %v3403 = vxor.u32 %v1596, 2147483648
        %v3404 = vxor.u32 %v1598, 2147483648
        %v3405 = vxor.u32 %v1789, 2147483648
        %v3406 = vxor.u32 %v1791, 2147483648
        %v3407 = vxor.u32 %v1982, 2147483648
        %v3408 = vxor.u32 %v1984, 2147483648
        %v3409 = vxor.u32 %v2175, 2147483648
        %v3410 = vxor.u32 %v2177, 2147483648
        %v3411 = vxor.u32 %v2368, 2147483648
        %v3412 = vxor.u32 %v2370, 2147483648
        %v3413 = vxor.u32 %v2561, 2147483648
        %v3414 = vxor.u32 %v2563, 2147483648
        %v3415 = vxor.u32 %v2754, 2147483648
        %v3416 = vxor.u32 %v2756, 2147483648
        %v3417 = vxor.u32 %v2947, 2147483648
        %v3418 = vxor.u32 %v2949, 2147483648
        %v3419 = vxor.u32 %v1602, 2147483648
        %v3420 = vxor.u32 %v1604, 2147483648
        %v3421 = vxor.u32 %v1795, 2147483648
        %v3422 = vxor.u32 %v1797, 2147483648
        %v3423 = vxor.u32 %v1988, 2147483648
        %v3424 = vxor.u32 %v1990, 2147483648
        %v3425 = vxor.u32 %v2181, 2147483648
        %v3426 = vxor.u32 %v2183, 2147483648
        %v3427 = vxor.u32 %v2374, 2147483648
        %v3428 = vxor.u32 %v2376, 2147483648
        %v3429 = vxor.u32 %v2567, 2147483648
        %v3430 = vxor.u32 %v2569, 2147483648
        %v3431 = vxor.u32 %v2760, 2147483648
        %v3432 = vxor.u32 %v2762, 2147483648
        %v3433 = vxor.u32 %v2953, 2147483648
        %v3434 = vxor.u32 %v2955, 2147483648
        %v3435 = vxor.u32 %v1606, 2147483648
        %v3436 = vxor.u32 %v1608, 2147483648
        %v3437 = vxor.u32 %v1799, 2147483648
        %v3438 = vxor.u32 %v1801, 2147483648
        %v3439 = vxor.u32 %v1992, 2147483648
        %v3440 = vxor.u32 %v1994, 2147483648
        %v3441 = vxor.u32 %v2185, 2147483648
        %v3442 = vxor.u32 %v2187, 2147483648
        %v3443 = vxor.u32 %v2378, 2147483648
        %v3444 = vxor.u32 %v2380, 2147483648
        %v3445 = vxor.u32 %v2571, 2147483648
        %v3446 = vxor.u32 %v2573, 2147483648
        %v3447 = vxor.u32 %v2764, 2147483648
        %v3448 = vxor.u32 %v2766, 2147483648
        %v3449 = vxor.u32 %v2957, 2147483648
        %v3450 = vxor.u32 %v2959, 2147483648
        %v3451 = vxor.u32 %v1612, 2147483648
        %v3452 = vxor.u32 %v1614, 2147483648
        %v3453 = vxor.u32 %v1805, 2147483648
        %v3454 = vxor.u32 %v1807, 2147483648
        %v3455 = vxor.u32 %v1998, 2147483648
        %v3456 = vxor.u32 %v2000, 2147483648
        %v3457 = vxor.u32 %v2191, 2147483648
        %v3458 = vxor.u32 %v2193, 2147483648
        %v3459 = vxor.u32 %v2384, 2147483648
        %v3460 = vxor.u32 %v2386, 2147483648
        %v3461 = vxor.u32 %v2577, 2147483648
        %v3462 = vxor.u32 %v2579, 2147483648
        %v3463 = vxor.u32 %v2770, 2147483648
        %v3464 = vxor.u32 %v2772, 2147483648
        %v3465 = vxor.u32 %v2963, 2147483648
        %v3466 = vxor.u32 %v2965, 2147483648
        %v3467 = vxor.u32 %v1616, 2147483648
        %v3468 = vxor.u32 %v1618, 2147483648
        %v3469 = vxor.u32 %v1809, 2147483648
        %v3470 = vxor.u32 %v1811, 2147483648
        %v3471 = vxor.u32 %v2002, 2147483648
        %v3472 = vxor.u32 %v2004, 2147483648
        %v3473 = vxor.u32 %v2195, 2147483648
        %v3474 = vxor.u32 %v2197, 2147483648
        %v3475 = vxor.u32 %v2388, 2147483648
        %v3476 = vxor.u32 %v2390, 2147483648
        %v3477 = vxor.u32 %v2581, 2147483648
        %v3478 = vxor.u32 %v2583, 2147483648
        %v3479 = vxor.u32 %v2774, 2147483648
        %v3480 = vxor.u32 %v2776, 2147483648
        %v3481 = vxor.u32 %v2967, 2147483648
        %v3482 = vxor.u32 %v2969, 2147483648
        %v3483 = vmul.f32 %v2971, 1.442695
        %v3484 = vpow.pop %v3483
        %v3485 = vmul.f32 %v2972, 1.442695
        %v3486 = vpow.pop %v3485
        %v3487 = vmul.f32 %v2973, 1.442695
        %v3488 = vpow.pop %v3487
        %v3489 = vmul.f32 %v2974, 1.442695
        %v3490 = vpow.pop %v3489
        %v3491 = vmul.f32 %v2975, 1.442695
        %v3492 = vpow.pop %v3491
        %v3493 = vmul.f32 %v2976, 1.442695
        %v3494 = vpow.pop %v3493
        %v3495 = vmul.f32 %v2977, 1.442695
        %v3496 = vpow.pop %v3495
        %v3497 = vmul.f32 %v2978, 1.442695
        %v3498 = vpow.pop %v3497
        %v3499 = vmul.f32 %v2979, 1.442695
        %v3500 = vpow.pop %v3499
        %v3501 = vmul.f32 %v2980, 1.442695
        %v3502 = vpow.pop %v3501
        %v3503 = vmul.f32 %v2981, 1.442695
        %v3504 = vpow.pop %v3503
        %v3505 = vmul.f32 %v2982, 1.442695
        %v3506 = vpow.pop %v3505
        %v3507 = vmul.f32 %v2983, 1.442695
        %v3508 = vpow.pop %v3507
        %v3509 = vmul.f32 %v2984, 1.442695
        %v3510 = vpow.pop %v3509
        %v3511 = vmul.f32 %v2985, 1.442695
        %v3512 = vpow.pop %v3511
        %v3513 = vmul.f32 %v2986, 1.442695
        %v3514 = vpow.pop %v3513
        %v3515 = vmul.f32 %v2987, 1.442695
        %v3516 = vpow.pop %v3515
        %v3517 = vmul.f32 %v2988, 1.442695
        %v3518 = vpow.pop %v3517
        %v3519 = vmul.f32 %v2989, 1.442695
        %v3520 = vpow.pop %v3519
        %v3521 = vmul.f32 %v2990, 1.442695
        %v3522 = vpow.pop %v3521
        %v3523 = vmul.f32 %v2991, 1.442695
        %v3524 = vpow.pop %v3523
        %v3525 = vmul.f32 %v2992, 1.442695
        %v3526 = vpow.pop %v3525
        %v3527 = vmul.f32 %v2993, 1.442695
        %v3528 = vpow.pop %v3527
        %v3529 = vmul.f32 %v2994, 1.442695
        %v3530 = vpow.pop %v3529
        %v3531 = vmul.f32 %v2995, 1.442695
        %v3532 = vpow.pop %v3531
        %v3533 = vmul.f32 %v2996, 1.442695
        %v3534 = vpow.pop %v3533
        %v3535 = vmul.f32 %v2997, 1.442695
        %v3536 = vpow.pop %v3535
        %v3537 = vmul.f32 %v2998, 1.442695
        %v3538 = vpow.pop %v3537
        %v3539 = vmul.f32 %v2999, 1.442695
        %v3540 = vpow.pop %v3539
        %v3541 = vmul.f32 %v3000, 1.442695
        %v3542 = vpow.pop %v3541
        %v3543 = vmul.f32 %v3001, 1.442695
        %v3544 = vpow.pop %v3543
        %v3545 = vmul.f32 %v3002, 1.442695
        %v3546 = vpow.pop %v3545
        %v3547 = vmul.f32 %v3003, 1.442695
        %v3548 = vpow.pop %v3547
        %v3549 = vmul.f32 %v3004, 1.442695
        %v3550 = vpow.pop %v3549
        %v3551 = vmul.f32 %v3005, 1.442695
        %v3552 = vpow.pop %v3551
        %v3553 = vmul.f32 %v3006, 1.442695
        %v3554 = vpow.pop %v3553
        %v3555 = vmul.f32 %v3007, 1.442695
        %v3556 = vpow.pop %v3555
        %v3557 = vmul.f32 %v3008, 1.442695
        %v3558 = vpow.pop %v3557
        %v3559 = vmul.f32 %v3009, 1.442695
        %v3560 = vpow.pop %v3559
        %v3561 = vmul.f32 %v3010, 1.442695
        %v3562 = vpow.pop %v3561
        %v3563 = vmul.f32 %v3011, 1.442695
        %v3564 = vpow.pop %v3563
        %v3565 = vmul.f32 %v3012, 1.442695
        %v3566 = vpow.pop %v3565
        %v3567 = vmul.f32 %v3013, 1.442695
        %v3568 = vpow.pop %v3567
        %v3569 = vmul.f32 %v3014, 1.442695
        %v3570 = vpow.pop %v3569
        %v3571 = vmul.f32 %v3015, 1.442695
        %v3572 = vpow.pop %v3571
        %v3573 = vmul.f32 %v3016, 1.442695
        %v3574 = vpow.pop %v3573
        %v3575 = vmul.f32 %v3017, 1.442695
        %v3576 = vpow.pop %v3575
        %v3577 = vmul.f32 %v3018, 1.442695
        %v3578 = vpow.pop %v3577
        %v3579 = vmul.f32 %v3019, 1.442695
        %v3580 = vpow.pop %v3579
        %v3581 = vmul.f32 %v3020, 1.442695
        %v3582 = vpow.pop %v3581
        %v3583 = vmul.f32 %v3021, 1.442695
        %v3584 = vpow.pop %v3583
        %v3585 = vmul.f32 %v3022, 1.442695
        %v3586 = vpow.pop %v3585
        %v3587 = vmul.f32 %v3023, 1.442695
        %v3588 = vpow.pop %v3587
        %v3589 = vmul.f32 %v3024, 1.442695
        %v3590 = vpow.pop %v3589
        %v3591 = vmul.f32 %v3025, 1.442695
        %v3592 = vpow.pop %v3591
        %v3593 = vmul.f32 %v3026, 1.442695
        %v3594 = vpow.pop %v3593
        %v3595 = vmul.f32 %v3027, 1.442695
        %v3596 = vpow.pop %v3595
        %v3597 = vmul.f32 %v3028, 1.442695
        %v3598 = vpow.pop %v3597
        %v3599 = vmul.f32 %v3029, 1.442695
        %v3600 = vpow.pop %v3599
        %v3601 = vmul.f32 %v3030, 1.442695
        %v3602 = vpow.pop %v3601
        %v3603 = vmul.f32 %v3031, 1.442695
        %v3604 = vpow.pop %v3603
        %v3605 = vmul.f32 %v3032, 1.442695
        %v3606 = vpow.pop %v3605
        %v3607 = vmul.f32 %v3033, 1.442695
        %v3608 = vpow.pop %v3607
        %v3609 = vmul.f32 %v3034, 1.442695
        %v3610 = vpow.pop %v3609
        %v3611 = vmul.f32 %v3035, 1.442695
        %v3612 = vpow.pop %v3611
        %v3613 = vmul.f32 %v3036, 1.442695
        %v3614 = vpow.pop %v3613
        %v3615 = vmul.f32 %v3037, 1.442695
        %v3616 = vpow.pop %v3615
        %v3617 = vmul.f32 %v3038, 1.442695
        %v3618 = vpow.pop %v3617
        %v3619 = vmul.f32 %v3039, 1.442695
        %v3620 = vpow.pop %v3619
        %v3621 = vmul.f32 %v3040, 1.442695
        %v3622 = vpow.pop %v3621
        %v3623 = vmul.f32 %v3041, 1.442695
        %v3624 = vpow.pop %v3623
        %v3625 = vmul.f32 %v3042, 1.442695
        %v3626 = vpow.pop %v3625
        %v3627 = vmul.f32 %v3043, 1.442695
        %v3628 = vpow.pop %v3627
        %v3629 = vmul.f32 %v3044, 1.442695
        %v3630 = vpow.pop %v3629
        %v3631 = vmul.f32 %v3045, 1.442695
        %v3632 = vpow.pop %v3631
        %v3633 = vmul.f32 %v3046, 1.442695
        %v3634 = vpow.pop %v3633
        %v3635 = vmul.f32 %v3047, 1.442695
        %v3636 = vpow.pop %v3635
        %v3637 = vmul.f32 %v3048, 1.442695
        %v3638 = vpow.pop %v3637
        %v3639 = vmul.f32 %v3049, 1.442695
        %v3640 = vpow.pop %v3639
        %v3641 = vmul.f32 %v3050, 1.442695
        %v3642 = vpow.pop %v3641
        %v3643 = vmul.f32 %v3051, 1.442695
        %v3644 = vpow.pop %v3643
        %v3645 = vmul.f32 %v3052, 1.442695
        %v3646 = vpow.pop %v3645
        %v3647 = vmul.f32 %v3053, 1.442695
        %v3648 = vpow.pop %v3647
        %v3649 = vmul.f32 %v3054, 1.442695
        %v3650 = vpow.pop %v3649
        %v3651 = vmul.f32 %v3055, 1.442695
        %v3652 = vpow.pop %v3651
        %v3653 = vmul.f32 %v3056, 1.442695
        %v3654 = vpow.pop %v3653
        %v3655 = vmul.f32 %v3057, 1.442695
        %v3656 = vpow.pop %v3655
        %v3657 = vmul.f32 %v3058, 1.442695
        %v3658 = vpow.pop %v3657
        %v3659 = vmul.f32 %v3059, 1.442695
        %v3660 = vpow.pop %v3659
        %v3661 = vmul.f32 %v3060, 1.442695
        %v3662 = vpow.pop %v3661
        %v3663 = vmul.f32 %v3061, 1.442695
        %v3664 = vpow.pop %v3663
        %v3665 = vmul.f32 %v3062, 1.442695
        %v3666 = vpow.pop %v3665
        %v3667 = vmul.f32 %v3063, 1.442695
        %v3668 = vpow.pop %v3667
        %v3669 = vmul.f32 %v3064, 1.442695
        %v3670 = vpow.pop %v3669
        %v3671 = vmul.f32 %v3065, 1.442695
        %v3672 = vpow.pop %v3671
        %v3673 = vmul.f32 %v3066, 1.442695
        %v3674 = vpow.pop %v3673
        %v3675 = vmul.f32 %v3067, 1.442695
        %v3676 = vpow.pop %v3675
        %v3677 = vmul.f32 %v3068, 1.442695
        %v3678 = vpow.pop %v3677
        %v3679 = vmul.f32 %v3069, 1.442695
        %v3680 = vpow.pop %v3679
        %v3681 = vmul.f32 %v3070, 1.442695
        %v3682 = vpow.pop %v3681
        %v3683 = vmul.f32 %v3071, 1.442695
        %v3684 = vpow.pop %v3683
        %v3685 = vmul.f32 %v3072, 1.442695
        %v3686 = vpow.pop %v3685
        %v3687 = vmul.f32 %v3073, 1.442695
        %v3688 = vpow.pop %v3687
        %v3689 = vmul.f32 %v3074, 1.442695
        %v3690 = vpow.pop %v3689
        %v3691 = vmul.f32 %v3075, 1.442695
        %v3692 = vpow.pop %v3691
        %v3693 = vmul.f32 %v3076, 1.442695
        %v3694 = vpow.pop %v3693
        %v3695 = vmul.f32 %v3077, 1.442695
        %v3696 = vpow.pop %v3695
        %v3697 = vmul.f32 %v3078, 1.442695
        %v3698 = vpow.pop %v3697
        %v3699 = vmul.f32 %v3079, 1.442695
        %v3700 = vpow.pop %v3699
        %v3701 = vmul.f32 %v3080, 1.442695
        %v3702 = vpow.pop %v3701
        %v3703 = vmul.f32 %v3081, 1.442695
        %v3704 = vpow.pop %v3703
        %v3705 = vmul.f32 %v3082, 1.442695
        %v3706 = vpow.pop %v3705
        %v3707 = vmul.f32 %v3083, 1.442695
        %v3708 = vpow.pop %v3707
        %v3709 = vmul.f32 %v3084, 1.442695
        %v3710 = vpow.pop %v3709
        %v3711 = vmul.f32 %v3085, 1.442695
        %v3712 = vpow.pop %v3711
        %v3713 = vmul.f32 %v3086, 1.442695
        %v3714 = vpow.pop %v3713
        %v3715 = vmul.f32 %v3087, 1.442695
        %v3716 = vpow.pop %v3715
        %v3717 = vmul.f32 %v3088, 1.442695
        %v3718 = vpow.pop %v3717
        %v3719 = vmul.f32 %v3089, 1.442695
        %v3720 = vpow.pop %v3719
        %v3721 = vmul.f32 %v3090, 1.442695
        %v3722 = vpow.pop %v3721
        %v3723 = vmul.f32 %v3091, 1.442695
        %v3724 = vpow.pop %v3723
        %v3725 = vmul.f32 %v3092, 1.442695
        %v3726 = vpow.pop %v3725
        %v3727 = vmul.f32 %v3093, 1.442695
        %v3728 = vpow.pop %v3727
        %v3729 = vmul.f32 %v3094, 1.442695
        %v3730 = vpow.pop %v3729
        %v3731 = vmul.f32 %v3095, 1.442695
        %v3732 = vpow.pop %v3731
        %v3733 = vmul.f32 %v3096, 1.442695
        %v3734 = vpow.pop %v3733
        %v3735 = vmul.f32 %v3097, 1.442695
        %v3736 = vpow.pop %v3735
        %v3737 = vmul.f32 %v3098, 1.442695
        %v3738 = vpow.pop %v3737
        %v3739 = vmul.f32 %v3099, 1.442695
        %v3740 = vpow.pop %v3739
        %v3741 = vmul.f32 %v3100, 1.442695
        %v3742 = vpow.pop %v3741
        %v3743 = vmul.f32 %v3101, 1.442695
        %v3744 = vpow.pop %v3743
        %v3745 = vmul.f32 %v3102, 1.442695
        %v3746 = vpow.pop %v3745
        %v3747 = vmul.f32 %v3103, 1.442695
        %v3748 = vpow.pop %v3747
        %v3749 = vmul.f32 %v3104, 1.442695
        %v3750 = vpow.pop %v3749
        %v3751 = vmul.f32 %v3105, 1.442695
        %v3752 = vpow.pop %v3751
        %v3753 = vmul.f32 %v3106, 1.442695
        %v3754 = vpow.pop %v3753
        %v3755 = vmul.f32 %v3107, 1.442695
        %v3756 = vpow.pop %v3755
        %v3757 = vmul.f32 %v3108, 1.442695
        %v3758 = vpow.pop %v3757
        %v3759 = vmul.f32 %v3109, 1.442695
        %v3760 = vpow.pop %v3759
        %v3761 = vmul.f32 %v3110, 1.442695
        %v3762 = vpow.pop %v3761
        %v3763 = vmul.f32 %v3111, 1.442695
        %v3764 = vpow.pop %v3763
        %v3765 = vmul.f32 %v3112, 1.442695
        %v3766 = vpow.pop %v3765
        %v3767 = vmul.f32 %v3113, 1.442695
        %v3768 = vpow.pop %v3767
        %v3769 = vmul.f32 %v3114, 1.442695
        %v3770 = vpow.pop %v3769
        %v3771 = vmul.f32 %v3115, 1.442695
        %v3772 = vpow.pop %v3771
        %v3773 = vmul.f32 %v3116, 1.442695
        %v3774 = vpow.pop %v3773
        %v3775 = vmul.f32 %v3117, 1.442695
        %v3776 = vpow.pop %v3775
        %v3777 = vmul.f32 %v3118, 1.442695
        %v3778 = vpow.pop %v3777
        %v3779 = vmul.f32 %v3119, 1.442695
        %v3780 = vpow.pop %v3779
        %v3781 = vmul.f32 %v3120, 1.442695
        %v3782 = vpow.pop %v3781
        %v3783 = vmul.f32 %v3121, 1.442695
        %v3784 = vpow.pop %v3783
        %v3785 = vmul.f32 %v3122, 1.442695
        %v3786 = vpow.pop %v3785
        %v3787 = vmul.f32 %v3123, 1.442695
        %v3788 = vpow.pop %v3787
        %v3789 = vmul.f32 %v3124, 1.442695
        %v3790 = vpow.pop %v3789
        %v3791 = vmul.f32 %v3125, 1.442695
        %v3792 = vpow.pop %v3791
        %v3793 = vmul.f32 %v3126, 1.442695
        %v3794 = vpow.pop %v3793
        %v3795 = vmul.f32 %v3127, 1.442695
        %v3796 = vpow.pop %v3795
        %v3797 = vmul.f32 %v3128, 1.442695
        %v3798 = vpow.pop %v3797
        %v3799 = vmul.f32 %v3129, 1.442695
        %v3800 = vpow.pop %v3799
        %v3801 = vmul.f32 %v3130, 1.442695
        %v3802 = vpow.pop %v3801
        %v3803 = vmul.f32 %v3131, 1.442695
        %v3804 = vpow.pop %v3803
        %v3805 = vmul.f32 %v3132, 1.442695
        %v3806 = vpow.pop %v3805
        %v3807 = vmul.f32 %v3133, 1.442695
        %v3808 = vpow.pop %v3807
        %v3809 = vmul.f32 %v3134, 1.442695
        %v3810 = vpow.pop %v3809
        %v3811 = vmul.f32 %v3135, 1.442695
        %v3812 = vpow.pop %v3811
        %v3813 = vmul.f32 %v3136, 1.442695
        %v3814 = vpow.pop %v3813
        %v3815 = vmul.f32 %v3137, 1.442695
        %v3816 = vpow.pop %v3815
        %v3817 = vmul.f32 %v3138, 1.442695
        %v3818 = vpow.pop %v3817
        %v3819 = vmul.f32 %v3139, 1.442695
        %v3820 = vpow.pop %v3819
        %v3821 = vmul.f32 %v3140, 1.442695
        %v3822 = vpow.pop %v3821
        %v3823 = vmul.f32 %v3141, 1.442695
        %v3824 = vpow.pop %v3823
        %v3825 = vmul.f32 %v3142, 1.442695
        %v3826 = vpow.pop %v3825
        %v3827 = vmul.f32 %v3143, 1.442695
        %v3828 = vpow.pop %v3827
        %v3829 = vmul.f32 %v3144, 1.442695
        %v3830 = vpow.pop %v3829
        %v3831 = vmul.f32 %v3145, 1.442695
        %v3832 = vpow.pop %v3831
        %v3833 = vmul.f32 %v3146, 1.442695
        %v3834 = vpow.pop %v3833
        %v3835 = vmul.f32 %v3147, 1.442695
        %v3836 = vpow.pop %v3835
        %v3837 = vmul.f32 %v3148, 1.442695
        %v3838 = vpow.pop %v3837
        %v3839 = vmul.f32 %v3149, 1.442695
        %v3840 = vpow.pop %v3839
        %v3841 = vmul.f32 %v3150, 1.442695
        %v3842 = vpow.pop %v3841
        %v3843 = vmul.f32 %v3151, 1.442695
        %v3844 = vpow.pop %v3843
        %v3845 = vmul.f32 %v3152, 1.442695
        %v3846 = vpow.pop %v3845
        %v3847 = vmul.f32 %v3153, 1.442695
        %v3848 = vpow.pop %v3847
        %v3849 = vmul.f32 %v3154, 1.442695
        %v3850 = vpow.pop %v3849
        %v3851 = vmul.f32 %v3155, 1.442695
        %v3852 = vpow.pop %v3851
        %v3853 = vmul.f32 %v3156, 1.442695
        %v3854 = vpow.pop %v3853
        %v3855 = vmul.f32 %v3157, 1.442695
        %v3856 = vpow.pop %v3855
        %v3857 = vmul.f32 %v3158, 1.442695
        %v3858 = vpow.pop %v3857
        %v3859 = vmul.f32 %v3159, 1.442695
        %v3860 = vpow.pop %v3859
        %v3861 = vmul.f32 %v3160, 1.442695
        %v3862 = vpow.pop %v3861
        %v3863 = vmul.f32 %v3161, 1.442695
        %v3864 = vpow.pop %v3863
        %v3865 = vmul.f32 %v3162, 1.442695
        %v3866 = vpow.pop %v3865
        %v3867 = vmul.f32 %v3163, 1.442695
        %v3868 = vpow.pop %v3867
        %v3869 = vmul.f32 %v3164, 1.442695
        %v3870 = vpow.pop %v3869
        %v3871 = vmul.f32 %v3165, 1.442695
        %v3872 = vpow.pop %v3871
        %v3873 = vmul.f32 %v3166, 1.442695
        %v3874 = vpow.pop %v3873
        %v3875 = vmul.f32 %v3167, 1.442695
        %v3876 = vpow.pop %v3875
        %v3877 = vmul.f32 %v3168, 1.442695
        %v3878 = vpow.pop %v3877
        %v3879 = vmul.f32 %v3169, 1.442695
        %v3880 = vpow.pop %v3879
        %v3881 = vmul.f32 %v3170, 1.442695
        %v3882 = vpow.pop %v3881
        %v3883 = vmul.f32 %v3171, 1.442695
        %v3884 = vpow.pop %v3883
        %v3885 = vmul.f32 %v3172, 1.442695
        %v3886 = vpow.pop %v3885
        %v3887 = vmul.f32 %v3173, 1.442695
        %v3888 = vpow.pop %v3887
        %v3889 = vmul.f32 %v3174, 1.442695
        %v3890 = vpow.pop %v3889
        %v3891 = vmul.f32 %v3175, 1.442695
        %v3892 = vpow.pop %v3891
        %v3893 = vmul.f32 %v3176, 1.442695
        %v3894 = vpow.pop %v3893
        %v3895 = vmul.f32 %v3177, 1.442695
        %v3896 = vpow.pop %v3895
        %v3897 = vmul.f32 %v3178, 1.442695
        %v3898 = vpow.pop %v3897
        %v3899 = vmul.f32 %v3179, 1.442695
        %v3900 = vpow.pop %v3899
        %v3901 = vmul.f32 %v3180, 1.442695
        %v3902 = vpow.pop %v3901
        %v3903 = vmul.f32 %v3181, 1.442695
        %v3904 = vpow.pop %v3903
        %v3905 = vmul.f32 %v3182, 1.442695
        %v3906 = vpow.pop %v3905
        %v3907 = vmul.f32 %v3183, 1.442695
        %v3908 = vpow.pop %v3907
        %v3909 = vmul.f32 %v3184, 1.442695
        %v3910 = vpow.pop %v3909
        %v3911 = vmul.f32 %v3185, 1.442695
        %v3912 = vpow.pop %v3911
        %v3913 = vmul.f32 %v3186, 1.442695
        %v3914 = vpow.pop %v3913
        %v3915 = vmul.f32 %v3187, 1.442695
        %v3916 = vpow.pop %v3915
        %v3917 = vmul.f32 %v3188, 1.442695
        %v3918 = vpow.pop %v3917
        %v3919 = vmul.f32 %v3189, 1.442695
        %v3920 = vpow.pop %v3919
        %v3921 = vmul.f32 %v3190, 1.442695
        %v3922 = vpow.pop %v3921
        %v3923 = vmul.f32 %v3191, 1.442695
        %v3924 = vpow.pop %v3923
        %v3925 = vmul.f32 %v3192, 1.442695
        %v3926 = vpow.pop %v3925
        %v3927 = vmul.f32 %v3193, 1.442695
        %v3928 = vpow.pop %v3927
        %v3929 = vmul.f32 %v3194, 1.442695
        %v3930 = vpow.pop %v3929
        %v3931 = vmul.f32 %v3195, 1.442695
        %v3932 = vpow.pop %v3931
        %v3933 = vmul.f32 %v3196, 1.442695
        %v3934 = vpow.pop %v3933
        %v3935 = vmul.f32 %v3197, 1.442695
        %v3936 = vpow.pop %v3935
        %v3937 = vmul.f32 %v3198, 1.442695
        %v3938 = vpow.pop %v3937
        %v3939 = vmul.f32 %v3199, 1.442695
        %v3940 = vpow.pop %v3939
        %v3941 = vmul.f32 %v3200, 1.442695
        %v3942 = vpow.pop %v3941
        %v3943 = vmul.f32 %v3201, 1.442695
        %v3944 = vpow.pop %v3943
        %v3945 = vmul.f32 %v3202, 1.442695
        %v3946 = vpow.pop %v3945
        %v3947 = vmul.f32 %v3203, 1.442695
        %v3948 = vpow.pop %v3947
        %v3949 = vmul.f32 %v3204, 1.442695
        %v3950 = vpow.pop %v3949
        %v3951 = vmul.f32 %v3205, 1.442695
        %v3952 = vpow.pop %v3951
        %v3953 = vmul.f32 %v3206, 1.442695
        %v3954 = vpow.pop %v3953
        %v3955 = vmul.f32 %v3207, 1.442695
        %v3956 = vpow.pop %v3955
        %v3957 = vmul.f32 %v3208, 1.442695
        %v3958 = vpow.pop %v3957
        %v3959 = vmul.f32 %v3209, 1.442695
        %v3960 = vpow.pop %v3959
        %v3961 = vmul.f32 %v3210, 1.442695
        %v3962 = vpow.pop %v3961
        %v3963 = vmul.f32 %v3211, 1.442695
        %v3964 = vpow.pop %v3963
        %v3965 = vmul.f32 %v3212, 1.442695
        %v3966 = vpow.pop %v3965
        %v3967 = vmul.f32 %v3213, 1.442695
        %v3968 = vpow.pop %v3967
        %v3969 = vmul.f32 %v3214, 1.442695
        %v3970 = vpow.pop %v3969
        %v3971 = vmul.f32 %v3215, 1.442695
        %v3972 = vpow.pop %v3971
        %v3973 = vmul.f32 %v3216, 1.442695
        %v3974 = vpow.pop %v3973
        %v3975 = vmul.f32 %v3217, 1.442695
        %v3976 = vpow.pop %v3975
        %v3977 = vmul.f32 %v3218, 1.442695
        %v3978 = vpow.pop %v3977
        %v3979 = vmul.f32 %v3219, 1.442695
        %v3980 = vpow.pop %v3979
        %v3981 = vmul.f32 %v3220, 1.442695
        %v3982 = vpow.pop %v3981
        %v3983 = vmul.f32 %v3221, 1.442695
        %v3984 = vpow.pop %v3983
        %v3985 = vmul.f32 %v3222, 1.442695
        %v3986 = vpow.pop %v3985
        %v3987 = vmul.f32 %v3223, 1.442695
        %v3988 = vpow.pop %v3987
        %v3989 = vmul.f32 %v3224, 1.442695
        %v3990 = vpow.pop %v3989
        %v3991 = vmul.f32 %v3225, 1.442695
        %v3992 = vpow.pop %v3991
        %v3993 = vmul.f32 %v3226, 1.442695
        %v3994 = vpow.pop %v3993
        %v3995 = vmul.f32 %v3227, 1.442695
        %v3996 = vpow.pop %v3995
        %v3997 = vmul.f32 %v3228, 1.442695
        %v3998 = vpow.pop %v3997
        %v3999 = vmul.f32 %v3229, 1.442695
        %v4000 = vpow.pop %v3999
        %v4001 = vmul.f32 %v3230, 1.442695
        %v4002 = vpow.pop %v4001
        %v4003 = vmul.f32 %v3231, 1.442695
        %v4004 = vpow.pop %v4003
        %v4005 = vmul.f32 %v3232, 1.442695
        %v4006 = vpow.pop %v4005
        %v4007 = vmul.f32 %v3233, 1.442695
        %v4008 = vpow.pop %v4007
        %v4009 = vmul.f32 %v3234, 1.442695
        %v4010 = vpow.pop %v4009
        %v4011 = vmul.f32 %v3235, 1.442695
        %v4012 = vpow.pop %v4011
        %v4013 = vmul.f32 %v3236, 1.442695
        %v4014 = vpow.pop %v4013
        %v4015 = vmul.f32 %v3237, 1.442695
        %v4016 = vpow.pop %v4015
        %v4017 = vmul.f32 %v3238, 1.442695
        %v4018 = vpow.pop %v4017
        %v4019 = vmul.f32 %v3239, 1.442695
        %v4020 = vpow.pop %v4019
        %v4021 = vmul.f32 %v3240, 1.442695
        %v4022 = vpow.pop %v4021
        %v4023 = vmul.f32 %v3241, 1.442695
        %v4024 = vpow.pop %v4023
        %v4025 = vmul.f32 %v3242, 1.442695
        %v4026 = vpow.pop %v4025
        %v4027 = vmul.f32 %v3243, 1.442695
        %v4028 = vpow.pop %v4027
        %v4029 = vmul.f32 %v3244, 1.442695
        %v4030 = vpow.pop %v4029
        %v4031 = vmul.f32 %v3245, 1.442695
        %v4032 = vpow.pop %v4031
        %v4033 = vmul.f32 %v3246, 1.442695
        %v4034 = vpow.pop %v4033
        %v4035 = vmul.f32 %v3247, 1.442695
        %v4036 = vpow.pop %v4035
        %v4037 = vmul.f32 %v3248, 1.442695
        %v4038 = vpow.pop %v4037
        %v4039 = vmul.f32 %v3249, 1.442695
        %v4040 = vpow.pop %v4039
        %v4041 = vmul.f32 %v3250, 1.442695
        %v4042 = vpow.pop %v4041
        %v4043 = vmul.f32 %v3251, 1.442695
        %v4044 = vpow.pop %v4043
        %v4045 = vmul.f32 %v3252, 1.442695
        %v4046 = vpow.pop %v4045
        %v4047 = vmul.f32 %v3253, 1.442695
        %v4048 = vpow.pop %v4047
        %v4049 = vmul.f32 %v3254, 1.442695
        %v4050 = vpow.pop %v4049
        %v4051 = vmul.f32 %v3255, 1.442695
        %v4052 = vpow.pop %v4051
        %v4053 = vmul.f32 %v3256, 1.442695
        %v4054 = vpow.pop %v4053
        %v4055 = vmul.f32 %v3257, 1.442695
        %v4056 = vpow.pop %v4055
        %v4057 = vmul.f32 %v3258, 1.442695
        %v4058 = vpow.pop %v4057
        %v4059 = vmul.f32 %v3259, 1.442695
        %v4060 = vpow.pop %v4059
        %v4061 = vmul.f32 %v3260, 1.442695
        %v4062 = vpow.pop %v4061
        %v4063 = vmul.f32 %v3261, 1.442695
        %v4064 = vpow.pop %v4063
        %v4065 = vmul.f32 %v3262, 1.442695
        %v4066 = vpow.pop %v4065
        %v4067 = vmul.f32 %v3263, 1.442695
        %v4068 = vpow.pop %v4067
        %v4069 = vmul.f32 %v3264, 1.442695
        %v4070 = vpow.pop %v4069
        %v4071 = vmul.f32 %v3265, 1.442695
        %v4072 = vpow.pop %v4071
        %v4073 = vmul.f32 %v3266, 1.442695
        %v4074 = vpow.pop %v4073
        %v4075 = vmul.f32 %v3267, 1.442695
        %v4076 = vpow.pop %v4075
        %v4077 = vmul.f32 %v3268, 1.442695
        %v4078 = vpow.pop %v4077
        %v4079 = vmul.f32 %v3269, 1.442695
        %v4080 = vpow.pop %v4079
        %v4081 = vmul.f32 %v3270, 1.442695
        %v4082 = vpow.pop %v4081
        %v4083 = vmul.f32 %v3271, 1.442695
        %v4084 = vpow.pop %v4083
        %v4085 = vmul.f32 %v3272, 1.442695
        %v4086 = vpow.pop %v4085
        %v4087 = vmul.f32 %v3273, 1.442695
        %v4088 = vpow.pop %v4087
        %v4089 = vmul.f32 %v3274, 1.442695
        %v4090 = vpow.pop %v4089
        %v4091 = vmul.f32 %v3275, 1.442695
        %v4092 = vpow.pop %v4091
        %v4093 = vmul.f32 %v3276, 1.442695
        %v4094 = vpow.pop %v4093
        %v4095 = vmul.f32 %v3277, 1.442695
        %v4096 = vpow.pop %v4095
        %v4097 = vmul.f32 %v3278, 1.442695
        %v4098 = vpow.pop %v4097
        %v4099 = vmul.f32 %v3279, 1.442695
        %v4100 = vpow.pop %v4099
        %v4101 = vmul.f32 %v3280, 1.442695
        %v4102 = vpow.pop %v4101
        %v4103 = vmul.f32 %v3281, 1.442695
        %v4104 = vpow.pop %v4103
        %v4105 = vmul.f32 %v3282, 1.442695
        %v4106 = vpow.pop %v4105
        %v4107 = vmul.f32 %v3283, 1.442695
        %v4108 = vpow.pop %v4107
        %v4109 = vmul.f32 %v3284, 1.442695
        %v4110 = vpow.pop %v4109
        %v4111 = vmul.f32 %v3285, 1.442695
        %v4112 = vpow.pop %v4111
        %v4113 = vmul.f32 %v3286, 1.442695
        %v4114 = vpow.pop %v4113
        %v4115 = vmul.f32 %v3287, 1.442695
        %v4116 = vpow.pop %v4115
        %v4117 = vmul.f32 %v3288, 1.442695
        %v4118 = vpow.pop %v4117
        %v4119 = vmul.f32 %v3289, 1.442695
        %v4120 = vpow.pop %v4119
        %v4121 = vmul.f32 %v3290, 1.442695
        %v4122 = vpow.pop %v4121
        %v4123 = vmul.f32 %v3291, 1.442695
        %v4124 = vpow.pop %v4123
        %v4125 = vmul.f32 %v3292, 1.442695
        %v4126 = vpow.pop %v4125
        %v4127 = vmul.f32 %v3293, 1.442695
        %v4128 = vpow.pop %v4127
        %v4129 = vmul.f32 %v3294, 1.442695
        %v4130 = vpow.pop %v4129
        %v4131 = vmul.f32 %v3295, 1.442695
        %v4132 = vpow.pop %v4131
        %v4133 = vmul.f32 %v3296, 1.442695
        %v4134 = vpow.pop %v4133
        %v4135 = vmul.f32 %v3297, 1.442695
        %v4136 = vpow.pop %v4135
        %v4137 = vmul.f32 %v3298, 1.442695
        %v4138 = vpow.pop %v4137
        %v4139 = vmul.f32 %v3299, 1.442695
        %v4140 = vpow.pop %v4139
        %v4141 = vmul.f32 %v3300, 1.442695
        %v4142 = vpow.pop %v4141
        %v4143 = vmul.f32 %v3301, 1.442695
        %v4144 = vpow.pop %v4143
        %v4145 = vmul.f32 %v3302, 1.442695
        %v4146 = vpow.pop %v4145
        %v4147 = vmul.f32 %v3303, 1.442695
        %v4148 = vpow.pop %v4147
        %v4149 = vmul.f32 %v3304, 1.442695
        %v4150 = vpow.pop %v4149
        %v4151 = vmul.f32 %v3305, 1.442695
        %v4152 = vpow.pop %v4151
        %v4153 = vmul.f32 %v3306, 1.442695
        %v4154 = vpow.pop %v4153
        %v4155 = vmul.f32 %v3307, 1.442695
        %v4156 = vpow.pop %v4155
        %v4157 = vmul.f32 %v3308, 1.442695
        %v4158 = vpow.pop %v4157
        %v4159 = vmul.f32 %v3309, 1.442695
        %v4160 = vpow.pop %v4159
        %v4161 = vmul.f32 %v3310, 1.442695
        %v4162 = vpow.pop %v4161
        %v4163 = vmul.f32 %v3311, 1.442695
        %v4164 = vpow.pop %v4163
        %v4165 = vmul.f32 %v3312, 1.442695
        %v4166 = vpow.pop %v4165
        %v4167 = vmul.f32 %v3313, 1.442695
        %v4168 = vpow.pop %v4167
        %v4169 = vmul.f32 %v3314, 1.442695
        %v4170 = vpow.pop %v4169
        %v4171 = vmul.f32 %v3315, 1.442695
        %v4172 = vpow.pop %v4171
        %v4173 = vmul.f32 %v3316, 1.442695
        %v4174 = vpow.pop %v4173
        %v4175 = vmul.f32 %v3317, 1.442695
        %v4176 = vpow.pop %v4175
        %v4177 = vmul.f32 %v3318, 1.442695
        %v4178 = vpow.pop %v4177
        %v4179 = vmul.f32 %v3319, 1.442695
        %v4180 = vpow.pop %v4179
        %v4181 = vmul.f32 %v3320, 1.442695
        %v4182 = vpow.pop %v4181
        %v4183 = vmul.f32 %v3321, 1.442695
        %v4184 = vpow.pop %v4183
        %v4185 = vmul.f32 %v3322, 1.442695
        %v4186 = vpow.pop %v4185
        %v4187 = vmul.f32 %v3323, 1.442695
        %v4188 = vpow.pop %v4187
        %v4189 = vmul.f32 %v3324, 1.442695
        %v4190 = vpow.pop %v4189
        %v4191 = vmul.f32 %v3325, 1.442695
        %v4192 = vpow.pop %v4191
        %v4193 = vmul.f32 %v3326, 1.442695
        %v4194 = vpow.pop %v4193
        %v4195 = vmul.f32 %v3327, 1.442695
        %v4196 = vpow.pop %v4195
        %v4197 = vmul.f32 %v3328, 1.442695
        %v4198 = vpow.pop %v4197
        %v4199 = vmul.f32 %v3329, 1.442695
        %v4200 = vpow.pop %v4199
        %v4201 = vmul.f32 %v3330, 1.442695
        %v4202 = vpow.pop %v4201
        %v4203 = vmul.f32 %v3331, 1.442695
        %v4204 = vpow.pop %v4203
        %v4205 = vmul.f32 %v3332, 1.442695
        %v4206 = vpow.pop %v4205
        %v4207 = vmul.f32 %v3333, 1.442695
        %v4208 = vpow.pop %v4207
        %v4209 = vmul.f32 %v3334, 1.442695
        %v4210 = vpow.pop %v4209
        %v4211 = vmul.f32 %v3335, 1.442695
        %v4212 = vpow.pop %v4211
        %v4213 = vmul.f32 %v3336, 1.442695
        %v4214 = vpow.pop %v4213
        %v4215 = vmul.f32 %v3337, 1.442695
        %v4216 = vpow.pop %v4215
        %v4217 = vmul.f32 %v3338, 1.442695
        %v4218 = vpow.pop %v4217
        %v4219 = vmul.f32 %v3339, 1.442695
        %v4220 = vpow.pop %v4219
        %v4221 = vmul.f32 %v3340, 1.442695
        %v4222 = vpow.pop %v4221
        %v4223 = vmul.f32 %v3341, 1.442695
        %v4224 = vpow.pop %v4223
        %v4225 = vmul.f32 %v3342, 1.442695
        %v4226 = vpow.pop %v4225
        %v4227 = vmul.f32 %v3343, 1.442695
        %v4228 = vpow.pop %v4227
        %v4229 = vmul.f32 %v3344, 1.442695
        %v4230 = vpow.pop %v4229
        %v4231 = vmul.f32 %v3345, 1.442695
        %v4232 = vpow.pop %v4231
        %v4233 = vmul.f32 %v3346, 1.442695
        %v4234 = vpow.pop %v4233
        %v4235 = vmul.f32 %v3347, 1.442695
        %v4236 = vpow.pop %v4235
        %v4237 = vmul.f32 %v3348, 1.442695
        %v4238 = vpow.pop %v4237
        %v4239 = vmul.f32 %v3349, 1.442695
        %v4240 = vpow.pop %v4239
        %v4241 = vmul.f32 %v3350, 1.442695
        %v4242 = vpow.pop %v4241
        %v4243 = vmul.f32 %v3351, 1.442695
        %v4244 = vpow.pop %v4243
        %v4245 = vmul.f32 %v3352, 1.442695
        %v4246 = vpow.pop %v4245
        %v4247 = vmul.f32 %v3353, 1.442695
        %v4248 = vpow.pop %v4247
        %v4249 = vmul.f32 %v3354, 1.442695
        %v4250 = vpow.pop %v4249
        %v4251 = vmul.f32 %v3355, 1.442695
        %v4252 = vpow.pop %v4251
        %v4253 = vmul.f32 %v3356, 1.442695
        %v4254 = vpow.pop %v4253
        %v4255 = vmul.f32 %v3357, 1.442695
        %v4256 = vpow.pop %v4255
        %v4257 = vmul.f32 %v3358, 1.442695
        %v4258 = vpow.pop %v4257
        %v4259 = vmul.f32 %v3359, 1.442695
        %v4260 = vpow.pop %v4259
        %v4261 = vmul.f32 %v3360, 1.442695
        %v4262 = vpow.pop %v4261
        %v4263 = vmul.f32 %v3361, 1.442695
        %v4264 = vpow.pop %v4263
        %v4265 = vmul.f32 %v3362, 1.442695
        %v4266 = vpow.pop %v4265
        %v4267 = vmul.f32 %v3363, 1.442695
        %v4268 = vpow.pop %v4267
        %v4269 = vmul.f32 %v3364, 1.442695
        %v4270 = vpow.pop %v4269
        %v4271 = vmul.f32 %v3365, 1.442695
        %v4272 = vpow.pop %v4271
        %v4273 = vmul.f32 %v3366, 1.442695
        %v4274 = vpow.pop %v4273
        %v4275 = vmul.f32 %v3367, 1.442695
        %v4276 = vpow.pop %v4275
        %v4277 = vmul.f32 %v3368, 1.442695
        %v4278 = vpow.pop %v4277
        %v4279 = vmul.f32 %v3369, 1.442695
        %v4280 = vpow.pop %v4279
        %v4281 = vmul.f32 %v3370, 1.442695
        %v4282 = vpow.pop %v4281
        %v4283 = vmul.f32 %v3371, 1.442695
        %v4284 = vpow.pop %v4283
        %v4285 = vmul.f32 %v3372, 1.442695
        %v4286 = vpow.pop %v4285
        %v4287 = vmul.f32 %v3373, 1.442695
        %v4288 = vpow.pop %v4287
        %v4289 = vmul.f32 %v3374, 1.442695
        %v4290 = vpow.pop %v4289
        %v4291 = vmul.f32 %v3375, 1.442695
        %v4292 = vpow.pop %v4291
        %v4293 = vmul.f32 %v3376, 1.442695
        %v4294 = vpow.pop %v4293
        %v4295 = vmul.f32 %v3377, 1.442695
        %v4296 = vpow.pop %v4295
        %v4297 = vmul.f32 %v3378, 1.442695
        %v4298 = vpow.pop %v4297
        %v4299 = vmul.f32 %v3379, 1.442695
        %v4300 = vpow.pop %v4299
        %v4301 = vmul.f32 %v3380, 1.442695
        %v4302 = vpow.pop %v4301
        %v4303 = vmul.f32 %v3381, 1.442695
        %v4304 = vpow.pop %v4303
        %v4305 = vmul.f32 %v3382, 1.442695
        %v4306 = vpow.pop %v4305
        %v4307 = vmul.f32 %v3383, 1.442695
        %v4308 = vpow.pop %v4307
        %v4309 = vmul.f32 %v3384, 1.442695
        %v4310 = vpow.pop %v4309
        %v4311 = vmul.f32 %v3385, 1.442695
        %v4312 = vpow.pop %v4311
        %v4313 = vmul.f32 %v3386, 1.442695
        %v4314 = vpow.pop %v4313
        %v4315 = vmul.f32 %v3387, 1.442695
        %v4316 = vpow.pop %v4315
        %v4317 = vmul.f32 %v3388, 1.442695
        %v4318 = vpow.pop %v4317
        %v4319 = vmul.f32 %v3389, 1.442695
        %v4320 = vpow.pop %v4319
        %v4321 = vmul.f32 %v3390, 1.442695
        %v4322 = vpow.pop %v4321
        %v4323 = vmul.f32 %v3391, 1.442695
        %v4324 = vpow.pop %v4323
        %v4325 = vmul.f32 %v3392, 1.442695
        %v4326 = vpow.pop %v4325
        %v4327 = vmul.f32 %v3393, 1.442695
        %v4328 = vpow.pop %v4327
        %v4329 = vmul.f32 %v3394, 1.442695
        %v4330 = vpow.pop %v4329
        %v4331 = vmul.f32 %v3395, 1.442695
        %v4332 = vpow.pop %v4331
        %v4333 = vmul.f32 %v3396, 1.442695
        %v4334 = vpow.pop %v4333
        %v4335 = vmul.f32 %v3397, 1.442695
        %v4336 = vpow.pop %v4335
        %v4337 = vmul.f32 %v3398, 1.442695
        %v4338 = vpow.pop %v4337
        %v4339 = vmul.f32 %v3399, 1.442695
        %v4340 = vpow.pop %v4339
        %v4341 = vmul.f32 %v3400, 1.442695
        %v4342 = vpow.pop %v4341
        %v4343 = vmul.f32 %v3401, 1.442695
        %v4344 = vpow.pop %v4343
        %v4345 = vmul.f32 %v3402, 1.442695
        %v4346 = vpow.pop %v4345
        %v4347 = vmul.f32 %v3403, 1.442695
        %v4348 = vpow.pop %v4347
        %v4349 = vmul.f32 %v3404, 1.442695
        %v4350 = vpow.pop %v4349
        %v4351 = vmul.f32 %v3405, 1.442695
        %v4352 = vpow.pop %v4351
        %v4353 = vmul.f32 %v3406, 1.442695
        %v4354 = vpow.pop %v4353
        %v4355 = vmul.f32 %v3407, 1.442695
        %v4356 = vpow.pop %v4355
        %v4357 = vmul.f32 %v3408, 1.442695
        %v4358 = vpow.pop %v4357
        %v4359 = vmul.f32 %v3409, 1.442695
        %v4360 = vpow.pop %v4359
        %v4361 = vmul.f32 %v3410, 1.442695
        %v4362 = vpow.pop %v4361
        %v4363 = vmul.f32 %v3411, 1.442695
        %v4364 = vpow.pop %v4363
        %v4365 = vmul.f32 %v3412, 1.442695
        %v4366 = vpow.pop %v4365
        %v4367 = vmul.f32 %v3413, 1.442695
        %v4368 = vpow.pop %v4367
        %v4369 = vmul.f32 %v3414, 1.442695
        %v4370 = vpow.pop %v4369
        %v4371 = vmul.f32 %v3415, 1.442695
        %v4372 = vpow.pop %v4371
        %v4373 = vmul.f32 %v3416, 1.442695
        %v4374 = vpow.pop %v4373
        %v4375 = vmul.f32 %v3417, 1.442695
        %v4376 = vpow.pop %v4375
        %v4377 = vmul.f32 %v3418, 1.442695
        %v4378 = vpow.pop %v4377
        %v4379 = vmul.f32 %v3419, 1.442695
        %v4380 = vpow.pop %v4379
        %v4381 = vmul.f32 %v3420, 1.442695
        %v4382 = vpow.pop %v4381
        %v4383 = vmul.f32 %v3421, 1.442695
        %v4384 = vpow.pop %v4383
        %v4385 = vmul.f32 %v3422, 1.442695
        %v4386 = vpow.pop %v4385
        %v4387 = vmul.f32 %v3423, 1.442695
        %v4388 = vpow.pop %v4387
        %v4389 = vmul.f32 %v3424, 1.442695
        %v4390 = vpow.pop %v4389
        %v4391 = vmul.f32 %v3425, 1.442695
        %v4392 = vpow.pop %v4391
        %v4393 = vmul.f32 %v3426, 1.442695
        %v4394 = vpow.pop %v4393
        %v4395 = vmul.f32 %v3427, 1.442695
        %v4396 = vpow.pop %v4395
        %v4397 = vmul.f32 %v3428, 1.442695
        %v4398 = vpow.pop %v4397
        %v4399 = vmul.f32 %v3429, 1.442695
        %v4400 = vpow.pop %v4399
        %v4401 = vmul.f32 %v3430, 1.442695
        %v4402 = vpow.pop %v4401
        %v4403 = vmul.f32 %v3431, 1.442695
        %v4404 = vpow.pop %v4403
        %v4405 = vmul.f32 %v3432, 1.442695
        %v4406 = vpow.pop %v4405
        %v4407 = vmul.f32 %v3433, 1.442695
        %v4408 = vpow.pop %v4407
        %v4409 = vmul.f32 %v3434, 1.442695
        %v4410 = vpow.pop %v4409
        %v4411 = vmul.f32 %v3435, 1.442695
        %v4412 = vpow.pop %v4411
        %v4413 = vmul.f32 %v3436, 1.442695
        %v4414 = vpow.pop %v4413
        %v4415 = vmul.f32 %v3437, 1.442695
        %v4416 = vpow.pop %v4415
        %v4417 = vmul.f32 %v3438, 1.442695
        %v4418 = vpow.pop %v4417
        %v4419 = vmul.f32 %v3439, 1.442695
        %v4420 = vpow.pop %v4419
        %v4421 = vmul.f32 %v3440, 1.442695
        %v4422 = vpow.pop %v4421
        %v4423 = vmul.f32 %v3441, 1.442695
        %v4424 = vpow.pop %v4423
        %v4425 = vmul.f32 %v3442, 1.442695
        %v4426 = vpow.pop %v4425
        %v4427 = vmul.f32 %v3443, 1.442695
        %v4428 = vpow.pop %v4427
        %v4429 = vmul.f32 %v3444, 1.442695
        %v4430 = vpow.pop %v4429
        %v4431 = vmul.f32 %v3445, 1.442695
        %v4432 = vpow.pop %v4431
        %v4433 = vmul.f32 %v3446, 1.442695
        %v4434 = vpow.pop %v4433
        %v4435 = vmul.f32 %v3447, 1.442695
        %v4436 = vpow.pop %v4435
        %v4437 = vmul.f32 %v3448, 1.442695
        %v4438 = vpow.pop %v4437
        %v4439 = vmul.f32 %v3449, 1.442695
        %v4440 = vpow.pop %v4439
        %v4441 = vmul.f32 %v3450, 1.442695
        %v4442 = vpow.pop %v4441
        %v4443 = vmul.f32 %v3451, 1.442695
        %v4444 = vpow.pop %v4443
        %v4445 = vmul.f32 %v3452, 1.442695
        %v4446 = vpow.pop %v4445
        %v4447 = vmul.f32 %v3453, 1.442695
        %v4448 = vpow.pop %v4447
        %v4449 = vmul.f32 %v3454, 1.442695
        %v4450 = vpow.pop %v4449
        %v4451 = vmul.f32 %v3455, 1.442695
        %v4452 = vpow.pop %v4451
        %v4453 = vmul.f32 %v3456, 1.442695
        %v4454 = vpow.pop %v4453
        %v4455 = vmul.f32 %v3457, 1.442695
        %v4456 = vpow.pop %v4455
        %v4457 = vmul.f32 %v3458, 1.442695
        %v4458 = vpow.pop %v4457
        %v4459 = vmul.f32 %v3459, 1.442695
        %v4460 = vpow.pop %v4459
        %v4461 = vmul.f32 %v3460, 1.442695
        %v4462 = vpow.pop %v4461
        %v4463 = vmul.f32 %v3461, 1.442695
        %v4464 = vpow.pop %v4463
        %v4465 = vmul.f32 %v3462, 1.442695
        %v4466 = vpow.pop %v4465
        %v4467 = vmul.f32 %v3463, 1.442695
        %v4468 = vpow.pop %v4467
        %v4469 = vmul.f32 %v3464, 1.442695
        %v4470 = vpow.pop %v4469
        %v4471 = vmul.f32 %v3465, 1.442695
        %v4472 = vpow.pop %v4471
        %v4473 = vmul.f32 %v3466, 1.442695
        %v4474 = vpow.pop %v4473
        %v4475 = vmul.f32 %v3467, 1.442695
        %v4476 = vpow.pop %v4475
        %v4477 = vmul.f32 %v3468, 1.442695
        %v4478 = vpow.pop %v4477
        %v4479 = vmul.f32 %v3469, 1.442695
        %v4480 = vpow.pop %v4479
        %v4481 = vmul.f32 %v3470, 1.442695
        %v4482 = vpow.pop %v4481
        %v4483 = vmul.f32 %v3471, 1.442695
        %v4484 = vpow.pop %v4483
        %v4485 = vmul.f32 %v3472, 1.442695
        %v4486 = vpow.pop %v4485
        %v4487 = vmul.f32 %v3473, 1.442695
        %v4488 = vpow.pop %v4487
        %v4489 = vmul.f32 %v3474, 1.442695
        %v4490 = vpow.pop %v4489
        %v4491 = vmul.f32 %v3475, 1.442695
        %v4492 = vpow.pop %v4491
        %v4493 = vmul.f32 %v3476, 1.442695
        %v4494 = vpow.pop %v4493
        %v4495 = vmul.f32 %v3477, 1.442695
        %v4496 = vpow.pop %v4495
        %v4497 = vmul.f32 %v3478, 1.442695
        %v4498 = vpow.pop %v4497
        %v4499 = vmul.f32 %v3479, 1.442695
        %v4500 = vpow.pop %v4499
        %v4501 = vmul.f32 %v3480, 1.442695
        %v4502 = vpow.pop %v4501
        %v4503 = vmul.f32 %v3481, 1.442695
        %v4504 = vpow.pop %v4503
        %v4505 = vmul.f32 %v3482, 1.442695
        %v4506 = vpow.pop %v4505
        %v4507 = vadd.f32 %v3484, 1.0
        %v4508 = vadd.f32 %v3486, 1.0
        %v4509 = vadd.f32 %v3488, 1.0
        %v4510 = vadd.f32 %v3490, 1.0
        %v4511 = vadd.f32 %v3492, 1.0
        %v4512 = vadd.f32 %v3494, 1.0
        %v4513 = vadd.f32 %v3496, 1.0
        %v4514 = vadd.f32 %v3498, 1.0
        %v4515 = vadd.f32 %v3500, 1.0
        %v4516 = vadd.f32 %v3502, 1.0
        %v4517 = vadd.f32 %v3504, 1.0
        %v4518 = vadd.f32 %v3506, 1.0
        %v4519 = vadd.f32 %v3508, 1.0
        %v4520 = vadd.f32 %v3510, 1.0
        %v4521 = vadd.f32 %v3512, 1.0
        %v4522 = vadd.f32 %v3514, 1.0
        %v4523 = vadd.f32 %v3516, 1.0
        %v4524 = vadd.f32 %v3518, 1.0
        %v4525 = vadd.f32 %v3520, 1.0
        %v4526 = vadd.f32 %v3522, 1.0
        %v4527 = vadd.f32 %v3524, 1.0
        %v4528 = vadd.f32 %v3526, 1.0
        %v4529 = vadd.f32 %v3528, 1.0
        %v4530 = vadd.f32 %v3530, 1.0
        %v4531 = vadd.f32 %v3532, 1.0
        %v4532 = vadd.f32 %v3534, 1.0
        %v4533 = vadd.f32 %v3536, 1.0
        %v4534 = vadd.f32 %v3538, 1.0
        %v4535 = vadd.f32 %v3540, 1.0
        %v4536 = vadd.f32 %v3542, 1.0
        %v4537 = vadd.f32 %v3544, 1.0
        %v4538 = vadd.f32 %v3546, 1.0
        %v4539 = vadd.f32 %v3548, 1.0
        %v4540 = vadd.f32 %v3550, 1.0
        %v4541 = vadd.f32 %v3552, 1.0
        %v4542 = vadd.f32 %v3554, 1.0
        %v4543 = vadd.f32 %v3556, 1.0
        %v4544 = vadd.f32 %v3558, 1.0
        %v4545 = vadd.f32 %v3560, 1.0
        %v4546 = vadd.f32 %v3562, 1.0
        %v4547 = vadd.f32 %v3564, 1.0
        %v4548 = vadd.f32 %v3566, 1.0
        %v4549 = vadd.f32 %v3568, 1.0
        %v4550 = vadd.f32 %v3570, 1.0
        %v4551 = vadd.f32 %v3572, 1.0
        %v4552 = vadd.f32 %v3574, 1.0
        %v4553 = vadd.f32 %v3576, 1.0
        %v4554 = vadd.f32 %v3578, 1.0
        %v4555 = vadd.f32 %v3580, 1.0
        %v4556 = vadd.f32 %v3582, 1.0
        %v4557 = vadd.f32 %v3584, 1.0
        %v4558 = vadd.f32 %v3586, 1.0
        %v4559 = vadd.f32 %v3588, 1.0
        %v4560 = vadd.f32 %v3590, 1.0
        %v4561 = vadd.f32 %v3592, 1.0
        %v4562 = vadd.f32 %v3594, 1.0
        %v4563 = vadd.f32 %v3596, 1.0
        %v4564 = vadd.f32 %v3598, 1.0
        %v4565 = vadd.f32 %v3600, 1.0
        %v4566 = vadd.f32 %v3602, 1.0
        %v4567 = vadd.f32 %v3604, 1.0
        %v4568 = vadd.f32 %v3606, 1.0
        %v4569 = vadd.f32 %v3608, 1.0
        %v4570 = vadd.f32 %v3610, 1.0
        %v4571 = vadd.f32 %v3612, 1.0
        %v4572 = vadd.f32 %v3614, 1.0
        %v4573 = vadd.f32 %v3616, 1.0
        %v4574 = vadd.f32 %v3618, 1.0
        %v4575 = vadd.f32 %v3620, 1.0
        %v4576 = vadd.f32 %v3622, 1.0
        %v4577 = vadd.f32 %v3624, 1.0
        %v4578 = vadd.f32 %v3626, 1.0
        %v4579 = vadd.f32 %v3628, 1.0
        %v4580 = vadd.f32 %v3630, 1.0
        %v4581 = vadd.f32 %v3632, 1.0
        %v4582 = vadd.f32 %v3634, 1.0
        %v4583 = vadd.f32 %v3636, 1.0
        %v4584 = vadd.f32 %v3638, 1.0
        %v4585 = vadd.f32 %v3640, 1.0
        %v4586 = vadd.f32 %v3642, 1.0
        %v4587 = vadd.f32 %v3644, 1.0
        %v4588 = vadd.f32 %v3646, 1.0
        %v4589 = vadd.f32 %v3648, 1.0
        %v4590 = vadd.f32 %v3650, 1.0
        %v4591 = vadd.f32 %v3652, 1.0
        %v4592 = vadd.f32 %v3654, 1.0
        %v4593 = vadd.f32 %v3656, 1.0
        %v4594 = vadd.f32 %v3658, 1.0
        %v4595 = vadd.f32 %v3660, 1.0
        %v4596 = vadd.f32 %v3662, 1.0
        %v4597 = vadd.f32 %v3664, 1.0
        %v4598 = vadd.f32 %v3666, 1.0
        %v4599 = vadd.f32 %v3668, 1.0
        %v4600 = vadd.f32 %v3670, 1.0
        %v4601 = vadd.f32 %v3672, 1.0
        %v4602 = vadd.f32 %v3674, 1.0
        %v4603 = vadd.f32 %v3676, 1.0
        %v4604 = vadd.f32 %v3678, 1.0
        %v4605 = vadd.f32 %v3680, 1.0
        %v4606 = vadd.f32 %v3682, 1.0
        %v4607 = vadd.f32 %v3684, 1.0
        %v4608 = vadd.f32 %v3686, 1.0
        %v4609 = vadd.f32 %v3688, 1.0
        %v4610 = vadd.f32 %v3690, 1.0
        %v4611 = vadd.f32 %v3692, 1.0
        %v4612 = vadd.f32 %v3694, 1.0
        %v4613 = vadd.f32 %v3696, 1.0
        %v4614 = vadd.f32 %v3698, 1.0
        %v4615 = vadd.f32 %v3700, 1.0
        %v4616 = vadd.f32 %v3702, 1.0
        %v4617 = vadd.f32 %v3704, 1.0
        %v4618 = vadd.f32 %v3706, 1.0
        %v4619 = vadd.f32 %v3708, 1.0
        %v4620 = vadd.f32 %v3710, 1.0
        %v4621 = vadd.f32 %v3712, 1.0
        %v4622 = vadd.f32 %v3714, 1.0
        %v4623 = vadd.f32 %v3716, 1.0
        %v4624 = vadd.f32 %v3718, 1.0
        %v4625 = vadd.f32 %v3720, 1.0
        %v4626 = vadd.f32 %v3722, 1.0
        %v4627 = vadd.f32 %v3724, 1.0
        %v4628 = vadd.f32 %v3726, 1.0
        %v4629 = vadd.f32 %v3728, 1.0
        %v4630 = vadd.f32 %v3730, 1.0
        %v4631 = vadd.f32 %v3732, 1.0
        %v4632 = vadd.f32 %v3734, 1.0
        %v4633 = vadd.f32 %v3736, 1.0
        %v4634 = vadd.f32 %v3738, 1.0
        %v4635 = vadd.f32 %v3740, 1.0
        %v4636 = vadd.f32 %v3742, 1.0
        %v4637 = vadd.f32 %v3744, 1.0
        %v4638 = vadd.f32 %v3746, 1.0
        %v4639 = vadd.f32 %v3748, 1.0
        %v4640 = vadd.f32 %v3750, 1.0
        %v4641 = vadd.f32 %v3752, 1.0
        %v4642 = vadd.f32 %v3754, 1.0
        %v4643 = vadd.f32 %v3756, 1.0
        %v4644 = vadd.f32 %v3758, 1.0
        %v4645 = vadd.f32 %v3760, 1.0
        %v4646 = vadd.f32 %v3762, 1.0
        %v4647 = vadd.f32 %v3764, 1.0
        %v4648 = vadd.f32 %v3766, 1.0
        %v4649 = vadd.f32 %v3768, 1.0
        %v4650 = vadd.f32 %v3770, 1.0
        %v4651 = vadd.f32 %v3772, 1.0
        %v4652 = vadd.f32 %v3774, 1.0
        %v4653 = vadd.f32 %v3776, 1.0
        %v4654 = vadd.f32 %v3778, 1.0
        %v4655 = vadd.f32 %v3780, 1.0
        %v4656 = vadd.f32 %v3782, 1.0
        %v4657 = vadd.f32 %v3784, 1.0
        %v4658 = vadd.f32 %v3786, 1.0
        %v4659 = vadd.f32 %v3788, 1.0
        %v4660 = vadd.f32 %v3790, 1.0
        %v4661 = vadd.f32 %v3792, 1.0
        %v4662 = vadd.f32 %v3794, 1.0
        %v4663 = vadd.f32 %v3796, 1.0
        %v4664 = vadd.f32 %v3798, 1.0
        %v4665 = vadd.f32 %v3800, 1.0
        %v4666 = vadd.f32 %v3802, 1.0
        %v4667 = vadd.f32 %v3804, 1.0
        %v4668 = vadd.f32 %v3806, 1.0
        %v4669 = vadd.f32 %v3808, 1.0
        %v4670 = vadd.f32 %v3810, 1.0
        %v4671 = vadd.f32 %v3812, 1.0
        %v4672 = vadd.f32 %v3814, 1.0
        %v4673 = vadd.f32 %v3816, 1.0
        %v4674 = vadd.f32 %v3818, 1.0
        %v4675 = vadd.f32 %v3820, 1.0
        %v4676 = vadd.f32 %v3822, 1.0
        %v4677 = vadd.f32 %v3824, 1.0
        %v4678 = vadd.f32 %v3826, 1.0
        %v4679 = vadd.f32 %v3828, 1.0
        %v4680 = vadd.f32 %v3830, 1.0
        %v4681 = vadd.f32 %v3832, 1.0
        %v4682 = vadd.f32 %v3834, 1.0
        %v4683 = vadd.f32 %v3836, 1.0
        %v4684 = vadd.f32 %v3838, 1.0
        %v4685 = vadd.f32 %v3840, 1.0
        %v4686 = vadd.f32 %v3842, 1.0
        %v4687 = vadd.f32 %v3844, 1.0
        %v4688 = vadd.f32 %v3846, 1.0
        %v4689 = vadd.f32 %v3848, 1.0
        %v4690 = vadd.f32 %v3850, 1.0
        %v4691 = vadd.f32 %v3852, 1.0
        %v4692 = vadd.f32 %v3854, 1.0
        %v4693 = vadd.f32 %v3856, 1.0
        %v4694 = vadd.f32 %v3858, 1.0
        %v4695 = vadd.f32 %v3860, 1.0
        %v4696 = vadd.f32 %v3862, 1.0
        %v4697 = vadd.f32 %v3864, 1.0
        %v4698 = vadd.f32 %v3866, 1.0
        %v4699 = vadd.f32 %v3868, 1.0
        %v4700 = vadd.f32 %v3870, 1.0
        %v4701 = vadd.f32 %v3872, 1.0
        %v4702 = vadd.f32 %v3874, 1.0
        %v4703 = vadd.f32 %v3876, 1.0
        %v4704 = vadd.f32 %v3878, 1.0
        %v4705 = vadd.f32 %v3880, 1.0
        %v4706 = vadd.f32 %v3882, 1.0
        %v4707 = vadd.f32 %v3884, 1.0
        %v4708 = vadd.f32 %v3886, 1.0
        %v4709 = vadd.f32 %v3888, 1.0
        %v4710 = vadd.f32 %v3890, 1.0
        %v4711 = vadd.f32 %v3892, 1.0
        %v4712 = vadd.f32 %v3894, 1.0
        %v4713 = vadd.f32 %v3896, 1.0
        %v4714 = vadd.f32 %v3898, 1.0
        %v4715 = vadd.f32 %v3900, 1.0
        %v4716 = vadd.f32 %v3902, 1.0
        %v4717 = vadd.f32 %v3904, 1.0
        %v4718 = vadd.f32 %v3906, 1.0
        %v4719 = vadd.f32 %v3908, 1.0
        %v4720 = vadd.f32 %v3910, 1.0
        %v4721 = vadd.f32 %v3912, 1.0
        %v4722 = vadd.f32 %v3914, 1.0
        %v4723 = vadd.f32 %v3916, 1.0
        %v4724 = vadd.f32 %v3918, 1.0
        %v4725 = vadd.f32 %v3920, 1.0
        %v4726 = vadd.f32 %v3922, 1.0
        %v4727 = vadd.f32 %v3924, 1.0
        %v4728 = vadd.f32 %v3926, 1.0
        %v4729 = vadd.f32 %v3928, 1.0
        %v4730 = vadd.f32 %v3930, 1.0
        %v4731 = vadd.f32 %v3932, 1.0
        %v4732 = vadd.f32 %v3934, 1.0
        %v4733 = vadd.f32 %v3936, 1.0
        %v4734 = vadd.f32 %v3938, 1.0
        %v4735 = vadd.f32 %v3940, 1.0
        %v4736 = vadd.f32 %v3942, 1.0
        %v4737 = vadd.f32 %v3944, 1.0
        %v4738 = vadd.f32 %v3946, 1.0
        %v4739 = vadd.f32 %v3948, 1.0
        %v4740 = vadd.f32 %v3950, 1.0
        %v4741 = vadd.f32 %v3952, 1.0
        %v4742 = vadd.f32 %v3954, 1.0
        %v4743 = vadd.f32 %v3956, 1.0
        %v4744 = vadd.f32 %v3958, 1.0
        %v4745 = vadd.f32 %v3960, 1.0
        %v4746 = vadd.f32 %v3962, 1.0
        %v4747 = vadd.f32 %v3964, 1.0
        %v4748 = vadd.f32 %v3966, 1.0
        %v4749 = vadd.f32 %v3968, 1.0
        %v4750 = vadd.f32 %v3970, 1.0
        %v4751 = vadd.f32 %v3972, 1.0
        %v4752 = vadd.f32 %v3974, 1.0
        %v4753 = vadd.f32 %v3976, 1.0
        %v4754 = vadd.f32 %v3978, 1.0
        %v4755 = vadd.f32 %v3980, 1.0
        %v4756 = vadd.f32 %v3982, 1.0
        %v4757 = vadd.f32 %v3984, 1.0
        %v4758 = vadd.f32 %v3986, 1.0
        %v4759 = vadd.f32 %v3988, 1.0
        %v4760 = vadd.f32 %v3990, 1.0
        %v4761 = vadd.f32 %v3992, 1.0
        %v4762 = vadd.f32 %v3994, 1.0
        %v4763 = vadd.f32 %v3996, 1.0
        %v4764 = vadd.f32 %v3998, 1.0
        %v4765 = vadd.f32 %v4000, 1.0
        %v4766 = vadd.f32 %v4002, 1.0
        %v4767 = vadd.f32 %v4004, 1.0
        %v4768 = vadd.f32 %v4006, 1.0
        %v4769 = vadd.f32 %v4008, 1.0
        %v4770 = vadd.f32 %v4010, 1.0
        %v4771 = vadd.f32 %v4012, 1.0
        %v4772 = vadd.f32 %v4014, 1.0
        %v4773 = vadd.f32 %v4016, 1.0
        %v4774 = vadd.f32 %v4018, 1.0
        %v4775 = vadd.f32 %v4020, 1.0
        %v4776 = vadd.f32 %v4022, 1.0
        %v4777 = vadd.f32 %v4024, 1.0
        %v4778 = vadd.f32 %v4026, 1.0
        %v4779 = vadd.f32 %v4028, 1.0
        %v4780 = vadd.f32 %v4030, 1.0
        %v4781 = vadd.f32 %v4032, 1.0
        %v4782 = vadd.f32 %v4034, 1.0
        %v4783 = vadd.f32 %v4036, 1.0
        %v4784 = vadd.f32 %v4038, 1.0
        %v4785 = vadd.f32 %v4040, 1.0
        %v4786 = vadd.f32 %v4042, 1.0
        %v4787 = vadd.f32 %v4044, 1.0
        %v4788 = vadd.f32 %v4046, 1.0
        %v4789 = vadd.f32 %v4048, 1.0
        %v4790 = vadd.f32 %v4050, 1.0
        %v4791 = vadd.f32 %v4052, 1.0
        %v4792 = vadd.f32 %v4054, 1.0
        %v4793 = vadd.f32 %v4056, 1.0
        %v4794 = vadd.f32 %v4058, 1.0
        %v4795 = vadd.f32 %v4060, 1.0
        %v4796 = vadd.f32 %v4062, 1.0
        %v4797 = vadd.f32 %v4064, 1.0
        %v4798 = vadd.f32 %v4066, 1.0
        %v4799 = vadd.f32 %v4068, 1.0
        %v4800 = vadd.f32 %v4070, 1.0
        %v4801 = vadd.f32 %v4072, 1.0
        %v4802 = vadd.f32 %v4074, 1.0
        %v4803 = vadd.f32 %v4076, 1.0
        %v4804 = vadd.f32 %v4078, 1.0
        %v4805 = vadd.f32 %v4080, 1.0
        %v4806 = vadd.f32 %v4082, 1.0
        %v4807 = vadd.f32 %v4084, 1.0
        %v4808 = vadd.f32 %v4086, 1.0
        %v4809 = vadd.f32 %v4088, 1.0
        %v4810 = vadd.f32 %v4090, 1.0
        %v4811 = vadd.f32 %v4092, 1.0
        %v4812 = vadd.f32 %v4094, 1.0
        %v4813 = vadd.f32 %v4096, 1.0
        %v4814 = vadd.f32 %v4098, 1.0
        %v4815 = vadd.f32 %v4100, 1.0
        %v4816 = vadd.f32 %v4102, 1.0
        %v4817 = vadd.f32 %v4104, 1.0
        %v4818 = vadd.f32 %v4106, 1.0
        %v4819 = vadd.f32 %v4108, 1.0
        %v4820 = vadd.f32 %v4110, 1.0
        %v4821 = vadd.f32 %v4112, 1.0
        %v4822 = vadd.f32 %v4114, 1.0
        %v4823 = vadd.f32 %v4116, 1.0
        %v4824 = vadd.f32 %v4118, 1.0
        %v4825 = vadd.f32 %v4120, 1.0
        %v4826 = vadd.f32 %v4122, 1.0
        %v4827 = vadd.f32 %v4124, 1.0
        %v4828 = vadd.f32 %v4126, 1.0
        %v4829 = vadd.f32 %v4128, 1.0
        %v4830 = vadd.f32 %v4130, 1.0
        %v4831 = vadd.f32 %v4132, 1.0
        %v4832 = vadd.f32 %v4134, 1.0
        %v4833 = vadd.f32 %v4136, 1.0
        %v4834 = vadd.f32 %v4138, 1.0
        %v4835 = vadd.f32 %v4140, 1.0
        %v4836 = vadd.f32 %v4142, 1.0
        %v4837 = vadd.f32 %v4144, 1.0
        %v4838 = vadd.f32 %v4146, 1.0
        %v4839 = vadd.f32 %v4148, 1.0
        %v4840 = vadd.f32 %v4150, 1.0
        %v4841 = vadd.f32 %v4152, 1.0
        %v4842 = vadd.f32 %v4154, 1.0
        %v4843 = vadd.f32 %v4156, 1.0
        %v4844 = vadd.f32 %v4158, 1.0
        %v4845 = vadd.f32 %v4160, 1.0
        %v4846 = vadd.f32 %v4162, 1.0
        %v4847 = vadd.f32 %v4164, 1.0
        %v4848 = vadd.f32 %v4166, 1.0
        %v4849 = vadd.f32 %v4168, 1.0
        %v4850 = vadd.f32 %v4170, 1.0
        %v4851 = vadd.f32 %v4172, 1.0
        %v4852 = vadd.f32 %v4174, 1.0
        %v4853 = vadd.f32 %v4176, 1.0
        %v4854 = vadd.f32 %v4178, 1.0
        %v4855 = vadd.f32 %v4180, 1.0
        %v4856 = vadd.f32 %v4182, 1.0
        %v4857 = vadd.f32 %v4184, 1.0
        %v4858 = vadd.f32 %v4186, 1.0
        %v4859 = vadd.f32 %v4188, 1.0
        %v4860 = vadd.f32 %v4190, 1.0
        %v4861 = vadd.f32 %v4192, 1.0
        %v4862 = vadd.f32 %v4194, 1.0
        %v4863 = vadd.f32 %v4196, 1.0
        %v4864 = vadd.f32 %v4198, 1.0
        %v4865 = vadd.f32 %v4200, 1.0
        %v4866 = vadd.f32 %v4202, 1.0
        %v4867 = vadd.f32 %v4204, 1.0
        %v4868 = vadd.f32 %v4206, 1.0
        %v4869 = vadd.f32 %v4208, 1.0
        %v4870 = vadd.f32 %v4210, 1.0
        %v4871 = vadd.f32 %v4212, 1.0
        %v4872 = vadd.f32 %v4214, 1.0
        %v4873 = vadd.f32 %v4216, 1.0
        %v4874 = vadd.f32 %v4218, 1.0
        %v4875 = vadd.f32 %v4220, 1.0
        %v4876 = vadd.f32 %v4222, 1.0
        %v4877 = vadd.f32 %v4224, 1.0
        %v4878 = vadd.f32 %v4226, 1.0
        %v4879 = vadd.f32 %v4228, 1.0
        %v4880 = vadd.f32 %v4230, 1.0
        %v4881 = vadd.f32 %v4232, 1.0
        %v4882 = vadd.f32 %v4234, 1.0
        %v4883 = vadd.f32 %v4236, 1.0
        %v4884 = vadd.f32 %v4238, 1.0
        %v4885 = vadd.f32 %v4240, 1.0
        %v4886 = vadd.f32 %v4242, 1.0
        %v4887 = vadd.f32 %v4244, 1.0
        %v4888 = vadd.f32 %v4246, 1.0
        %v4889 = vadd.f32 %v4248, 1.0
        %v4890 = vadd.f32 %v4250, 1.0
        %v4891 = vadd.f32 %v4252, 1.0
        %v4892 = vadd.f32 %v4254, 1.0
        %v4893 = vadd.f32 %v4256, 1.0
        %v4894 = vadd.f32 %v4258, 1.0
        %v4895 = vadd.f32 %v4260, 1.0
        %v4896 = vadd.f32 %v4262, 1.0
        %v4897 = vadd.f32 %v4264, 1.0
        %v4898 = vadd.f32 %v4266, 1.0
        %v4899 = vadd.f32 %v4268, 1.0
        %v4900 = vadd.f32 %v4270, 1.0
        %v4901 = vadd.f32 %v4272, 1.0
        %v4902 = vadd.f32 %v4274, 1.0
        %v4903 = vadd.f32 %v4276, 1.0
        %v4904 = vadd.f32 %v4278, 1.0
        %v4905 = vadd.f32 %v4280, 1.0
        %v4906 = vadd.f32 %v4282, 1.0
        %v4907 = vadd.f32 %v4284, 1.0
        %v4908 = vadd.f32 %v4286, 1.0
        %v4909 = vadd.f32 %v4288, 1.0
        %v4910 = vadd.f32 %v4290, 1.0
        %v4911 = vadd.f32 %v4292, 1.0
        %v4912 = vadd.f32 %v4294, 1.0
        %v4913 = vadd.f32 %v4296, 1.0
        %v4914 = vadd.f32 %v4298, 1.0
        %v4915 = vadd.f32 %v4300, 1.0
        %v4916 = vadd.f32 %v4302, 1.0
        %v4917 = vadd.f32 %v4304, 1.0
        %v4918 = vadd.f32 %v4306, 1.0
        %v4919 = vadd.f32 %v4308, 1.0
        %v4920 = vadd.f32 %v4310, 1.0
        %v4921 = vadd.f32 %v4312, 1.0
        %v4922 = vadd.f32 %v4314, 1.0
        %v4923 = vadd.f32 %v4316, 1.0
        %v4924 = vadd.f32 %v4318, 1.0
        %v4925 = vadd.f32 %v4320, 1.0
        %v4926 = vadd.f32 %v4322, 1.0
        %v4927 = vadd.f32 %v4324, 1.0
        %v4928 = vadd.f32 %v4326, 1.0
        %v4929 = vadd.f32 %v4328, 1.0
        %v4930 = vadd.f32 %v4330, 1.0
        %v4931 = vadd.f32 %v4332, 1.0
        %v4932 = vadd.f32 %v4334, 1.0
        %v4933 = vadd.f32 %v4336, 1.0
        %v4934 = vadd.f32 %v4338, 1.0
        %v4935 = vadd.f32 %v4340, 1.0
        %v4936 = vadd.f32 %v4342, 1.0
        %v4937 = vadd.f32 %v4344, 1.0
        %v4938 = vadd.f32 %v4346, 1.0
        %v4939 = vadd.f32 %v4348, 1.0
        %v4940 = vadd.f32 %v4350, 1.0
        %v4941 = vadd.f32 %v4352, 1.0
        %v4942 = vadd.f32 %v4354, 1.0
        %v4943 = vadd.f32 %v4356, 1.0
        %v4944 = vadd.f32 %v4358, 1.0
        %v4945 = vadd.f32 %v4360, 1.0
        %v4946 = vadd.f32 %v4362, 1.0
        %v4947 = vadd.f32 %v4364, 1.0
        %v4948 = vadd.f32 %v4366, 1.0
        %v4949 = vadd.f32 %v4368, 1.0
        %v4950 = vadd.f32 %v4370, 1.0
        %v4951 = vadd.f32 %v4372, 1.0
        %v4952 = vadd.f32 %v4374, 1.0
        %v4953 = vadd.f32 %v4376, 1.0
        %v4954 = vadd.f32 %v4378, 1.0
        %v4955 = vadd.f32 %v4380, 1.0
        %v4956 = vadd.f32 %v4382, 1.0
        %v4957 = vadd.f32 %v4384, 1.0
        %v4958 = vadd.f32 %v4386, 1.0
        %v4959 = vadd.f32 %v4388, 1.0
        %v4960 = vadd.f32 %v4390, 1.0
        %v4961 = vadd.f32 %v4392, 1.0
        %v4962 = vadd.f32 %v4394, 1.0
        %v4963 = vadd.f32 %v4396, 1.0
        %v4964 = vadd.f32 %v4398, 1.0
        %v4965 = vadd.f32 %v4400, 1.0
        %v4966 = vadd.f32 %v4402, 1.0
        %v4967 = vadd.f32 %v4404, 1.0
        %v4968 = vadd.f32 %v4406, 1.0
        %v4969 = vadd.f32 %v4408, 1.0
        %v4970 = vadd.f32 %v4410, 1.0
        %v4971 = vadd.f32 %v4412, 1.0
        %v4972 = vadd.f32 %v4414, 1.0
        %v4973 = vadd.f32 %v4416, 1.0
        %v4974 = vadd.f32 %v4418, 1.0
        %v4975 = vadd.f32 %v4420, 1.0
        %v4976 = vadd.f32 %v4422, 1.0
        %v4977 = vadd.f32 %v4424, 1.0
        %v4978 = vadd.f32 %v4426, 1.0
        %v4979 = vadd.f32 %v4428, 1.0
        %v4980 = vadd.f32 %v4430, 1.0
        %v4981 = vadd.f32 %v4432, 1.0
        %v4982 = vadd.f32 %v4434, 1.0
        %v4983 = vadd.f32 %v4436, 1.0
        %v4984 = vadd.f32 %v4438, 1.0
        %v4985 = vadd.f32 %v4440, 1.0
        %v4986 = vadd.f32 %v4442, 1.0
        %v4987 = vadd.f32 %v4444, 1.0
        %v4988 = vadd.f32 %v4446, 1.0
        %v4989 = vadd.f32 %v4448, 1.0
        %v4990 = vadd.f32 %v4450, 1.0
        %v4991 = vadd.f32 %v4452, 1.0
        %v4992 = vadd.f32 %v4454, 1.0
        %v4993 = vadd.f32 %v4456, 1.0
        %v4994 = vadd.f32 %v4458, 1.0
        %v4995 = vadd.f32 %v4460, 1.0
        %v4996 = vadd.f32 %v4462, 1.0
        %v4997 = vadd.f32 %v4464, 1.0
        %v4998 = vadd.f32 %v4466, 1.0
        %v4999 = vadd.f32 %v4468, 1.0
        %v5000 = vadd.f32 %v4470, 1.0
        %v5001 = vadd.f32 %v4472, 1.0
        %v5002 = vadd.f32 %v4474, 1.0
        %v5003 = vadd.f32 %v4476, 1.0
        %v5004 = vadd.f32 %v4478, 1.0
        %v5005 = vadd.f32 %v4480, 1.0
        %v5006 = vadd.f32 %v4482, 1.0
        %v5007 = vadd.f32 %v4484, 1.0
        %v5008 = vadd.f32 %v4486, 1.0
        %v5009 = vadd.f32 %v4488, 1.0
        %v5010 = vadd.f32 %v4490, 1.0
        %v5011 = vadd.f32 %v4492, 1.0
        %v5012 = vadd.f32 %v4494, 1.0
        %v5013 = vadd.f32 %v4496, 1.0
        %v5014 = vadd.f32 %v4498, 1.0
        %v5015 = vadd.f32 %v4500, 1.0
        %v5016 = vadd.f32 %v4502, 1.0
        %v5017 = vadd.f32 %v4504, 1.0
        %v5018 = vadd.f32 %v4506, 1.0
        %v5019 = vrcp.pop %v4507
        %v5020 = vmul.f32 1.0, %v5019
        %v5021 = vrcp.pop %v4508
        %v5022 = vmul.f32 1.0, %v5021
        %v5023 = vrcp.pop %v4509
        %v5024 = vmul.f32 1.0, %v5023
        %v5025 = vrcp.pop %v4510
        %v5026 = vmul.f32 1.0, %v5025
        %v5027 = vrcp.pop %v4511
        %v5028 = vmul.f32 1.0, %v5027
        %v5029 = vrcp.pop %v4512
        %v5030 = vmul.f32 1.0, %v5029
        %v5031 = vrcp.pop %v4513
        %v5032 = vmul.f32 1.0, %v5031
        %v5033 = vrcp.pop %v4514
        %v5034 = vmul.f32 1.0, %v5033
        %v5035 = vrcp.pop %v4515
        %v5036 = vmul.f32 1.0, %v5035
        %v5037 = vrcp.pop %v4516
        %v5038 = vmul.f32 1.0, %v5037
        %v5039 = vrcp.pop %v4517
        %v5040 = vmul.f32 1.0, %v5039
        %v5041 = vrcp.pop %v4518
        %v5042 = vmul.f32 1.0, %v5041
        %v5043 = vrcp.pop %v4519
        %v5044 = vmul.f32 1.0, %v5043
        %v5045 = vrcp.pop %v4520
        %v5046 = vmul.f32 1.0, %v5045
        %v5047 = vrcp.pop %v4521
        %v5048 = vmul.f32 1.0, %v5047
        %v5049 = vrcp.pop %v4522
        %v5050 = vmul.f32 1.0, %v5049
        %v5051 = vrcp.pop %v4523
        %v5052 = vmul.f32 1.0, %v5051
        %v5053 = vrcp.pop %v4524
        %v5054 = vmul.f32 1.0, %v5053
        %v5055 = vrcp.pop %v4525
        %v5056 = vmul.f32 1.0, %v5055
        %v5057 = vrcp.pop %v4526
        %v5058 = vmul.f32 1.0, %v5057
        %v5059 = vrcp.pop %v4527
        %v5060 = vmul.f32 1.0, %v5059
        %v5061 = vrcp.pop %v4528
        %v5062 = vmul.f32 1.0, %v5061
        %v5063 = vrcp.pop %v4529
        %v5064 = vmul.f32 1.0, %v5063
        %v5065 = vrcp.pop %v4530
        %v5066 = vmul.f32 1.0, %v5065
        %v5067 = vrcp.pop %v4531
        %v5068 = vmul.f32 1.0, %v5067
        %v5069 = vrcp.pop %v4532
        %v5070 = vmul.f32 1.0, %v5069
        %v5071 = vrcp.pop %v4533
        %v5072 = vmul.f32 1.0, %v5071
        %v5073 = vrcp.pop %v4534
        %v5074 = vmul.f32 1.0, %v5073
        %v5075 = vrcp.pop %v4535
        %v5076 = vmul.f32 1.0, %v5075
        %v5077 = vrcp.pop %v4536
        %v5078 = vmul.f32 1.0, %v5077
        %v5079 = vrcp.pop %v4537
        %v5080 = vmul.f32 1.0, %v5079
        %v5081 = vrcp.pop %v4538
        %v5082 = vmul.f32 1.0, %v5081
        %v5083 = vrcp.pop %v4539
        %v5084 = vmul.f32 1.0, %v5083
        %v5085 = vrcp.pop %v4540
        %v5086 = vmul.f32 1.0, %v5085
        %v5087 = vrcp.pop %v4541
        %v5088 = vmul.f32 1.0, %v5087
        %v5089 = vrcp.pop %v4542
        %v5090 = vmul.f32 1.0, %v5089
        %v5091 = vrcp.pop %v4543
        %v5092 = vmul.f32 1.0, %v5091
        %v5093 = vrcp.pop %v4544
        %v5094 = vmul.f32 1.0, %v5093
        %v5095 = vrcp.pop %v4545
        %v5096 = vmul.f32 1.0, %v5095
        %v5097 = vrcp.pop %v4546
        %v5098 = vmul.f32 1.0, %v5097
        %v5099 = vrcp.pop %v4547
        %v5100 = vmul.f32 1.0, %v5099
        %v5101 = vrcp.pop %v4548
        %v5102 = vmul.f32 1.0, %v5101
        %v5103 = vrcp.pop %v4549
        %v5104 = vmul.f32 1.0, %v5103
        %v5105 = vrcp.pop %v4550
        %v5106 = vmul.f32 1.0, %v5105
        %v5107 = vrcp.pop %v4551
        %v5108 = vmul.f32 1.0, %v5107
        %v5109 = vrcp.pop %v4552
        %v5110 = vmul.f32 1.0, %v5109
        %v5111 = vrcp.pop %v4553
        %v5112 = vmul.f32 1.0, %v5111
        %v5113 = vrcp.pop %v4554
        %v5114 = vmul.f32 1.0, %v5113
        %v5115 = vrcp.pop %v4555
        %v5116 = vmul.f32 1.0, %v5115
        %v5117 = vrcp.pop %v4556
        %v5118 = vmul.f32 1.0, %v5117
        %v5119 = vrcp.pop %v4557
        %v5120 = vmul.f32 1.0, %v5119
        %v5121 = vrcp.pop %v4558
        %v5122 = vmul.f32 1.0, %v5121
        %v5123 = vrcp.pop %v4559
        %v5124 = vmul.f32 1.0, %v5123
        %v5125 = vrcp.pop %v4560
        %v5126 = vmul.f32 1.0, %v5125
        %v5127 = vrcp.pop %v4561
        %v5128 = vmul.f32 1.0, %v5127
        %v5129 = vrcp.pop %v4562
        %v5130 = vmul.f32 1.0, %v5129
        %v5131 = vrcp.pop %v4563
        %v5132 = vmul.f32 1.0, %v5131
        %v5133 = vrcp.pop %v4564
        %v5134 = vmul.f32 1.0, %v5133
        %v5135 = vrcp.pop %v4565
        %v5136 = vmul.f32 1.0, %v5135
        %v5137 = vrcp.pop %v4566
        %v5138 = vmul.f32 1.0, %v5137
        %v5139 = vrcp.pop %v4567
        %v5140 = vmul.f32 1.0, %v5139
        %v5141 = vrcp.pop %v4568
        %v5142 = vmul.f32 1.0, %v5141
        %v5143 = vrcp.pop %v4569
        %v5144 = vmul.f32 1.0, %v5143
        %v5145 = vrcp.pop %v4570
        %v5146 = vmul.f32 1.0, %v5145
        %v5147 = vrcp.pop %v4571
        %v5148 = vmul.f32 1.0, %v5147
        %v5149 = vrcp.pop %v4572
        %v5150 = vmul.f32 1.0, %v5149
        %v5151 = vrcp.pop %v4573
        %v5152 = vmul.f32 1.0, %v5151
        %v5153 = vrcp.pop %v4574
        %v5154 = vmul.f32 1.0, %v5153
        %v5155 = vrcp.pop %v4575
        %v5156 = vmul.f32 1.0, %v5155
        %v5157 = vrcp.pop %v4576
        %v5158 = vmul.f32 1.0, %v5157
        %v5159 = vrcp.pop %v4577
        %v5160 = vmul.f32 1.0, %v5159
        %v5161 = vrcp.pop %v4578
        %v5162 = vmul.f32 1.0, %v5161
        %v5163 = vrcp.pop %v4579
        %v5164 = vmul.f32 1.0, %v5163
        %v5165 = vrcp.pop %v4580
        %v5166 = vmul.f32 1.0, %v5165
        %v5167 = vrcp.pop %v4581
        %v5168 = vmul.f32 1.0, %v5167
        %v5169 = vrcp.pop %v4582
        %v5170 = vmul.f32 1.0, %v5169
        %v5171 = vrcp.pop %v4583
        %v5172 = vmul.f32 1.0, %v5171
        %v5173 = vrcp.pop %v4584
        %v5174 = vmul.f32 1.0, %v5173
        %v5175 = vrcp.pop %v4585
        %v5176 = vmul.f32 1.0, %v5175
        %v5177 = vrcp.pop %v4586
        %v5178 = vmul.f32 1.0, %v5177
        %v5179 = vrcp.pop %v4587
        %v5180 = vmul.f32 1.0, %v5179
        %v5181 = vrcp.pop %v4588
        %v5182 = vmul.f32 1.0, %v5181
        %v5183 = vrcp.pop %v4589
        %v5184 = vmul.f32 1.0, %v5183
        %v5185 = vrcp.pop %v4590
        %v5186 = vmul.f32 1.0, %v5185
        %v5187 = vrcp.pop %v4591
        %v5188 = vmul.f32 1.0, %v5187
        %v5189 = vrcp.pop %v4592
        %v5190 = vmul.f32 1.0, %v5189
        %v5191 = vrcp.pop %v4593
        %v5192 = vmul.f32 1.0, %v5191
        %v5193 = vrcp.pop %v4594
        %v5194 = vmul.f32 1.0, %v5193
        %v5195 = vrcp.pop %v4595
        %v5196 = vmul.f32 1.0, %v5195
        %v5197 = vrcp.pop %v4596
        %v5198 = vmul.f32 1.0, %v5197
        %v5199 = vrcp.pop %v4597
        %v5200 = vmul.f32 1.0, %v5199
        %v5201 = vrcp.pop %v4598
        %v5202 = vmul.f32 1.0, %v5201
        %v5203 = vrcp.pop %v4599
        %v5204 = vmul.f32 1.0, %v5203
        %v5205 = vrcp.pop %v4600
        %v5206 = vmul.f32 1.0, %v5205
        %v5207 = vrcp.pop %v4601
        %v5208 = vmul.f32 1.0, %v5207
        %v5209 = vrcp.pop %v4602
        %v5210 = vmul.f32 1.0, %v5209
        %v5211 = vrcp.pop %v4603
        %v5212 = vmul.f32 1.0, %v5211
        %v5213 = vrcp.pop %v4604
        %v5214 = vmul.f32 1.0, %v5213
        %v5215 = vrcp.pop %v4605
        %v5216 = vmul.f32 1.0, %v5215
        %v5217 = vrcp.pop %v4606
        %v5218 = vmul.f32 1.0, %v5217
        %v5219 = vrcp.pop %v4607
        %v5220 = vmul.f32 1.0, %v5219
        %v5221 = vrcp.pop %v4608
        %v5222 = vmul.f32 1.0, %v5221
        %v5223 = vrcp.pop %v4609
        %v5224 = vmul.f32 1.0, %v5223
        %v5225 = vrcp.pop %v4610
        %v5226 = vmul.f32 1.0, %v5225
        %v5227 = vrcp.pop %v4611
        %v5228 = vmul.f32 1.0, %v5227
        %v5229 = vrcp.pop %v4612
        %v5230 = vmul.f32 1.0, %v5229
        %v5231 = vrcp.pop %v4613
        %v5232 = vmul.f32 1.0, %v5231
        %v5233 = vrcp.pop %v4614
        %v5234 = vmul.f32 1.0, %v5233
        %v5235 = vrcp.pop %v4615
        %v5236 = vmul.f32 1.0, %v5235
        %v5237 = vrcp.pop %v4616
        %v5238 = vmul.f32 1.0, %v5237
        %v5239 = vrcp.pop %v4617
        %v5240 = vmul.f32 1.0, %v5239
        %v5241 = vrcp.pop %v4618
        %v5242 = vmul.f32 1.0, %v5241
        %v5243 = vrcp.pop %v4619
        %v5244 = vmul.f32 1.0, %v5243
        %v5245 = vrcp.pop %v4620
        %v5246 = vmul.f32 1.0, %v5245
        %v5247 = vrcp.pop %v4621
        %v5248 = vmul.f32 1.0, %v5247
        %v5249 = vrcp.pop %v4622
        %v5250 = vmul.f32 1.0, %v5249
        %v5251 = vrcp.pop %v4623
        %v5252 = vmul.f32 1.0, %v5251
        %v5253 = vrcp.pop %v4624
        %v5254 = vmul.f32 1.0, %v5253
        %v5255 = vrcp.pop %v4625
        %v5256 = vmul.f32 1.0, %v5255
        %v5257 = vrcp.pop %v4626
        %v5258 = vmul.f32 1.0, %v5257
        %v5259 = vrcp.pop %v4627
        %v5260 = vmul.f32 1.0, %v5259
        %v5261 = vrcp.pop %v4628
        %v5262 = vmul.f32 1.0, %v5261
        %v5263 = vrcp.pop %v4629
        %v5264 = vmul.f32 1.0, %v5263
        %v5265 = vrcp.pop %v4630
        %v5266 = vmul.f32 1.0, %v5265
        %v5267 = vrcp.pop %v4631
        %v5268 = vmul.f32 1.0, %v5267
        %v5269 = vrcp.pop %v4632
        %v5270 = vmul.f32 1.0, %v5269
        %v5271 = vrcp.pop %v4633
        %v5272 = vmul.f32 1.0, %v5271
        %v5273 = vrcp.pop %v4634
        %v5274 = vmul.f32 1.0, %v5273
        %v5275 = vrcp.pop %v4635
        %v5276 = vmul.f32 1.0, %v5275
        %v5277 = vrcp.pop %v4636
        %v5278 = vmul.f32 1.0, %v5277
        %v5279 = vrcp.pop %v4637
        %v5280 = vmul.f32 1.0, %v5279
        %v5281 = vrcp.pop %v4638
        %v5282 = vmul.f32 1.0, %v5281
        %v5283 = vrcp.pop %v4639
        %v5284 = vmul.f32 1.0, %v5283
        %v5285 = vrcp.pop %v4640
        %v5286 = vmul.f32 1.0, %v5285
        %v5287 = vrcp.pop %v4641
        %v5288 = vmul.f32 1.0, %v5287
        %v5289 = vrcp.pop %v4642
        %v5290 = vmul.f32 1.0, %v5289
        %v5291 = vrcp.pop %v4643
        %v5292 = vmul.f32 1.0, %v5291
        %v5293 = vrcp.pop %v4644
        %v5294 = vmul.f32 1.0, %v5293
        %v5295 = vrcp.pop %v4645
        %v5296 = vmul.f32 1.0, %v5295
        %v5297 = vrcp.pop %v4646
        %v5298 = vmul.f32 1.0, %v5297
        %v5299 = vrcp.pop %v4647
        %v5300 = vmul.f32 1.0, %v5299
        %v5301 = vrcp.pop %v4648
        %v5302 = vmul.f32 1.0, %v5301
        %v5303 = vrcp.pop %v4649
        %v5304 = vmul.f32 1.0, %v5303
        %v5305 = vrcp.pop %v4650
        %v5306 = vmul.f32 1.0, %v5305
        %v5307 = vrcp.pop %v4651
        %v5308 = vmul.f32 1.0, %v5307
        %v5309 = vrcp.pop %v4652
        %v5310 = vmul.f32 1.0, %v5309
        %v5311 = vrcp.pop %v4653
        %v5312 = vmul.f32 1.0, %v5311
        %v5313 = vrcp.pop %v4654
        %v5314 = vmul.f32 1.0, %v5313
        %v5315 = vrcp.pop %v4655
        %v5316 = vmul.f32 1.0, %v5315
        %v5317 = vrcp.pop %v4656
        %v5318 = vmul.f32 1.0, %v5317
        %v5319 = vrcp.pop %v4657
        %v5320 = vmul.f32 1.0, %v5319
        %v5321 = vrcp.pop %v4658
        %v5322 = vmul.f32 1.0, %v5321
        %v5323 = vrcp.pop %v4659
        %v5324 = vmul.f32 1.0, %v5323
        %v5325 = vrcp.pop %v4660
        %v5326 = vmul.f32 1.0, %v5325
        %v5327 = vrcp.pop %v4661
        %v5328 = vmul.f32 1.0, %v5327
        %v5329 = vrcp.pop %v4662
        %v5330 = vmul.f32 1.0, %v5329
        %v5331 = vrcp.pop %v4663
        %v5332 = vmul.f32 1.0, %v5331
        %v5333 = vrcp.pop %v4664
        %v5334 = vmul.f32 1.0, %v5333
        %v5335 = vrcp.pop %v4665
        %v5336 = vmul.f32 1.0, %v5335
        %v5337 = vrcp.pop %v4666
        %v5338 = vmul.f32 1.0, %v5337
        %v5339 = vrcp.pop %v4667
        %v5340 = vmul.f32 1.0, %v5339
        %v5341 = vrcp.pop %v4668
        %v5342 = vmul.f32 1.0, %v5341
        %v5343 = vrcp.pop %v4669
        %v5344 = vmul.f32 1.0, %v5343
        %v5345 = vrcp.pop %v4670
        %v5346 = vmul.f32 1.0, %v5345
        %v5347 = vrcp.pop %v4671
        %v5348 = vmul.f32 1.0, %v5347
        %v5349 = vrcp.pop %v4672
        %v5350 = vmul.f32 1.0, %v5349
        %v5351 = vrcp.pop %v4673
        %v5352 = vmul.f32 1.0, %v5351
        %v5353 = vrcp.pop %v4674
        %v5354 = vmul.f32 1.0, %v5353
        %v5355 = vrcp.pop %v4675
        %v5356 = vmul.f32 1.0, %v5355
        %v5357 = vrcp.pop %v4676
        %v5358 = vmul.f32 1.0, %v5357
        %v5359 = vrcp.pop %v4677
        %v5360 = vmul.f32 1.0, %v5359
        %v5361 = vrcp.pop %v4678
        %v5362 = vmul.f32 1.0, %v5361
        %v5363 = vrcp.pop %v4679
        %v5364 = vmul.f32 1.0, %v5363
        %v5365 = vrcp.pop %v4680
        %v5366 = vmul.f32 1.0, %v5365
        %v5367 = vrcp.pop %v4681
        %v5368 = vmul.f32 1.0, %v5367
        %v5369 = vrcp.pop %v4682
        %v5370 = vmul.f32 1.0, %v5369
        %v5371 = vrcp.pop %v4683
        %v5372 = vmul.f32 1.0, %v5371
        %v5373 = vrcp.pop %v4684
        %v5374 = vmul.f32 1.0, %v5373
        %v5375 = vrcp.pop %v4685
        %v5376 = vmul.f32 1.0, %v5375
        %v5377 = vrcp.pop %v4686
        %v5378 = vmul.f32 1.0, %v5377
        %v5379 = vrcp.pop %v4687
        %v5380 = vmul.f32 1.0, %v5379
        %v5381 = vrcp.pop %v4688
        %v5382 = vmul.f32 1.0, %v5381
        %v5383 = vrcp.pop %v4689
        %v5384 = vmul.f32 1.0, %v5383
        %v5385 = vrcp.pop %v4690
        %v5386 = vmul.f32 1.0, %v5385
        %v5387 = vrcp.pop %v4691
        %v5388 = vmul.f32 1.0, %v5387
        %v5389 = vrcp.pop %v4692
        %v5390 = vmul.f32 1.0, %v5389
        %v5391 = vrcp.pop %v4693
        %v5392 = vmul.f32 1.0, %v5391
        %v5393 = vrcp.pop %v4694
        %v5394 = vmul.f32 1.0, %v5393
        %v5395 = vrcp.pop %v4695
        %v5396 = vmul.f32 1.0, %v5395
        %v5397 = vrcp.pop %v4696
        %v5398 = vmul.f32 1.0, %v5397
        %v5399 = vrcp.pop %v4697
        %v5400 = vmul.f32 1.0, %v5399
        %v5401 = vrcp.pop %v4698
        %v5402 = vmul.f32 1.0, %v5401
        %v5403 = vrcp.pop %v4699
        %v5404 = vmul.f32 1.0, %v5403
        %v5405 = vrcp.pop %v4700
        %v5406 = vmul.f32 1.0, %v5405
        %v5407 = vrcp.pop %v4701
        %v5408 = vmul.f32 1.0, %v5407
        %v5409 = vrcp.pop %v4702
        %v5410 = vmul.f32 1.0, %v5409
        %v5411 = vrcp.pop %v4703
        %v5412 = vmul.f32 1.0, %v5411
        %v5413 = vrcp.pop %v4704
        %v5414 = vmul.f32 1.0, %v5413
        %v5415 = vrcp.pop %v4705
        %v5416 = vmul.f32 1.0, %v5415
        %v5417 = vrcp.pop %v4706
        %v5418 = vmul.f32 1.0, %v5417
        %v5419 = vrcp.pop %v4707
        %v5420 = vmul.f32 1.0, %v5419
        %v5421 = vrcp.pop %v4708
        %v5422 = vmul.f32 1.0, %v5421
        %v5423 = vrcp.pop %v4709
        %v5424 = vmul.f32 1.0, %v5423
        %v5425 = vrcp.pop %v4710
        %v5426 = vmul.f32 1.0, %v5425
        %v5427 = vrcp.pop %v4711
        %v5428 = vmul.f32 1.0, %v5427
        %v5429 = vrcp.pop %v4712
        %v5430 = vmul.f32 1.0, %v5429
        %v5431 = vrcp.pop %v4713
        %v5432 = vmul.f32 1.0, %v5431
        %v5433 = vrcp.pop %v4714
        %v5434 = vmul.f32 1.0, %v5433
        %v5435 = vrcp.pop %v4715
        %v5436 = vmul.f32 1.0, %v5435
        %v5437 = vrcp.pop %v4716
        %v5438 = vmul.f32 1.0, %v5437
        %v5439 = vrcp.pop %v4717
        %v5440 = vmul.f32 1.0, %v5439
        %v5441 = vrcp.pop %v4718
        %v5442 = vmul.f32 1.0, %v5441
        %v5443 = vrcp.pop %v4719
        %v5444 = vmul.f32 1.0, %v5443
        %v5445 = vrcp.pop %v4720
        %v5446 = vmul.f32 1.0, %v5445
        %v5447 = vrcp.pop %v4721
        %v5448 = vmul.f32 1.0, %v5447
        %v5449 = vrcp.pop %v4722
        %v5450 = vmul.f32 1.0, %v5449
        %v5451 = vrcp.pop %v4723
        %v5452 = vmul.f32 1.0, %v5451
        %v5453 = vrcp.pop %v4724
        %v5454 = vmul.f32 1.0, %v5453
        %v5455 = vrcp.pop %v4725
        %v5456 = vmul.f32 1.0, %v5455
        %v5457 = vrcp.pop %v4726
        %v5458 = vmul.f32 1.0, %v5457
        %v5459 = vrcp.pop %v4727
        %v5460 = vmul.f32 1.0, %v5459
        %v5461 = vrcp.pop %v4728
        %v5462 = vmul.f32 1.0, %v5461
        %v5463 = vrcp.pop %v4729
        %v5464 = vmul.f32 1.0, %v5463
        %v5465 = vrcp.pop %v4730
        %v5466 = vmul.f32 1.0, %v5465
        %v5467 = vrcp.pop %v4731
        %v5468 = vmul.f32 1.0, %v5467
        %v5469 = vrcp.pop %v4732
        %v5470 = vmul.f32 1.0, %v5469
        %v5471 = vrcp.pop %v4733
        %v5472 = vmul.f32 1.0, %v5471
        %v5473 = vrcp.pop %v4734
        %v5474 = vmul.f32 1.0, %v5473
        %v5475 = vrcp.pop %v4735
        %v5476 = vmul.f32 1.0, %v5475
        %v5477 = vrcp.pop %v4736
        %v5478 = vmul.f32 1.0, %v5477
        %v5479 = vrcp.pop %v4737
        %v5480 = vmul.f32 1.0, %v5479
        %v5481 = vrcp.pop %v4738
        %v5482 = vmul.f32 1.0, %v5481
        %v5483 = vrcp.pop %v4739
        %v5484 = vmul.f32 1.0, %v5483
        %v5485 = vrcp.pop %v4740
        %v5486 = vmul.f32 1.0, %v5485
        %v5487 = vrcp.pop %v4741
        %v5488 = vmul.f32 1.0, %v5487
        %v5489 = vrcp.pop %v4742
        %v5490 = vmul.f32 1.0, %v5489
        %v5491 = vrcp.pop %v4743
        %v5492 = vmul.f32 1.0, %v5491
        %v5493 = vrcp.pop %v4744
        %v5494 = vmul.f32 1.0, %v5493
        %v5495 = vrcp.pop %v4745
        %v5496 = vmul.f32 1.0, %v5495
        %v5497 = vrcp.pop %v4746
        %v5498 = vmul.f32 1.0, %v5497
        %v5499 = vrcp.pop %v4747
        %v5500 = vmul.f32 1.0, %v5499
        %v5501 = vrcp.pop %v4748
        %v5502 = vmul.f32 1.0, %v5501
        %v5503 = vrcp.pop %v4749
        %v5504 = vmul.f32 1.0, %v5503
        %v5505 = vrcp.pop %v4750
        %v5506 = vmul.f32 1.0, %v5505
        %v5507 = vrcp.pop %v4751
        %v5508 = vmul.f32 1.0, %v5507
        %v5509 = vrcp.pop %v4752
        %v5510 = vmul.f32 1.0, %v5509
        %v5511 = vrcp.pop %v4753
        %v5512 = vmul.f32 1.0, %v5511
        %v5513 = vrcp.pop %v4754
        %v5514 = vmul.f32 1.0, %v5513
        %v5515 = vrcp.pop %v4755
        %v5516 = vmul.f32 1.0, %v5515
        %v5517 = vrcp.pop %v4756
        %v5518 = vmul.f32 1.0, %v5517
        %v5519 = vrcp.pop %v4757
        %v5520 = vmul.f32 1.0, %v5519
        %v5521 = vrcp.pop %v4758
        %v5522 = vmul.f32 1.0, %v5521
        %v5523 = vrcp.pop %v4759
        %v5524 = vmul.f32 1.0, %v5523
        %v5525 = vrcp.pop %v4760
        %v5526 = vmul.f32 1.0, %v5525
        %v5527 = vrcp.pop %v4761
        %v5528 = vmul.f32 1.0, %v5527
        %v5529 = vrcp.pop %v4762
        %v5530 = vmul.f32 1.0, %v5529
        %v5531 = vrcp.pop %v4763
        %v5532 = vmul.f32 1.0, %v5531
        %v5533 = vrcp.pop %v4764
        %v5534 = vmul.f32 1.0, %v5533
        %v5535 = vrcp.pop %v4765
        %v5536 = vmul.f32 1.0, %v5535
        %v5537 = vrcp.pop %v4766
        %v5538 = vmul.f32 1.0, %v5537
        %v5539 = vrcp.pop %v4767
        %v5540 = vmul.f32 1.0, %v5539
        %v5541 = vrcp.pop %v4768
        %v5542 = vmul.f32 1.0, %v5541
        %v5543 = vrcp.pop %v4769
        %v5544 = vmul.f32 1.0, %v5543
        %v5545 = vrcp.pop %v4770
        %v5546 = vmul.f32 1.0, %v5545
        %v5547 = vrcp.pop %v4771
        %v5548 = vmul.f32 1.0, %v5547
        %v5549 = vrcp.pop %v4772
        %v5550 = vmul.f32 1.0, %v5549
        %v5551 = vrcp.pop %v4773
        %v5552 = vmul.f32 1.0, %v5551
        %v5553 = vrcp.pop %v4774
        %v5554 = vmul.f32 1.0, %v5553
        %v5555 = vrcp.pop %v4775
        %v5556 = vmul.f32 1.0, %v5555
        %v5557 = vrcp.pop %v4776
        %v5558 = vmul.f32 1.0, %v5557
        %v5559 = vrcp.pop %v4777
        %v5560 = vmul.f32 1.0, %v5559
        %v5561 = vrcp.pop %v4778
        %v5562 = vmul.f32 1.0, %v5561
        %v5563 = vrcp.pop %v4779
        %v5564 = vmul.f32 1.0, %v5563
        %v5565 = vrcp.pop %v4780
        %v5566 = vmul.f32 1.0, %v5565
        %v5567 = vrcp.pop %v4781
        %v5568 = vmul.f32 1.0, %v5567
        %v5569 = vrcp.pop %v4782
        %v5570 = vmul.f32 1.0, %v5569
        %v5571 = vrcp.pop %v4783
        %v5572 = vmul.f32 1.0, %v5571
        %v5573 = vrcp.pop %v4784
        %v5574 = vmul.f32 1.0, %v5573
        %v5575 = vrcp.pop %v4785
        %v5576 = vmul.f32 1.0, %v5575
        %v5577 = vrcp.pop %v4786
        %v5578 = vmul.f32 1.0, %v5577
        %v5579 = vrcp.pop %v4787
        %v5580 = vmul.f32 1.0, %v5579
        %v5581 = vrcp.pop %v4788
        %v5582 = vmul.f32 1.0, %v5581
        %v5583 = vrcp.pop %v4789
        %v5584 = vmul.f32 1.0, %v5583
        %v5585 = vrcp.pop %v4790
        %v5586 = vmul.f32 1.0, %v5585
        %v5587 = vrcp.pop %v4791
        %v5588 = vmul.f32 1.0, %v5587
        %v5589 = vrcp.pop %v4792
        %v5590 = vmul.f32 1.0, %v5589
        %v5591 = vrcp.pop %v4793
        %v5592 = vmul.f32 1.0, %v5591
        %v5593 = vrcp.pop %v4794
        %v5594 = vmul.f32 1.0, %v5593
        %v5595 = vrcp.pop %v4795
        %v5596 = vmul.f32 1.0, %v5595
        %v5597 = vrcp.pop %v4796
        %v5598 = vmul.f32 1.0, %v5597
        %v5599 = vrcp.pop %v4797
        %v5600 = vmul.f32 1.0, %v5599
        %v5601 = vrcp.pop %v4798
        %v5602 = vmul.f32 1.0, %v5601
        %v5603 = vrcp.pop %v4799
        %v5604 = vmul.f32 1.0, %v5603
        %v5605 = vrcp.pop %v4800
        %v5606 = vmul.f32 1.0, %v5605
        %v5607 = vrcp.pop %v4801
        %v5608 = vmul.f32 1.0, %v5607
        %v5609 = vrcp.pop %v4802
        %v5610 = vmul.f32 1.0, %v5609
        %v5611 = vrcp.pop %v4803
        %v5612 = vmul.f32 1.0, %v5611
        %v5613 = vrcp.pop %v4804
        %v5614 = vmul.f32 1.0, %v5613
        %v5615 = vrcp.pop %v4805
        %v5616 = vmul.f32 1.0, %v5615
        %v5617 = vrcp.pop %v4806
        %v5618 = vmul.f32 1.0, %v5617
        %v5619 = vrcp.pop %v4807
        %v5620 = vmul.f32 1.0, %v5619
        %v5621 = vrcp.pop %v4808
        %v5622 = vmul.f32 1.0, %v5621
        %v5623 = vrcp.pop %v4809
        %v5624 = vmul.f32 1.0, %v5623
        %v5625 = vrcp.pop %v4810
        %v5626 = vmul.f32 1.0, %v5625
        %v5627 = vrcp.pop %v4811
        %v5628 = vmul.f32 1.0, %v5627
        %v5629 = vrcp.pop %v4812
        %v5630 = vmul.f32 1.0, %v5629
        %v5631 = vrcp.pop %v4813
        %v5632 = vmul.f32 1.0, %v5631
        %v5633 = vrcp.pop %v4814
        %v5634 = vmul.f32 1.0, %v5633
        %v5635 = vrcp.pop %v4815
        %v5636 = vmul.f32 1.0, %v5635
        %v5637 = vrcp.pop %v4816
        %v5638 = vmul.f32 1.0, %v5637
        %v5639 = vrcp.pop %v4817
        %v5640 = vmul.f32 1.0, %v5639
        %v5641 = vrcp.pop %v4818
        %v5642 = vmul.f32 1.0, %v5641
        %v5643 = vrcp.pop %v4819
        %v5644 = vmul.f32 1.0, %v5643
        %v5645 = vrcp.pop %v4820
        %v5646 = vmul.f32 1.0, %v5645
        %v5647 = vrcp.pop %v4821
        %v5648 = vmul.f32 1.0, %v5647
        %v5649 = vrcp.pop %v4822
        %v5650 = vmul.f32 1.0, %v5649
        %v5651 = vrcp.pop %v4823
        %v5652 = vmul.f32 1.0, %v5651
        %v5653 = vrcp.pop %v4824
        %v5654 = vmul.f32 1.0, %v5653
        %v5655 = vrcp.pop %v4825
        %v5656 = vmul.f32 1.0, %v5655
        %v5657 = vrcp.pop %v4826
        %v5658 = vmul.f32 1.0, %v5657
        %v5659 = vrcp.pop %v4827
        %v5660 = vmul.f32 1.0, %v5659
        %v5661 = vrcp.pop %v4828
        %v5662 = vmul.f32 1.0, %v5661
        %v5663 = vrcp.pop %v4829
        %v5664 = vmul.f32 1.0, %v5663
        %v5665 = vrcp.pop %v4830
        %v5666 = vmul.f32 1.0, %v5665
        %v5667 = vrcp.pop %v4831
        %v5668 = vmul.f32 1.0, %v5667
        %v5669 = vrcp.pop %v4832
        %v5670 = vmul.f32 1.0, %v5669
        %v5671 = vrcp.pop %v4833
        %v5672 = vmul.f32 1.0, %v5671
        %v5673 = vrcp.pop %v4834
        %v5674 = vmul.f32 1.0, %v5673
        %v5675 = vrcp.pop %v4835
        %v5676 = vmul.f32 1.0, %v5675
        %v5677 = vrcp.pop %v4836
        %v5678 = vmul.f32 1.0, %v5677
        %v5679 = vrcp.pop %v4837
        %v5680 = vmul.f32 1.0, %v5679
        %v5681 = vrcp.pop %v4838
        %v5682 = vmul.f32 1.0, %v5681
        %v5683 = vrcp.pop %v4839
        %v5684 = vmul.f32 1.0, %v5683
        %v5685 = vrcp.pop %v4840
        %v5686 = vmul.f32 1.0, %v5685
        %v5687 = vrcp.pop %v4841
        %v5688 = vmul.f32 1.0, %v5687
        %v5689 = vrcp.pop %v4842
        %v5690 = vmul.f32 1.0, %v5689
        %v5691 = vrcp.pop %v4843
        %v5692 = vmul.f32 1.0, %v5691
        %v5693 = vrcp.pop %v4844
        %v5694 = vmul.f32 1.0, %v5693
        %v5695 = vrcp.pop %v4845
        %v5696 = vmul.f32 1.0, %v5695
        %v5697 = vrcp.pop %v4846
        %v5698 = vmul.f32 1.0, %v5697
        %v5699 = vrcp.pop %v4847
        %v5700 = vmul.f32 1.0, %v5699
        %v5701 = vrcp.pop %v4848
        %v5702 = vmul.f32 1.0, %v5701
        %v5703 = vrcp.pop %v4849
        %v5704 = vmul.f32 1.0, %v5703
        %v5705 = vrcp.pop %v4850
        %v5706 = vmul.f32 1.0, %v5705
        %v5707 = vrcp.pop %v4851
        %v5708 = vmul.f32 1.0, %v5707
        %v5709 = vrcp.pop %v4852
        %v5710 = vmul.f32 1.0, %v5709
        %v5711 = vrcp.pop %v4853
        %v5712 = vmul.f32 1.0, %v5711
        %v5713 = vrcp.pop %v4854
        %v5714 = vmul.f32 1.0, %v5713
        %v5715 = vrcp.pop %v4855
        %v5716 = vmul.f32 1.0, %v5715
        %v5717 = vrcp.pop %v4856
        %v5718 = vmul.f32 1.0, %v5717
        %v5719 = vrcp.pop %v4857
        %v5720 = vmul.f32 1.0, %v5719
        %v5721 = vrcp.pop %v4858
        %v5722 = vmul.f32 1.0, %v5721
        %v5723 = vrcp.pop %v4859
        %v5724 = vmul.f32 1.0, %v5723
        %v5725 = vrcp.pop %v4860
        %v5726 = vmul.f32 1.0, %v5725
        %v5727 = vrcp.pop %v4861
        %v5728 = vmul.f32 1.0, %v5727
        %v5729 = vrcp.pop %v4862
        %v5730 = vmul.f32 1.0, %v5729
        %v5731 = vrcp.pop %v4863
        %v5732 = vmul.f32 1.0, %v5731
        %v5733 = vrcp.pop %v4864
        %v5734 = vmul.f32 1.0, %v5733
        %v5735 = vrcp.pop %v4865
        %v5736 = vmul.f32 1.0, %v5735
        %v5737 = vrcp.pop %v4866
        %v5738 = vmul.f32 1.0, %v5737
        %v5739 = vrcp.pop %v4867
        %v5740 = vmul.f32 1.0, %v5739
        %v5741 = vrcp.pop %v4868
        %v5742 = vmul.f32 1.0, %v5741
        %v5743 = vrcp.pop %v4869
        %v5744 = vmul.f32 1.0, %v5743
        %v5745 = vrcp.pop %v4870
        %v5746 = vmul.f32 1.0, %v5745
        %v5747 = vrcp.pop %v4871
        %v5748 = vmul.f32 1.0, %v5747
        %v5749 = vrcp.pop %v4872
        %v5750 = vmul.f32 1.0, %v5749
        %v5751 = vrcp.pop %v4873
        %v5752 = vmul.f32 1.0, %v5751
        %v5753 = vrcp.pop %v4874
        %v5754 = vmul.f32 1.0, %v5753
        %v5755 = vrcp.pop %v4875
        %v5756 = vmul.f32 1.0, %v5755
        %v5757 = vrcp.pop %v4876
        %v5758 = vmul.f32 1.0, %v5757
        %v5759 = vrcp.pop %v4877
        %v5760 = vmul.f32 1.0, %v5759
        %v5761 = vrcp.pop %v4878
        %v5762 = vmul.f32 1.0, %v5761
        %v5763 = vrcp.pop %v4879
        %v5764 = vmul.f32 1.0, %v5763
        %v5765 = vrcp.pop %v4880
        %v5766 = vmul.f32 1.0, %v5765
        %v5767 = vrcp.pop %v4881
        %v5768 = vmul.f32 1.0, %v5767
        %v5769 = vrcp.pop %v4882
        %v5770 = vmul.f32 1.0, %v5769
        %v5771 = vrcp.pop %v4883
        %v5772 = vmul.f32 1.0, %v5771
        %v5773 = vrcp.pop %v4884
        %v5774 = vmul.f32 1.0, %v5773
        %v5775 = vrcp.pop %v4885
        %v5776 = vmul.f32 1.0, %v5775
        %v5777 = vrcp.pop %v4886
        %v5778 = vmul.f32 1.0, %v5777
        %v5779 = vrcp.pop %v4887
        %v5780 = vmul.f32 1.0, %v5779
        %v5781 = vrcp.pop %v4888
        %v5782 = vmul.f32 1.0, %v5781
        %v5783 = vrcp.pop %v4889
        %v5784 = vmul.f32 1.0, %v5783
        %v5785 = vrcp.pop %v4890
        %v5786 = vmul.f32 1.0, %v5785
        %v5787 = vrcp.pop %v4891
        %v5788 = vmul.f32 1.0, %v5787
        %v5789 = vrcp.pop %v4892
        %v5790 = vmul.f32 1.0, %v5789
        %v5791 = vrcp.pop %v4893
        %v5792 = vmul.f32 1.0, %v5791
        %v5793 = vrcp.pop %v4894
        %v5794 = vmul.f32 1.0, %v5793
        %v5795 = vrcp.pop %v4895
        %v5796 = vmul.f32 1.0, %v5795
        %v5797 = vrcp.pop %v4896
        %v5798 = vmul.f32 1.0, %v5797
        %v5799 = vrcp.pop %v4897
        %v5800 = vmul.f32 1.0, %v5799
        %v5801 = vrcp.pop %v4898
        %v5802 = vmul.f32 1.0, %v5801
        %v5803 = vrcp.pop %v4899
        %v5804 = vmul.f32 1.0, %v5803
        %v5805 = vrcp.pop %v4900
        %v5806 = vmul.f32 1.0, %v5805
        %v5807 = vrcp.pop %v4901
        %v5808 = vmul.f32 1.0, %v5807
        %v5809 = vrcp.pop %v4902
        %v5810 = vmul.f32 1.0, %v5809
        %v5811 = vrcp.pop %v4903
        %v5812 = vmul.f32 1.0, %v5811
        %v5813 = vrcp.pop %v4904
        %v5814 = vmul.f32 1.0, %v5813
        %v5815 = vrcp.pop %v4905
        %v5816 = vmul.f32 1.0, %v5815
        %v5817 = vrcp.pop %v4906
        %v5818 = vmul.f32 1.0, %v5817
        %v5819 = vrcp.pop %v4907
        %v5820 = vmul.f32 1.0, %v5819
        %v5821 = vrcp.pop %v4908
        %v5822 = vmul.f32 1.0, %v5821
        %v5823 = vrcp.pop %v4909
        %v5824 = vmul.f32 1.0, %v5823
        %v5825 = vrcp.pop %v4910
        %v5826 = vmul.f32 1.0, %v5825
        %v5827 = vrcp.pop %v4911
        %v5828 = vmul.f32 1.0, %v5827
        %v5829 = vrcp.pop %v4912
        %v5830 = vmul.f32 1.0, %v5829
        %v5831 = vrcp.pop %v4913
        %v5832 = vmul.f32 1.0, %v5831
        %v5833 = vrcp.pop %v4914
        %v5834 = vmul.f32 1.0, %v5833
        %v5835 = vrcp.pop %v4915
        %v5836 = vmul.f32 1.0, %v5835
        %v5837 = vrcp.pop %v4916
        %v5838 = vmul.f32 1.0, %v5837
        %v5839 = vrcp.pop %v4917
        %v5840 = vmul.f32 1.0, %v5839
        %v5841 = vrcp.pop %v4918
        %v5842 = vmul.f32 1.0, %v5841
        %v5843 = vrcp.pop %v4919
        %v5844 = vmul.f32 1.0, %v5843
        %v5845 = vrcp.pop %v4920
        %v5846 = vmul.f32 1.0, %v5845
        %v5847 = vrcp.pop %v4921
        %v5848 = vmul.f32 1.0, %v5847
        %v5849 = vrcp.pop %v4922
        %v5850 = vmul.f32 1.0, %v5849
        %v5851 = vrcp.pop %v4923
        %v5852 = vmul.f32 1.0, %v5851
        %v5853 = vrcp.pop %v4924
        %v5854 = vmul.f32 1.0, %v5853
        %v5855 = vrcp.pop %v4925
        %v5856 = vmul.f32 1.0, %v5855
        %v5857 = vrcp.pop %v4926
        %v5858 = vmul.f32 1.0, %v5857
        %v5859 = vrcp.pop %v4927
        %v5860 = vmul.f32 1.0, %v5859
        %v5861 = vrcp.pop %v4928
        %v5862 = vmul.f32 1.0, %v5861
        %v5863 = vrcp.pop %v4929
        %v5864 = vmul.f32 1.0, %v5863
        %v5865 = vrcp.pop %v4930
        %v5866 = vmul.f32 1.0, %v5865
        %v5867 = vrcp.pop %v4931
        %v5868 = vmul.f32 1.0, %v5867
        %v5869 = vrcp.pop %v4932
        %v5870 = vmul.f32 1.0, %v5869
        %v5871 = vrcp.pop %v4933
        %v5872 = vmul.f32 1.0, %v5871
        %v5873 = vrcp.pop %v4934
        %v5874 = vmul.f32 1.0, %v5873
        %v5875 = vrcp.pop %v4935
        %v5876 = vmul.f32 1.0, %v5875
        %v5877 = vrcp.pop %v4936
        %v5878 = vmul.f32 1.0, %v5877
        %v5879 = vrcp.pop %v4937
        %v5880 = vmul.f32 1.0, %v5879
        %v5881 = vrcp.pop %v4938
        %v5882 = vmul.f32 1.0, %v5881
        %v5883 = vrcp.pop %v4939
        %v5884 = vmul.f32 1.0, %v5883
        %v5885 = vrcp.pop %v4940
        %v5886 = vmul.f32 1.0, %v5885
        %v5887 = vrcp.pop %v4941
        %v5888 = vmul.f32 1.0, %v5887
        %v5889 = vrcp.pop %v4942
        %v5890 = vmul.f32 1.0, %v5889
        %v5891 = vrcp.pop %v4943
        %v5892 = vmul.f32 1.0, %v5891
        %v5893 = vrcp.pop %v4944
        %v5894 = vmul.f32 1.0, %v5893
        %v5895 = vrcp.pop %v4945
        %v5896 = vmul.f32 1.0, %v5895
        %v5897 = vrcp.pop %v4946
        %v5898 = vmul.f32 1.0, %v5897
        %v5899 = vrcp.pop %v4947
        %v5900 = vmul.f32 1.0, %v5899
        %v5901 = vrcp.pop %v4948
        %v5902 = vmul.f32 1.0, %v5901
        %v5903 = vrcp.pop %v4949
        %v5904 = vmul.f32 1.0, %v5903
        %v5905 = vrcp.pop %v4950
        %v5906 = vmul.f32 1.0, %v5905
        %v5907 = vrcp.pop %v4951
        %v5908 = vmul.f32 1.0, %v5907
        %v5909 = vrcp.pop %v4952
        %v5910 = vmul.f32 1.0, %v5909
        %v5911 = vrcp.pop %v4953
        %v5912 = vmul.f32 1.0, %v5911
        %v5913 = vrcp.pop %v4954
        %v5914 = vmul.f32 1.0, %v5913
        %v5915 = vrcp.pop %v4955
        %v5916 = vmul.f32 1.0, %v5915
        %v5917 = vrcp.pop %v4956
        %v5918 = vmul.f32 1.0, %v5917
        %v5919 = vrcp.pop %v4957
        %v5920 = vmul.f32 1.0, %v5919
        %v5921 = vrcp.pop %v4958
        %v5922 = vmul.f32 1.0, %v5921
        %v5923 = vrcp.pop %v4959
        %v5924 = vmul.f32 1.0, %v5923
        %v5925 = vrcp.pop %v4960
        %v5926 = vmul.f32 1.0, %v5925
        %v5927 = vrcp.pop %v4961
        %v5928 = vmul.f32 1.0, %v5927
        %v5929 = vrcp.pop %v4962
        %v5930 = vmul.f32 1.0, %v5929
        %v5931 = vrcp.pop %v4963
        %v5932 = vmul.f32 1.0, %v5931
        %v5933 = vrcp.pop %v4964
        %v5934 = vmul.f32 1.0, %v5933
        %v5935 = vrcp.pop %v4965
        %v5936 = vmul.f32 1.0, %v5935
        %v5937 = vrcp.pop %v4966
        %v5938 = vmul.f32 1.0, %v5937
        %v5939 = vrcp.pop %v4967
        %v5940 = vmul.f32 1.0, %v5939
        %v5941 = vrcp.pop %v4968
        %v5942 = vmul.f32 1.0, %v5941
        %v5943 = vrcp.pop %v4969
        %v5944 = vmul.f32 1.0, %v5943
        %v5945 = vrcp.pop %v4970
        %v5946 = vmul.f32 1.0, %v5945
        %v5947 = vrcp.pop %v4971
        %v5948 = vmul.f32 1.0, %v5947
        %v5949 = vrcp.pop %v4972
        %v5950 = vmul.f32 1.0, %v5949
        %v5951 = vrcp.pop %v4973
        %v5952 = vmul.f32 1.0, %v5951
        %v5953 = vrcp.pop %v4974
        %v5954 = vmul.f32 1.0, %v5953
        %v5955 = vrcp.pop %v4975
        %v5956 = vmul.f32 1.0, %v5955
        %v5957 = vrcp.pop %v4976
        %v5958 = vmul.f32 1.0, %v5957
        %v5959 = vrcp.pop %v4977
        %v5960 = vmul.f32 1.0, %v5959
        %v5961 = vrcp.pop %v4978
        %v5962 = vmul.f32 1.0, %v5961
        %v5963 = vrcp.pop %v4979
        %v5964 = vmul.f32 1.0, %v5963
        %v5965 = vrcp.pop %v4980
        %v5966 = vmul.f32 1.0, %v5965
        %v5967 = vrcp.pop %v4981
        %v5968 = vmul.f32 1.0, %v5967
        %v5969 = vrcp.pop %v4982
        %v5970 = vmul.f32 1.0, %v5969
        %v5971 = vrcp.pop %v4983
        %v5972 = vmul.f32 1.0, %v5971
        %v5973 = vrcp.pop %v4984
        %v5974 = vmul.f32 1.0, %v5973
        %v5975 = vrcp.pop %v4985
        %v5976 = vmul.f32 1.0, %v5975
        %v5977 = vrcp.pop %v4986
        %v5978 = vmul.f32 1.0, %v5977
        %v5979 = vrcp.pop %v4987
        %v5980 = vmul.f32 1.0, %v5979
        %v5981 = vrcp.pop %v4988
        %v5982 = vmul.f32 1.0, %v5981
        %v5983 = vrcp.pop %v4989
        %v5984 = vmul.f32 1.0, %v5983
        %v5985 = vrcp.pop %v4990
        %v5986 = vmul.f32 1.0, %v5985
        %v5987 = vrcp.pop %v4991
        %v5988 = vmul.f32 1.0, %v5987
        %v5989 = vrcp.pop %v4992
        %v5990 = vmul.f32 1.0, %v5989
        %v5991 = vrcp.pop %v4993
        %v5992 = vmul.f32 1.0, %v5991
        %v5993 = vrcp.pop %v4994
        %v5994 = vmul.f32 1.0, %v5993
        %v5995 = vrcp.pop %v4995
        %v5996 = vmul.f32 1.0, %v5995
        %v5997 = vrcp.pop %v4996
        %v5998 = vmul.f32 1.0, %v5997
        %v5999 = vrcp.pop %v4997
        %v6000 = vmul.f32 1.0, %v5999
        %v6001 = vrcp.pop %v4998
        %v6002 = vmul.f32 1.0, %v6001
        %v6003 = vrcp.pop %v4999
        %v6004 = vmul.f32 1.0, %v6003
        %v6005 = vrcp.pop %v5000
        %v6006 = vmul.f32 1.0, %v6005
        %v6007 = vrcp.pop %v5001
        %v6008 = vmul.f32 1.0, %v6007
        %v6009 = vrcp.pop %v5002
        %v6010 = vmul.f32 1.0, %v6009
        %v6011 = vrcp.pop %v5003
        %v6012 = vmul.f32 1.0, %v6011
        %v6013 = vrcp.pop %v5004
        %v6014 = vmul.f32 1.0, %v6013
        %v6015 = vrcp.pop %v5005
        %v6016 = vmul.f32 1.0, %v6015
        %v6017 = vrcp.pop %v5006
        %v6018 = vmul.f32 1.0, %v6017
        %v6019 = vrcp.pop %v5007
        %v6020 = vmul.f32 1.0, %v6019
        %v6021 = vrcp.pop %v5008
        %v6022 = vmul.f32 1.0, %v6021
        %v6023 = vrcp.pop %v5009
        %v6024 = vmul.f32 1.0, %v6023
        %v6025 = vrcp.pop %v5010
        %v6026 = vmul.f32 1.0, %v6025
        %v6027 = vrcp.pop %v5011
        %v6028 = vmul.f32 1.0, %v6027
        %v6029 = vrcp.pop %v5012
        %v6030 = vmul.f32 1.0, %v6029
        %v6031 = vrcp.pop %v5013
        %v6032 = vmul.f32 1.0, %v6031
        %v6033 = vrcp.pop %v5014
        %v6034 = vmul.f32 1.0, %v6033
        %v6035 = vrcp.pop %v5015
        %v6036 = vmul.f32 1.0, %v6035
        %v6037 = vrcp.pop %v5016
        %v6038 = vmul.f32 1.0, %v6037
        %v6039 = vrcp.pop %v5017
        %v6040 = vmul.f32 1.0, %v6039
        %v6041 = vrcp.pop %v5018
        %v6042 = vmul.f32 1.0, %v6041
        %v6043 = vmul.f32 %v1462, %v5020
        %v6044 = vmul.f32 %v1464, %v5022
        %v6045 = vmul.f32 %v1655, %v5024
        %v6046 = vmul.f32 %v1657, %v5026
        %v6047 = vmul.f32 %v1848, %v5028
        %v6048 = vmul.f32 %v1850, %v5030
        %v6049 = vmul.f32 %v2041, %v5032
        %v6050 = vmul.f32 %v2043, %v5034
        %v6051 = vmul.f32 %v2234, %v5036
        %v6052 = vmul.f32 %v2236, %v5038
        %v6053 = vmul.f32 %v2427, %v5040
        %v6054 = vmul.f32 %v2429, %v5042
        %v6055 = vmul.f32 %v2620, %v5044
        %v6056 = vmul.f32 %v2622, %v5046
        %v6057 = vmul.f32 %v2813, %v5048
        %v6058 = vmul.f32 %v2815, %v5050
        %v6059 = vmul.f32 %v1466, %v5052
        %v6060 = vmul.f32 %v1468, %v5054
        %v6061 = vmul.f32 %v1659, %v5056
        %v6062 = vmul.f32 %v1661, %v5058
        %v6063 = vmul.f32 %v1852, %v5060
        %v6064 = vmul.f32 %v1854, %v5062
        %v6065 = vmul.f32 %v2045, %v5064
        %v6066 = vmul.f32 %v2047, %v5066
        %v6067 = vmul.f32 %v2238, %v5068
        %v6068 = vmul.f32 %v2240, %v5070
        %v6069 = vmul.f32 %v2431, %v5072
        %v6070 = vmul.f32 %v2433, %v5074
        %v6071 = vmul.f32 %v2624, %v5076
        %v6072 = vmul.f32 %v2626, %v5078
        %v6073 = vmul.f32 %v2817, %v5080
        %v6074 = vmul.f32 %v2819, %v5082
        %v6075 = vmul.f32 %v1472, %v5084
        %v6076 = vmul.f32 %v1474, %v5086
        %v6077 = vmul.f32 %v1665, %v5088
        %v6078 = vmul.f32 %v1667, %v5090
        %v6079 = vmul.f32 %v1858, %v5092
        %v6080 = vmul.f32 %v1860, %v5094
        %v6081 = vmul.f32 %v2051, %v5096
        %v6082 = vmul.f32 %v2053, %v5098
        %v6083 = vmul.f32 %v2244, %v5100
        %v6084 = vmul.f32 %v2246, %v5102
        %v6085 = vmul.f32 %v2437, %v5104
        %v6086 = vmul.f32 %v2439, %v5106
        %v6087 = vmul.f32 %v2630, %v5108
        %v6088 = vmul.f32 %v2632, %v5110
        %v6089 = vmul.f32 %v2823, %v5112
        %v6090 = vmul.f32 %v2825, %v5114
        %v6091 = vmul.f32 %v1476, %v5116
        %v6092 = vmul.f32 %v1478, %v5118
        %v6093 = vmul.f32 %v1669, %v5120
        %v6094 = vmul.f32 %v1671, %v5122
        %v6095 = vmul.f32 %v1862, %v5124
        %v6096 = vmul.f32 %v1864, %v5126
        %v6097 = vmul.f32 %v2055, %v5128
        %v6098 = vmul.f32 %v2057, %v5130
        %v6099 = vmul.f32 %v2248, %v5132
        %v6100 = vmul.f32 %v2250, %v5134
        %v6101 = vmul.f32 %v2441, %v5136
        %v6102 = vmul.f32 %v2443, %v5138
        %v6103 = vmul.f32 %v2634, %v5140
        %v6104 = vmul.f32 %v2636, %v5142
        %v6105 = vmul.f32 %v2827, %v5144
        %v6106 = vmul.f32 %v2829, %v5146
        %v6107 = vmul.f32 %v1482, %v5148
        %v6108 = vmul.f32 %v1484, %v5150
        %v6109 = vmul.f32 %v1675, %v5152
        %v6110 = vmul.f32 %v1677, %v5154
        %v6111 = vmul.f32 %v1868, %v5156
        %v6112 = vmul.f32 %v1870, %v5158
        %v6113 = vmul.f32 %v2061, %v5160
        %v6114 = vmul.f32 %v2063, %v5162
        %v6115 = vmul.f32 %v2254, %v5164
        %v6116 = vmul.f32 %v2256, %v5166
        %v6117 = vmul.f32 %v2447, %v5168
        %v6118 = vmul.f32 %v2449, %v5170
        %v6119 = vmul.f32 %v2640, %v5172
        %v6120 = vmul.f32 %v2642, %v5174
        %v6121 = vmul.f32 %v2833, %v5176
        %v6122 = vmul.f32 %v2835, %v5178
        %v6123 = vmul.f32 %v1486, %v5180
        %v6124 = vmul.f32 %v1488, %v5182
        %v6125 = vmul.f32 %v1679, %v5184
        %v6126 = vmul.f32 %v1681, %v5186
        %v6127 = vmul.f32 %v1872, %v5188
        %v6128 = vmul.f32 %v1874, %v5190
        %v6129 = vmul.f32 %v2065, %v5192
        %v6130 = vmul.f32 %v2067, %v5194
        %v6131 = vmul.f32 %v2258, %v5196
        %v6132 = vmul.f32 %v2260, %v5198
        %v6133 = vmul.f32 %v2451, %v5200
        %v6134 = vmul.f32 %v2453, %v5202
        %v6135 = vmul.f32 %v2644, %v5204
        %v6136 = vmul.f32 %v2646, %v5206
        %v6137 = vmul.f32 %v2837, %v5208
        %v6138 = vmul.f32 %v2839, %v5210
        %v6139 = vmul.f32 %v1492, %v5212
        %v6140 = vmul.f32 %v1494, %v5214
        %v6141 = vmul.f32 %v1685, %v5216
        %v6142 = vmul.f32 %v1687, %v5218
        %v6143 = vmul.f32 %v1878, %v5220
        %v6144 = vmul.f32 %v1880, %v5222
        %v6145 = vmul.f32 %v2071, %v5224
        %v6146 = vmul.f32 %v2073, %v5226
        %v6147 = vmul.f32 %v2264, %v5228
        %v6148 = vmul.f32 %v2266, %v5230
        %v6149 = vmul.f32 %v2457, %v5232
        %v6150 = vmul.f32 %v2459, %v5234
        %v6151 = vmul.f32 %v2650, %v5236
        %v6152 = vmul.f32 %v2652, %v5238
        %v6153 = vmul.f32 %v2843, %v5240
        %v6154 = vmul.f32 %v2845, %v5242
        %v6155 = vmul.f32 %v1496, %v5244
        %v6156 = vmul.f32 %v1498, %v5246
        %v6157 = vmul.f32 %v1689, %v5248
        %v6158 = vmul.f32 %v1691, %v5250
        %v6159 = vmul.f32 %v1882, %v5252
        %v6160 = vmul.f32 %v1884, %v5254
        %v6161 = vmul.f32 %v2075, %v5256
        %v6162 = vmul.f32 %v2077, %v5258
        %v6163 = vmul.f32 %v2268, %v5260
        %v6164 = vmul.f32 %v2270, %v5262
        %v6165 = vmul.f32 %v2461, %v5264
        %v6166 = vmul.f32 %v2463, %v5266
        %v6167 = vmul.f32 %v2654, %v5268
        %v6168 = vmul.f32 %v2656, %v5270
        %v6169 = vmul.f32 %v2847, %v5272
        %v6170 = vmul.f32 %v2849, %v5274
        %v6171 = vmul.f32 %v1502, %v5276
        %v6172 = vmul.f32 %v1504, %v5278
        %v6173 = vmul.f32 %v1695, %v5280
        %v6174 = vmul.f32 %v1697, %v5282
        %v6175 = vmul.f32 %v1888, %v5284
        %v6176 = vmul.f32 %v1890, %v5286
        %v6177 = vmul.f32 %v2081, %v5288
        %v6178 = vmul.f32 %v2083, %v5290
        %v6179 = vmul.f32 %v2274, %v5292
        %v6180 = vmul.f32 %v2276, %v5294
        %v6181 = vmul.f32 %v2467, %v5296
        %v6182 = vmul.f32 %v2469, %v5298
        %v6183 = vmul.f32 %v2660, %v5300
        %v6184 = vmul.f32 %v2662, %v5302
        %v6185 = vmul.f32 %v2853, %v5304
        %v6186 = vmul.f32 %v2855, %v5306
        %v6187 = vmul.f32 %v1506, %v5308
        %v6188 = vmul.f32 %v1508, %v5310
        %v6189 = vmul.f32 %v1699, %v5312
        %v6190 = vmul.f32 %v1701, %v5314
        %v6191 = vmul.f32 %v1892, %v5316
        %v6192 = vmul.f32 %v1894, %v5318
        %v6193 = vmul.f32 %v2085, %v5320
        %v6194 = vmul.f32 %v2087, %v5322
        %v6195 = vmul.f32 %v2278, %v5324
        %v6196 = vmul.f32 %v2280, %v5326
        %v6197 = vmul.f32 %v2471, %v5328
        %v6198 = vmul.f32 %v2473, %v5330
        %v6199 = vmul.f32 %v2664, %v5332
        %v6200 = vmul.f32 %v2666, %v5334
        %v6201 = vmul.f32 %v2857, %v5336
        %v6202 = vmul.f32 %v2859, %v5338
        %v6203 = vmul.f32 %v1512, %v5340
        %v6204 = vmul.f32 %v1514, %v5342
        %v6205 = vmul.f32 %v1705, %v5344
        %v6206 = vmul.f32 %v1707, %v5346
        %v6207 = vmul.f32 %v1898, %v5348
        %v6208 = vmul.f32 %v1900, %v5350
        %v6209 = vmul.f32 %v2091, %v5352
        %v6210 = vmul.f32 %v2093, %v5354
        %v6211 = vmul.f32 %v2284, %v5356
        %v6212 = vmul.f32 %v2286, %v5358
        %v6213 = vmul.f32 %v2477, %v5360
        %v6214 = vmul.f32 %v2479, %v5362
        %v6215 = vmul.f32 %v2670, %v5364
        %v6216 = vmul.f32 %v2672, %v5366
        %v6217 = vmul.f32 %v2863, %v5368
        %v6218 = vmul.f32 %v2865, %v5370
        %v6219 = vmul.f32 %v1516, %v5372
        %v6220 = vmul.f32 %v1518, %v5374
        %v6221 = vmul.f32 %v1709, %v5376
        %v6222 = vmul.f32 %v1711, %v5378
        %v6223 = vmul.f32 %v1902, %v5380
        %v6224 = vmul.f32 %v1904, %v5382
        %v6225 = vmul.f32 %v2095, %v5384
        %v6226 = vmul.f32 %v2097, %v5386
        %v6227 = vmul.f32 %v2288, %v5388
        %v6228 = vmul.f32 %v2290, %v5390
        %v6229 = vmul.f32 %v2481, %v5392
        %v6230 = vmul.f32 %v2483, %v5394
        %v6231 = vmul.f32 %v2674, %v5396
        %v6232 = vmul.f32 %v2676, %v5398
        %v6233 = vmul.f32 %v2867, %v5400
        %v6234 = vmul.f32 %v2869, %v5402
        %v6235 = vmul.f32 %v1522, %v5404
        %v6236 = vmul.f32 %v1524, %v5406
        %v6237 = vmul.f32 %v1715, %v5408
        %v6238 = vmul.f32 %v1717, %v5410
        %v6239 = vmul.f32 %v1908, %v5412
        %v6240 = vmul.f32 %v1910, %v5414
        %v6241 = vmul.f32 %v2101, %v5416
        %v6242 = vmul.f32 %v2103, %v5418
        %v6243 = vmul.f32 %v2294, %v5420
        %v6244 = vmul.f32 %v2296, %v5422
        %v6245 = vmul.f32 %v2487, %v5424
        %v6246 = vmul.f32 %v2489, %v5426
        %v6247 = vmul.f32 %v2680, %v5428
        %v6248 = vmul.f32 %v2682, %v5430
        %v6249 = vmul.f32 %v2873, %v5432
        %v6250 = vmul.f32 %v2875, %v5434
        %v6251 = vmul.f32 %v1526, %v5436
        %v6252 = vmul.f32 %v1528, %v5438
        %v6253 = vmul.f32 %v1719, %v5440
        %v6254 = vmul.f32 %v1721, %v5442
        %v6255 = vmul.f32 %v1912, %v5444
        %v6256 = vmul.f32 %v1914, %v5446
        %v6257 = vmul.f32 %v2105, %v5448
        %v6258 = vmul.f32 %v2107, %v5450
        %v6259 = vmul.f32 %v2298, %v5452
        %v6260 = vmul.f32 %v2300, %v5454
        %v6261 = vmul.f32 %v2491, %v5456
        %v6262 = vmul.f32 %v2493, %v5458
        %v6263 = vmul.f32 %v2684, %v5460
        %v6264 = vmul.f32 %v2686, %v5462
        %v6265 = vmul.f32 %v2877, %v5464
        %v6266 = vmul.f32 %v2879, %v5466
        %v6267 = vmul.f32 %v1532, %v5468
        %v6268 = vmul.f32 %v1534, %v5470
        %v6269 = vmul.f32 %v1725, %v5472
        %v6270 = vmul.f32 %v1727, %v5474
        %v6271 = vmul.f32 %v1918, %v5476
        %v6272 = vmul.f32 %v1920, %v5478
        %v6273 = vmul.f32 %v2111, %v5480
        %v6274 = vmul.f32 %v2113, %v5482
        %v6275 = vmul.f32 %v2304, %v5484
        %v6276 = vmul.f32 %v2306, %v5486
        %v6277 = vmul.f32 %v2497, %v5488
        %v6278 = vmul.f32 %v2499, %v5490
        %v6279 = vmul.f32 %v2690, %v5492
        %v6280 = vmul.f32 %v2692, %v5494
        %v6281 = vmul.f32 %v2883, %v5496
        %v6282 = vmul.f32 %v2885, %v5498
        %v6283 = vmul.f32 %v1536, %v5500
        %v6284 = vmul.f32 %v1538, %v5502
        %v6285 = vmul.f32 %v1729, %v5504
        %v6286 = vmul.f32 %v1731, %v5506
        %v6287 = vmul.f32 %v1922, %v5508
        %v6288 = vmul.f32 %v1924, %v5510
        %v6289 = vmul.f32 %v2115, %v5512
        %v6290 = vmul.f32 %v2117, %v5514
        %v6291 = vmul.f32 %v2308, %v5516
        %v6292 = vmul.f32 %v2310, %v5518
        %v6293 = vmul.f32 %v2501, %v5520
        %v6294 = vmul.f32 %v2503, %v5522
        %v6295 = vmul.f32 %v2694, %v5524
        %v6296 = vmul.f32 %v2696, %v5526
        %v6297 = vmul.f32 %v2887, %v5528
        %v6298 = vmul.f32 %v2889, %v5530
        %v6299 = vmul.f32 %v1542, %v5532
        %v6300 = vmul.f32 %v1544, %v5534
        %v6301 = vmul.f32 %v1735, %v5536
        %v6302 = vmul.f32 %v1737, %v5538
        %v6303 = vmul.f32 %v1928, %v5540
        %v6304 = vmul.f32 %v1930, %v5542
        %v6305 = vmul.f32 %v2121, %v5544
        %v6306 = vmul.f32 %v2123, %v5546
        %v6307 = vmul.f32 %v2314, %v5548
        %v6308 = vmul.f32 %v2316, %v5550
        %v6309 = vmul.f32 %v2507, %v5552
        %v6310 = vmul.f32 %v2509, %v5554
        %v6311 = vmul.f32 %v2700, %v5556
        %v6312 = vmul.f32 %v2702, %v5558
        %v6313 = vmul.f32 %v2893, %v5560
        %v6314 = vmul.f32 %v2895, %v5562
        %v6315 = vmul.f32 %v1546, %v5564
        %v6316 = vmul.f32 %v1548, %v5566
        %v6317 = vmul.f32 %v1739, %v5568
        %v6318 = vmul.f32 %v1741, %v5570
        %v6319 = vmul.f32 %v1932, %v5572
        %v6320 = vmul.f32 %v1934, %v5574
        %v6321 = vmul.f32 %v2125, %v5576
        %v6322 = vmul.f32 %v2127, %v5578
        %v6323 = vmul.f32 %v2318, %v5580
        %v6324 = vmul.f32 %v2320, %v5582
        %v6325 = vmul.f32 %v2511, %v5584
        %v6326 = vmul.f32 %v2513, %v5586
        %v6327 = vmul.f32 %v2704, %v5588
        %v6328 = vmul.f32 %v2706, %v5590
        %v6329 = vmul.f32 %v2897, %v5592
        %v6330 = vmul.f32 %v2899, %v5594
        %v6331 = vmul.f32 %v1552, %v5596
        %v6332 = vmul.f32 %v1554, %v5598
        %v6333 = vmul.f32 %v1745, %v5600
        %v6334 = vmul.f32 %v1747, %v5602
        %v6335 = vmul.f32 %v1938, %v5604
        %v6336 = vmul.f32 %v1940, %v5606
        %v6337 = vmul.f32 %v2131, %v5608
        %v6338 = vmul.f32 %v2133, %v5610
        %v6339 = vmul.f32 %v2324, %v5612
        %v6340 = vmul.f32 %v2326, %v5614
        %v6341 = vmul.f32 %v2517, %v5616
        %v6342 = vmul.f32 %v2519, %v5618
        %v6343 = vmul.f32 %v2710, %v5620
        %v6344 = vmul.f32 %v2712, %v5622
        %v6345 = vmul.f32 %v2903, %v5624
        %v6346 = vmul.f32 %v2905, %v5626
        %v6347 = vmul.f32 %v1556, %v5628
        %v6348 = vmul.f32 %v1558, %v5630
        %v6349 = vmul.f32 %v1749, %v5632
        %v6350 = vmul.f32 %v1751, %v5634
        %v6351 = vmul.f32 %v1942, %v5636
        %v6352 = vmul.f32 %v1944, %v5638
        %v6353 = vmul.f32 %v2135, %v5640
        %v6354 = vmul.f32 %v2137, %v5642
        %v6355 = vmul.f32 %v2328, %v5644
        %v6356 = vmul.f32 %v2330, %v5646
        %v6357 = vmul.f32 %v2521, %v5648
        %v6358 = vmul.f32 %v2523, %v5650
        %v6359 = vmul.f32 %v2714, %v5652
        %v6360 = vmul.f32 %v2716, %v5654
        %v6361 = vmul.f32 %v2907, %v5656
        %v6362 = vmul.f32 %v2909, %v5658
        %v6363 = vmul.f32 %v1562, %v5660
        %v6364 = vmul.f32 %v1564, %v5662
        %v6365 = vmul.f32 %v1755, %v5664
        %v6366 = vmul.f32 %v1757, %v5666
        %v6367 = vmul.f32 %v1948, %v5668
        %v6368 = vmul.f32 %v1950, %v5670
        %v6369 = vmul.f32 %v2141, %v5672
        %v6370 = vmul.f32 %v2143, %v5674
        %v6371 = vmul.f32 %v2334, %v5676
        %v6372 = vmul.f32 %v2336, %v5678
        %v6373 = vmul.f32 %v2527, %v5680
        %v6374 = vmul.f32 %v2529, %v5682
        %v6375 = vmul.f32 %v2720, %v5684
        %v6376 = vmul.f32 %v2722, %v5686
        %v6377 = vmul.f32 %v2913, %v5688
        %v6378 = vmul.f32 %v2915, %v5690
        %v6379 = vmul.f32 %v1566, %v5692
        %v6380 = vmul.f32 %v1568, %v5694
        %v6381 = vmul.f32 %v1759, %v5696
        %v6382 = vmul.f32 %v1761, %v5698
        %v6383 = vmul.f32 %v1952, %v5700
        %v6384 = vmul.f32 %v1954, %v5702
        %v6385 = vmul.f32 %v2145, %v5704
        %v6386 = vmul.f32 %v2147, %v5706
        %v6387 = vmul.f32 %v2338, %v5708
        %v6388 = vmul.f32 %v2340, %v5710
        %v6389 = vmul.f32 %v2531, %v5712
        %v6390 = vmul.f32 %v2533, %v5714
        %v6391 = vmul.f32 %v2724, %v5716
        %v6392 = vmul.f32 %v2726, %v5718
        %v6393 = vmul.f32 %v2917, %v5720
        %v6394 = vmul.f32 %v2919, %v5722
        %v6395 = vmul.f32 %v1572, %v5724
        %v6396 = vmul.f32 %v1574, %v5726
        %v6397 = vmul.f32 %v1765, %v5728
        %v6398 = vmul.f32 %v1767, %v5730
        %v6399 = vmul.f32 %v1958, %v5732
        %v6400 = vmul.f32 %v1960, %v5734
        %v6401 = vmul.f32 %v2151, %v5736
        %v6402 = vmul.f32 %v2153, %v5738
        %v6403 = vmul.f32 %v2344, %v5740
        %v6404 = vmul.f32 %v2346, %v5742
        %v6405 = vmul.f32 %v2537, %v5744
        %v6406 = vmul.f32 %v2539, %v5746
        %v6407 = vmul.f32 %v2730, %v5748
        %v6408 = vmul.f32 %v2732, %v5750
        %v6409 = vmul.f32 %v2923, %v5752
        %v6410 = vmul.f32 %v2925, %v5754
        %v6411 = vmul.f32 %v1576, %v5756
        %v6412 = vmul.f32 %v1578, %v5758
        %v6413 = vmul.f32 %v1769, %v5760
        %v6414 = vmul.f32 %v1771, %v5762
        %v6415 = vmul.f32 %v1962, %v5764
        %v6416 = vmul.f32 %v1964, %v5766
        %v6417 = vmul.f32 %v2155, %v5768
        %v6418 = vmul.f32 %v2157, %v5770
        %v6419 = vmul.f32 %v2348, %v5772
        %v6420 = vmul.f32 %v2350, %v5774
        %v6421 = vmul.f32 %v2541, %v5776
        %v6422 = vmul.f32 %v2543, %v5778
        %v6423 = vmul.f32 %v2734, %v5780
        %v6424 = vmul.f32 %v2736, %v5782
        %v6425 = vmul.f32 %v2927, %v5784
        %v6426 = vmul.f32 %v2929, %v5786
        %v6427 = vmul.f32 %v1582, %v5788
        %v6428 = vmul.f32 %v1584, %v5790
        %v6429 = vmul.f32 %v1775, %v5792
        %v6430 = vmul.f32 %v1777, %v5794
        %v6431 = vmul.f32 %v1968, %v5796
        %v6432 = vmul.f32 %v1970, %v5798
        %v6433 = vmul.f32 %v2161, %v5800
        %v6434 = vmul.f32 %v2163, %v5802
        %v6435 = vmul.f32 %v2354, %v5804
        %v6436 = vmul.f32 %v2356, %v5806
        %v6437 = vmul.f32 %v2547, %v5808
        %v6438 = vmul.f32 %v2549, %v5810
        %v6439 = vmul.f32 %v2740, %v5812
        %v6440 = vmul.f32 %v2742, %v5814
        %v6441 = vmul.f32 %v2933, %v5816
        %v6442 = vmul.f32 %v2935, %v5818
        %v6443 = vmul.f32 %v1586, %v5820
        %v6444 = vmul.f32 %v1588, %v5822
        %v6445 = vmul.f32 %v1779, %v5824
        %v6446 = vmul.f32 %v1781, %v5826
        %v6447 = vmul.f32 %v1972, %v5828
        %v6448 = vmul.f32 %v1974, %v5830
        %v6449 = vmul.f32 %v2165, %v5832
        %v6450 = vmul.f32 %v2167, %v5834
        %v6451 = vmul.f32 %v2358, %v5836
        %v6452 = vmul.f32 %v2360, %v5838
        %v6453 = vmul.f32 %v2551, %v5840
        %v6454 = vmul.f32 %v2553, %v5842
        %v6455 = vmul.f32 %v2744, %v5844
        %v6456 = vmul.f32 %v2746, %v5846
        %v6457 = vmul.f32 %v2937, %v5848
        %v6458 = vmul.f32 %v2939, %v5850
        %v6459 = vmul.f32 %v1592, %v5852
        %v6460 = vmul.f32 %v1594, %v5854
        %v6461 = vmul.f32 %v1785, %v5856
        %v6462 = vmul.f32 %v1787, %v5858
        %v6463 = vmul.f32 %v1978, %v5860
        %v6464 = vmul.f32 %v1980, %v5862
        %v6465 = vmul.f32 %v2171, %v5864
        %v6466 = vmul.f32 %v2173, %v5866
        %v6467 = vmul.f32 %v2364, %v5868
        %v6468 = vmul.f32 %v2366, %v5870
        %v6469 = vmul.f32 %v2557, %v5872
        %v6470 = vmul.f32 %v2559, %v5874
        %v6471 = vmul.f32 %v2750, %v5876
        %v6472 = vmul.f32 %v2752, %v5878
        %v6473 = vmul.f32 %v2943, %v5880
        %v6474 = vmul.f32 %v2945, %v5882
        %v6475 = vmul.f32 %v1596, %v5884
        %v6476 = vmul.f32 %v1598, %v5886
        %v6477 = vmul.f32 %v1789, %v5888
        %v6478 = vmul.f32 %v1791, %v5890
        %v6479 = vmul.f32 %v1982, %v5892
        %v6480 = vmul.f32 %v1984, %v5894
        %v6481 = vmul.f32 %v2175, %v5896
        %v6482 = vmul.f32 %v2177, %v5898
        %v6483 = vmul.f32 %v2368, %v5900
        %v6484 = vmul.f32 %v2370, %v5902
        %v6485 = vmul.f32 %v2561, %v5904
        %v6486 = vmul.f32 %v2563, %v5906
        %v6487 = vmul.f32 %v2754, %v5908
        %v6488 = vmul.f32 %v2756, %v5910
        %v6489 = vmul.f32 %v2947, %v5912
        %v6490 = vmul.f32 %v2949, %v5914
        %v6491 = vmul.f32 %v1602, %v5916
        %v6492 = vmul.f32 %v1604, %v5918
        %v6493 = vmul.f32 %v1795, %v5920
        %v6494 = vmul.f32 %v1797, %v5922
        %v6495 = vmul.f32 %v1988, %v5924
        %v6496 = vmul.f32 %v1990, %v5926
        %v6497 = vmul.f32 %v2181, %v5928
        %v6498 = vmul.f32 %v2183, %v5930
        %v6499 = vmul.f32 %v2374, %v5932
        %v6500 = vmul.f32 %v2376, %v5934
        %v6501 = vmul.f32 %v2567, %v5936
        %v6502 = vmul.f32 %v2569, %v5938
        %v6503 = vmul.f32 %v2760, %v5940
        %v6504 = vmul.f32 %v2762, %v5942
        %v6505 = vmul.f32 %v2953, %v5944
        %v6506 = vmul.f32 %v2955, %v5946
        %v6507 = vmul.f32 %v1606, %v5948
        %v6508 = vmul.f32 %v1608, %v5950
        %v6509 = vmul.f32 %v1799, %v5952
        %v6510 = vmul.f32 %v1801, %v5954
        %v6511 = vmul.f32 %v1992, %v5956
        %v6512 = vmul.f32 %v1994, %v5958
        %v6513 = vmul.f32 %v2185, %v5960
        %v6514 = vmul.f32 %v2187, %v5962
        %v6515 = vmul.f32 %v2378, %v5964
        %v6516 = vmul.f32 %v2380, %v5966
        %v6517 = vmul.f32 %v2571, %v5968
        %v6518 = vmul.f32 %v2573, %v5970
        %v6519 = vmul.f32 %v2764, %v5972
        %v6520 = vmul.f32 %v2766, %v5974
        %v6521 = vmul.f32 %v2957, %v5976
        %v6522 = vmul.f32 %v2959, %v5978
        %v6523 = vmul.f32 %v1612, %v5980
        %v6524 = vmul.f32 %v1614, %v5982
        %v6525 = vmul.f32 %v1805, %v5984
        %v6526 = vmul.f32 %v1807, %v5986
        %v6527 = vmul.f32 %v1998, %v5988
        %v6528 = vmul.f32 %v2000, %v5990
        %v6529 = vmul.f32 %v2191, %v5992
        %v6530 = vmul.f32 %v2193, %v5994
        %v6531 = vmul.f32 %v2384, %v5996
        %v6532 = vmul.f32 %v2386, %v5998
        %v6533 = vmul.f32 %v2577, %v6000
        %v6534 = vmul.f32 %v2579, %v6002
        %v6535 = vmul.f32 %v2770, %v6004
        %v6536 = vmul.f32 %v2772, %v6006
        %v6537 = vmul.f32 %v2963, %v6008
        %v6538 = vmul.f32 %v2965, %v6010
        %v6539 = vmul.f32 %v1616, %v6012
        %v6540 = vmul.f32 %v1618, %v6014
        %v6541 = vmul.f32 %v1809, %v6016
        %v6542 = vmul.f32 %v1811, %v6018
        %v6543 = vmul.f32 %v2002, %v6020
        %v6544 = vmul.f32 %v2004, %v6022
        %v6545 = vmul.f32 %v2195, %v6024
        %v6546 = vmul.f32 %v2197, %v6026
        %v6547 = vmul.f32 %v2388, %v6028
        %v6548 = vmul.f32 %v2390, %v6030
        %v6549 = vmul.f32 %v2581, %v6032
        %v6550 = vmul.f32 %v2583, %v6034
        %v6551 = vmul.f32 %v2774, %v6036
        %v6552 = vmul.f32 %v2776, %v6038
        %v6553 = vmul.f32 %v2967, %v6040
        %v6554 = vmul.f32 %v2969, %v6042
        %v6555 = vld [vmem:[#allocation2] sm:$0xff]
        %v6556 = vld [vmem:[#allocation2 + $0x8] sm:$0xff]
        %v6557 = vld [vmem:[#allocation2 + $0x10] sm:$0xff]
        %v6558 = vld [vmem:[#allocation2 + $0x18] sm:$0xff]
        %v6559 = vld [vmem:[#allocation2 + $0x20] sm:$0xff]
        %v6560 = vld [vmem:[#allocation2 + $0x28] sm:$0xff]
        %v6561 = vld [vmem:[#allocation2 + $0x30] sm:$0xff]
        %v6562 = vld [vmem:[#allocation2 + $0x38] sm:$0xff]
        %v6563 = vld [vmem:[#allocation2 + $0x40] sm:$0xff]
        %v6564 = vld [vmem:[#allocation2 + $0x48] sm:$0xff]
        %v6565 = vld [vmem:[#allocation2 + $0x50] sm:$0xff]
        %v6566 = vld [vmem:[#allocation2 + $0x58] sm:$0xff]
        %v6567 = vld [vmem:[#allocation2 + $0x60] sm:$0xff]
        %v6568 = vld [vmem:[#allocation2 + $0x68] sm:$0xff]
        %v6569 = vld [vmem:[#allocation2 + $0x70] sm:$0xff]
        %v6570 = vld [vmem:[#allocation2 + $0x78] sm:$0xff]
        %v6571 = vadd.f32 %v6555, %v6043
        %v6572 = vadd.f32 %v6556, %v6044
        %v6573 = vadd.f32 %v6557, %v6045
        %v6574 = vadd.f32 %v6558, %v6046
        %v6575 = vadd.f32 %v6559, %v6047
        %v6576 = vadd.f32 %v6560, %v6048
        %v6577 = vadd.f32 %v6561, %v6049
        %v6578 = vadd.f32 %v6562, %v6050
        %v6579 = vadd.f32 %v6563, %v6051
        %v6580 = vadd.f32 %v6564, %v6052
        %v6581 = vadd.f32 %v6565, %v6053
        %v6582 = vadd.f32 %v6566, %v6054
        %v6583 = vadd.f32 %v6567, %v6055
        %v6584 = vadd.f32 %v6568, %v6056
        %v6585 = vadd.f32 %v6569, %v6057
        %v6586 = vadd.f32 %v6570, %v6058
        %v6587 = vadd.f32 %v6571, %v6059
        %v6588 = vadd.f32 %v6572, %v6060
        %v6589 = vadd.f32 %v6573, %v6061
        %v6590 = vadd.f32 %v6574, %v6062
        %v6591 = vadd.f32 %v6575, %v6063
        %v6592 = vadd.f32 %v6576, %v6064
        %v6593 = vadd.f32 %v6577, %v6065
        %v6594 = vadd.f32 %v6578, %v6066
        %v6595 = vadd.f32 %v6579, %v6067
        %v6596 = vadd.f32 %v6580, %v6068
        %v6597 = vadd.f32 %v6581, %v6069
        %v6598 = vadd.f32 %v6582, %v6070
        %v6599 = vadd.f32 %v6583, %v6071
        %v6600 = vadd.f32 %v6584, %v6072
        %v6601 = vadd.f32 %v6585, %v6073
        %v6602 = vadd.f32 %v6586, %v6074
        %v6603 = vadd.f32 %v6587, %v6075
        %v6604 = vadd.f32 %v6588, %v6076
        %v6605 = vadd.f32 %v6589, %v6077
        %v6606 = vadd.f32 %v6590, %v6078
        %v6607 = vadd.f32 %v6591, %v6079
        %v6608 = vadd.f32 %v6592, %v6080
        %v6609 = vadd.f32 %v6593, %v6081
        %v6610 = vadd.f32 %v6594, %v6082
        %v6611 = vadd.f32 %v6595, %v6083
        %v6612 = vadd.f32 %v6596, %v6084
        %v6613 = vadd.f32 %v6597, %v6085
        %v6614 = vadd.f32 %v6598, %v6086
        %v6615 = vadd.f32 %v6599, %v6087
        %v6616 = vadd.f32 %v6600, %v6088
        %v6617 = vadd.f32 %v6601, %v6089
        %v6618 = vadd.f32 %v6602, %v6090
        %v6619 = vadd.f32 %v6603, %v6091
        %v6620 = vadd.f32 %v6604, %v6092
        %v6621 = vadd.f32 %v6605, %v6093
        %v6622 = vadd.f32 %v6606, %v6094
        %v6623 = vadd.f32 %v6607, %v6095
        %v6624 = vadd.f32 %v6608, %v6096
        %v6625 = vadd.f32 %v6609, %v6097
        %v6626 = vadd.f32 %v6610, %v6098
        %v6627 = vadd.f32 %v6611, %v6099
        %v6628 = vadd.f32 %v6612, %v6100
        %v6629 = vadd.f32 %v6613, %v6101
        %v6630 = vadd.f32 %v6614, %v6102
        %v6631 = vadd.f32 %v6615, %v6103
        %v6632 = vadd.f32 %v6616, %v6104
        %v6633 = vadd.f32 %v6617, %v6105
        %v6634 = vadd.f32 %v6618, %v6106
        %v6635 = vadd.f32 %v6619, %v6107
        %v6636 = vadd.f32 %v6620, %v6108
        %v6637 = vadd.f32 %v6621, %v6109
        %v6638 = vadd.f32 %v6622, %v6110
        %v6639 = vadd.f32 %v6623, %v6111
        %v6640 = vadd.f32 %v6624, %v6112
        %v6641 = vadd.f32 %v6625, %v6113
        %v6642 = vadd.f32 %v6626, %v6114
        %v6643 = vadd.f32 %v6627, %v6115
        %v6644 = vadd.f32 %v6628, %v6116
        %v6645 = vadd.f32 %v6629, %v6117
        %v6646 = vadd.f32 %v6630, %v6118
        %v6647 = vadd.f32 %v6631, %v6119
        %v6648 = vadd.f32 %v6632, %v6120
        %v6649 = vadd.f32 %v6633, %v6121
        %v6650 = vadd.f32 %v6634, %v6122
        %v6651 = vadd.f32 %v6635, %v6123
        %v6652 = vadd.f32 %v6636, %v6124
        %v6653 = vadd.f32 %v6637, %v6125
        %v6654 = vadd.f32 %v6638, %v6126
        %v6655 = vadd.f32 %v6639, %v6127
        %v6656 = vadd.f32 %v6640, %v6128
        %v6657 = vadd.f32 %v6641, %v6129
        %v6658 = vadd.f32 %v6642, %v6130
        %v6659 = vadd.f32 %v6643, %v6131
        %v6660 = vadd.f32 %v6644, %v6132
        %v6661 = vadd.f32 %v6645, %v6133
        %v6662 = vadd.f32 %v6646, %v6134
        %v6663 = vadd.f32 %v6647, %v6135
        %v6664 = vadd.f32 %v6648, %v6136
        %v6665 = vadd.f32 %v6649, %v6137
        %v6666 = vadd.f32 %v6650, %v6138
        %v6667 = vadd.f32 %v6651, %v6139
        %v6668 = vadd.f32 %v6652, %v6140
        %v6669 = vadd.f32 %v6653, %v6141
        %v6670 = vadd.f32 %v6654, %v6142
        %v6671 = vadd.f32 %v6655, %v6143
        %v6672 = vadd.f32 %v6656, %v6144
        %v6673 = vadd.f32 %v6657, %v6145
        %v6674 = vadd.f32 %v6658, %v6146
        %v6675 = vadd.f32 %v6659, %v6147
        %v6676 = vadd.f32 %v6660, %v6148
        %v6677 = vadd.f32 %v6661, %v6149
        %v6678 = vadd.f32 %v6662, %v6150
        %v6679 = vadd.f32 %v6663, %v6151
        %v6680 = vadd.f32 %v6664, %v6152
        %v6681 = vadd.f32 %v6665, %v6153
        %v6682 = vadd.f32 %v6666, %v6154
        %v6683 = vadd.f32 %v6667, %v6155
        %v6684 = vadd.f32 %v6668, %v6156
        %v6685 = vadd.f32 %v6669, %v6157
        %v6686 = vadd.f32 %v6670, %v6158
        %v6687 = vadd.f32 %v6671, %v6159
        %v6688 = vadd.f32 %v6672, %v6160
        %v6689 = vadd.f32 %v6673, %v6161
        %v6690 = vadd.f32 %v6674, %v6162
        %v6691 = vadd.f32 %v6675, %v6163
        %v6692 = vadd.f32 %v6676, %v6164
        %v6693 = vadd.f32 %v6677, %v6165
        %v6694 = vadd.f32 %v6678, %v6166
        %v6695 = vadd.f32 %v6679, %v6167
        %v6696 = vadd.f32 %v6680, %v6168
        %v6697 = vadd.f32 %v6681, %v6169
        %v6698 = vadd.f32 %v6682, %v6170
        %v6699 = vadd.f32 %v6683, %v6171
        %v6700 = vadd.f32 %v6684, %v6172
        %v6701 = vadd.f32 %v6685, %v6173
        %v6702 = vadd.f32 %v6686, %v6174
        %v6703 = vadd.f32 %v6687, %v6175
        %v6704 = vadd.f32 %v6688, %v6176
        %v6705 = vadd.f32 %v6689, %v6177
        %v6706 = vadd.f32 %v6690, %v6178
        %v6707 = vadd.f32 %v6691, %v6179
        %v6708 = vadd.f32 %v6692, %v6180
        %v6709 = vadd.f32 %v6693, %v6181
        %v6710 = vadd.f32 %v6694, %v6182
        %v6711 = vadd.f32 %v6695, %v6183
        %v6712 = vadd.f32 %v6696, %v6184
        %v6713 = vadd.f32 %v6697, %v6185
        %v6714 = vadd.f32 %v6698, %v6186
        %v6715 = vadd.f32 %v6699, %v6187
        %v6716 = vadd.f32 %v6700, %v6188
        %v6717 = vadd.f32 %v6701, %v6189
        %v6718 = vadd.f32 %v6702, %v6190
        %v6719 = vadd.f32 %v6703, %v6191
        %v6720 = vadd.f32 %v6704, %v6192
        %v6721 = vadd.f32 %v6705, %v6193
        %v6722 = vadd.f32 %v6706, %v6194
        %v6723 = vadd.f32 %v6707, %v6195
        %v6724 = vadd.f32 %v6708, %v6196
        %v6725 = vadd.f32 %v6709, %v6197
        %v6726 = vadd.f32 %v6710, %v6198
        %v6727 = vadd.f32 %v6711, %v6199
        %v6728 = vadd.f32 %v6712, %v6200
        %v6729 = vadd.f32 %v6713, %v6201
        %v6730 = vadd.f32 %v6714, %v6202
        %v6731 = vadd.f32 %v6715, %v6203
        %v6732 = vadd.f32 %v6716, %v6204
        %v6733 = vadd.f32 %v6717, %v6205
        %v6734 = vadd.f32 %v6718, %v6206
        %v6735 = vadd.f32 %v6719, %v6207
        %v6736 = vadd.f32 %v6720, %v6208
        %v6737 = vadd.f32 %v6721, %v6209
        %v6738 = vadd.f32 %v6722, %v6210
        %v6739 = vadd.f32 %v6723, %v6211
        %v6740 = vadd.f32 %v6724, %v6212
        %v6741 = vadd.f32 %v6725, %v6213
        %v6742 = vadd.f32 %v6726, %v6214
        %v6743 = vadd.f32 %v6727, %v6215
        %v6744 = vadd.f32 %v6728, %v6216
        %v6745 = vadd.f32 %v6729, %v6217
        %v6746 = vadd.f32 %v6730, %v6218
        %v6747 = vadd.f32 %v6731, %v6219
        %v6748 = vadd.f32 %v6732, %v6220
        %v6749 = vadd.f32 %v6733, %v6221
        %v6750 = vadd.f32 %v6734, %v6222
        %v6751 = vadd.f32 %v6735, %v6223
        %v6752 = vadd.f32 %v6736, %v6224
        %v6753 = vadd.f32 %v6737, %v6225
        %v6754 = vadd.f32 %v6738, %v6226
        %v6755 = vadd.f32 %v6739, %v6227
        %v6756 = vadd.f32 %v6740, %v6228
        %v6757 = vadd.f32 %v6741, %v6229
        %v6758 = vadd.f32 %v6742, %v6230
        %v6759 = vadd.f32 %v6743, %v6231
        %v6760 = vadd.f32 %v6744, %v6232
        %v6761 = vadd.f32 %v6745, %v6233
        %v6762 = vadd.f32 %v6746, %v6234
        %v6763 = vadd.f32 %v6747, %v6235
        %v6764 = vadd.f32 %v6748, %v6236
        %v6765 = vadd.f32 %v6749, %v6237
        %v6766 = vadd.f32 %v6750, %v6238
        %v6767 = vadd.f32 %v6751, %v6239
        %v6768 = vadd.f32 %v6752, %v6240
        %v6769 = vadd.f32 %v6753, %v6241
        %v6770 = vadd.f32 %v6754, %v6242
        %v6771 = vadd.f32 %v6755, %v6243
        %v6772 = vadd.f32 %v6756, %v6244
        %v6773 = vadd.f32 %v6757, %v6245
        %v6774 = vadd.f32 %v6758, %v6246
        %v6775 = vadd.f32 %v6759, %v6247
        %v6776 = vadd.f32 %v6760, %v6248
        %v6777 = vadd.f32 %v6761, %v6249
        %v6778 = vadd.f32 %v6762, %v6250
        %v6779 = vadd.f32 %v6763, %v6251
        %v6780 = vadd.f32 %v6764, %v6252
        %v6781 = vadd.f32 %v6765, %v6253
        %v6782 = vadd.f32 %v6766, %v6254
        %v6783 = vadd.f32 %v6767, %v6255
        %v6784 = vadd.f32 %v6768, %v6256
        %v6785 = vadd.f32 %v6769, %v6257
        %v6786 = vadd.f32 %v6770, %v6258
        %v6787 = vadd.f32 %v6771, %v6259
        %v6788 = vadd.f32 %v6772, %v6260
        %v6789 = vadd.f32 %v6773, %v6261
        %v6790 = vadd.f32 %v6774, %v6262
        %v6791 = vadd.f32 %v6775, %v6263
        %v6792 = vadd.f32 %v6776, %v6264
        %v6793 = vadd.f32 %v6777, %v6265
        %v6794 = vadd.f32 %v6778, %v6266
        %v6795 = vadd.f32 %v6779, %v6267
        %v6796 = vadd.f32 %v6780, %v6268
        %v6797 = vadd.f32 %v6781, %v6269
        %v6798 = vadd.f32 %v6782, %v6270
        %v6799 = vadd.f32 %v6783, %v6271
        %v6800 = vadd.f32 %v6784, %v6272
        %v6801 = vadd.f32 %v6785, %v6273
        %v6802 = vadd.f32 %v6786, %v6274
        %v6803 = vadd.f32 %v6787, %v6275
        %v6804 = vadd.f32 %v6788, %v6276
        %v6805 = vadd.f32 %v6789, %v6277
        %v6806 = vadd.f32 %v6790, %v6278
        %v6807 = vadd.f32 %v6791, %v6279
        %v6808 = vadd.f32 %v6792, %v6280
        %v6809 = vadd.f32 %v6793, %v6281
        %v6810 = vadd.f32 %v6794, %v6282
        %v6811 = vadd.f32 %v6795, %v6283
        %v6812 = vadd.f32 %v6796, %v6284
        %v6813 = vadd.f32 %v6797, %v6285
        %v6814 = vadd.f32 %v6798, %v6286
        %v6815 = vadd.f32 %v6799, %v6287
        %v6816 = vadd.f32 %v6800, %v6288
        %v6817 = vadd.f32 %v6801, %v6289
        %v6818 = vadd.f32 %v6802, %v6290
        %v6819 = vadd.f32 %v6803, %v6291
        %v6820 = vadd.f32 %v6804, %v6292
        %v6821 = vadd.f32 %v6805, %v6293
        %v6822 = vadd.f32 %v6806, %v6294
        %v6823 = vadd.f32 %v6807, %v6295
        %v6824 = vadd.f32 %v6808, %v6296
        %v6825 = vadd.f32 %v6809, %v6297
        %v6826 = vadd.f32 %v6810, %v6298
        %v6827 = vadd.f32 %v6811, %v6299
        %v6828 = vadd.f32 %v6812, %v6300
        %v6829 = vadd.f32 %v6813, %v6301
        %v6830 = vadd.f32 %v6814, %v6302
        %v6831 = vadd.f32 %v6815, %v6303
        %v6832 = vadd.f32 %v6816, %v6304
        %v6833 = vadd.f32 %v6817, %v6305
        %v6834 = vadd.f32 %v6818, %v6306
        %v6835 = vadd.f32 %v6819, %v6307
        %v6836 = vadd.f32 %v6820, %v6308
        %v6837 = vadd.f32 %v6821, %v6309
        %v6838 = vadd.f32 %v6822, %v6310
        %v6839 = vadd.f32 %v6823, %v6311
        %v6840 = vadd.f32 %v6824, %v6312
        %v6841 = vadd.f32 %v6825, %v6313
        %v6842 = vadd.f32 %v6826, %v6314
        %v6843 = vadd.f32 %v6827, %v6315
        %v6844 = vadd.f32 %v6828, %v6316
        %v6845 = vadd.f32 %v6829, %v6317
        %v6846 = vadd.f32 %v6830, %v6318
        %v6847 = vadd.f32 %v6831, %v6319
        %v6848 = vadd.f32 %v6832, %v6320
        %v6849 = vadd.f32 %v6833, %v6321
        %v6850 = vadd.f32 %v6834, %v6322
        %v6851 = vadd.f32 %v6835, %v6323
        %v6852 = vadd.f32 %v6836, %v6324
        %v6853 = vadd.f32 %v6837, %v6325
        %v6854 = vadd.f32 %v6838, %v6326
        %v6855 = vadd.f32 %v6839, %v6327
        %v6856 = vadd.f32 %v6840, %v6328
        %v6857 = vadd.f32 %v6841, %v6329
        %v6858 = vadd.f32 %v6842, %v6330
        %v6859 = vadd.f32 %v6843, %v6331
        %v6860 = vadd.f32 %v6844, %v6332
        %v6861 = vadd.f32 %v6845, %v6333
        %v6862 = vadd.f32 %v6846, %v6334
        %v6863 = vadd.f32 %v6847, %v6335
        %v6864 = vadd.f32 %v6848, %v6336
        %v6865 = vadd.f32 %v6849, %v6337
        %v6866 = vadd.f32 %v6850, %v6338
        %v6867 = vadd.f32 %v6851, %v6339
        %v6868 = vadd.f32 %v6852, %v6340
        %v6869 = vadd.f32 %v6853, %v6341
        %v6870 = vadd.f32 %v6854, %v6342
        %v6871 = vadd.f32 %v6855, %v6343
        %v6872 = vadd.f32 %v6856, %v6344
        %v6873 = vadd.f32 %v6857, %v6345
        %v6874 = vadd.f32 %v6858, %v6346
        %v6875 = vadd.f32 %v6859, %v6347
        %v6876 = vadd.f32 %v6860, %v6348
        %v6877 = vadd.f32 %v6861, %v6349
        %v6878 = vadd.f32 %v6862, %v6350
        %v6879 = vadd.f32 %v6863, %v6351
        %v6880 = vadd.f32 %v6864, %v6352
        %v6881 = vadd.f32 %v6865, %v6353
        %v6882 = vadd.f32 %v6866, %v6354
        %v6883 = vadd.f32 %v6867, %v6355
        %v6884 = vadd.f32 %v6868, %v6356
        %v6885 = vadd.f32 %v6869, %v6357
        %v6886 = vadd.f32 %v6870, %v6358
        %v6887 = vadd.f32 %v6871, %v6359
        %v6888 = vadd.f32 %v6872, %v6360
        %v6889 = vadd.f32 %v6873, %v6361
        %v6890 = vadd.f32 %v6874, %v6362
        %v6891 = vadd.f32 %v6875, %v6363
        %v6892 = vadd.f32 %v6876, %v6364
        %v6893 = vadd.f32 %v6877, %v6365
        %v6894 = vadd.f32 %v6878, %v6366
        %v6895 = vadd.f32 %v6879, %v6367
        %v6896 = vadd.f32 %v6880, %v6368
        %v6897 = vadd.f32 %v6881, %v6369
        %v6898 = vadd.f32 %v6882, %v6370
        %v6899 = vadd.f32 %v6883, %v6371
        %v6900 = vadd.f32 %v6884, %v6372
        %v6901 = vadd.f32 %v6885, %v6373
        %v6902 = vadd.f32 %v6886, %v6374
        %v6903 = vadd.f32 %v6887, %v6375
        %v6904 = vadd.f32 %v6888, %v6376
        %v6905 = vadd.f32 %v6889, %v6377
        %v6906 = vadd.f32 %v6890, %v6378
        %v6907 = vadd.f32 %v6891, %v6379
        %v6908 = vadd.f32 %v6892, %v6380
        %v6909 = vadd.f32 %v6893, %v6381
        %v6910 = vadd.f32 %v6894, %v6382
        %v6911 = vadd.f32 %v6895, %v6383
        %v6912 = vadd.f32 %v6896, %v6384
        %v6913 = vadd.f32 %v6897, %v6385
        %v6914 = vadd.f32 %v6898, %v6386
        %v6915 = vadd.f32 %v6899, %v6387
        %v6916 = vadd.f32 %v6900, %v6388
        %v6917 = vadd.f32 %v6901, %v6389
        %v6918 = vadd.f32 %v6902, %v6390
        %v6919 = vadd.f32 %v6903, %v6391
        %v6920 = vadd.f32 %v6904, %v6392
        %v6921 = vadd.f32 %v6905, %v6393
        %v6922 = vadd.f32 %v6906, %v6394
        %v6923 = vadd.f32 %v6907, %v6395
        %v6924 = vadd.f32 %v6908, %v6396
        %v6925 = vadd.f32 %v6909, %v6397
        %v6926 = vadd.f32 %v6910, %v6398
        %v6927 = vadd.f32 %v6911, %v6399
        %v6928 = vadd.f32 %v6912, %v6400
        %v6929 = vadd.f32 %v6913, %v6401
        %v6930 = vadd.f32 %v6914, %v6402
        %v6931 = vadd.f32 %v6915, %v6403
        %v6932 = vadd.f32 %v6916, %v6404
        %v6933 = vadd.f32 %v6917, %v6405
        %v6934 = vadd.f32 %v6918, %v6406
        %v6935 = vadd.f32 %v6919, %v6407
        %v6936 = vadd.f32 %v6920, %v6408
        %v6937 = vadd.f32 %v6921, %v6409
        %v6938 = vadd.f32 %v6922, %v6410
        %v6939 = vadd.f32 %v6923, %v6411
        %v6940 = vadd.f32 %v6924, %v6412
        %v6941 = vadd.f32 %v6925, %v6413
        %v6942 = vadd.f32 %v6926, %v6414
        %v6943 = vadd.f32 %v6927, %v6415
        %v6944 = vadd.f32 %v6928, %v6416
        %v6945 = vadd.f32 %v6929, %v6417
        %v6946 = vadd.f32 %v6930, %v6418
        %v6947 = vadd.f32 %v6931, %v6419
        %v6948 = vadd.f32 %v6932, %v6420
        %v6949 = vadd.f32 %v6933, %v6421
        %v6950 = vadd.f32 %v6934, %v6422
        %v6951 = vadd.f32 %v6935, %v6423
        %v6952 = vadd.f32 %v6936, %v6424
        %v6953 = vadd.f32 %v6937, %v6425
        %v6954 = vadd.f32 %v6938, %v6426
        %v6955 = vadd.f32 %v6939, %v6427
        %v6956 = vadd.f32 %v6940, %v6428
        %v6957 = vadd.f32 %v6941, %v6429
        %v6958 = vadd.f32 %v6942, %v6430
        %v6959 = vadd.f32 %v6943, %v6431
        %v6960 = vadd.f32 %v6944, %v6432
        %v6961 = vadd.f32 %v6945, %v6433
        %v6962 = vadd.f32 %v6946, %v6434
        %v6963 = vadd.f32 %v6947, %v6435
        %v6964 = vadd.f32 %v6948, %v6436
        %v6965 = vadd.f32 %v6949, %v6437
        %v6966 = vadd.f32 %v6950, %v6438
        %v6967 = vadd.f32 %v6951, %v6439
        %v6968 = vadd.f32 %v6952, %v6440
        %v6969 = vadd.f32 %v6953, %v6441
        %v6970 = vadd.f32 %v6954, %v6442
        %v6971 = vadd.f32 %v6955, %v6443
        %v6972 = vadd.f32 %v6956, %v6444
        %v6973 = vadd.f32 %v6957, %v6445
        %v6974 = vadd.f32 %v6958, %v6446
        %v6975 = vadd.f32 %v6959, %v6447
        %v6976 = vadd.f32 %v6960, %v6448
        %v6977 = vadd.f32 %v6961, %v6449
        %v6978 = vadd.f32 %v6962, %v6450
        %v6979 = vadd.f32 %v6963, %v6451
        %v6980 = vadd.f32 %v6964, %v6452
        %v6981 = vadd.f32 %v6965, %v6453
        %v6982 = vadd.f32 %v6966, %v6454
        %v6983 = vadd.f32 %v6967, %v6455
        %v6984 = vadd.f32 %v6968, %v6456
        %v6985 = vadd.f32 %v6969, %v6457
        %v6986 = vadd.f32 %v6970, %v6458
        %v6987 = vadd.f32 %v6971, %v6459
        %v6988 = vadd.f32 %v6972, %v6460
        %v6989 = vadd.f32 %v6973, %v6461
        %v6990 = vadd.f32 %v6974, %v6462
        %v6991 = vadd.f32 %v6975, %v6463
        %v6992 = vadd.f32 %v6976, %v6464
        %v6993 = vadd.f32 %v6977, %v6465
        %v6994 = vadd.f32 %v6978, %v6466
        %v6995 = vadd.f32 %v6979, %v6467
        %v6996 = vadd.f32 %v6980, %v6468
        %v6997 = vadd.f32 %v6981, %v6469
        %v6998 = vadd.f32 %v6982, %v6470
        %v6999 = vadd.f32 %v6983, %v6471
        %v7000 = vadd.f32 %v6984, %v6472
        %v7001 = vadd.f32 %v6985, %v6473
        %v7002 = vadd.f32 %v6986, %v6474
        %v7003 = vadd.f32 %v6987, %v6475
        %v7004 = vadd.f32 %v6988, %v6476
        %v7005 = vadd.f32 %v6989, %v6477
        %v7006 = vadd.f32 %v6990, %v6478
        %v7007 = vadd.f32 %v6991, %v6479
        %v7008 = vadd.f32 %v6992, %v6480
        %v7009 = vadd.f32 %v6993, %v6481
        %v7010 = vadd.f32 %v6994, %v6482
        %v7011 = vadd.f32 %v6995, %v6483
        %v7012 = vadd.f32 %v6996, %v6484
        %v7013 = vadd.f32 %v6997, %v6485
        %v7014 = vadd.f32 %v6998, %v6486
        %v7015 = vadd.f32 %v6999, %v6487
        %v7016 = vadd.f32 %v7000, %v6488
        %v7017 = vadd.f32 %v7001, %v6489
        %v7018 = vadd.f32 %v7002, %v6490
        %v7019 = vadd.f32 %v7003, %v6491
        %v7020 = vadd.f32 %v7004, %v6492
        %v7021 = vadd.f32 %v7005, %v6493
        %v7022 = vadd.f32 %v7006, %v6494
        %v7023 = vadd.f32 %v7007, %v6495
        %v7024 = vadd.f32 %v7008, %v6496
        %v7025 = vadd.f32 %v7009, %v6497
        %v7026 = vadd.f32 %v7010, %v6498
        %v7027 = vadd.f32 %v7011, %v6499
        %v7028 = vadd.f32 %v7012, %v6500
        %v7029 = vadd.f32 %v7013, %v6501
        %v7030 = vadd.f32 %v7014, %v6502
        %v7031 = vadd.f32 %v7015, %v6503
        %v7032 = vadd.f32 %v7016, %v6504
        %v7033 = vadd.f32 %v7017, %v6505
        %v7034 = vadd.f32 %v7018, %v6506
        %v7035 = vadd.f32 %v7019, %v6507
        %v7036 = vadd.f32 %v7020, %v6508
        %v7037 = vadd.f32 %v7021, %v6509
        %v7038 = vadd.f32 %v7022, %v6510
        %v7039 = vadd.f32 %v7023, %v6511
        %v7040 = vadd.f32 %v7024, %v6512
        %v7041 = vadd.f32 %v7025, %v6513
        %v7042 = vadd.f32 %v7026, %v6514
        %v7043 = vadd.f32 %v7027, %v6515
        %v7044 = vadd.f32 %v7028, %v6516
        %v7045 = vadd.f32 %v7029, %v6517
        %v7046 = vadd.f32 %v7030, %v6518
        %v7047 = vadd.f32 %v7031, %v6519
        %v7048 = vadd.f32 %v7032, %v6520
        %v7049 = vadd.f32 %v7033, %v6521
        %v7050 = vadd.f32 %v7034, %v6522
        %v7051 = vadd.f32 %v7035, %v6523
        %v7052 = vadd.f32 %v7036, %v6524
        %v7053 = vadd.f32 %v7037, %v6525
        %v7054 = vadd.f32 %v7038, %v6526
        %v7055 = vadd.f32 %v7039, %v6527
        %v7056 = vadd.f32 %v7040, %v6528
        %v7057 = vadd.f32 %v7041, %v6529
        %v7058 = vadd.f32 %v7042, %v6530
        %v7059 = vadd.f32 %v7043, %v6531
        %v7060 = vadd.f32 %v7044, %v6532
        %v7061 = vadd.f32 %v7045, %v6533
        %v7062 = vadd.f32 %v7046, %v6534
        %v7063 = vadd.f32 %v7047, %v6535
        %v7064 = vadd.f32 %v7048, %v6536
        %v7065 = vadd.f32 %v7049, %v6537
        %v7066 = vadd.f32 %v7050, %v6538
        %v7067 = vadd.f32 %v7051, %v6539
        %v7068 = vadd.f32 %v7052, %v6540
        %v7069 = vadd.f32 %v7053, %v6541
        %v7070 = vadd.f32 %v7054, %v6542
        %v7071 = vadd.f32 %v7055, %v6543
        %v7072 = vadd.f32 %v7056, %v6544
        %v7073 = vadd.f32 %v7057, %v6545
        %v7074 = vadd.f32 %v7058, %v6546
        %v7075 = vadd.f32 %v7059, %v6547
        %v7076 = vadd.f32 %v7060, %v6548
        %v7077 = vadd.f32 %v7061, %v6549
        %v7078 = vadd.f32 %v7062, %v6550
        %v7079 = vadd.f32 %v7063, %v6551
        %v7080 = vadd.f32 %v7064, %v6552
        %v7081 = vadd.f32 %v7065, %v6553
        %v7082 = vadd.f32 %v7066, %v6554
        %7083 = vst [vmem:[#allocation2] sm:$0xff] %v7067
        %7084 = vst [vmem:[#allocation2 + $0x8] sm:$0xff] %v7068
        %7085 = vst [vmem:[#allocation2 + $0x10] sm:$0xff] %v7069
        %7086 = vst [vmem:[#allocation2 + $0x18] sm:$0xff] %v7070
        %7087 = vst [vmem:[#allocation2 + $0x20] sm:$0xff] %v7071
        %7088 = vst [vmem:[#allocation2 + $0x28] sm:$0xff] %v7072
        %7089 = vst [vmem:[#allocation2 + $0x30] sm:$0xff] %v7073
        %7090 = vst [vmem:[#allocation2 + $0x38] sm:$0xff] %v7074
        %7091 = vst [vmem:[#allocation2 + $0x40] sm:$0xff] %v7075
        %7092 = vst [vmem:[#allocation2 + $0x48] sm:$0xff] %v7076
        %7093 = vst [vmem:[#allocation2 + $0x50] sm:$0xff] %v7077
        %7094 = vst [vmem:[#allocation2 + $0x58] sm:$0xff] %v7078
        %7095 = vst [vmem:[#allocation2 + $0x60] sm:$0xff] %v7079
        %7096 = vst [vmem:[#allocation2 + $0x68] sm:$0xff] %v7080
        %7097 = vst [vmem:[#allocation2 + $0x70] sm:$0xff] %v7081
        %7098 = vst [vmem:[#allocation2 + $0x78] sm:$0xff] %v7082
        // Predicated region
        $region53: #{model_multilabel_forward.1} parent=47 // pred_check
          %p7099 = pneg %p305
        $region54: #{model_multilabel_forward.1} parent=47 // pred_check_branch
          %7101 = sbr.rel (%p7099) target = $region56
        $region55: #{model_multilabel_forward.1} parent=47 // pred_region
          %v7102 = vld [vmem:[#allocation2] sm:$0xff]
          %v7103 = vld [vmem:[#allocation2 + $0x8] sm:$0xff]
          %v7104 = vld [vmem:[#allocation2 + $0x10] sm:$0xff]
          %v7105 = vld [vmem:[#allocation2 + $0x18] sm:$0xff]
          %v7106 = vld [vmem:[#allocation2 + $0x20] sm:$0xff]
          %v7107 = vld [vmem:[#allocation2 + $0x28] sm:$0xff]
          %v7108 = vld [vmem:[#allocation2 + $0x30] sm:$0xff]
          %v7109 = vld [vmem:[#allocation2 + $0x38] sm:$0xff]
          %v7110 = vld [vmem:[#allocation2 + $0x40] sm:$0xff]
          %v7111 = vld [vmem:[#allocation2 + $0x48] sm:$0xff]
          %v7112 = vld [vmem:[#allocation2 + $0x50] sm:$0xff]
          %v7113 = vld [vmem:[#allocation2 + $0x58] sm:$0xff]
          %v7114 = vld [vmem:[#allocation2 + $0x60] sm:$0xff]
          %v7115 = vld [vmem:[#allocation2 + $0x68] sm:$0xff]
          %v7116 = vld [vmem:[#allocation2 + $0x70] sm:$0xff]
          %v7117 = vld [vmem:[#allocation2 + $0x78] sm:$0xff]
          %v7118 = vrot.slane %v7102, 4
          %v7119 = vadd.f32 %v7102, %v7118
          %v7120 = vrot.slane %v7119, 2
          %v7121 = vadd.f32 %v7119, %v7120
          %v7122 = vrot.slane %v7121, 1
          %v7123 = vadd.f32 %v7121, %v7122
          %v7124 = vrot.slane %v7103, 4
          %v7125 = vadd.f32 %v7103, %v7124
          %v7126 = vrot.slane %v7125, 2
          %v7127 = vadd.f32 %v7125, %v7126
          %v7128 = vrot.slane %v7127, 1
          %v7129 = vadd.f32 %v7127, %v7128
          %v7130 = vrot.slane %v7104, 4
          %v7131 = vadd.f32 %v7104, %v7130
          %v7132 = vrot.slane %v7131, 2
          %v7133 = vadd.f32 %v7131, %v7132
          %v7134 = vrot.slane %v7133, 1
          %v7135 = vadd.f32 %v7133, %v7134
          %v7136 = vrot.slane %v7105, 4
          %v7137 = vadd.f32 %v7105, %v7136
          %v7138 = vrot.slane %v7137, 2
          %v7139 = vadd.f32 %v7137, %v7138
          %v7140 = vrot.slane %v7139, 1
          %v7141 = vadd.f32 %v7139, %v7140
          %v7142 = vrot.slane %v7106, 4
          %v7143 = vadd.f32 %v7106, %v7142
          %v7144 = vrot.slane %v7143, 2
          %v7145 = vadd.f32 %v7143, %v7144
          %v7146 = vrot.slane %v7145, 1
          %v7147 = vadd.f32 %v7145, %v7146
          %v7148 = vrot.slane %v7107, 4
          %v7149 = vadd.f32 %v7107, %v7148
          %v7150 = vrot.slane %v7149, 2
          %v7151 = vadd.f32 %v7149, %v7150
          %v7152 = vrot.slane %v7151, 1
          %v7153 = vadd.f32 %v7151, %v7152
          %v7154 = vrot.slane %v7108, 4
          %v7155 = vadd.f32 %v7108, %v7154
          %v7156 = vrot.slane %v7155, 2
          %v7157 = vadd.f32 %v7155, %v7156
          %v7158 = vrot.slane %v7157, 1
          %v7159 = vadd.f32 %v7157, %v7158
          %v7160 = vrot.slane %v7109, 4
          %v7161 = vadd.f32 %v7109, %v7160
          %v7162 = vrot.slane %v7161, 2
          %v7163 = vadd.f32 %v7161, %v7162
          %v7164 = vrot.slane %v7163, 1
          %v7165 = vadd.f32 %v7163, %v7164
          %v7166 = vrot.slane %v7110, 4
          %v7167 = vadd.f32 %v7110, %v7166
          %v7168 = vrot.slane %v7167, 2
          %v7169 = vadd.f32 %v7167, %v7168
          %v7170 = vrot.slane %v7169, 1
          %v7171 = vadd.f32 %v7169, %v7170
          %v7172 = vrot.slane %v7111, 4
          %v7173 = vadd.f32 %v7111, %v7172
          %v7174 = vrot.slane %v7173, 2
          %v7175 = vadd.f32 %v7173, %v7174
          %v7176 = vrot.slane %v7175, 1
          %v7177 = vadd.f32 %v7175, %v7176
          %v7178 = vrot.slane %v7112, 4
          %v7179 = vadd.f32 %v7112, %v7178
          %v7180 = vrot.slane %v7179, 2
          %v7181 = vadd.f32 %v7179, %v7180
          %v7182 = vrot.slane %v7181, 1
          %v7183 = vadd.f32 %v7181, %v7182
          %v7184 = vrot.slane %v7113, 4
          %v7185 = vadd.f32 %v7113, %v7184
          %v7186 = vrot.slane %v7185, 2
          %v7187 = vadd.f32 %v7185, %v7186
          %v7188 = vrot.slane %v7187, 1
          %v7189 = vadd.f32 %v7187, %v7188
          %v7190 = vrot.slane %v7114, 4
          %v7191 = vadd.f32 %v7114, %v7190
          %v7192 = vrot.slane %v7191, 2
          %v7193 = vadd.f32 %v7191, %v7192
          %v7194 = vrot.slane %v7193, 1
          %v7195 = vadd.f32 %v7193, %v7194
          %v7196 = vrot.slane %v7115, 4
          %v7197 = vadd.f32 %v7115, %v7196
          %v7198 = vrot.slane %v7197, 2
          %v7199 = vadd.f32 %v7197, %v7198
          %v7200 = vrot.slane %v7199, 1
          %v7201 = vadd.f32 %v7199, %v7200
          %v7202 = vrot.slane %v7116, 4
          %v7203 = vadd.f32 %v7116, %v7202
          %v7204 = vrot.slane %v7203, 2
          %v7205 = vadd.f32 %v7203, %v7204
          %v7206 = vrot.slane %v7205, 1
          %v7207 = vadd.f32 %v7205, %v7206
          %v7208 = vrot.slane %v7117, 4
          %v7209 = vadd.f32 %v7117, %v7208
          %v7210 = vrot.slane %v7209, 2
          %v7211 = vadd.f32 %v7209, %v7210
          %v7212 = vrot.slane %v7211, 1
          %v7213 = vadd.f32 %v7211, %v7212
          %v7214 = vmul.f32 %v7123, 0.00390625
          %v7215 = vmul.f32 %v7129, 0.00390625
          %v7216 = vmul.f32 %v7135, 0.00390625
          %v7217 = vmul.f32 %v7141, 0.00390625
          %v7218 = vmul.f32 %v7147, 0.00390625
          %v7219 = vmul.f32 %v7153, 0.00390625
          %v7220 = vmul.f32 %v7159, 0.00390625
          %v7221 = vmul.f32 %v7165, 0.00390625
          %v7222 = vmul.f32 %v7171, 0.00390625
          %v7223 = vmul.f32 %v7177, 0.00390625
          %v7224 = vmul.f32 %v7183, 0.00390625
          %v7225 = vmul.f32 %v7189, 0.00390625
          %v7226 = vmul.f32 %v7195, 0.00390625
          %v7227 = vmul.f32 %v7201, 0.00390625
          %v7228 = vmul.f32 %v7207, 0.00390625
          %v7229 = vmul.f32 %v7213, 0.00390625
          %v7230 = vpack.c.bf16 %v7214, %v7214
          %v7231 = vpack.c.bf16 %v7215, %v7215
          %v7232 = vpack.c.bf16 %v7216, %v7216
          %v7233 = vpack.c.bf16 %v7217, %v7217
          %v7234 = vpack.c.bf16 %v7218, %v7218
          %v7235 = vpack.c.bf16 %v7219, %v7219
          %v7236 = vpack.c.bf16 %v7220, %v7220
          %v7237 = vpack.c.bf16 %v7221, %v7221
          %v7238 = vpack.c.bf16 %v7222, %v7222
          %v7239 = vpack.c.bf16 %v7223, %v7223
          %v7240 = vpack.c.bf16 %v7224, %v7224
          %v7241 = vpack.c.bf16 %v7225, %v7225
          %v7242 = vpack.c.bf16 %v7226, %v7226
          %v7243 = vpack.c.bf16 %v7227, %v7227
          %v7244 = vpack.c.bf16 %v7228, %v7228
          %v7245 = vpack.c.bf16 %v7229, %v7229
          %v7246 = vld [vmem:[%s5] sm:$0xf]
          %v7247 = vld [vmem:[%s5 + $0x4] sm:$0xf]
          %v7248 = vld [vmem:[%s5 + $0x8] sm:$0xf]
          %v7249 = vld [vmem:[%s5 + $0xc] sm:$0xf]
          %v7250 = vld [vmem:[%s5 + $0x10] sm:$0xf]
          %v7251 = vld [vmem:[%s5 + $0x14] sm:$0xf]
          %v7252 = vld [vmem:[%s5 + $0x18] sm:$0xf]
          %v7253 = vld [vmem:[%s5 + $0x1c] sm:$0xf]
          %v7254 = vld [vmem:[%s5 + $0x20] sm:$0xf]
          %v7255 = vld [vmem:[%s5 + $0x24] sm:$0xf]
          %v7256 = vld [vmem:[%s5 + $0x28] sm:$0xf]
          %v7257 = vld [vmem:[%s5 + $0x2c] sm:$0xf]
          %v7258 = vld [vmem:[%s5 + $0x30] sm:$0xf]
          %v7259 = vld [vmem:[%s5 + $0x34] sm:$0xf]
          %v7260 = vld [vmem:[%s5 + $0x38] sm:$0xf]
          %v7261 = vld [vmem:[%s5 + $0x3c] sm:$0xf]
          %v7262 = vld [vmem:[%s5 + $0x40] sm:$0xf]
          %v7263 = vld [vmem:[%s5 + $0x44] sm:$0xf]
          %v7264 = vld [vmem:[%s5 + $0x48] sm:$0xf]
          %v7265 = vld [vmem:[%s5 + $0x4c] sm:$0xf]
          %v7266 = vld [vmem:[%s5 + $0x50] sm:$0xf]
          %v7267 = vld [vmem:[%s5 + $0x54] sm:$0xf]
          %v7268 = vld [vmem:[%s5 + $0x58] sm:$0xf]
          %v7269 = vld [vmem:[%s5 + $0x5c] sm:$0xf]
          %v7270 = vld [vmem:[%s5 + $0x60] sm:$0xf]
          %v7271 = vld [vmem:[%s5 + $0x64] sm:$0xf]
          %v7272 = vld [vmem:[%s5 + $0x68] sm:$0xf]
          %v7273 = vld [vmem:[%s5 + $0x6c] sm:$0xf]
          %v7274 = vld [vmem:[%s5 + $0x70] sm:$0xf]
          %v7275 = vld [vmem:[%s5 + $0x74] sm:$0xf]
          %v7276 = vld [vmem:[%s5 + $0x78] sm:$0xf]
          %v7277 = vld [vmem:[%s5 + $0x7c] sm:$0xf]
          %v7278 = vld [vmem:[%s5 + $0x80] sm:$0xf]
          %v7279 = vld [vmem:[%s5 + $0x84] sm:$0xf]
          %v7280 = vld [vmem:[%s5 + $0x88] sm:$0xf]
          %v7281 = vld [vmem:[%s5 + $0x8c] sm:$0xf]
          %v7282 = vld [vmem:[%s5 + $0x90] sm:$0xf]
          %v7283 = vld [vmem:[%s5 + $0x94] sm:$0xf]
          %v7284 = vld [vmem:[%s5 + $0x98] sm:$0xf]
          %v7285 = vld [vmem:[%s5 + $0x9c] sm:$0xf]
          %v7286 = vld [vmem:[%s5 + $0xa0] sm:$0xf]
          %v7287 = vld [vmem:[%s5 + $0xa4] sm:$0xf]
          %v7288 = vld [vmem:[%s5 + $0xa8] sm:$0xf]
          %v7289 = vld [vmem:[%s5 + $0xac] sm:$0xf]
          %v7290 = vld [vmem:[%s5 + $0xb0] sm:$0xf]
          %v7291 = vld [vmem:[%s5 + $0xb4] sm:$0xf]
          %v7292 = vld [vmem:[%s5 + $0xb8] sm:$0xf]
          %v7293 = vld [vmem:[%s5 + $0xbc] sm:$0xf]
          %v7294 = vld [vmem:[%s5 + $0xc0] sm:$0xf]
          %v7295 = vld [vmem:[%s5 + $0xc4] sm:$0xf]
          %v7296 = vld [vmem:[%s5 + $0xc8] sm:$0xf]
          %v7297 = vld [vmem:[%s5 + $0xcc] sm:$0xf]
          %v7298 = vld [vmem:[%s5 + $0xd0] sm:$0xf]
          %v7299 = vld [vmem:[%s5 + $0xd4] sm:$0xf]
          %v7300 = vld [vmem:[%s5 + $0xd8] sm:$0xf]
          %v7301 = vld [vmem:[%s5 + $0xdc] sm:$0xf]
          %v7302 = vld [vmem:[%s5 + $0xe0] sm:$0xf]
          %v7303 = vld [vmem:[%s5 + $0xe4] sm:$0xf]
          %v7304 = vld [vmem:[%s5 + $0xe8] sm:$0xf]
          %v7305 = vld [vmem:[%s5 + $0xec] sm:$0xf]
          %v7306 = vld [vmem:[%s5 + $0xf0] sm:$0xf]
          %v7307 = vld [vmem:[%s5 + $0xf4] sm:$0xf]
          %v7308 = vld [vmem:[%s5 + $0xf8] sm:$0xf]
          %v7309 = vld [vmem:[%s5 + $0xfc] sm:$0xf]
          %v7310 = vld [vmem:[%s5 + $0x100] sm:$0xf]
          %v7311 = vld [vmem:[%s5 + $0x104] sm:$0xf]
          %v7312 = vld [vmem:[%s5 + $0x108] sm:$0xf]
          %v7313 = vld [vmem:[%s5 + $0x10c] sm:$0xf]
          %v7314 = vld [vmem:[%s5 + $0x110] sm:$0xf]
          %v7315 = vld [vmem:[%s5 + $0x114] sm:$0xf]
          %v7316 = vld [vmem:[%s5 + $0x118] sm:$0xf]
          %v7317 = vld [vmem:[%s5 + $0x11c] sm:$0xf]
          %v7318 = vld [vmem:[%s5 + $0x120] sm:$0xf]
          %v7319 = vld [vmem:[%s5 + $0x124] sm:$0xf]
          %v7320 = vld [vmem:[%s5 + $0x128] sm:$0xf]
          %v7321 = vld [vmem:[%s5 + $0x12c] sm:$0xf]
          %v7322 = vld [vmem:[%s5 + $0x130] sm:$0xf]
          %v7323 = vld [vmem:[%s5 + $0x134] sm:$0xf]
          %v7324 = vld [vmem:[%s5 + $0x138] sm:$0xf]
          %v7325 = vld [vmem:[%s5 + $0x13c] sm:$0xf]
          %v7326 = vld [vmem:[%s5 + $0x140] sm:$0xf]
          %v7327 = vld [vmem:[%s5 + $0x144] sm:$0xf]
          %v7328 = vld [vmem:[%s5 + $0x148] sm:$0xf]
          %v7329 = vld [vmem:[%s5 + $0x14c] sm:$0xf]
          %v7330 = vld [vmem:[%s5 + $0x150] sm:$0xf]
          %v7331 = vld [vmem:[%s5 + $0x154] sm:$0xf]
          %v7332 = vld [vmem:[%s5 + $0x158] sm:$0xf]
          %v7333 = vld [vmem:[%s5 + $0x15c] sm:$0xf]
          %v7334 = vld [vmem:[%s5 + $0x160] sm:$0xf]
          %v7335 = vld [vmem:[%s5 + $0x164] sm:$0xf]
          %v7336 = vld [vmem:[%s5 + $0x168] sm:$0xf]
          %v7337 = vld [vmem:[%s5 + $0x16c] sm:$0xf]
          %v7338 = vld [vmem:[%s5 + $0x170] sm:$0xf]
          %v7339 = vld [vmem:[%s5 + $0x174] sm:$0xf]
          %v7340 = vld [vmem:[%s5 + $0x178] sm:$0xf]
          %v7341 = vld [vmem:[%s5 + $0x17c] sm:$0xf]
          %v7342 = vld [vmem:[%s5 + $0x180] sm:$0xf]
          %v7343 = vld [vmem:[%s5 + $0x184] sm:$0xf]
          %v7344 = vld [vmem:[%s5 + $0x188] sm:$0xf]
          %v7345 = vld [vmem:[%s5 + $0x18c] sm:$0xf]
          %v7346 = vld [vmem:[%s5 + $0x190] sm:$0xf]
          %v7347 = vld [vmem:[%s5 + $0x194] sm:$0xf]
          %v7348 = vld [vmem:[%s5 + $0x198] sm:$0xf]
          %v7349 = vld [vmem:[%s5 + $0x19c] sm:$0xf]
          %v7350 = vld [vmem:[%s5 + $0x1a0] sm:$0xf]
          %v7351 = vld [vmem:[%s5 + $0x1a4] sm:$0xf]
          %v7352 = vld [vmem:[%s5 + $0x1a8] sm:$0xf]
          %v7353 = vld [vmem:[%s5 + $0x1ac] sm:$0xf]
          %v7354 = vld [vmem:[%s5 + $0x1b0] sm:$0xf]
          %v7355 = vld [vmem:[%s5 + $0x1b4] sm:$0xf]
          %v7356 = vld [vmem:[%s5 + $0x1b8] sm:$0xf]
          %v7357 = vld [vmem:[%s5 + $0x1bc] sm:$0xf]
          %v7358 = vld [vmem:[%s5 + $0x1c0] sm:$0xf]
          %v7359 = vld [vmem:[%s5 + $0x1c4] sm:$0xf]
          %v7360 = vld [vmem:[%s5 + $0x1c8] sm:$0xf]
          %v7361 = vld [vmem:[%s5 + $0x1cc] sm:$0xf]
          %v7362 = vld [vmem:[%s5 + $0x1d0] sm:$0xf]
          %v7363 = vld [vmem:[%s5 + $0x1d4] sm:$0xf]
          %v7364 = vld [vmem:[%s5 + $0x1d8] sm:$0xf]
          %v7365 = vld [vmem:[%s5 + $0x1dc] sm:$0xf]
          %v7366 = vld [vmem:[%s5 + $0x1e0] sm:$0xf]
          %v7367 = vld [vmem:[%s5 + $0x1e4] sm:$0xf]
          %v7368 = vld [vmem:[%s5 + $0x1e8] sm:$0xf]
          %v7369 = vld [vmem:[%s5 + $0x1ec] sm:$0xf]
          %v7370 = vld [vmem:[%s5 + $0x1f0] sm:$0xf]
          %v7371 = vld [vmem:[%s5 + $0x1f4] sm:$0xf]
          %v7372 = vld [vmem:[%s5 + $0x1f8] sm:$0xf]
          %v7373 = vld [vmem:[%s5 + $0x1fc] sm:$0xf]
          %v7374 = vld [vmem:[%s5 + $0x200] sm:$0xf]
          %v7375 = vld [vmem:[%s5 + $0x204] sm:$0xf]
          %v7376 = vld [vmem:[%s5 + $0x208] sm:$0xf]
          %v7377 = vld [vmem:[%s5 + $0x20c] sm:$0xf]
          %v7378 = vld [vmem:[%s5 + $0x210] sm:$0xf]
          %v7379 = vld [vmem:[%s5 + $0x214] sm:$0xf]
          %v7380 = vld [vmem:[%s5 + $0x218] sm:$0xf]
          %v7381 = vld [vmem:[%s5 + $0x21c] sm:$0xf]
          %v7382 = vld [vmem:[%s5 + $0x220] sm:$0xf]
          %v7383 = vld [vmem:[%s5 + $0x224] sm:$0xf]
          %v7384 = vld [vmem:[%s5 + $0x228] sm:$0xf]
          %v7385 = vld [vmem:[%s5 + $0x22c] sm:$0xf]
          %v7386 = vld [vmem:[%s5 + $0x230] sm:$0xf]
          %v7387 = vld [vmem:[%s5 + $0x234] sm:$0xf]
          %v7388 = vld [vmem:[%s5 + $0x238] sm:$0xf]
          %v7389 = vld [vmem:[%s5 + $0x23c] sm:$0xf]
          %v7390 = vld [vmem:[%s5 + $0x240] sm:$0xf]
          %v7391 = vld [vmem:[%s5 + $0x244] sm:$0xf]
          %v7392 = vld [vmem:[%s5 + $0x248] sm:$0xf]
          %v7393 = vld [vmem:[%s5 + $0x24c] sm:$0xf]
          %v7394 = vld [vmem:[%s5 + $0x250] sm:$0xf]
          %v7395 = vld [vmem:[%s5 + $0x254] sm:$0xf]
          %v7396 = vld [vmem:[%s5 + $0x258] sm:$0xf]
          %v7397 = vld [vmem:[%s5 + $0x25c] sm:$0xf]
          %v7398 = vld [vmem:[%s5 + $0x260] sm:$0xf]
          %v7399 = vld [vmem:[%s5 + $0x264] sm:$0xf]
          %v7400 = vld [vmem:[%s5 + $0x268] sm:$0xf]
          %v7401 = vld [vmem:[%s5 + $0x26c] sm:$0xf]
          %v7402 = vld [vmem:[%s5 + $0x270] sm:$0xf]
          %v7403 = vld [vmem:[%s5 + $0x274] sm:$0xf]
          %v7404 = vld [vmem:[%s5 + $0x278] sm:$0xf]
          %v7405 = vld [vmem:[%s5 + $0x27c] sm:$0xf]
          %v7406 = vld [vmem:[%s5 + $0x280] sm:$0xf]
          %v7407 = vld [vmem:[%s5 + $0x284] sm:$0xf]
          %v7408 = vld [vmem:[%s5 + $0x288] sm:$0xf]
          %v7409 = vld [vmem:[%s5 + $0x28c] sm:$0xf]
          %v7410 = vld [vmem:[%s5 + $0x290] sm:$0xf]
          %v7411 = vld [vmem:[%s5 + $0x294] sm:$0xf]
          %v7412 = vld [vmem:[%s5 + $0x298] sm:$0xf]
          %v7413 = vld [vmem:[%s5 + $0x29c] sm:$0xf]
          %v7414 = vld [vmem:[%s5 + $0x2a0] sm:$0xf]
          %v7415 = vld [vmem:[%s5 + $0x2a4] sm:$0xf]
          %v7416 = vld [vmem:[%s5 + $0x2a8] sm:$0xf]
          %v7417 = vld [vmem:[%s5 + $0x2ac] sm:$0xf]
          %v7418 = vld [vmem:[%s5 + $0x2b0] sm:$0xf]
          %v7419 = vld [vmem:[%s5 + $0x2b4] sm:$0xf]
          %v7420 = vld [vmem:[%s5 + $0x2b8] sm:$0xf]
          %v7421 = vld [vmem:[%s5 + $0x2bc] sm:$0xf]
          %v7422 = vld [vmem:[%s5 + $0x2c0] sm:$0xf]
          %v7423 = vld [vmem:[%s5 + $0x2c4] sm:$0xf]
          %v7424 = vld [vmem:[%s5 + $0x2c8] sm:$0xf]
          %v7425 = vld [vmem:[%s5 + $0x2cc] sm:$0xf]
          %v7426 = vld [vmem:[%s5 + $0x2d0] sm:$0xf]
          %v7427 = vld [vmem:[%s5 + $0x2d4] sm:$0xf]
          %v7428 = vld [vmem:[%s5 + $0x2d8] sm:$0xf]
          %v7429 = vld [vmem:[%s5 + $0x2dc] sm:$0xf]
          %v7430 = vld [vmem:[%s5 + $0x2e0] sm:$0xf]
          %v7431 = vld [vmem:[%s5 + $0x2e4] sm:$0xf]
          %v7432 = vld [vmem:[%s5 + $0x2e8] sm:$0xf]
          %v7433 = vld [vmem:[%s5 + $0x2ec] sm:$0xf]
          %v7434 = vld [vmem:[%s5 + $0x2f0] sm:$0xf]
          %v7435 = vld [vmem:[%s5 + $0x2f4] sm:$0xf]
          %v7436 = vld [vmem:[%s5 + $0x2f8] sm:$0xf]
          %v7437 = vld [vmem:[%s5 + $0x2fc] sm:$0xf]
          %v7438 = vld [vmem:[%s5 + $0x300] sm:$0xf]
          %v7439 = vld [vmem:[%s5 + $0x304] sm:$0xf]
          %v7440 = vld [vmem:[%s5 + $0x308] sm:$0xf]
          %v7441 = vld [vmem:[%s5 + $0x30c] sm:$0xf]
          %v7442 = vld [vmem:[%s5 + $0x310] sm:$0xf]
          %v7443 = vld [vmem:[%s5 + $0x314] sm:$0xf]
          %v7444 = vld [vmem:[%s5 + $0x318] sm:$0xf]
          %v7445 = vld [vmem:[%s5 + $0x31c] sm:$0xf]
          %v7446 = vld [vmem:[%s5 + $0x320] sm:$0xf]
          %v7447 = vld [vmem:[%s5 + $0x324] sm:$0xf]
          %v7448 = vld [vmem:[%s5 + $0x328] sm:$0xf]
          %v7449 = vld [vmem:[%s5 + $0x32c] sm:$0xf]
          %v7450 = vld [vmem:[%s5 + $0x330] sm:$0xf]
          %v7451 = vld [vmem:[%s5 + $0x334] sm:$0xf]
          %v7452 = vld [vmem:[%s5 + $0x338] sm:$0xf]
          %v7453 = vld [vmem:[%s5 + $0x33c] sm:$0xf]
          %v7454 = vld [vmem:[%s5 + $0x340] sm:$0xf]
          %v7455 = vld [vmem:[%s5 + $0x344] sm:$0xf]
          %v7456 = vld [vmem:[%s5 + $0x348] sm:$0xf]
          %v7457 = vld [vmem:[%s5 + $0x34c] sm:$0xf]
          %v7458 = vld [vmem:[%s5 + $0x350] sm:$0xf]
          %v7459 = vld [vmem:[%s5 + $0x354] sm:$0xf]
          %v7460 = vld [vmem:[%s5 + $0x358] sm:$0xf]
          %v7461 = vld [vmem:[%s5 + $0x35c] sm:$0xf]
          %v7462 = vld [vmem:[%s5 + $0x360] sm:$0xf]
          %v7463 = vld [vmem:[%s5 + $0x364] sm:$0xf]
          %v7464 = vld [vmem:[%s5 + $0x368] sm:$0xf]
          %v7465 = vld [vmem:[%s5 + $0x36c] sm:$0xf]
          %v7466 = vld [vmem:[%s5 + $0x370] sm:$0xf]
          %v7467 = vld [vmem:[%s5 + $0x374] sm:$0xf]
          %v7468 = vld [vmem:[%s5 + $0x378] sm:$0xf]
          %v7469 = vld [vmem:[%s5 + $0x37c] sm:$0xf]
          %v7470 = vld [vmem:[%s5 + $0x380] sm:$0xf]
          %v7471 = vld [vmem:[%s5 + $0x384] sm:$0xf]
          %v7472 = vld [vmem:[%s5 + $0x388] sm:$0xf]
          %v7473 = vld [vmem:[%s5 + $0x38c] sm:$0xf]
          %v7474 = vld [vmem:[%s5 + $0x390] sm:$0xf]
          %v7475 = vld [vmem:[%s5 + $0x394] sm:$0xf]
          %v7476 = vld [vmem:[%s5 + $0x398] sm:$0xf]
          %v7477 = vld [vmem:[%s5 + $0x39c] sm:$0xf]
          %v7478 = vld [vmem:[%s5 + $0x3a0] sm:$0xf]
          %v7479 = vld [vmem:[%s5 + $0x3a4] sm:$0xf]
          %v7480 = vld [vmem:[%s5 + $0x3a8] sm:$0xf]
          %v7481 = vld [vmem:[%s5 + $0x3ac] sm:$0xf]
          %v7482 = vld [vmem:[%s5 + $0x3b0] sm:$0xf]
          %v7483 = vld [vmem:[%s5 + $0x3b4] sm:$0xf]
          %v7484 = vld [vmem:[%s5 + $0x3b8] sm:$0xf]
          %v7485 = vld [vmem:[%s5 + $0x3bc] sm:$0xf]
          %v7486 = vld [vmem:[%s5 + $0x3c0] sm:$0xf]
          %v7487 = vld [vmem:[%s5 + $0x3c4] sm:$0xf]
          %v7488 = vld [vmem:[%s5 + $0x3c8] sm:$0xf]
          %v7489 = vld [vmem:[%s5 + $0x3cc] sm:$0xf]
          %v7490 = vld [vmem:[%s5 + $0x3d0] sm:$0xf]
          %v7491 = vld [vmem:[%s5 + $0x3d4] sm:$0xf]
          %v7492 = vld [vmem:[%s5 + $0x3d8] sm:$0xf]
          %v7493 = vld [vmem:[%s5 + $0x3dc] sm:$0xf]
          %v7494 = vld [vmem:[%s5 + $0x3e0] sm:$0xf]
          %v7495 = vld [vmem:[%s5 + $0x3e4] sm:$0xf]
          %v7496 = vld [vmem:[%s5 + $0x3e8] sm:$0xf]
          %v7497 = vld [vmem:[%s5 + $0x3ec] sm:$0xf]
          %v7498 = vld [vmem:[%s5 + $0x3f0] sm:$0xf]
          %v7499 = vld [vmem:[%s5 + $0x3f4] sm:$0xf]
          %v7500 = vld [vmem:[%s5 + $0x3f8] sm:$0xf]
          %v7501 = vld [vmem:[%s5 + $0x3fc] sm:$0xf]
          %v7502 = vld [vmem:[%s6] sm:$0x1]
          %v7759 = vunpack.c.l.b16 %v7246
          %v7760 = vunpack.c.l.b16 %v7247
          %v7761 = vunpack.c.l.b16 %v7248
          %v7762 = vunpack.c.l.b16 %v7249
          %v7763 = vunpack.c.l.b16 %v7250
          %v7764 = vunpack.c.l.b16 %v7251
          %v7765 = vunpack.c.l.b16 %v7252
          %v7766 = vunpack.c.l.b16 %v7253
          %v7767 = vunpack.c.l.b16 %v7254
          %v7768 = vunpack.c.l.b16 %v7255
          %v7769 = vunpack.c.l.b16 %v7256
          %v7770 = vunpack.c.l.b16 %v7257
          %v7771 = vunpack.c.l.b16 %v7258
          %v7772 = vunpack.c.l.b16 %v7259
          %v7773 = vunpack.c.l.b16 %v7260
          %v7774 = vunpack.c.l.b16 %v7261
          %v7775 = vunpack.c.l.b16 %v7262
          %v7776 = vunpack.c.l.b16 %v7263
          %v7777 = vunpack.c.l.b16 %v7264
          %v7778 = vunpack.c.l.b16 %v7265
          %v7779 = vunpack.c.l.b16 %v7266
          %v7780 = vunpack.c.l.b16 %v7267
          %v7781 = vunpack.c.l.b16 %v7268
          %v7782 = vunpack.c.l.b16 %v7269
          %v7783 = vunpack.c.l.b16 %v7270
          %v7784 = vunpack.c.l.b16 %v7271
          %v7785 = vunpack.c.l.b16 %v7272
          %v7786 = vunpack.c.l.b16 %v7273
          %v7787 = vunpack.c.l.b16 %v7274
          %v7788 = vunpack.c.l.b16 %v7275
          %v7789 = vunpack.c.l.b16 %v7276
          %v7790 = vunpack.c.l.b16 %v7277
          %v7791 = vunpack.c.l.b16 %v7278
          %v7792 = vunpack.c.l.b16 %v7279
          %v7793 = vunpack.c.l.b16 %v7280
          %v7794 = vunpack.c.l.b16 %v7281
          %v7795 = vunpack.c.l.b16 %v7282
          %v7796 = vunpack.c.l.b16 %v7283
          %v7797 = vunpack.c.l.b16 %v7284
          %v7798 = vunpack.c.l.b16 %v7285
          %v7799 = vunpack.c.l.b16 %v7286
          %v7800 = vunpack.c.l.b16 %v7287
          %v7801 = vunpack.c.l.b16 %v7288
          %v7802 = vunpack.c.l.b16 %v7289
          %v7803 = vunpack.c.l.b16 %v7290
          %v7804 = vunpack.c.l.b16 %v7291
          %v7805 = vunpack.c.l.b16 %v7292
          %v7806 = vunpack.c.l.b16 %v7293
          %v7807 = vunpack.c.l.b16 %v7294
          %v7808 = vunpack.c.l.b16 %v7295
          %v7809 = vunpack.c.l.b16 %v7296
          %v7810 = vunpack.c.l.b16 %v7297
          %v7811 = vunpack.c.l.b16 %v7298
          %v7812 = vunpack.c.l.b16 %v7299
          %v7813 = vunpack.c.l.b16 %v7300
          %v7814 = vunpack.c.l.b16 %v7301
          %v7815 = vunpack.c.l.b16 %v7302
          %v7816 = vunpack.c.l.b16 %v7303
          %v7817 = vunpack.c.l.b16 %v7304
          %v7818 = vunpack.c.l.b16 %v7305
          %v7819 = vunpack.c.l.b16 %v7306
          %v7820 = vunpack.c.l.b16 %v7307
          %v7821 = vunpack.c.l.b16 %v7308
          %v7822 = vunpack.c.l.b16 %v7309
          %v7823 = vunpack.c.l.b16 %v7310
          %v7824 = vunpack.c.l.b16 %v7311
          %v7825 = vunpack.c.l.b16 %v7312
          %v7826 = vunpack.c.l.b16 %v7313
          %v7827 = vunpack.c.l.b16 %v7314
          %v7828 = vunpack.c.l.b16 %v7315
          %v7829 = vunpack.c.l.b16 %v7316
          %v7830 = vunpack.c.l.b16 %v7317
          %v7831 = vunpack.c.l.b16 %v7318
          %v7832 = vunpack.c.l.b16 %v7319
          %v7833 = vunpack.c.l.b16 %v7320
          %v7834 = vunpack.c.l.b16 %v7321
          %v7835 = vunpack.c.l.b16 %v7322
          %v7836 = vunpack.c.l.b16 %v7323
          %v7837 = vunpack.c.l.b16 %v7324
          %v7838 = vunpack.c.l.b16 %v7325
          %v7839 = vunpack.c.l.b16 %v7326
          %v7840 = vunpack.c.l.b16 %v7327
          %v7841 = vunpack.c.l.b16 %v7328
          %v7842 = vunpack.c.l.b16 %v7329
          %v7843 = vunpack.c.l.b16 %v7330
          %v7844 = vunpack.c.l.b16 %v7331
          %v7845 = vunpack.c.l.b16 %v7332
          %v7846 = vunpack.c.l.b16 %v7333
          %v7847 = vunpack.c.l.b16 %v7334
          %v7848 = vunpack.c.l.b16 %v7335
          %v7849 = vunpack.c.l.b16 %v7336
          %v7850 = vunpack.c.l.b16 %v7337
          %v7851 = vunpack.c.l.b16 %v7338
          %v7852 = vunpack.c.l.b16 %v7339
          %v7853 = vunpack.c.l.b16 %v7340
          %v7854 = vunpack.c.l.b16 %v7341
          %v7855 = vunpack.c.l.b16 %v7342
          %v7856 = vunpack.c.l.b16 %v7343
          %v7857 = vunpack.c.l.b16 %v7344
          %v7858 = vunpack.c.l.b16 %v7345
          %v7859 = vunpack.c.l.b16 %v7346
          %v7860 = vunpack.c.l.b16 %v7347
          %v7861 = vunpack.c.l.b16 %v7348
          %v7862 = vunpack.c.l.b16 %v7349
          %v7863 = vunpack.c.l.b16 %v7350
          %v7864 = vunpack.c.l.b16 %v7351
          %v7865 = vunpack.c.l.b16 %v7352
          %v7866 = vunpack.c.l.b16 %v7353
          %v7867 = vunpack.c.l.b16 %v7354
          %v7868 = vunpack.c.l.b16 %v7355
          %v7869 = vunpack.c.l.b16 %v7356
          %v7870 = vunpack.c.l.b16 %v7357
          %v7871 = vunpack.c.l.b16 %v7358
          %v7872 = vunpack.c.l.b16 %v7359
          %v7873 = vunpack.c.l.b16 %v7360
          %v7874 = vunpack.c.l.b16 %v7361
          %v7875 = vunpack.c.l.b16 %v7362
          %v7876 = vunpack.c.l.b16 %v7363
          %v7877 = vunpack.c.l.b16 %v7364
          %v7878 = vunpack.c.l.b16 %v7365
          %v7879 = vunpack.c.l.b16 %v7366
          %v7880 = vunpack.c.l.b16 %v7367
          %v7881 = vunpack.c.l.b16 %v7368
          %v7882 = vunpack.c.l.b16 %v7369
          %v7883 = vunpack.c.l.b16 %v7370
          %v7884 = vunpack.c.l.b16 %v7371
          %v7885 = vunpack.c.l.b16 %v7372
          %v7886 = vunpack.c.l.b16 %v7373
          %v7887 = vunpack.c.l.b16 %v7374
          %v7888 = vunpack.c.l.b16 %v7375
          %v7889 = vunpack.c.l.b16 %v7376
          %v7890 = vunpack.c.l.b16 %v7377
          %v7891 = vunpack.c.l.b16 %v7378
          %v7892 = vunpack.c.l.b16 %v7379
          %v7893 = vunpack.c.l.b16 %v7380
          %v7894 = vunpack.c.l.b16 %v7381
          %v7895 = vunpack.c.l.b16 %v7382
          %v7896 = vunpack.c.l.b16 %v7383
          %v7897 = vunpack.c.l.b16 %v7384
          %v7898 = vunpack.c.l.b16 %v7385
          %v7899 = vunpack.c.l.b16 %v7386
          %v7900 = vunpack.c.l.b16 %v7387
          %v7901 = vunpack.c.l.b16 %v7388
          %v7902 = vunpack.c.l.b16 %v7389
          %v7903 = vunpack.c.l.b16 %v7390
          %v7904 = vunpack.c.l.b16 %v7391
          %v7905 = vunpack.c.l.b16 %v7392
          %v7906 = vunpack.c.l.b16 %v7393
          %v7907 = vunpack.c.l.b16 %v7394
          %v7908 = vunpack.c.l.b16 %v7395
          %v7909 = vunpack.c.l.b16 %v7396
          %v7910 = vunpack.c.l.b16 %v7397
          %v7911 = vunpack.c.l.b16 %v7398
          %v7912 = vunpack.c.l.b16 %v7399
          %v7913 = vunpack.c.l.b16 %v7400
          %v7914 = vunpack.c.l.b16 %v7401
          %v7915 = vunpack.c.l.b16 %v7402
          %v7916 = vunpack.c.l.b16 %v7403
          %v7917 = vunpack.c.l.b16 %v7404
          %v7918 = vunpack.c.l.b16 %v7405
          %v7919 = vunpack.c.l.b16 %v7406
          %v7920 = vunpack.c.l.b16 %v7407
          %v7921 = vunpack.c.l.b16 %v7408
          %v7922 = vunpack.c.l.b16 %v7409
          %v7923 = vunpack.c.l.b16 %v7410
          %v7924 = vunpack.c.l.b16 %v7411
          %v7925 = vunpack.c.l.b16 %v7412
          %v7926 = vunpack.c.l.b16 %v7413
          %v7927 = vunpack.c.l.b16 %v7414
          %v7928 = vunpack.c.l.b16 %v7415
          %v7929 = vunpack.c.l.b16 %v7416
          %v7930 = vunpack.c.l.b16 %v7417
          %v7931 = vunpack.c.l.b16 %v7418
          %v7932 = vunpack.c.l.b16 %v7419
          %v7933 = vunpack.c.l.b16 %v7420
          %v7934 = vunpack.c.l.b16 %v7421
          %v7935 = vunpack.c.l.b16 %v7422
          %v7936 = vunpack.c.l.b16 %v7423
          %v7937 = vunpack.c.l.b16 %v7424
          %v7938 = vunpack.c.l.b16 %v7425
          %v7939 = vunpack.c.l.b16 %v7426
          %v7940 = vunpack.c.l.b16 %v7427
          %v7941 = vunpack.c.l.b16 %v7428
          %v7942 = vunpack.c.l.b16 %v7429
          %v7943 = vunpack.c.l.b16 %v7430
          %v7944 = vunpack.c.l.b16 %v7431
          %v7945 = vunpack.c.l.b16 %v7432
          %v7946 = vunpack.c.l.b16 %v7433
          %v7947 = vunpack.c.l.b16 %v7434
          %v7948 = vunpack.c.l.b16 %v7435
          %v7949 = vunpack.c.l.b16 %v7436
          %v7950 = vunpack.c.l.b16 %v7437
          %v7951 = vunpack.c.l.b16 %v7438
          %v7952 = vunpack.c.l.b16 %v7439
          %v7953 = vunpack.c.l.b16 %v7440
          %v7954 = vunpack.c.l.b16 %v7441
          %v7955 = vunpack.c.l.b16 %v7442
          %v7956 = vunpack.c.l.b16 %v7443
          %v7957 = vunpack.c.l.b16 %v7444
          %v7958 = vunpack.c.l.b16 %v7445
          %v7959 = vunpack.c.l.b16 %v7446
          %v7960 = vunpack.c.l.b16 %v7447
          %v7961 = vunpack.c.l.b16 %v7448
          %v7962 = vunpack.c.l.b16 %v7449
          %v7963 = vunpack.c.l.b16 %v7450
          %v7964 = vunpack.c.l.b16 %v7451
          %v7965 = vunpack.c.l.b16 %v7452
          %v7966 = vunpack.c.l.b16 %v7453
          %v7967 = vunpack.c.l.b16 %v7454
          %v7968 = vunpack.c.l.b16 %v7455
          %v7969 = vunpack.c.l.b16 %v7456
          %v7970 = vunpack.c.l.b16 %v7457
          %v7971 = vunpack.c.l.b16 %v7458
          %v7972 = vunpack.c.l.b16 %v7459
          %v7973 = vunpack.c.l.b16 %v7460
          %v7974 = vunpack.c.l.b16 %v7461
          %v7975 = vunpack.c.l.b16 %v7462
          %v7976 = vunpack.c.l.b16 %v7463
          %v7977 = vunpack.c.l.b16 %v7464
          %v7978 = vunpack.c.l.b16 %v7465
          %v7979 = vunpack.c.l.b16 %v7466
          %v7980 = vunpack.c.l.b16 %v7467
          %v7981 = vunpack.c.l.b16 %v7468
          %v7982 = vunpack.c.l.b16 %v7469
          %v7983 = vunpack.c.l.b16 %v7470
          %v7984 = vunpack.c.l.b16 %v7471
          %v7985 = vunpack.c.l.b16 %v7472
          %v7986 = vunpack.c.l.b16 %v7473
          %v7987 = vunpack.c.l.b16 %v7474
          %v7988 = vunpack.c.l.b16 %v7475
          %v7989 = vunpack.c.l.b16 %v7476
          %v7990 = vunpack.c.l.b16 %v7477
          %v7991 = vunpack.c.l.b16 %v7478
          %v7992 = vunpack.c.l.b16 %v7479
          %v7993 = vunpack.c.l.b16 %v7480
          %v7994 = vunpack.c.l.b16 %v7481
          %v7995 = vunpack.c.l.b16 %v7482
          %v7996 = vunpack.c.l.b16 %v7483
          %v7997 = vunpack.c.l.b16 %v7484
          %v7998 = vunpack.c.l.b16 %v7485
          %v7999 = vunpack.c.l.b16 %v7486
          %v8000 = vunpack.c.l.b16 %v7487
          %v8001 = vunpack.c.l.b16 %v7488
          %v8002 = vunpack.c.l.b16 %v7489
          %v8003 = vunpack.c.l.b16 %v7490
          %v8004 = vunpack.c.l.b16 %v7491
          %v8005 = vunpack.c.l.b16 %v7492
          %v8006 = vunpack.c.l.b16 %v7493
          %v8007 = vunpack.c.l.b16 %v7494
          %v8008 = vunpack.c.l.b16 %v7495
          %v8009 = vunpack.c.l.b16 %v7496
          %v8010 = vunpack.c.l.b16 %v7497
          %v8011 = vunpack.c.l.b16 %v7498
          %v8012 = vunpack.c.l.b16 %v7499
          %v8013 = vunpack.c.l.b16 %v7500
          %v8014 = vunpack.c.l.b16 %v7501
          %v8015 = vpack.c.b16 %v7760, %v7759
          %v8016 = vpack.c.b16 %v7762, %v7761
          %v8017 = vpack.c.b16 %v7764, %v7763
          %v8018 = vpack.c.b16 %v7766, %v7765
          %v8019 = vpack.c.b16 %v7768, %v7767
          %v8020 = vpack.c.b16 %v7770, %v7769
          %v8021 = vpack.c.b16 %v7772, %v7771
          %v8022 = vpack.c.b16 %v7774, %v7773
          %v8023 = vpack.c.b16 %v7776, %v7775
          %v8024 = vpack.c.b16 %v7778, %v7777
          %v8025 = vpack.c.b16 %v7780, %v7779
          %v8026 = vpack.c.b16 %v7782, %v7781
          %v8027 = vpack.c.b16 %v7784, %v7783
          %v8028 = vpack.c.b16 %v7786, %v7785
          %v8029 = vpack.c.b16 %v7788, %v7787
          %v8030 = vpack.c.b16 %v7790, %v7789
          %v8031 = vpack.c.b16 %v7792, %v7791
          %v8032 = vpack.c.b16 %v7794, %v7793
          %v8033 = vpack.c.b16 %v7796, %v7795
          %v8034 = vpack.c.b16 %v7798, %v7797
          %v8035 = vpack.c.b16 %v7800, %v7799
          %v8036 = vpack.c.b16 %v7802, %v7801
          %v8037 = vpack.c.b16 %v7804, %v7803
          %v8038 = vpack.c.b16 %v7806, %v7805
          %v8039 = vpack.c.b16 %v7808, %v7807
          %v8040 = vpack.c.b16 %v7810, %v7809
          %v8041 = vpack.c.b16 %v7812, %v7811
          %v8042 = vpack.c.b16 %v7814, %v7813
          %v8043 = vpack.c.b16 %v7816, %v7815
          %v8044 = vpack.c.b16 %v7818, %v7817
          %v8045 = vpack.c.b16 %v7820, %v7819
          %v8046 = vpack.c.b16 %v7822, %v7821
          %v8047 = vpack.c.b16 %v7824, %v7823
          %v8048 = vpack.c.b16 %v7826, %v7825
          %v8049 = vpack.c.b16 %v7828, %v7827
          %v8050 = vpack.c.b16 %v7830, %v7829
          %v8051 = vpack.c.b16 %v7832, %v7831
          %v8052 = vpack.c.b16 %v7834, %v7833
          %v8053 = vpack.c.b16 %v7836, %v7835
          %v8054 = vpack.c.b16 %v7838, %v7837
          %v8055 = vpack.c.b16 %v7840, %v7839
          %v8056 = vpack.c.b16 %v7842, %v7841
          %v8057 = vpack.c.b16 %v7844, %v7843
          %v8058 = vpack.c.b16 %v7846, %v7845
          %v8059 = vpack.c.b16 %v7848, %v7847
          %v8060 = vpack.c.b16 %v7850, %v7849
          %v8061 = vpack.c.b16 %v7852, %v7851
          %v8062 = vpack.c.b16 %v7854, %v7853
          %v8063 = vpack.c.b16 %v7856, %v7855
          %v8064 = vpack.c.b16 %v7858, %v7857
          %v8065 = vpack.c.b16 %v7860, %v7859
          %v8066 = vpack.c.b16 %v7862, %v7861
          %v8067 = vpack.c.b16 %v7864, %v7863
          %v8068 = vpack.c.b16 %v7866, %v7865
          %v8069 = vpack.c.b16 %v7868, %v7867
          %v8070 = vpack.c.b16 %v7870, %v7869
          %v8071 = vpack.c.b16 %v7872, %v7871
          %v8072 = vpack.c.b16 %v7874, %v7873
          %v8073 = vpack.c.b16 %v7876, %v7875
          %v8074 = vpack.c.b16 %v7878, %v7877
          %v8075 = vpack.c.b16 %v7880, %v7879
          %v8076 = vpack.c.b16 %v7882, %v7881
          %v8077 = vpack.c.b16 %v7884, %v7883
          %v8078 = vpack.c.b16 %v7886, %v7885
          %v8079 = vpack.c.b16 %v7888, %v7887
          %v8080 = vpack.c.b16 %v7890, %v7889
          %v8081 = vpack.c.b16 %v7892, %v7891
          %v8082 = vpack.c.b16 %v7894, %v7893
          %v8083 = vpack.c.b16 %v7896, %v7895
          %v8084 = vpack.c.b16 %v7898, %v7897
          %v8085 = vpack.c.b16 %v7900, %v7899
          %v8086 = vpack.c.b16 %v7902, %v7901
          %v8087 = vpack.c.b16 %v7904, %v7903
          %v8088 = vpack.c.b16 %v7906, %v7905
          %v8089 = vpack.c.b16 %v7908, %v7907
          %v8090 = vpack.c.b16 %v7910, %v7909
          %v8091 = vpack.c.b16 %v7912, %v7911
          %v8092 = vpack.c.b16 %v7914, %v7913
          %v8093 = vpack.c.b16 %v7916, %v7915
          %v8094 = vpack.c.b16 %v7918, %v7917
          %v8095 = vpack.c.b16 %v7920, %v7919
          %v8096 = vpack.c.b16 %v7922, %v7921
          %v8097 = vpack.c.b16 %v7924, %v7923
          %v8098 = vpack.c.b16 %v7926, %v7925
          %v8099 = vpack.c.b16 %v7928, %v7927
          %v8100 = vpack.c.b16 %v7930, %v7929
          %v8101 = vpack.c.b16 %v7932, %v7931
          %v8102 = vpack.c.b16 %v7934, %v7933
          %v8103 = vpack.c.b16 %v7936, %v7935
          %v8104 = vpack.c.b16 %v7938, %v7937
          %v8105 = vpack.c.b16 %v7940, %v7939
          %v8106 = vpack.c.b16 %v7942, %v7941
          %v8107 = vpack.c.b16 %v7944, %v7943
          %v8108 = vpack.c.b16 %v7946, %v7945
          %v8109 = vpack.c.b16 %v7948, %v7947
          %v8110 = vpack.c.b16 %v7950, %v7949
          %v8111 = vpack.c.b16 %v7952, %v7951
          %v8112 = vpack.c.b16 %v7954, %v7953
          %v8113 = vpack.c.b16 %v7956, %v7955
          %v8114 = vpack.c.b16 %v7958, %v7957
          %v8115 = vpack.c.b16 %v7960, %v7959
          %v8116 = vpack.c.b16 %v7962, %v7961
          %v8117 = vpack.c.b16 %v7964, %v7963
          %v8118 = vpack.c.b16 %v7966, %v7965
          %v8119 = vpack.c.b16 %v7968, %v7967
          %v8120 = vpack.c.b16 %v7970, %v7969
          %v8121 = vpack.c.b16 %v7972, %v7971
          %v8122 = vpack.c.b16 %v7974, %v7973
          %v8123 = vpack.c.b16 %v7976, %v7975
          %v8124 = vpack.c.b16 %v7978, %v7977
          %v8125 = vpack.c.b16 %v7980, %v7979
          %v8126 = vpack.c.b16 %v7982, %v7981
          %v8127 = vpack.c.b16 %v7984, %v7983
          %v8128 = vpack.c.b16 %v7986, %v7985
          %v8129 = vpack.c.b16 %v7988, %v7987
          %v8130 = vpack.c.b16 %v7990, %v7989
          %v8131 = vpack.c.b16 %v7992, %v7991
          %v8132 = vpack.c.b16 %v7994, %v7993
          %v8133 = vpack.c.b16 %v7996, %v7995
          %v8134 = vpack.c.b16 %v7998, %v7997
          %v8135 = vpack.c.b16 %v8000, %v7999
          %v8136 = vpack.c.b16 %v8002, %v8001
          %v8137 = vpack.c.b16 %v8004, %v8003
          %v8138 = vpack.c.b16 %v8006, %v8005
          %v8139 = vpack.c.b16 %v8008, %v8007
          %v8140 = vpack.c.b16 %v8010, %v8009
          %v8141 = vpack.c.b16 %v8012, %v8011
          %v8142 = vpack.c.b16 %v8014, %v8013
          %8271 = vmatprep.subr.bf16.mxu0 0
          %8272 = vmatpush1.bf16.msra.mxu0 %v8015
          %8273 = vmatprep.subr.bf16.mxu0 0
          %8274 = vmatpush1.bf16.msra.mxu0 %v8016
          %8275 = vmatprep.subr.bf16.mxu0 0
          %8276 = vmatpush1.bf16.msra.mxu0 %v8017
          %8277 = vmatprep.subr.bf16.mxu0 0
          %8278 = vmatpush1.bf16.msra.mxu0 %v8018
          %8279 = vmatprep.subr.bf16.mxu0 0
          %8280 = vmatpush1.bf16.msra.mxu0 %v8019
          %8281 = vmatprep.subr.bf16.mxu0 0
          %8282 = vmatpush1.bf16.msra.mxu0 %v8020
          %8283 = vmatprep.subr.bf16.mxu0 0
          %8284 = vmatpush1.bf16.msra.mxu0 %v8021
          %8285 = vmatprep.subr.bf16.mxu0 0
          %8286 = vmatpush1.bf16.msra.mxu0 %v8022
          %8287 = vmatprep.subr.bf16.mxu0 0
          %8288 = vmatpush1.bf16.msra.mxu0 %v8023
          %8289 = vmatprep.subr.bf16.mxu0 0
          %8290 = vmatpush1.bf16.msra.mxu0 %v8024
          %8291 = vmatprep.subr.bf16.mxu0 0
          %8292 = vmatpush1.bf16.msra.mxu0 %v8025
          %8293 = vmatprep.subr.bf16.mxu0 0
          %8294 = vmatpush1.bf16.msra.mxu0 %v8026
          %8295 = vmatprep.subr.bf16.mxu0 0
          %8296 = vmatpush1.bf16.msra.mxu0 %v8027
          %8297 = vmatprep.subr.bf16.mxu0 0
          %8298 = vmatpush1.bf16.msra.mxu0 %v8028
          %8299 = vmatprep.subr.bf16.mxu0 0
          %8300 = vmatpush1.bf16.msra.mxu0 %v8029
          %8301 = vmatprep.subr.bf16.mxu0 0
          %8302 = vmatpush1.bf16.msra.mxu0 %v8030
          %8303 = vmatprep.mubr.bf16.mxu0 %v7231
          %8304 = vmatmul.mubr.bf16.gmra.mrb[0].mxu0 %v7230
          %v8305 = vpop.f32.mrb[0].mxu0
          %v8306 = vadd.f32 %v7502, %v8305
          %v8307 = vpop.f32.mrb[0].mxu0
          %v8308 = vpop.f32.mrb[0].mxu0
          %v8309 = vpop.f32.mrb[0].mxu0
          %8310 = vdwg.mxu0
          %8311 = vmatprep.subr.bf16.mxu0 0
          %8312 = vmatpush1.bf16.msra.mxu0 %v8031
          %8313 = vmatprep.subr.bf16.mxu0 0
          %8314 = vmatpush1.bf16.msra.mxu0 %v8032
          %8315 = vmatprep.subr.bf16.mxu0 0
          %8316 = vmatpush1.bf16.msra.mxu0 %v8033
          %8317 = vmatprep.subr.bf16.mxu0 0
          %8318 = vmatpush1.bf16.msra.mxu0 %v8034
          %8319 = vmatprep.subr.bf16.mxu0 0
          %8320 = vmatpush1.bf16.msra.mxu0 %v8035
          %8321 = vmatprep.subr.bf16.mxu0 0
          %8322 = vmatpush1.bf16.msra.mxu0 %v8036
          %8323 = vmatprep.subr.bf16.mxu0 0
          %8324 = vmatpush1.bf16.msra.mxu0 %v8037
          %8325 = vmatprep.subr.bf16.mxu0 0
          %8326 = vmatpush1.bf16.msra.mxu0 %v8038
          %8327 = vmatprep.subr.bf16.mxu0 0
          %8328 = vmatpush1.bf16.msra.mxu0 %v8039
          %8329 = vmatprep.subr.bf16.mxu0 0
          %8330 = vmatpush1.bf16.msra.mxu0 %v8040
          %8331 = vmatprep.subr.bf16.mxu0 0
          %8332 = vmatpush1.bf16.msra.mxu0 %v8041
          %8333 = vmatprep.subr.bf16.mxu0 0
          %8334 = vmatpush1.bf16.msra.mxu0 %v8042
          %8335 = vmatprep.subr.bf16.mxu0 0
          %8336 = vmatpush1.bf16.msra.mxu0 %v8043
          %8337 = vmatprep.subr.bf16.mxu0 0
          %8338 = vmatpush1.bf16.msra.mxu0 %v8044
          %8339 = vmatprep.subr.bf16.mxu0 0
          %8340 = vmatpush1.bf16.msra.mxu0 %v8045
          %8341 = vmatprep.subr.bf16.mxu0 0
          %8342 = vmatpush1.bf16.msra.mxu0 %v8046
          %8343 = vmatprep.mubr.bf16.mxu0 %v7233
          %8344 = vmatmul.mubr.bf16.gmra.mrb[0].mxu0 %v7232
          %v8345 = vpop.f32.mrb[0].mxu0
          %v8346 = vadd.f32 %v8306, %v8345
          %v8347 = vpop.f32.mrb[0].mxu0
          %v8348 = vpop.f32.mrb[0].mxu0
          %v8349 = vpop.f32.mrb[0].mxu0
          %8350 = vdwg.mxu0
          %8351 = vmatprep.subr.bf16.mxu0 0
          %8352 = vmatpush1.bf16.msra.mxu0 %v8047
          %8353 = vmatprep.subr.bf16.mxu0 0
          %8354 = vmatpush1.bf16.msra.mxu0 %v8048
          %8355 = vmatprep.subr.bf16.mxu0 0
          %8356 = vmatpush1.bf16.msra.mxu0 %v8049
          %8357 = vmatprep.subr.bf16.mxu0 0
          %8358 = vmatpush1.bf16.msra.mxu0 %v8050
          %8359 = vmatprep.subr.bf16.mxu0 0
          %8360 = vmatpush1.bf16.msra.mxu0 %v8051
          %8361 = vmatprep.subr.bf16.mxu0 0
          %8362 = vmatpush1.bf16.msra.mxu0 %v8052
          %8363 = vmatprep.subr.bf16.mxu0 0
          %8364 = vmatpush1.bf16.msra.mxu0 %v8053
          %8365 = vmatprep.subr.bf16.mxu0 0
          %8366 = vmatpush1.bf16.msra.mxu0 %v8054
          %8367 = vmatprep.subr.bf16.mxu0 0
          %8368 = vmatpush1.bf16.msra.mxu0 %v8055
          %8369 = vmatprep.subr.bf16.mxu0 0
          %8370 = vmatpush1.bf16.msra.mxu0 %v8056
          %8371 = vmatprep.subr.bf16.mxu0 0
          %8372 = vmatpush1.bf16.msra.mxu0 %v8057
          %8373 = vmatprep.subr.bf16.mxu0 0
          %8374 = vmatpush1.bf16.msra.mxu0 %v8058
          %8375 = vmatprep.subr.bf16.mxu0 0
          %8376 = vmatpush1.bf16.msra.mxu0 %v8059
          %8377 = vmatprep.subr.bf16.mxu0 0
          %8378 = vmatpush1.bf16.msra.mxu0 %v8060
          %8379 = vmatprep.subr.bf16.mxu0 0
          %8380 = vmatpush1.bf16.msra.mxu0 %v8061
          %8381 = vmatprep.subr.bf16.mxu0 0
          %8382 = vmatpush1.bf16.msra.mxu0 %v8062
          %8383 = vmatprep.mubr.bf16.mxu0 %v7235
          %8384 = vmatmul.mubr.bf16.gmra.mrb[0].mxu0 %v7234
          %v8385 = vpop.f32.mrb[0].mxu0
          %v8386 = vadd.f32 %v8346, %v8385
          %v8387 = vpop.f32.mrb[0].mxu0
          %v8388 = vpop.f32.mrb[0].mxu0
          %v8389 = vpop.f32.mrb[0].mxu0
          %8390 = vdwg.mxu0
          %8391 = vmatprep.subr.bf16.mxu0 0
          %8392 = vmatpush1.bf16.msra.mxu0 %v8063
          %8393 = vmatprep.subr.bf16.mxu0 0
          %8394 = vmatpush1.bf16.msra.mxu0 %v8064
          %8395 = vmatprep.subr.bf16.mxu0 0
          %8396 = vmatpush1.bf16.msra.mxu0 %v8065
          %8397 = vmatprep.subr.bf16.mxu0 0
          %8398 = vmatpush1.bf16.msra.mxu0 %v8066
          %8399 = vmatprep.subr.bf16.mxu0 0
          %8400 = vmatpush1.bf16.msra.mxu0 %v8067
          %8401 = vmatprep.subr.bf16.mxu0 0
          %8402 = vmatpush1.bf16.msra.mxu0 %v8068
          %8403 = vmatprep.subr.bf16.mxu0 0
          %8404 = vmatpush1.bf16.msra.mxu0 %v8069
          %8405 = vmatprep.subr.bf16.mxu0 0
          %8406 = vmatpush1.bf16.msra.mxu0 %v8070
          %8407 = vmatprep.subr.bf16.mxu0 0
          %8408 = vmatpush1.bf16.msra.mxu0 %v8071
          %8409 = vmatprep.subr.bf16.mxu0 0
          %8410 = vmatpush1.bf16.msra.mxu0 %v8072
          %8411 = vmatprep.subr.bf16.mxu0 0
          %8412 = vmatpush1.bf16.msra.mxu0 %v8073
          %8413 = vmatprep.subr.bf16.mxu0 0
          %8414 = vmatpush1.bf16.msra.mxu0 %v8074
          %8415 = vmatprep.subr.bf16.mxu0 0
          %8416 = vmatpush1.bf16.msra.mxu0 %v8075
          %8417 = vmatprep.subr.bf16.mxu0 0
          %8418 = vmatpush1.bf16.msra.mxu0 %v8076
          %8419 = vmatprep.subr.bf16.mxu0 0
          %8420 = vmatpush1.bf16.msra.mxu0 %v8077
          %8421 = vmatprep.subr.bf16.mxu0 0
          %8422 = vmatpush1.bf16.msra.mxu0 %v8078
          %8423 = vmatprep.mubr.bf16.mxu0 %v7237
          %8424 = vmatmul.mubr.bf16.gmra.mrb[0].mxu0 %v7236
          %v8425 = vpop.f32.mrb[0].mxu0
          %v8426 = vadd.f32 %v8386, %v8425
          %v8427 = vpop.f32.mrb[0].mxu0
          %v8428 = vpop.f32.mrb[0].mxu0
          %v8429 = vpop.f32.mrb[0].mxu0
          %8430 = vdwg.mxu0
          %8431 = vmatprep.subr.bf16.mxu0 0
          %8432 = vmatpush1.bf16.msra.mxu0 %v8079
          %8433 = vmatprep.subr.bf16.mxu0 0
          %8434 = vmatpush1.bf16.msra.mxu0 %v8080
          %8435 = vmatprep.subr.bf16.mxu0 0
          %8436 = vmatpush1.bf16.msra.mxu0 %v8081
          %8437 = vmatprep.subr.bf16.mxu0 0
          %8438 = vmatpush1.bf16.msra.mxu0 %v8082
          %8439 = vmatprep.subr.bf16.mxu0 0
          %8440 = vmatpush1.bf16.msra.mxu0 %v8083
          %8441 = vmatprep.subr.bf16.mxu0 0
          %8442 = vmatpush1.bf16.msra.mxu0 %v8084
          %8443 = vmatprep.subr.bf16.mxu0 0
          %8444 = vmatpush1.bf16.msra.mxu0 %v8085
          %8445 = vmatprep.subr.bf16.mxu0 0
          %8446 = vmatpush1.bf16.msra.mxu0 %v8086
          %8447 = vmatprep.subr.bf16.mxu0 0
          %8448 = vmatpush1.bf16.msra.mxu0 %v8087
          %8449 = vmatprep.subr.bf16.mxu0 0
          %8450 = vmatpush1.bf16.msra.mxu0 %v8088
          %8451 = vmatprep.subr.bf16.mxu0 0
          %8452 = vmatpush1.bf16.msra.mxu0 %v8089
          %8453 = vmatprep.subr.bf16.mxu0 0
          %8454 = vmatpush1.bf16.msra.mxu0 %v8090
          %8455 = vmatprep.subr.bf16.mxu0 0
          %8456 = vmatpush1.bf16.msra.mxu0 %v8091
          %8457 = vmatprep.subr.bf16.mxu0 0
          %8458 = vmatpush1.bf16.msra.mxu0 %v8092
          %8459 = vmatprep.subr.bf16.mxu0 0
          %8460 = vmatpush1.bf16.msra.mxu0 %v8093
          %8461 = vmatprep.subr.bf16.mxu0 0
          %8462 = vmatpush1.bf16.msra.mxu0 %v8094
          %8463 = vmatprep.mubr.bf16.mxu0 %v7239
          %8464 = vmatmul.mubr.bf16.gmra.mrb[0].mxu0 %v7238
          %v8465 = vpop.f32.mrb[0].mxu0
          %v8466 = vadd.f32 %v8426, %v8465
          %v8467 = vpop.f32.mrb[0].mxu0
          %v8468 = vpop.f32.mrb[0].mxu0
          %v8469 = vpop.f32.mrb[0].mxu0
          %8470 = vdwg.mxu0
          %8471 = vmatprep.subr.bf16.mxu0 0
          %8472 = vmatpush1.bf16.msra.mxu0 %v8095
          %8473 = vmatprep.subr.bf16.mxu0 0
          %8474 = vmatpush1.bf16.msra.mxu0 %v8096
          %8475 = vmatprep.subr.bf16.mxu0 0
          %8476 = vmatpush1.bf16.msra.mxu0 %v8097
          %8477 = vmatprep.subr.bf16.mxu0 0
          %8478 = vmatpush1.bf16.msra.mxu0 %v8098
          %8479 = vmatprep.subr.bf16.mxu0 0
          %8480 = vmatpush1.bf16.msra.mxu0 %v8099
          %8481 = vmatprep.subr.bf16.mxu0 0
          %8482 = vmatpush1.bf16.msra.mxu0 %v8100
          %8483 = vmatprep.subr.bf16.mxu0 0
          %8484 = vmatpush1.bf16.msra.mxu0 %v8101
          %8485 = vmatprep.subr.bf16.mxu0 0
          %8486 = vmatpush1.bf16.msra.mxu0 %v8102
          %8487 = vmatprep.subr.bf16.mxu0 0
          %8488 = vmatpush1.bf16.msra.mxu0 %v8103
          %8489 = vmatprep.subr.bf16.mxu0 0
          %8490 = vmatpush1.bf16.msra.mxu0 %v8104
          %8491 = vmatprep.subr.bf16.mxu0 0
          %8492 = vmatpush1.bf16.msra.mxu0 %v8105
          %8493 = vmatprep.subr.bf16.mxu0 0
          %8494 = vmatpush1.bf16.msra.mxu0 %v8106
          %8495 = vmatprep.subr.bf16.mxu0 0
          %8496 = vmatpush1.bf16.msra.mxu0 %v8107
          %8497 = vmatprep.subr.bf16.mxu0 0
          %8498 = vmatpush1.bf16.msra.mxu0 %v8108
          %8499 = vmatprep.subr.bf16.mxu0 0
          %8500 = vmatpush1.bf16.msra.mxu0 %v8109
          %8501 = vmatprep.subr.bf16.mxu0 0
          %8502 = vmatpush1.bf16.msra.mxu0 %v8110
          %8503 = vmatprep.mubr.bf16.mxu0 %v7241
          %8504 = vmatmul.mubr.bf16.gmra.mrb[0].mxu0 %v7240
          %v8505 = vpop.f32.mrb[0].mxu0
          %v8506 = vadd.f32 %v8466, %v8505
          %v8507 = vpop.f32.mrb[0].mxu0
          %v8508 = vpop.f32.mrb[0].mxu0
          %v8509 = vpop.f32.mrb[0].mxu0
          %8510 = vdwg.mxu0
          %8511 = vmatprep.subr.bf16.mxu0 0
          %8512 = vmatpush1.bf16.msra.mxu0 %v8111
          %8513 = vmatprep.subr.bf16.mxu0 0
          %8514 = vmatpush1.bf16.msra.mxu0 %v8112
          %8515 = vmatprep.subr.bf16.mxu0 0
          %8516 = vmatpush1.bf16.msra.mxu0 %v8113
          %8517 = vmatprep.subr.bf16.mxu0 0
          %8518 = vmatpush1.bf16.msra.mxu0 %v8114
          %8519 = vmatprep.subr.bf16.mxu0 0
          %8520 = vmatpush1.bf16.msra.mxu0 %v8115
          %8521 = vmatprep.subr.bf16.mxu0 0
          %8522 = vmatpush1.bf16.msra.mxu0 %v8116
          %8523 = vmatprep.subr.bf16.mxu0 0
          %8524 = vmatpush1.bf16.msra.mxu0 %v8117
          %8525 = vmatprep.subr.bf16.mxu0 0
          %8526 = vmatpush1.bf16.msra.mxu0 %v8118
          %8527 = vmatprep.subr.bf16.mxu0 0
          %8528 = vmatpush1.bf16.msra.mxu0 %v8119
          %8529 = vmatprep.subr.bf16.mxu0 0
          %8530 = vmatpush1.bf16.msra.mxu0 %v8120
          %8531 = vmatprep.subr.bf16.mxu0 0
          %8532 = vmatpush1.bf16.msra.mxu0 %v8121
          %8533 = vmatprep.subr.bf16.mxu0 0
          %8534 = vmatpush1.bf16.msra.mxu0 %v8122
          %8535 = vmatprep.subr.bf16.mxu0 0
          %8536 = vmatpush1.bf16.msra.mxu0 %v8123
          %8537 = vmatprep.subr.bf16.mxu0 0
          %8538 = vmatpush1.bf16.msra.mxu0 %v8124
          %8539 = vmatprep.subr.bf16.mxu0 0
          %8540 = vmatpush1.bf16.msra.mxu0 %v8125
          %8541 = vmatprep.subr.bf16.mxu0 0
          %8542 = vmatpush1.bf16.msra.mxu0 %v8126
          %8543 = vmatprep.mubr.bf16.mxu0 %v7243
          %8544 = vmatmul.mubr.bf16.gmra.mrb[0].mxu0 %v7242
          %v8545 = vpop.f32.mrb[0].mxu0
          %v8546 = vadd.f32 %v8506, %v8545
          %v8547 = vpop.f32.mrb[0].mxu0
          %v8548 = vpop.f32.mrb[0].mxu0
          %v8549 = vpop.f32.mrb[0].mxu0
          %8550 = vdwg.mxu0
          %8551 = vmatprep.subr.bf16.mxu0 0
          %8552 = vmatpush1.bf16.msra.mxu0 %v8127
          %8553 = vmatprep.subr.bf16.mxu0 0
          %8554 = vmatpush1.bf16.msra.mxu0 %v8128
          %8555 = vmatprep.subr.bf16.mxu0 0
          %8556 = vmatpush1.bf16.msra.mxu0 %v8129
          %8557 = vmatprep.subr.bf16.mxu0 0
          %8558 = vmatpush1.bf16.msra.mxu0 %v8130
          %8559 = vmatprep.subr.bf16.mxu0 0
          %8560 = vmatpush1.bf16.msra.mxu0 %v8131
          %8561 = vmatprep.subr.bf16.mxu0 0
          %8562 = vmatpush1.bf16.msra.mxu0 %v8132
          %8563 = vmatprep.subr.bf16.mxu0 0
          %8564 = vmatpush1.bf16.msra.mxu0 %v8133
          %8565 = vmatprep.subr.bf16.mxu0 0
          %8566 = vmatpush1.bf16.msra.mxu0 %v8134
          %8567 = vmatprep.subr.bf16.mxu0 0
          %8568 = vmatpush1.bf16.msra.mxu0 %v8135
          %8569 = vmatprep.subr.bf16.mxu0 0
          %8570 = vmatpush1.bf16.msra.mxu0 %v8136
          %8571 = vmatprep.subr.bf16.mxu0 0
          %8572 = vmatpush1.bf16.msra.mxu0 %v8137
          %8573 = vmatprep.subr.bf16.mxu0 0
          %8574 = vmatpush1.bf16.msra.mxu0 %v8138
          %8575 = vmatprep.subr.bf16.mxu0 0
          %8576 = vmatpush1.bf16.msra.mxu0 %v8139
          %8577 = vmatprep.subr.bf16.mxu0 0
          %8578 = vmatpush1.bf16.msra.mxu0 %v8140
          %8579 = vmatprep.subr.bf16.mxu0 0
          %8580 = vmatpush1.bf16.msra.mxu0 %v8141
          %8581 = vmatprep.subr.bf16.mxu0 0
          %8582 = vmatpush1.bf16.msra.mxu0 %v8142
          %8583 = vmatprep.mubr.bf16.mxu0 %v7245
          %8584 = vmatmul.mubr.bf16.gmra.mrb[0].mxu0 %v7244
          %v8585 = vpop.f32.mrb[0].mxu0
          %v8586 = vadd.f32 %v8546, %v8585
          %v8587 = vpop.f32.mrb[0].mxu0
          %v8588 = vpop.f32.mrb[0].mxu0
          %v8589 = vpop.f32.mrb[0].mxu0
          %8590 = vdwg.mxu0
          %v8591 = vxor.u32 %v8586, 2147483648
          %v8592 = vmul.f32 %v8591, 1.442695
          %v8593 = vpow.pop %v8592
          %v8594 = vadd.f32 %v8593, 1.0
          %v8595 = vrcp.pop %v8594
          %v8596 = vmul.f32 1.0, %v8595
          %8597 = vst [vmem:[%s293] sm:$0x1] %v8596
        $region56: #{model_multilabel_forward.1} parent=47 // pred_fallthru
          _
        %s8598 = sand.u32 %s195, 1
        %s8599 = scalar_lea.sflag [#allocation4], %s8598
        %s8600 = sand.u32 %s195, 1
        %s8601 = scalar_lea.vmem [#allocation3], %s8600
        // Predicated region
        $region57: #{model_multilabel_forward.1} parent=47 // pred_check
          %p8602 = pneg %p205
        $region58: #{model_multilabel_forward.1} parent=47 // pred_check_branch
          %8604 = sbr.rel (%p8602) target = $region60
        $region59: #{model_multilabel_forward.1} parent=47 // pred_region
          %s8606 = ssub.s32 16, 16
          %8607 = vsyncadd %s8599, %s8606
          %s8608 = smul.addr %s25, 16
          %s8609 = scalar_lea.hbm %s7, %s8608
          %s8611 = sshll.u32 %s8601, 4
          %s8612 = int_to_ptr.vmem [resolvable:$true] %s8611
          %8614 = dma.vmem_to_hbm [thread:$0]  %s8612, 16, %s8609, %s8599
        $region60: #{model_multilabel_forward.1} parent=47 // pred_fallthru
          _
      $region48: #{model_multilabel_forward.1} parent=5 // pred_fallthru
        _
      %p8615 = scmp.le.s32.totalorder 2, %s16
      // Predicated region
      $region61: #{model_multilabel_forward.1} parent=5 // pred_check
        %p8616 = pneg %p8615
      $region62: #{model_multilabel_forward.1} parent=5 // pred_check_branch
        %8618 = sbr.rel (%p8616) target = $region64
      $region63: #{model_multilabel_forward.1} parent=5 // pred_region
        %s8619 = ssub.s32 %s16, 2
        // Predicated region
        $region65: #{model_multilabel_forward.1} parent=63 // pred_check
          %p8620 = pneg %p211
        $region66: #{model_multilabel_forward.1} parent=63 // pred_check_branch
          %8622 = sbr.rel (%p8620) target = $region68
        $region67: #{model_multilabel_forward.1} parent=63 // pred_region
          %s8623 = sand.u32 %s196, 1
          %s8624 = scalar_lea.sflag [#allocation4], %s8623
          %s8625 = sand.u32 %s196, 1
          %s8626 = scalar_lea.vmem [#allocation3], %s8625
          %8627 = dma.done %s8624, 16
        $region68: #{model_multilabel_forward.1} parent=63 // pred_fallthru
          _
      $region64: #{model_multilabel_forward.1} parent=5 // pred_fallthru
        _
    $region6: #{model_multilabel_forward.1} parent=1 // loop_footer
      %s20 = sadd.s32 1, %s16
    $region7: #{model_multilabel_forward.1} parent=1 // loop_footer_branch
      %15 = sbr.rel target = $region3
    $region8: #{model_multilabel_forward.1} parent=1 // loop_exit
      _
    %8628 = vsyncpa [#allocation4], 1
    %s8629 = scalar_lea.sflag [#allocation4], 1
    %8630 = vsyncpa %s8629, 1

</llo_original>
